<compile_context>
chip_gen: v7x
topology: tpu7x:2x2x1
jax: 0.10.0
libtpu: 0.0.40
codegen_flags: <defaults>
</compile_context>

<pallas_src>
import jax
import jax.numpy as jnp
from jax.experimental import pallas as pl
from jax.experimental.pallas import tpu as pltpu

LN_EPS = 1e-5


def _layernorm(x, gamma, beta):
    # PyTorch nn.LayerNorm over the last dim: centered two-pass, biased variance, eps=1e-5.
    mu = jnp.mean(x, axis=-1, keepdims=True)
    xc = x - mu
    var = jnp.mean(xc * xc, axis=-1, keepdims=True)
    return xc * jax.lax.rsqrt(var + LN_EPS) * gamma + beta


def _partial_encoder_kernel(
    x_ref, m_ref, embp_ref, stats_ref, w1x_ref, ln1_ref,
    w2_ref, p2_ref, w3_ref, p3_ref, w4_ref, b4_ref,
    out_ref, c_acc,
):
    d_idx = pl.program_id(1)

    @pl.when(d_idx == 0)
    def _():
        c_acc[...] = jnp.zeros_like(c_acc)

    x = x_ref[...]            # (tb, td)
    m = m_ref[...]            # (tb, td)
    embp = embp_ref[...]      # (td, Hh) = emb @ W1e + b1 (precomputed in wrapper)
    s = stats_ref[...]        # (5, td)  = [me, ve, cwe, mw, vw] per feature (wrapper precompute)
    tb, td = x.shape
    Hh = embp.shape[1]
    K = w2_ref.shape[1]

    # --- LayerNorm-1 statistics, hoisted algebraically (no in-kernel reduction over Hh).
    me_r, ve_r, cw_r, mw_r, vw_r = s[0:1, :], s[1:2, :], s[2:3, :], s[3:4, :], s[4:5, :]
    mean = x * mw_r + me_r                                   # (tb, td)
    var = (x * x) * vw_r + 2.0 * (x * cw_r) + ve_r           # centered moments -> no cancellation
    inv = jax.lax.rsqrt(var + LN_EPS)                        # (tb, td)

    # --- h_layer, Linear(1+K -> Hh) + LN1 + ReLU, now purely elementwise over (tb, td, Hh).
    w1x = w1x_ref[0, :]                                      # (Hh,)
    g1, be1 = ln1_ref[0, :], ln1_ref[1, :]
    pre1 = x[:, :, None] * w1x[None, None, :] + embp[None, :, :]          # (tb, td, Hh)
    h1 = jnp.maximum(
        (pre1 - mean[:, :, None]) * inv[:, :, None] * g1[None, None, :] + be1[None, None, :],
        0.0)
    # (Dropout(rate=0.0) / eval -> identity)

    # --- h_layer, Linear(Hh -> K) as ONE 2-D MXU matmul over all tb*td rows, then LN2 + ReLU.
    b2, g2, be2 = p2_ref[0, :], p2_ref[1, :], p2_ref[2, :]
    pre2 = jnp.dot(h1.reshape(tb * td, Hh), w2_ref[...],
                   preferred_element_type=jnp.float32) + b2[None, :]
    mu2 = jnp.mean(pre2, axis=-1, keepdims=True)
    xc2 = pre2 - mu2
    var2 = jnp.mean(xc2 * xc2, axis=-1, keepdims=True)
    h2 = jnp.maximum(xc2 * jax.lax.rsqrt(var2 + LN_EPS) * g2[None, :] + be2[None, :], 0.0)
    h2 = h2.reshape(tb, td, K)

    # --- masked sum over this feature tile on VPU/XLU (no M=1 batched MXU pushes):
    #     c[b, k] += sum_t m[b, t] * h2[b, t, k]
    c_acc[...] += jnp.sum(m[:, :, None] * h2, axis=1)        # (tb, K)

    @pl.when(d_idx == pl.num_programs(1) - 1)
    def _():
        c = c_acc[...]                                       # (tb, K)
        b3, g3, be3 = p3_ref[0, :], p3_ref[1, :], p3_ref[2, :]
        pre3 = jnp.dot(c, w3_ref[...], preferred_element_type=jnp.float32) + b3[None, :]
        mu3 = jnp.mean(pre3, axis=-1, keepdims=True)
        xc3 = pre3 - mu3
        var3 = jnp.mean(xc3 * xc3, axis=-1, keepdims=True)
        h3 = jnp.maximum(xc3 * jax.lax.rsqrt(var3 + LN_EPS) * g3[None, :] + be3[None, :], 0.0)
        # w4/b4 are zero-padded to a multiple of 128 output columns -> lane-dense unmasked store.
        out = jnp.dot(h3, w4_ref[...], preferred_element_type=jnp.float32) + b4_ref[0, :][None, :]
        out_ref[...] = out.astype(out_ref.dtype)             # (tb, P)


def _est_bytes(tb, td, Hh, K):
    # Rough per-step live-VMEM estimate: f32 3-D intermediates + double-buffered feature tiles.
    big = 4 * tb * td * (2 * Hh + 2 * K)
    tiles = 4 * (2 * (2 * tb * td) + 2 * td * Hh + 2 * 5 * td)
    return big + tiles


def _pick_td(D, Hh, K, budget):
    """Returns (td, Dp). td divides Dp; td is a multiple of 128 or equal to the full axis."""
    TD_CAP = 1024
    if D <= TD_CAP and _est_bytes(8, D, Hh, K) <= budget:
        return D, D
    Dp = -(-D // 128) * 128
    for cand in (1024, 512, 256, 128):
        if cand <= TD_CAP and Dp % cand == 0 and _est_bytes(8, cand, Hh, K) <= budget:
            return cand, Dp
    return 128, Dp


def partial_encoder_forward(x, mask, params, *, tb=None, td=None,
                            vmem_budget_bytes=12 * 1024 * 1024):
    B, D = x.shape
    Hh = params["b1"].shape[1]
    K = params["w2"].shape[1]
    He = params["b3"].shape[1]
    two_z = params["b4"].shape[1]
    Z = two_z // 2
    f32 = jnp.float32

    # ---- hoisted, batch-independent precompute ----
    embp = params["emb"].astype(f32) @ params["w1e"].astype(f32) + params["b1"].astype(f32)  # (D, Hh)
    w1x = params["w1x"].astype(f32)                       # (1, Hh)
    mw = jnp.mean(w1x)
    wc = w1x - mw
    vw = jnp.mean(wc * wc)
    me = jnp.mean(embp, axis=1)                           # (D,)
    ec = embp - me[:, None]
    ve = jnp.mean(ec * ec, axis=1)                        # (D,)
    cwe = jnp.mean(ec * wc, axis=1)                       # (D,)
    stats = jnp.stack(
        [me, ve, cwe, jnp.broadcast_to(mw, (D,)), jnp.broadcast_to(vw, (D,))], axis=0)  # (5, D)

    # Pack the small per-stage vectors (fewer pipelined inputs / DMAs).
    ln1 = jnp.concatenate([params["g1"], params["be1"]], axis=0).astype(f32)               # (2, Hh)
    p2 = jnp.concatenate([params["b2"], params["g2"], params["be2"]], axis=0).astype(f32)  # (3, K)
    p3 = jnp.concatenate([params["b3"], params["g3"], params["be3"]], axis=0).astype(f32)  # (3, He)

    # Lane-dense output: pad the last linear to a multiple of 128 output columns.
    P = -(-two_z // 128) * 128
    w4p = jnp.zeros((He, P), f32).at[:, :two_z].set(params["w4"].astype(f32))
    b4p = jnp.zeros((1, P), f32).at[:, :two_z].set(params["b4"].astype(f32))

    # ---- batch padding (never fall back to tb = B for non-multiple-of-8 batches) ----
    Bp = -(-B // 8) * 8
    if Bp != B:
        x = jnp.pad(x, ((0, Bp - B), (0, 0)))
        mask = jnp.pad(mask, ((0, Bp - B), (0, 0)))

    # ---- feature tiling (cap against the VMEM budget; allow larger tiles for large D) ----
    if td is None:
        td, Dp = _pick_td(D, Hh, K, vmem_budget_bytes)
    else:
        Dp = -(-D // td) * td
    if Dp != D:
        x = jnp.pad(x, ((0, 0), (0, Dp - D)))
        mask = jnp.pad(mask, ((0, 0), (0, Dp - D)))      # padded features masked out -> 0 contribution
        embp = jnp.pad(embp, ((0, Dp - D), (0, 0)))
        stats = jnp.pad(stats, ((0, 0), (0, Dp - D)))

    # ---- batch tile: multiple-of-8 divisor, VMEM-budget capped, >=2 tiles when possible
    #      (so the "parallel" grid axis can use both TensorCores on v7x) ----
    if tb is None:
        divs = [t for t in range(8, Bp + 1, 8) if Bp % t == 0]
        ok = [t for t in divs if _est_bytes(t, td, Hh, K) <= vmem_budget_bytes] or [8]
        two_tiles = [t for t in ok if Bp // t >= 2]
        tb = max(two_tiles) if (Bp >= 16 and two_tiles) else max(ok)
    assert Bp % tb == 0 and Dp % td == 0

    full = lambda shape: pl.BlockSpec(shape, lambda i, j: (0, 0))
    in_specs = [
        pl.BlockSpec((tb, td), lambda i, j: (i, j)),   # x
        pl.BlockSpec((tb, td), lambda i, j: (i, j)),   # mask
        pl.BlockSpec((td, Hh), lambda i, j: (j, 0)),   # embp  (feature-tiled)
        pl.BlockSpec((5, td), lambda i, j: (0, j)),    # stats (feature-tiled LN1 moments)
        full((1, Hh)),       # w1x
        full((2, Hh)),       # ln1: [gamma1; beta1]
        full((Hh, K)),       # w2
        full((3, K)),        # p2: [b2; gamma2; beta2]
        full((K, He)),       # w3
        full((3, He)),       # p3: [b3; gamma3; beta3]
        full((He, P)),       # w4 (zero-padded to P cols)
        full((1, P)),        # b4 (zero-padded)
    ]
    out_specs = pl.BlockSpec((tb, P), lambda i, j: (i, 0))

    grid_spec = pltpu.PrefetchScalarGridSpec(
        num_scalar_prefetch=0,
        grid=(Bp // tb, Dp // td),
        in_specs=in_specs,
        out_specs=out_specs,
        scratch_shapes=[pltpu.VMEM((tb, K), jnp.float32)],
    )

    out = pl.pallas_call(
        _partial_encoder_kernel,
        grid_spec=grid_spec,
        out_shape=jax.ShapeDtypeStruct((Bp, P), x.dtype),
        compiler_params=pltpu.CompilerParams(
            dimension_semantics=("parallel", "arbitrary"),
            vmem_limit_bytes=32 * 1024 * 1024,   # safe on v5e/v6e/v7x; >= all default scoped limits
        ),
    )(x, mask, embp, stats, params["w1x"].astype(f32), ln1, params["w2"].astype(f32), p2,
      params["w3"].astype(f32), p3, w4p, b4p)

    return out[:B, :Z], out[:B, Z:two_z]


def ref_forward(x, mask, p):
    """Pure-JAX reference mirroring the PyTorch forward exactly."""
    B, D = x.shape
    K = p["emb"].shape[1]
    Z = p["b4"].shape[1] // 2
    x_flat = x.reshape(-1, 1)
    F_embed = jnp.broadcast_to(p["emb"][None], (B, D, K)).reshape(-1, K)
    h_in = jnp.concatenate([x_flat, F_embed], axis=1)
    W1 = jnp.concatenate([p["w1x"], p["w1e"]], axis=0)          # (1+K, Hh)
    h1 = jnp.maximum(_layernorm(h_in @ W1 + p["b1"], p["g1"], p["be1"]), 0.0)
    h2 = jnp.maximum(_layernorm(h1 @ p["w2"] + p["b2"], p["g2"], p["be2"]), 0.0)
    h_out = h2.reshape(B, D, K) * mask[..., None]
    c = h_out.sum(axis=1)
    h3 = jnp.maximum(_layernorm(c @ p["w3"] + p["b3"], p["g3"], p["be3"]), 0.0)
    out = h3 @ p["w4"] + p["b4"]
    return out[:, :Z], out[:, Z:]


def init_params(key, input_dim, h_hidden_dim, encoder_hidden_dim, latent_dim, code_dim):
    ks = jax.random.split(key, 8)
    scale = lambda fan_in: 1.0 / jnp.sqrt(fan_in)
    K, Hh, He, Z, D = code_dim, h_hidden_dim, encoder_hidden_dim, latent_dim, input_dim
    p = {
        "emb": jax.random.normal(ks[0], (D, K), jnp.float32),
        # h_layer Linear(1+K -> Hh), weight stored as (in, out); row 0 is the x column.
        "w1x": jax.random.uniform(ks[1], (1, Hh), jnp.float32, -1, 1) * scale(1 + K),
        "w1e": jax.random.uniform(ks[2], (K, Hh), jnp.float32, -1, 1) * scale(1 + K),
        "b1": jax.random.uniform(ks[3], (1, Hh), jnp.float32, -1, 1) * scale(1 + K),
        "g1": jnp.ones((1, Hh), jnp.float32),
        "be1": jnp.zeros((1, Hh), jnp.float32),
        # h_layer Linear(Hh -> K)
        "w2": jax.random.uniform(ks[4], (Hh, K), jnp.float32, -1, 1) * scale(Hh),
        "b2": jax.random.uniform(ks[5], (1, K), jnp.float32, -1, 1) * scale(Hh),
        "g2": jnp.ones((1, K), jnp.float32),
        "be2": jnp.zeros((1, K), jnp.float32),
        # encoder_mlp Linear(K -> He)
        "w3": jax.random.uniform(ks[6], (K, He), jnp.float32, -1, 1) * scale(K),
        "b3": jnp.zeros((1, He), jnp.float32),
        "g3": jnp.ones((1, He), jnp.float32),
        "be3": jnp.zeros((1, He), jnp.float32),
        # encoder_mlp Linear(He -> 2Z)
        "w4": jax.random.uniform(ks[7], (He, 2 * Z), jnp.float32, -1, 1) * scale(He),
        "b4": jnp.zeros((1, 2 * Z), jnp.float32),
    }
    return p


if __name__ == "__main__":
    # Small shapes implied by the module: x, mask are (batch, input_dim).
    B, D = 8, 256                   # batch, input_dim (junctions/features)
    K, Hh, He, Z = 32, 64, 64, 16   # code_dim, h_hidden_dim, encoder_hidden_dim, latent_dim

    key = jax.random.PRNGKey(0)
    kx, km, kp = jax.random.split(key, 3)
    x = jax.random.normal(kx, (B, D), jnp.float32)
    mask = (jax.random.uniform(km, (B, D)) > 0.4).astype(jnp.float32)
    params = init_params(kp, D, Hh, He, Z, K)

    mu_ref, lv_ref = ref_forward(x, mask, params)

    # 1) Default tiling (single feature step).
    mu, logvar = partial_encoder_forward(x, mask, params)
    jax.block_until_ready((mu, logvar))
    assert mu.shape == (B, Z) and logvar.shape == (B, Z)
    assert jnp.allclose(mu, mu_ref, atol=1e-4, rtol=1e-4), "mu mismatch vs reference"
    assert jnp.allclose(logvar, lv_ref, atol=1e-4, rtol=1e-4), "logvar mismatch vs reference"

    # 2) Forced multi-step feature reduction (exercises the VMEM accumulator path).
    mu2, logvar2 = partial_encoder_forward(x, mask, params, td=128)
    jax.block_until_ready((mu2, logvar2))
    assert jnp.allclose(mu2, mu_ref, atol=1e-4, rtol=1e-4), "mu mismatch (td=128)"
    assert jnp.allclose(logvar2, lv_ref, atol=1e-4, rtol=1e-4), "logvar mismatch (td=128)"

    # 3) Non-multiple-of-8 batch (exercises the batch-padding path; no tb=B fallback).
    xb, mb = x[:5], mask[:5]
    mu3_ref, lv3_ref = ref_forward(xb, mb, params)
    mu3, logvar3 = partial_encoder_forward(xb, mb, params)
    jax.block_until_ready((mu3, logvar3))
    assert mu3.shape == (5, Z) and logvar3.shape == (5, Z)
    assert jnp.allclose(mu3, mu3_ref, atol=1e-4, rtol=1e-4), "mu mismatch (padded batch)"
    assert jnp.allclose(logvar3, lv3_ref, atol=1e-4, rtol=1e-4), "logvar mismatch (padded batch)"

    print("KERNEL_OK")
</pallas_src>

<mosaic_0001>
module attributes {stable_mosaic.version = 11 : i64} {
  func.func @_partial_encoder_kernel(%arg0: i32, %arg1: i32, %arg2: memref<8x256xf32, #tpu.memory_space<vmem>>, %arg3: memref<8x256xf32, #tpu.memory_space<vmem>>, %arg4: memref<256x64xf32, #tpu.memory_space<vmem>>, %arg5: memref<5x256xf32, #tpu.memory_space<vmem>>, %arg6: memref<1x64xf32, #tpu.memory_space<vmem>>, %arg7: memref<2x64xf32, #tpu.memory_space<vmem>>, %arg8: memref<64x32xf32, #tpu.memory_space<vmem>>, %arg9: memref<3x32xf32, #tpu.memory_space<vmem>>, %arg10: memref<32x64xf32, #tpu.memory_space<vmem>>, %arg11: memref<3x64xf32, #tpu.memory_space<vmem>>, %arg12: memref<64x128xf32, #tpu.memory_space<vmem>>, %arg13: memref<1x128xf32, #tpu.memory_space<vmem>>, %arg14: memref<8x128xf32, #tpu.memory_space<vmem>>, %arg15: memref<8x32xf32, #tpu.memory_space<vmem>>) attributes {dimension_semantics = [#tpu.dimension_semantics<parallel>, #tpu.dimension_semantics<arbitrary>], iteration_bounds = array<i64: 1, 1>, scalar_prefetch = 0 : i64, scratch_operands = 1 : i64, tpu.core_type = #tpu.core_type<tc>, window_params = [{transform_indices = @transform_0, window_bounds = array<i64: 8, 256>}, {transform_indices = @transform_1, window_bounds = array<i64: 8, 256>}, {transform_indices = @transform_2, window_bounds = array<i64: 256, 64>}, {transform_indices = @transform_3, window_bounds = array<i64: 5, 256>}, {pipeline_mode = #tpu.pipeline_mode<synchronous>, transform_indices = @transform_4, window_bounds = array<i64: 1, 64>}, {pipeline_mode = #tpu.pipeline_mode<synchronous>, transform_indices = @transform_5, window_bounds = array<i64: 2, 64>}, {pipeline_mode = #tpu.pipeline_mode<synchronous>, transform_indices = @transform_6, window_bounds = array<i64: 64, 32>}, {pipeline_mode = #tpu.pipeline_mode<synchronous>, transform_indices = @transform_7, window_bounds = array<i64: 3, 32>}, {pipeline_mode = #tpu.pipeline_mode<synchronous>, transform_indices = @transform_8, window_bounds = array<i64: 32, 64>}, {pipeline_mode = #tpu.pipeline_mode<synchronous>, transform_indices = @transform_9, window_bounds = array<i64: 3, 64>}, {pipeline_mode = #tpu.pipeline_mode<synchronous>, transform_indices = @transform_10, window_bounds = array<i64: 64, 128>}, {pipeline_mode = #tpu.pipeline_mode<synchronous>, transform_indices = @transform_11, window_bounds = array<i64: 1, 128>}, {transform_indices = @transform_12, window_bounds = array<i64: 8, 128>}]} {
    %c0_i32 = arith.constant 0 : i32
    %0 = arith.cmpi eq, %arg1, %c0_i32 : i32
    %1 = arith.extui %0 : i1 to i32
    %c0_i32_0 = arith.constant 0 : i32
    %2 = arith.cmpi ne, %1, %c0_i32_0 : i32
    scf.if %2 {
      %cst_36 = arith.constant 0.000000e+00 : f32
      %104 = vector.broadcast %cst_36 : f32 to vector<8x32xf32>
      %c0_37 = arith.constant 0 : index
      %c0_38 = arith.constant 0 : index
      %105 = vector.load %arg15[%c0_37, %c0_38] : memref<8x32xf32, #tpu.memory_space<vmem>>, vector<8x32xf32>
      tpu.vector_store %arg15[%c0_37, %c0_38], %104 {strides = array<i32>} : memref<8x32xf32, #tpu.memory_space<vmem>>, vector<8x32xf32>,
    } else {
    }
    %c0 = arith.constant 0 : index
    %c0_1 = arith.constant 0 : index
    %3 = vector.load %arg2[%c0, %c0_1] : memref<8x256xf32, #tpu.memory_space<vmem>>, vector<8x256xf32>
    %c0_2 = arith.constant 0 : index
    %c0_3 = arith.constant 0 : index
    %4 = vector.load %arg3[%c0_2, %c0_3] : memref<8x256xf32, #tpu.memory_space<vmem>>, vector<8x256xf32>
    %c0_4 = arith.constant 0 : index
    %c0_5 = arith.constant 0 : index
    %5 = vector.load %arg4[%c0_4, %c0_5] : memref<256x64xf32, #tpu.memory_space<vmem>>, vector<256x64xf32>
    %c0_6 = arith.constant 0 : index
    %c0_7 = arith.constant 0 : index
    %6 = vector.load %arg5[%c0_6, %c0_7] : memref<5x256xf32, #tpu.memory_space<vmem>>, vector<5x256xf32>
    %7 = vector.extract_strided_slice %6 {offsets = [0, 0], sizes = [1, 256], strides = [1, 1]} : vector<5x256xf32> to vector<1x256xf32>
    %8 = vector.extract_strided_slice %6 {offsets = [1, 0], sizes = [1, 256], strides = [1, 1]} : vector<5x256xf32> to vector<1x256xf32>
    %9 = vector.extract_strided_slice %6 {offsets = [2, 0], sizes = [1, 256], strides = [1, 1]} : vector<5x256xf32> to vector<1x256xf32>
    %10 = vector.extract_strided_slice %6 {offsets = [3, 0], sizes = [1, 256], strides = [1, 1]} : vector<5x256xf32> to vector<1x256xf32>
    %11 = vector.extract_strided_slice %6 {offsets = [4, 0], sizes = [1, 256], strides = [1, 1]} : vector<5x256xf32> to vector<1x256xf32>
    %12 = vector.broadcast %10 : vector<1x256xf32> to vector<8x256xf32>
    %13 = arith.mulf %3, %12 : vector<8x256xf32>
    %14 = vector.broadcast %7 : vector<1x256xf32> to vector<8x256xf32>
    %15 = arith.addf %13, %14 : vector<8x256xf32>
    %16 = arith.mulf %3, %3 : vector<8x256xf32>
    %17 = vector.broadcast %11 : vector<1x256xf32> to vector<8x256xf32>
    %18 = arith.mulf %16, %17 : vector<8x256xf32>
    %19 = vector.broadcast %9 : vector<1x256xf32> to vector<8x256xf32>
    %20 = arith.mulf %3, %19 : vector<8x256xf32>
    %cst = arith.constant 2.000000e+00 : f32
    %21 = vector.broadcast %cst : f32 to vector<8x256xf32>
    %22 = arith.mulf %21, %20 : vector<8x256xf32>
    %23 = arith.addf %18, %22 : vector<8x256xf32>
    %24 = vector.broadcast %8 : vector<1x256xf32> to vector<8x256xf32>
    %25 = arith.addf %23, %24 : vector<8x256xf32>
    %cst_8 = arith.constant 9.99999974E-6 : f32
    %26 = vector.broadcast %cst_8 : f32 to vector<8x256xf32>
    %27 = arith.addf %25, %26 : vector<8x256xf32>
    %28 = math.rsqrt %27 : vector<8x256xf32>
    %c0_9 = arith.constant 0 : index
    %c0_10 = arith.constant 0 : index
    %29 = vector.load %arg6[%c0_9, %c0_10] : memref<1x64xf32, #tpu.memory_space<vmem>>, vector<1x64xf32>
    %30 = vector.shape_cast %29 : vector<1x64xf32> to vector<64xf32>
    %c0_11 = arith.constant 0 : index
    %c0_12 = arith.constant 0 : index
    %31 = vector.load %arg7[%c0_11, %c0_12] : memref<2x64xf32, #tpu.memory_space<vmem>>, vector<1x64xf32>
    %32 = vector.shape_cast %31 : vector<1x64xf32> to vector<64xf32>
    %c1 = arith.constant 1 : index
    %c0_13 = arith.constant 0 : index
    %33 = vector.load %arg7[%c1, %c0_13] : memref<2x64xf32, #tpu.memory_space<vmem>>, vector<1x64xf32>
    %34 = vector.shape_cast %33 : vector<1x64xf32> to vector<64xf32>
    %35 = vector.shape_cast %3 : vector<8x256xf32> to vector<8x256x1xf32>
    %36 = vector.shape_cast %30 : vector<64xf32> to vector<1x1x64xf32>
    %37 = vector.broadcast %35 : vector<8x256x1xf32> to vector<8x256x64xf32>
    %38 = vector.broadcast %36 : vector<1x1x64xf32> to vector<8x256x64xf32>
    %39 = arith.mulf %37, %38 : vector<8x256x64xf32>
    %40 = vector.shape_cast %5 : vector<256x64xf32> to vector<1x256x64xf32>
    %41 = vector.broadcast %40 : vector<1x256x64xf32> to vector<8x256x64xf32>
    %42 = arith.addf %39, %41 : vector<8x256x64xf32>
    %43 = vector.shape_cast %15 : vector<8x256xf32> to vector<8x256x1xf32>
    %44 = vector.broadcast %43 : vector<8x256x1xf32> to vector<8x256x64xf32>
    %45 = arith.subf %42, %44 : vector<8x256x64xf32>
    %46 = vector.shape_cast %28 : vector<8x256xf32> to vector<8x256x1xf32>
    %47 = vector.broadcast %46 : vector<8x256x1xf32> to vector<8x256x64xf32>
    %48 = arith.mulf %45, %47 : vector<8x256x64xf32>
    %49 = vector.shape_cast %32 : vector<64xf32> to vector<1x1x64xf32>
    %50 = vector.broadcast %49 : vector<1x1x64xf32> to vector<8x256x64xf32>
    %51 = arith.mulf %48, %50 : vector<8x256x64xf32>
    %52 = vector.shape_cast %34 : vector<64xf32> to vector<1x1x64xf32>
    %53 = vector.broadcast %52 : vector<1x1x64xf32> to vector<8x256x64xf32>
    %54 = arith.addf %51, %53 : vector<8x256x64xf32>
    %cst_14 = arith.constant 0.000000e+00 : f32
    %55 = vector.broadcast %cst_14 : f32 to vector<8x256x64xf32>
    %56 = arith.maximumf %54, %55 : vector<8x256x64xf32>
    %c0_15 = arith.constant 0 : index
    %c0_16 = arith.constant 0 : index
    %57 = vector.load %arg9[%c0_15, %c0_16] : memref<3x32xf32, #tpu.memory_space<vmem>>, vector<1x32xf32>
    %58 = vector.shape_cast %57 : vector<1x32xf32> to vector<32xf32>
    %c1_17 = arith.constant 1 : index
    %c0_18 = arith.constant 0 : index
    %59 = vector.load %arg9[%c1_17, %c0_18] : memref<3x32xf32, #tpu.memory_space<vmem>>, vector<1x32xf32>
    %60 = vector.shape_cast %59 : vector<1x32xf32> to vector<32xf32>
    %c2 = arith.constant 2 : index
    %c0_19 = arith.constant 0 : index
    %61 = vector.load %arg9[%c2, %c0_19] : memref<3x32xf32, #tpu.memory_space<vmem>>, vector<1x32xf32>
    %62 = vector.shape_cast %61 : vector<1x32xf32> to vector<32xf32>
    %63 = vector.shape_cast %56 : vector<8x256x64xf32> to vector<2048x64xf32>
    %c0_20 = arith.constant 0 : index
    %c0_21 = arith.constant 0 : index
    %64 = vector.load %arg8[%c0_20, %c0_21] : memref<64x32xf32, #tpu.memory_space<vmem>>, vector<64x32xf32>
    %cst_22 = arith.constant dense<0.000000e+00> : vector<2048x32xf32>
    %65 = tpu.matmul %63, %64, %cst_22 {dimension_numbers = #tpu.dot_dimension_numbers<[1], [0], [0], [1], [0, 0, 1, 1], [], []>} : vector<2048x64xf32>, vector<64x32xf32>, vector<2048x32xf32> -> vector<2048x32xf32>
    %66 = vector.shape_cast %58 : vector<32xf32> to vector<1x32xf32>
    %67 = vector.broadcast %66 : vector<1x32xf32> to vector<2048x32xf32>
    %68 = arith.addf %65, %67 : vector<2048x32xf32>
    %cst_23 = arith.constant dense<0.000000e+00> : vector<2048xf32>
    %69 = vector.multi_reduction <add>, %68, %cst_23 [1] : vector<2048x32xf32> to vector<2048xf32>
    %70 = vector.shape_cast %69 : vector<2048xf32> to vector<2048x1xf32>
    %cst_24 = arith.constant 3.200000e+01 : f32
    %71 = vector.broadcast %cst_24 : f32 to vector<2048x1xf32>
    %72 = arith.divf %70, %71 : vector<2048x1xf32>
    %73 = vector.broadcast %72 : vector<2048x1xf32> to vector<2048x32xf32>
    %74 = arith.subf %68, %73 : vector<2048x32xf32>
    %75 = arith.mulf %74, %74 : vector<2048x32xf32>
    %cst_25 = arith.constant dense<0.000000e+00> : vector<2048xf32>
    %76 = vector.multi_reduction <add>, %75, %cst_25 [1] : vector<2048x32xf32> to vector<2048xf32>
    %77 = vector.shape_cast %76 : vector<2048xf32> to vector<2048x1xf32>
    %cst_26 = arith.constant 3.200000e+01 : f32
    %78 = vector.broadcast %cst_26 : f32 to vector<2048x1xf32>
    %79 = arith.divf %77, %78 : vector<2048x1xf32>
    %cst_27 = arith.constant 9.99999974E-6 : f32
    %80 = vector.broadcast %cst_27 : f32 to vector<2048x1xf32>
    %81 = arith.addf %79, %80 : vector<2048x1xf32>
    %82 = math.rsqrt %81 : vector<2048x1xf32>
    %83 = vector.broadcast %82 : vector<2048x1xf32> to vector<2048x32xf32>
    %84 = arith.mulf %74, %83 : vector<2048x32xf32>
    %85 = vector.shape_cast %60 : vector<32xf32> to vector<1x32xf32>
    %86 = vector.broadcast %85 : vector<1x32xf32> to vector<2048x32xf32>
    %87 = arith.mulf %84, %86 : vector<2048x32xf32>
    %88 = vector.shape_cast %62 : vector<32xf32> to vector<1x32xf32>
    %89 = vector.broadcast %88 : vector<1x32xf32> to vector<2048x32xf32>
    %90 = arith.addf %87, %89 : vector<2048x32xf32>
    %cst_28 = arith.constant 0.000000e+00 : f32
    %91 = vector.broadcast %cst_28 : f32 to vector<2048x32xf32>
    %92 = arith.maximumf %90, %91 : vector<2048x32xf32>
    %93 = vector.shape_cast %92 : vector<2048x32xf32> to vector<8x256x32xf32>
    %c0_29 = arith.constant 0 : index
    %c0_30 = arith.constant 0 : index
    %94 = vector.load %arg15[%c0_29, %c0_30] : memref<8x32xf32, #tpu.memory_space<vmem>>, vector<8x32xf32>
    %95 = vector.shape_cast %4 : vector<8x256xf32> to vector<8x256x1xf32>
    %96 = vector.broadcast %95 : vector<8x256x1xf32> to vector<8x256x32xf32>
    %97 = arith.mulf %96, %93 : vector<8x256x32xf32>
    %cst_31 = arith.constant dense<0.000000e+00> : vector<8x32xf32>
    %98 = vector.multi_reduction <add>, %97, %cst_31 [1] : vector<8x256x32xf32> to vector<8x32xf32>
    %99 = arith.addf %94, %98 : vector<8x32xf32>
    %c0_32 = arith.constant 0 : index
    %c0_33 = arith.constant 0 : index
    %100 = vector.load %arg15[%c0_32, %c0_33] : memref<8x32xf32, #tpu.memory_space<vmem>>, vector<8x32xf32>
    tpu.vector_store %arg15[%c0_32, %c0_33], %99 {strides = array<i32>} : memref<8x32xf32, #tpu.memory_space<vmem>>, vector<8x32xf32>,
    %c0_i32_34 = arith.constant 0 : i32
    %101 = arith.cmpi eq, %arg1, %c0_i32_34 : i32
    %102 = arith.extui %101 : i1 to i32
    %c0_i32_35 = arith.constant 0 : i32
    %103 = arith.cmpi ne, %102, %c0_i32_35 : i32
    scf.if %103 {
      %c0_36 = arith.constant 0 : index
      %c0_37 = arith.constant 0 : index
      %104 = vector.load %arg15[%c0_36, %c0_37] : memref<8x32xf32, #tpu.memory_space<vmem>>, vector<8x32xf32>
      %c0_38 = arith.constant 0 : index
      %c0_39 = arith.constant 0 : index
      %105 = vector.load %arg11[%c0_38, %c0_39] : memref<3x64xf32, #tpu.memory_space<vmem>>, vector<1x64xf32>
      %106 = vector.shape_cast %105 : vector<1x64xf32> to vector<64xf32>
      %c1_40 = arith.constant 1 : index
      %c0_41 = arith.constant 0 : index
      %107 = vector.load %arg11[%c1_40, %c0_41] : memref<3x64xf32, #tpu.memory_space<vmem>>, vector<1x64xf32>
      %108 = vector.shape_cast %107 : vector<1x64xf32> to vector<64xf32>
      %c2_42 = arith.constant 2 : index
      %c0_43 = arith.constant 0 : index
      %109 = vector.load %arg11[%c2_42, %c0_43] : memref<3x64xf32, #tpu.memory_space<vmem>>, vector<1x64xf32>
      %110 = vector.shape_cast %109 : vector<1x64xf32> to vector<64xf32>
      %c0_44 = arith.constant 0 : index
      %c0_45 = arith.constant 0 : index
      %111 = vector.load %arg10[%c0_44, %c0_45] : memref<32x64xf32, #tpu.memory_space<vmem>>, vector<32x64xf32>
      %cst_46 = arith.constant dense<0.000000e+00> : vector<8x64xf32>
      %112 = tpu.matmul %104, %111, %cst_46 {dimension_numbers = #tpu.dot_dimension_numbers<[1], [0], [0], [1], [0, 0, 1, 1], [], []>} : vector<8x32xf32>, vector<32x64xf32>, vector<8x64xf32> -> vector<8x64xf32>
      %113 = vector.shape_cast %106 : vector<64xf32> to vector<1x64xf32>
      %114 = vector.broadcast %113 : vector<1x64xf32> to vector<8x64xf32>
      %115 = arith.addf %112, %114 : vector<8x64xf32>
      %cst_47 = arith.constant dense<0.000000e+00> : vector<8xf32>
      %116 = vector.multi_reduction <add>, %115, %cst_47 [1] : vector<8x64xf32> to vector<8xf32>
      %117 = vector.shape_cast %116 : vector<8xf32> to vector<8x1xf32>
      %cst_48 = arith.constant 6.400000e+01 : f32
      %118 = vector.broadcast %cst_48 : f32 to vector<8x1xf32>
      %119 = arith.divf %117, %118 : vector<8x1xf32>
      %120 = vector.broadcast %119 : vector<8x1xf32> to vector<8x64xf32>
      %121 = arith.subf %115, %120 : vector<8x64xf32>
      %122 = arith.mulf %121, %121 : vector<8x64xf32>
      %cst_49 = arith.constant dense<0.000000e+00> : vector<8xf32>
      %123 = vector.multi_reduction <add>, %122, %cst_49 [1] : vector<8x64xf32> to vector<8xf32>
      %124 = vector.shape_cast %123 : vector<8xf32> to vector<8x1xf32>
      %cst_50 = arith.constant 6.400000e+01 : f32
      %125 = vector.broadcast %cst_50 : f32 to vector<8x1xf32>
      %126 = arith.divf %124, %125 : vector<8x1xf32>
      %cst_51 = arith.constant 9.99999974E-6 : f32
      %127 = vector.broadcast %cst_51 : f32 to vector<8x1xf32>
      %128 = arith.addf %126, %127 : vector<8x1xf32>
      %129 = math.rsqrt %128 : vector<8x1xf32>
      %130 = vector.broadcast %129 : vector<8x1xf32> to vector<8x64xf32>
      %131 = arith.mulf %121, %130 : vector<8x64xf32>
      %132 = vector.shape_cast %108 : vector<64xf32> to vector<1x64xf32>
      %133 = vector.broadcast %132 : vector<1x64xf32> to vector<8x64xf32>
      %134 = arith.mulf %131, %133 : vector<8x64xf32>
      %135 = vector.shape_cast %110 : vector<64xf32> to vector<1x64xf32>
      %136 = vector.broadcast %135 : vector<1x64xf32> to vector<8x64xf32>
      %137 = arith.addf %134, %136 : vector<8x64xf32>
      %cst_52 = arith.constant 0.000000e+00 : f32
      %138 = vector.broadcast %cst_52 : f32 to vector<8x64xf32>
      %139 = arith.maximumf %137, %138 : vector<8x64xf32>
      %c0_53 = arith.constant 0 : index
      %c0_54 = arith.constant 0 : index
      %140 = vector.load %arg12[%c0_53, %c0_54] : memref<64x128xf32, #tpu.memory_space<vmem>>, vector<64x128xf32>
      %cst_55 = arith.constant dense<0.000000e+00> : vector<8x128xf32>
      %141 = tpu.matmul %139, %140, %cst_55 {dimension_numbers = #tpu.dot_dimension_numbers<[1], [0], [0], [1], [0, 0, 1, 1], [], []>} : vector<8x64xf32>, vector<64x128xf32>, vector<8x128xf32> -> vector<8x128xf32>
      %c0_56 = arith.constant 0 : index
      %c0_57 = arith.constant 0 : index
      %142 = vector.load %arg13[%c0_56, %c0_57] : memref<1x128xf32, #tpu.memory_space<vmem>>, vector<1x128xf32>
      %143 = vector.shape_cast %142 : vector<1x128xf32> to vector<128xf32>
      %144 = vector.shape_cast %143 : vector<128xf32> to vector<1x128xf32>
      %145 = vector.broadcast %144 : vector<1x128xf32> to vector<8x128xf32>
      %146 = arith.addf %141, %145 : vector<8x128xf32>
      %c0_58 = arith.constant 0 : index
      %c0_59 = arith.constant 0 : index
      %147 = vector.load %arg14[%c0_58, %c0_59] : memref<8x128xf32, #tpu.memory_space<vmem>>, vector<8x128xf32>
      tpu.vector_store %arg14[%c0_58, %c0_59], %146 {strides = array<i32>} : memref<8x128xf32, #tpu.memory_space<vmem>>, vector<8x128xf32>,
    } else {
    }
    return
  }
  func.func @transform_0(%arg0: i32, %arg1: i32) -> (i32, i32) {
    %c0_i32 = arith.constant 0 : i32
    return %arg0, %arg1 : i32, i32
  }
  func.func @transform_1(%arg0: i32, %arg1: i32) -> (i32, i32) {
    %c0_i32 = arith.constant 0 : i32
    return %arg0, %arg1 : i32, i32
  }
  func.func @transform_2(%arg0: i32, %arg1: i32) -> (i32, i32) {
    %c0_i32 = arith.constant 0 : i32
    %c0_i32_0 = arith.constant 0 : i32
    return %arg1, %c0_i32 : i32, i32
  }
  func.func @transform_3(%arg0: i32, %arg1: i32) -> (i32, i32) {
    %c0_i32 = arith.constant 0 : i32
    %c0_i32_0 = arith.constant 0 : i32
    return %c0_i32, %arg1 : i32, i32
  }
  func.func @transform_4(%arg0: i32, %arg1: i32) -> (i32, i32) {
    %c0_i32 = arith.constant 0 : i32
    %c0_i32_0 = arith.constant 0 : i32
    %c0_i32_1 = arith.constant 0 : i32
    return %c0_i32, %c0_i32_0 : i32, i32
  }
  func.func @transform_5(%arg0: i32, %arg1: i32) -> (i32, i32) {
    %c0_i32 = arith.constant 0 : i32
    %c0_i32_0 = arith.constant 0 : i32
    %c0_i32_1 = arith.constant 0 : i32
    return %c0_i32, %c0_i32_0 : i32, i32
  }
  func.func @transform_6(%arg0: i32, %arg1: i32) -> (i32, i32) {
    %c0_i32 = arith.constant 0 : i32
    %c0_i32_0 = arith.constant 0 : i32
    %c0_i32_1 = arith.constant 0 : i32
    return %c0_i32, %c0_i32_0 : i32, i32
  }
  func.func @transform_7(%arg0: i32, %arg1: i32) -> (i32, i32) {
    %c0_i32 = arith.constant 0 : i32
    %c0_i32_0 = arith.constant 0 : i32
    %c0_i32_1 = arith.constant 0 : i32
    return %c0_i32, %c0_i32_0 : i32, i32
  }
  func.func @transform_8(%arg0: i32, %arg1: i32) -> (i32, i32) {
    %c0_i32 = arith.constant 0 : i32
    %c0_i32_0 = arith.constant 0 : i32
    %c0_i32_1 = arith.constant 0 : i32
    return %c0_i32, %c0_i32_0 : i32, i32
  }
  func.func @transform_9(%arg0: i32, %arg1: i32) -> (i32, i32) {
    %c0_i32 = arith.constant 0 : i32
    %c0_i32_0 = arith.constant 0 : i32
    %c0_i32_1 = arith.constant 0 : i32
    return %c0_i32, %c0_i32_0 : i32, i32
  }
  func.func @transform_10(%arg0: i32, %arg1: i32) -> (i32, i32) {
    %c0_i32 = arith.constant 0 : i32
    %c0_i32_0 = arith.constant 0 : i32
    %c0_i32_1 = arith.constant 0 : i32
    return %c0_i32, %c0_i32_0 : i32, i32
  }
  func.func @transform_11(%arg0: i32, %arg1: i32) -> (i32, i32) {
    %c0_i32 = arith.constant 0 : i32
    %c0_i32_0 = arith.constant 0 : i32
    %c0_i32_1 = arith.constant 0 : i32
    return %c0_i32, %c0_i32_0 : i32, i32
  }
  func.func @transform_12(%arg0: i32, %arg1: i32) -> (i32, i32) {
    %c0_i32 = arith.constant 0 : i32
    %c0_i32_0 = arith.constant 0 : i32
    return %arg0, %c0_i32 : i32, i32
  }
}

</mosaic_0001>

<llo_original>
// kernel: tpu_custom_call.1
$region0: #{tpu_custom_call.1}
  #allocation0 [shape = 'u32[]', space=smem, size = 0x4, offset = 0x4, fixed_abs, tag = 'smem constant byte address 0x4 - core index']
  #allocation1 [shape = 'u32[144,128]{1,0:T(1,128)}', space=vmem, size = 0x12000, scoped, tag = 'internal scratch']
  #allocation2 [shape = 'f32[8,32]{1,0:T(8,128)}', space=vmem, size = 0x1000, scoped, tag = 'scratch operand']
  %s0 = inlined_call_operand.vmem [shape: f32[8,256], index: 0, kind: input, shape index: {}]
  %s1 = inlined_call_operand.vmem [shape: f32[8,256], index: 1, kind: input, shape index: {}]
  %s2 = inlined_call_operand.vmem [shape: f32[256,64], index: 2, kind: input, shape index: {}]
  %s3 = inlined_call_operand.vmem [shape: f32[5,256], index: 3, kind: input, shape index: {}]
  %s4 = inlined_call_operand.vmem [shape: f32[1,64], index: 4, kind: input, shape index: {}]
  %s5 = inlined_call_operand.vmem [shape: f32[2,64], index: 5, kind: input, shape index: {}]
  %s6 = inlined_call_operand.vmem [shape: f32[64,32], index: 6, kind: input, shape index: {}]
  %s7 = inlined_call_operand.vmem [shape: f32[3,32], index: 7, kind: input, shape index: {}]
  %s8 = inlined_call_operand.vmem [shape: f32[32,64], index: 8, kind: input, shape index: {}]
  %s9 = inlined_call_operand.vmem [shape: f32[3,64], index: 9, kind: input, shape index: {}]
  %s10 = inlined_call_operand.vmem [shape: f32[64,128], index: 10, kind: input, shape index: {}]
  %s11 = inlined_call_operand.vmem [shape: f32[1,128], index: 11, kind: input, shape index: {}]
  %s12 = inlined_call_operand.hbm [shape: f32[8,128], index: 12, kind: output, shape index: {}]
  %s13 = sld [smem:[#allocation0]]
  $region66: #{tpu_custom_call.1} parent=0
    _
  %s15 = ssub.s32 1, %s13
  %s16 = scalar_select 0, %s15, %s13
  $region1: #{tpu_custom_call.1} parent=0
    #allocation3 [shape = 'u8[4096]{0}', space=vmem, size = 0x1000, scoped, tag = 'output window, operand 0, single buffered']
    #allocation4 [shape = 's32[1]{0}', space=sflag, size = 0x4, scoped, tag = 'scoped memory for tpu_custom_call.1']
    %17 = vsyncpa [#allocation4], 0
    // Predicated region
    $region2: #{tpu_custom_call.1} parent=1 // pred_check
      _
    $region3: #{tpu_custom_call.1} parent=1 // pred_check_branch
      %19 = sbr.rel (0) target = $region5
    $region4: #{tpu_custom_call.1} parent=1 // pred_region
      _
    $region5: #{tpu_custom_call.1} parent=1 // pred_fallthru
      _
    // Predicated region
    $region6: #{tpu_custom_call.1} parent=1 // pred_check
      _
    $region7: #{tpu_custom_call.1} parent=1 // pred_check_branch
      %21 = sbr.rel (0) target = $region9
    $region8: #{tpu_custom_call.1} parent=1 // pred_region
      _
    $region9: #{tpu_custom_call.1} parent=1 // pred_fallthru
      _
    // Predicated region
    $region10: #{tpu_custom_call.1} parent=1 // pred_check
      _
    $region11: #{tpu_custom_call.1} parent=1 // pred_check_branch
      %23 = sbr.rel (0) target = $region13
    $region12: #{tpu_custom_call.1} parent=1 // pred_region
      _
    $region13: #{tpu_custom_call.1} parent=1 // pred_fallthru
      _
    // Predicated region
    $region14: #{tpu_custom_call.1} parent=1 // pred_check
      _
    $region15: #{tpu_custom_call.1} parent=1 // pred_check_branch
      %25 = sbr.rel (0) target = $region17
    $region16: #{tpu_custom_call.1} parent=1 // pred_region
      _
    $region17: #{tpu_custom_call.1} parent=1 // pred_fallthru
      _
    // Predicated region
    $region18: #{tpu_custom_call.1} parent=1 // pred_check
      _
    $region19: #{tpu_custom_call.1} parent=1 // pred_check_branch
      %27 = sbr.rel (0) target = $region21
    $region20: #{tpu_custom_call.1} parent=1 // pred_region
      _
    $region21: #{tpu_custom_call.1} parent=1 // pred_fallthru
      _
    // Predicated region
    $region22: #{tpu_custom_call.1} parent=1 // pred_check
      _
    $region23: #{tpu_custom_call.1} parent=1 // pred_check_branch
      %29 = sbr.rel (0) target = $region25
    $region24: #{tpu_custom_call.1} parent=1 // pred_region
      _
    $region25: #{tpu_custom_call.1} parent=1 // pred_fallthru
      _
    // Predicated region
    $region26: #{tpu_custom_call.1} parent=1 // pred_check
      _
    $region27: #{tpu_custom_call.1} parent=1 // pred_check_branch
      %31 = sbr.rel (0) target = $region29
    $region28: #{tpu_custom_call.1} parent=1 // pred_region
      _
    $region29: #{tpu_custom_call.1} parent=1 // pred_fallthru
      _
    // Predicated region
    $region30: #{tpu_custom_call.1} parent=1 // pred_check
      _
    $region31: #{tpu_custom_call.1} parent=1 // pred_check_branch
      %33 = sbr.rel (0) target = $region33
    $region32: #{tpu_custom_call.1} parent=1 // pred_region
      _
    $region33: #{tpu_custom_call.1} parent=1 // pred_fallthru
      _
    // Predicated region
    $region34: #{tpu_custom_call.1} parent=1 // pred_check
      _
    $region35: #{tpu_custom_call.1} parent=1 // pred_check_branch
      %35 = sbr.rel (0) target = $region37
    $region36: #{tpu_custom_call.1} parent=1 // pred_region
      _
    $region37: #{tpu_custom_call.1} parent=1 // pred_fallthru
      _
    // Predicated region
    $region38: #{tpu_custom_call.1} parent=1 // pred_check
      _
    $region39: #{tpu_custom_call.1} parent=1 // pred_check_branch
      %37 = sbr.rel (0) target = $region41
    $region40: #{tpu_custom_call.1} parent=1 // pred_region
      _
    $region41: #{tpu_custom_call.1} parent=1 // pred_fallthru
      _
    // Predicated region
    $region42: #{tpu_custom_call.1} parent=1 // pred_check
      _
    $region43: #{tpu_custom_call.1} parent=1 // pred_check_branch
      %39 = sbr.rel (0) target = $region45
    $region44: #{tpu_custom_call.1} parent=1 // pred_region
      _
    $region45: #{tpu_custom_call.1} parent=1 // pred_fallthru
      _
    // Predicated region
    $region46: #{tpu_custom_call.1} parent=1 // pred_check
      _
    $region47: #{tpu_custom_call.1} parent=1 // pred_check_branch
      %41 = sbr.rel (0) target = $region49
    $region48: #{tpu_custom_call.1} parent=1 // pred_region
      _
    $region49: #{tpu_custom_call.1} parent=1 // pred_fallthru
      _
    %p42 = scmp.eq.s32.totalorder 0, 0
    // Predicated region
    $region50: #{tpu_custom_call.1} parent=1 // pred_check
      %p43 = pneg %p42
    $region51: #{tpu_custom_call.1} parent=1 // pred_check_branch
      %45 = sbr.rel (%p43) target = $region53
    $region52: #{tpu_custom_call.1} parent=1 // pred_region
      %vm46 = vcmask 261120
      %47 = vst.msk [vmem:[#allocation2] sm:$0xff] %vm46, 0.0
    $region53: #{tpu_custom_call.1} parent=1 // pred_fallthru
      _
    %v48 = vld [vmem:[%s0] sm:$0xff]
    %v49 = vld [vmem:[%s0 + $0x8] sm:$0xff]
    %v50 = vld [vmem:[%s1] sm:$0xff]
    %v51 = vld [vmem:[%s1 + $0x8] sm:$0xff]
    %v52 = vld [vmem:[%s2] sm:$0xff]
    %v53 = vld [vmem:[%s2 + $0x8] sm:$0xff]
    %v54 = vld [vmem:[%s2 + $0x10] sm:$0xff]
    %v55 = vld [vmem:[%s2 + $0x18] sm:$0xff]
    %v56 = vld [vmem:[%s2 + $0x20] sm:$0xff]
    %v57 = vld [vmem:[%s2 + $0x28] sm:$0xff]
    %v58 = vld [vmem:[%s2 + $0x30] sm:$0xff]
    %v59 = vld [vmem:[%s2 + $0x38] sm:$0xff]
    %v60 = vld [vmem:[%s2 + $0x40] sm:$0xff]
    %v61 = vld [vmem:[%s2 + $0x48] sm:$0xff]
    %v62 = vld [vmem:[%s2 + $0x50] sm:$0xff]
    %v63 = vld [vmem:[%s2 + $0x58] sm:$0xff]
    %v64 = vld [vmem:[%s2 + $0x60] sm:$0xff]
    %v65 = vld [vmem:[%s2 + $0x68] sm:$0xff]
    %v66 = vld [vmem:[%s2 + $0x70] sm:$0xff]
    %v67 = vld [vmem:[%s2 + $0x78] sm:$0xff]
    %v68 = vld [vmem:[%s2 + $0x80] sm:$0xff]
    %v69 = vld [vmem:[%s2 + $0x88] sm:$0xff]
    %v70 = vld [vmem:[%s2 + $0x90] sm:$0xff]
    %v71 = vld [vmem:[%s2 + $0x98] sm:$0xff]
    %v72 = vld [vmem:[%s2 + $0xa0] sm:$0xff]
    %v73 = vld [vmem:[%s2 + $0xa8] sm:$0xff]
    %v74 = vld [vmem:[%s2 + $0xb0] sm:$0xff]
    %v75 = vld [vmem:[%s2 + $0xb8] sm:$0xff]
    %v76 = vld [vmem:[%s2 + $0xc0] sm:$0xff]
    %v77 = vld [vmem:[%s2 + $0xc8] sm:$0xff]
    %v78 = vld [vmem:[%s2 + $0xd0] sm:$0xff]
    %v79 = vld [vmem:[%s2 + $0xd8] sm:$0xff]
    %v80 = vld [vmem:[%s2 + $0xe0] sm:$0xff]
    %v81 = vld [vmem:[%s2 + $0xe8] sm:$0xff]
    %v82 = vld [vmem:[%s2 + $0xf0] sm:$0xff]
    %v83 = vld [vmem:[%s2 + $0xf8] sm:$0xff]
    %v84 = vld [vmem:[%s3] sm:$0x1f]
    %v85 = vld [vmem:[%s3 + $0x8] sm:$0x1f]
    %v86 = vlaneseq
    %v87 = vshrl.u32 %v86, 7
    %v88 = vsub.s32 3, %v87
    %v89 = vrot.slane %v84, %v88
    %v90 = vlaneseq
    %v91 = vshrl.u32 %v90, 7
    %v92 = vsub.s32 3, %v91
    %v93 = vrot.slane %v85, %v92
    %v94 = vmul.f32 %v48, %v89
    %v95 = vmul.f32 %v49, %v93
    %v96 = vlaneseq
    %v97 = vshrl.u32 %v96, 7
    %v98 = vsub.s32 0, %v97
    %v99 = vrot.slane %v84, %v98
    %v100 = vlaneseq
    %v101 = vshrl.u32 %v100, 7
    %v102 = vsub.s32 0, %v101
    %v103 = vrot.slane %v85, %v102
    %v104 = vadd.f32 %v94, %v99
    %v105 = vadd.f32 %v95, %v103
    %v106 = vmul.f32 %v48, %v48
    %v107 = vmul.f32 %v49, %v49
    %v108 = vlaneseq
    %v109 = vshrl.u32 %v108, 7
    %v110 = vsub.s32 4, %v109
    %v111 = vrot.slane %v84, %v110
    %v112 = vlaneseq
    %v113 = vshrl.u32 %v112, 7
    %v114 = vsub.s32 4, %v113
    %v115 = vrot.slane %v85, %v114
    %v116 = vmul.f32 %v106, %v111
    %v117 = vmul.f32 %v107, %v115
    %v118 = vlaneseq
    %v119 = vshrl.u32 %v118, 7
    %v120 = vsub.s32 2, %v119
    %v121 = vrot.slane %v84, %v120
    %v122 = vlaneseq
    %v123 = vshrl.u32 %v122, 7
    %v124 = vsub.s32 2, %v123
    %v125 = vrot.slane %v85, %v124
    %v126 = vmul.f32 %v48, %v121
    %v127 = vmul.f32 %v49, %v125
    %v128 = vmul.f32 %v126, 2.0
    %v129 = vmul.f32 %v127, 2.0
    %v130 = vadd.f32 %v116, %v128
    %v131 = vadd.f32 %v117, %v129
    %v132 = vlaneseq
    %v133 = vshrl.u32 %v132, 7
    %v134 = vsub.s32 1, %v133
    %v135 = vrot.slane %v84, %v134
    %v136 = vlaneseq
    %v137 = vshrl.u32 %v136, 7
    %v138 = vsub.s32 1, %v137
    %v139 = vrot.slane %v85, %v138
    %v140 = vadd.f32 %v130, %v135
    %v141 = vadd.f32 %v131, %v139
    %v142 = vadd.f32 %v140, 1e-05
    %v143 = vadd.f32 %v141, 1e-05
    %v144 = vrsqrt.pop %v142
    %v145 = vrsqrt.pop %v143
    %v146 = vld [vmem:[%s4] sm:$0x1]
    %v147 = vld [vmem:[%s5] sm:$0x1]
    %v148 = vld [vmem:[%s5 + $0x1] sm:$0x1]
    %v149 = vlaneseq
    %v150 = vshrl.u32 %v149, 7
    %v151 = vsub.s32 0, %v150
    %v152 = vrot.slane %v48, %v151
    %154 = vbcast.lane.b32.xlu0 %v152, 256
    %v155 = vpop.permute.xlu0 %154
    %s157 = sor.u32 256, 8
    %158 = vbcast.lane.b32.xlu0 %v152, %s157
    %v159 = vpop.permute.xlu0 %158
    %s161 = sor.u32 256, 16
    %162 = vbcast.lane.b32.xlu0 %v152, %s161
    %v163 = vpop.permute.xlu0 %162
    %s165 = sor.u32 256, 24
    %166 = vbcast.lane.b32.xlu0 %v152, %s165
    %v167 = vpop.permute.xlu0 %166
    %s169 = sor.u32 256, 32
    %170 = vbcast.lane.b32.xlu0 %v152, %s169
    %v171 = vpop.permute.xlu0 %170
    %s173 = sor.u32 256, 40
    %174 = vbcast.lane.b32.xlu0 %v152, %s173
    %v175 = vpop.permute.xlu0 %174
    %s177 = sor.u32 256, 48
    %178 = vbcast.lane.b32.xlu0 %v152, %s177
    %v179 = vpop.permute.xlu0 %178
    %s181 = sor.u32 256, 56
    %182 = vbcast.lane.b32.xlu0 %v152, %s181
    %v183 = vpop.permute.xlu0 %182
    %s185 = sor.u32 256, 64
    %186 = vbcast.lane.b32.xlu0 %v152, %s185
    %v187 = vpop.permute.xlu0 %186
    %s189 = sor.u32 256, 72
    %190 = vbcast.lane.b32.xlu0 %v152, %s189
    %v191 = vpop.permute.xlu0 %190
    %s193 = sor.u32 256, 80
    %194 = vbcast.lane.b32.xlu0 %v152, %s193
    %v195 = vpop.permute.xlu0 %194
    %s197 = sor.u32 256, 88
    %198 = vbcast.lane.b32.xlu0 %v152, %s197
    %v199 = vpop.permute.xlu0 %198
    %s201 = sor.u32 256, 96
    %202 = vbcast.lane.b32.xlu0 %v152, %s201
    %v203 = vpop.permute.xlu0 %202
    %s205 = sor.u32 256, 104
    %206 = vbcast.lane.b32.xlu0 %v152, %s205
    %v207 = vpop.permute.xlu0 %206
    %s209 = sor.u32 256, 112
    %210 = vbcast.lane.b32.xlu0 %v152, %s209
    %v211 = vpop.permute.xlu0 %210
    %s213 = sor.u32 256, 120
    %214 = vbcast.lane.b32.xlu0 %v152, %s213
    %v215 = vpop.permute.xlu0 %214
    %v216 = vlaneseq
    %v217 = vshrl.u32 %v216, 7
    %v218 = vsub.s32 0, %v217
    %v219 = vrot.slane %v49, %v218
    %221 = vbcast.lane.b32.xlu0 %v219, 256
    %v222 = vpop.permute.xlu0 %221
    %s224 = sor.u32 256, 8
    %225 = vbcast.lane.b32.xlu0 %v219, %s224
    %v226 = vpop.permute.xlu0 %225
    %s228 = sor.u32 256, 16
    %229 = vbcast.lane.b32.xlu0 %v219, %s228
    %v230 = vpop.permute.xlu0 %229
    %s232 = sor.u32 256, 24
    %233 = vbcast.lane.b32.xlu0 %v219, %s232
    %v234 = vpop.permute.xlu0 %233
    %s236 = sor.u32 256, 32
    %237 = vbcast.lane.b32.xlu0 %v219, %s236
    %v238 = vpop.permute.xlu0 %237
    %s240 = sor.u32 256, 40
    %241 = vbcast.lane.b32.xlu0 %v219, %s240
    %v242 = vpop.permute.xlu0 %241
    %s244 = sor.u32 256, 48
    %245 = vbcast.lane.b32.xlu0 %v219, %s244
    %v246 = vpop.permute.xlu0 %245
    %s248 = sor.u32 256, 56
    %249 = vbcast.lane.b32.xlu0 %v219, %s248
    %v250 = vpop.permute.xlu0 %249
    %s252 = sor.u32 256, 64
    %253 = vbcast.lane.b32.xlu0 %v219, %s252
    %v254 = vpop.permute.xlu0 %253
    %s256 = sor.u32 256, 72
    %257 = vbcast.lane.b32.xlu0 %v219, %s256
    %v258 = vpop.permute.xlu0 %257
    %s260 = sor.u32 256, 80
    %261 = vbcast.lane.b32.xlu0 %v219, %s260
    %v262 = vpop.permute.xlu0 %261
    %s264 = sor.u32 256, 88
    %265 = vbcast.lane.b32.xlu0 %v219, %s264
    %v266 = vpop.permute.xlu0 %265
    %s268 = sor.u32 256, 96
    %269 = vbcast.lane.b32.xlu0 %v219, %s268
    %v270 = vpop.permute.xlu0 %269
    %s272 = sor.u32 256, 104
    %273 = vbcast.lane.b32.xlu0 %v219, %s272
    %v274 = vpop.permute.xlu0 %273
    %s276 = sor.u32 256, 112
    %277 = vbcast.lane.b32.xlu0 %v219, %s276
    %v278 = vpop.permute.xlu0 %277
    %s280 = sor.u32 256, 120
    %281 = vbcast.lane.b32.xlu0 %v219, %s280
    %v282 = vpop.permute.xlu0 %281
    %v283 = vlaneseq
    %v284 = vshrl.u32 %v283, 7
    %v285 = vsub.s32 1, %v284
    %v286 = vrot.slane %v48, %v285
    %288 = vbcast.lane.b32.xlu0 %v286, 256
    %v289 = vpop.permute.xlu0 %288
    %s291 = sor.u32 256, 8
    %292 = vbcast.lane.b32.xlu0 %v286, %s291
    %v293 = vpop.permute.xlu0 %292
    %s295 = sor.u32 256, 16
    %296 = vbcast.lane.b32.xlu0 %v286, %s295
    %v297 = vpop.permute.xlu0 %296
    %s299 = sor.u32 256, 24
    %300 = vbcast.lane.b32.xlu0 %v286, %s299
    %v301 = vpop.permute.xlu0 %300
    %s303 = sor.u32 256, 32
    %304 = vbcast.lane.b32.xlu0 %v286, %s303
    %v305 = vpop.permute.xlu0 %304
    %s307 = sor.u32 256, 40
    %308 = vbcast.lane.b32.xlu0 %v286, %s307
    %v309 = vpop.permute.xlu0 %308
    %s311 = sor.u32 256, 48
    %312 = vbcast.lane.b32.xlu0 %v286, %s311
    %v313 = vpop.permute.xlu0 %312
    %s315 = sor.u32 256, 56
    %316 = vbcast.lane.b32.xlu0 %v286, %s315
    %v317 = vpop.permute.xlu0 %316
    %s319 = sor.u32 256, 64
    %320 = vbcast.lane.b32.xlu0 %v286, %s319
    %v321 = vpop.permute.xlu0 %320
    %s323 = sor.u32 256, 72
    %324 = vbcast.lane.b32.xlu0 %v286, %s323
    %v325 = vpop.permute.xlu0 %324
    %s327 = sor.u32 256, 80
    %328 = vbcast.lane.b32.xlu0 %v286, %s327
    %v329 = vpop.permute.xlu0 %328
    %s331 = sor.u32 256, 88
    %332 = vbcast.lane.b32.xlu0 %v286, %s331
    %v333 = vpop.permute.xlu0 %332
    %s335 = sor.u32 256, 96
    %336 = vbcast.lane.b32.xlu0 %v286, %s335
    %v337 = vpop.permute.xlu0 %336
    %s339 = sor.u32 256, 104
    %340 = vbcast.lane.b32.xlu0 %v286, %s339
    %v341 = vpop.permute.xlu0 %340
    %s343 = sor.u32 256, 112
    %344 = vbcast.lane.b32.xlu0 %v286, %s343
    %v345 = vpop.permute.xlu0 %344
    %s347 = sor.u32 256, 120
    %348 = vbcast.lane.b32.xlu0 %v286, %s347
    %v349 = vpop.permute.xlu0 %348
    %v350 = vlaneseq
    %v351 = vshrl.u32 %v350, 7
    %v352 = vsub.s32 1, %v351
    %v353 = vrot.slane %v49, %v352
    %355 = vbcast.lane.b32.xlu0 %v353, 256
    %v356 = vpop.permute.xlu0 %355
    %s358 = sor.u32 256, 8
    %359 = vbcast.lane.b32.xlu0 %v353, %s358
    %v360 = vpop.permute.xlu0 %359
    %s362 = sor.u32 256, 16
    %363 = vbcast.lane.b32.xlu0 %v353, %s362
    %v364 = vpop.permute.xlu0 %363
    %s366 = sor.u32 256, 24
    %367 = vbcast.lane.b32.xlu0 %v353, %s366
    %v368 = vpop.permute.xlu0 %367
    %s370 = sor.u32 256, 32
    %371 = vbcast.lane.b32.xlu0 %v353, %s370
    %v372 = vpop.permute.xlu0 %371
    %s374 = sor.u32 256, 40
    %375 = vbcast.lane.b32.xlu0 %v353, %s374
    %v376 = vpop.permute.xlu0 %375
    %s378 = sor.u32 256, 48
    %379 = vbcast.lane.b32.xlu0 %v353, %s378
    %v380 = vpop.permute.xlu0 %379
    %s382 = sor.u32 256, 56
    %383 = vbcast.lane.b32.xlu0 %v353, %s382
    %v384 = vpop.permute.xlu0 %383
    %s386 = sor.u32 256, 64
    %387 = vbcast.lane.b32.xlu0 %v353, %s386
    %v388 = vpop.permute.xlu0 %387
    %s390 = sor.u32 256, 72
    %391 = vbcast.lane.b32.xlu0 %v353, %s390
    %v392 = vpop.permute.xlu0 %391
    %s394 = sor.u32 256, 80
    %395 = vbcast.lane.b32.xlu0 %v353, %s394
    %v396 = vpop.permute.xlu0 %395
    %s398 = sor.u32 256, 88
    %399 = vbcast.lane.b32.xlu0 %v353, %s398
    %v400 = vpop.permute.xlu0 %399
    %s402 = sor.u32 256, 96
    %403 = vbcast.lane.b32.xlu0 %v353, %s402
    %v404 = vpop.permute.xlu0 %403
    %s406 = sor.u32 256, 104
    %407 = vbcast.lane.b32.xlu0 %v353, %s406
    %v408 = vpop.permute.xlu0 %407
    %s410 = sor.u32 256, 112
    %411 = vbcast.lane.b32.xlu0 %v353, %s410
    %v412 = vpop.permute.xlu0 %411
    %s414 = sor.u32 256, 120
    %415 = vbcast.lane.b32.xlu0 %v353, %s414
    %v416 = vpop.permute.xlu0 %415
    %v417 = vlaneseq
    %v418 = vshrl.u32 %v417, 7
    %v419 = vsub.s32 2, %v418
    %v420 = vrot.slane %v48, %v419
    %422 = vbcast.lane.b32.xlu0 %v420, 256
    %v423 = vpop.permute.xlu0 %422
    %s425 = sor.u32 256, 8
    %426 = vbcast.lane.b32.xlu0 %v420, %s425
    %v427 = vpop.permute.xlu0 %426
    %s429 = sor.u32 256, 16
    %430 = vbcast.lane.b32.xlu0 %v420, %s429
    %v431 = vpop.permute.xlu0 %430
    %s433 = sor.u32 256, 24
    %434 = vbcast.lane.b32.xlu0 %v420, %s433
    %v435 = vpop.permute.xlu0 %434
    %s437 = sor.u32 256, 32
    %438 = vbcast.lane.b32.xlu0 %v420, %s437
    %v439 = vpop.permute.xlu0 %438
    %s441 = sor.u32 256, 40
    %442 = vbcast.lane.b32.xlu0 %v420, %s441
    %v443 = vpop.permute.xlu0 %442
    %s445 = sor.u32 256, 48
    %446 = vbcast.lane.b32.xlu0 %v420, %s445
    %v447 = vpop.permute.xlu0 %446
    %s449 = sor.u32 256, 56
    %450 = vbcast.lane.b32.xlu0 %v420, %s449
    %v451 = vpop.permute.xlu0 %450
    %s453 = sor.u32 256, 64
    %454 = vbcast.lane.b32.xlu0 %v420, %s453
    %v455 = vpop.permute.xlu0 %454
    %s457 = sor.u32 256, 72
    %458 = vbcast.lane.b32.xlu0 %v420, %s457
    %v459 = vpop.permute.xlu0 %458
    %s461 = sor.u32 256, 80
    %462 = vbcast.lane.b32.xlu0 %v420, %s461
    %v463 = vpop.permute.xlu0 %462
    %s465 = sor.u32 256, 88
    %466 = vbcast.lane.b32.xlu0 %v420, %s465
    %v467 = vpop.permute.xlu0 %466
    %s469 = sor.u32 256, 96
    %470 = vbcast.lane.b32.xlu0 %v420, %s469
    %v471 = vpop.permute.xlu0 %470
    %s473 = sor.u32 256, 104
    %474 = vbcast.lane.b32.xlu0 %v420, %s473
    %v475 = vpop.permute.xlu0 %474
    %s477 = sor.u32 256, 112
    %478 = vbcast.lane.b32.xlu0 %v420, %s477
    %v479 = vpop.permute.xlu0 %478
    %s481 = sor.u32 256, 120
    %482 = vbcast.lane.b32.xlu0 %v420, %s481
    %v483 = vpop.permute.xlu0 %482
    %v484 = vlaneseq
    %v485 = vshrl.u32 %v484, 7
    %v486 = vsub.s32 2, %v485
    %v487 = vrot.slane %v49, %v486
    %489 = vbcast.lane.b32.xlu0 %v487, 256
    %v490 = vpop.permute.xlu0 %489
    %s492 = sor.u32 256, 8
    %493 = vbcast.lane.b32.xlu0 %v487, %s492
    %v494 = vpop.permute.xlu0 %493
    %s496 = sor.u32 256, 16
    %497 = vbcast.lane.b32.xlu0 %v487, %s496
    %v498 = vpop.permute.xlu0 %497
    %s500 = sor.u32 256, 24
    %501 = vbcast.lane.b32.xlu0 %v487, %s500
    %v502 = vpop.permute.xlu0 %501
    %s504 = sor.u32 256, 32
    %505 = vbcast.lane.b32.xlu0 %v487, %s504
    %v506 = vpop.permute.xlu0 %505
    %s508 = sor.u32 256, 40
    %509 = vbcast.lane.b32.xlu0 %v487, %s508
    %v510 = vpop.permute.xlu0 %509
    %s512 = sor.u32 256, 48
    %513 = vbcast.lane.b32.xlu0 %v487, %s512
    %v514 = vpop.permute.xlu0 %513
    %s516 = sor.u32 256, 56
    %517 = vbcast.lane.b32.xlu0 %v487, %s516
    %v518 = vpop.permute.xlu0 %517
    %s520 = sor.u32 256, 64
    %521 = vbcast.lane.b32.xlu0 %v487, %s520
    %v522 = vpop.permute.xlu0 %521
    %s524 = sor.u32 256, 72
    %525 = vbcast.lane.b32.xlu0 %v487, %s524
    %v526 = vpop.permute.xlu0 %525
    %s528 = sor.u32 256, 80
    %529 = vbcast.lane.b32.xlu0 %v487, %s528
    %v530 = vpop.permute.xlu0 %529
    %s532 = sor.u32 256, 88
    %533 = vbcast.lane.b32.xlu0 %v487, %s532
    %v534 = vpop.permute.xlu0 %533
    %s536 = sor.u32 256, 96
    %537 = vbcast.lane.b32.xlu0 %v487, %s536
    %v538 = vpop.permute.xlu0 %537
    %s540 = sor.u32 256, 104
    %541 = vbcast.lane.b32.xlu0 %v487, %s540
    %v542 = vpop.permute.xlu0 %541
    %s544 = sor.u32 256, 112
    %545 = vbcast.lane.b32.xlu0 %v487, %s544
    %v546 = vpop.permute.xlu0 %545
    %s548 = sor.u32 256, 120
    %549 = vbcast.lane.b32.xlu0 %v487, %s548
    %v550 = vpop.permute.xlu0 %549
    %v551 = vlaneseq
    %v552 = vshrl.u32 %v551, 7
    %v553 = vsub.s32 3, %v552
    %v554 = vrot.slane %v48, %v553
    %556 = vbcast.lane.b32.xlu0 %v554, 256
    %v557 = vpop.permute.xlu0 %556
    %s559 = sor.u32 256, 8
    %560 = vbcast.lane.b32.xlu0 %v554, %s559
    %v561 = vpop.permute.xlu0 %560
    %s563 = sor.u32 256, 16
    %564 = vbcast.lane.b32.xlu0 %v554, %s563
    %v565 = vpop.permute.xlu0 %564
    %s567 = sor.u32 256, 24
    %568 = vbcast.lane.b32.xlu0 %v554, %s567
    %v569 = vpop.permute.xlu0 %568
    %s571 = sor.u32 256, 32
    %572 = vbcast.lane.b32.xlu0 %v554, %s571
    %v573 = vpop.permute.xlu0 %572
    %s575 = sor.u32 256, 40
    %576 = vbcast.lane.b32.xlu0 %v554, %s575
    %v577 = vpop.permute.xlu0 %576
    %s579 = sor.u32 256, 48
    %580 = vbcast.lane.b32.xlu0 %v554, %s579
    %v581 = vpop.permute.xlu0 %580
    %s583 = sor.u32 256, 56
    %584 = vbcast.lane.b32.xlu0 %v554, %s583
    %v585 = vpop.permute.xlu0 %584
    %s587 = sor.u32 256, 64
    %588 = vbcast.lane.b32.xlu0 %v554, %s587
    %v589 = vpop.permute.xlu0 %588
    %s591 = sor.u32 256, 72
    %592 = vbcast.lane.b32.xlu0 %v554, %s591
    %v593 = vpop.permute.xlu0 %592
    %s595 = sor.u32 256, 80
    %596 = vbcast.lane.b32.xlu0 %v554, %s595
    %v597 = vpop.permute.xlu0 %596
    %s599 = sor.u32 256, 88
    %600 = vbcast.lane.b32.xlu0 %v554, %s599
    %v601 = vpop.permute.xlu0 %600
    %s603 = sor.u32 256, 96
    %604 = vbcast.lane.b32.xlu0 %v554, %s603
    %v605 = vpop.permute.xlu0 %604
    %s607 = sor.u32 256, 104
    %608 = vbcast.lane.b32.xlu0 %v554, %s607
    %v609 = vpop.permute.xlu0 %608
    %s611 = sor.u32 256, 112
    %612 = vbcast.lane.b32.xlu0 %v554, %s611
    %v613 = vpop.permute.xlu0 %612
    %s615 = sor.u32 256, 120
    %616 = vbcast.lane.b32.xlu0 %v554, %s615
    %v617 = vpop.permute.xlu0 %616
    %v618 = vlaneseq
    %v619 = vshrl.u32 %v618, 7
    %v620 = vsub.s32 3, %v619
    %v621 = vrot.slane %v49, %v620
    %623 = vbcast.lane.b32.xlu0 %v621, 256
    %v624 = vpop.permute.xlu0 %623
    %s626 = sor.u32 256, 8
    %627 = vbcast.lane.b32.xlu0 %v621, %s626
    %v628 = vpop.permute.xlu0 %627
    %s630 = sor.u32 256, 16
    %631 = vbcast.lane.b32.xlu0 %v621, %s630
    %v632 = vpop.permute.xlu0 %631
    %s634 = sor.u32 256, 24
    %635 = vbcast.lane.b32.xlu0 %v621, %s634
    %v636 = vpop.permute.xlu0 %635
    %s638 = sor.u32 256, 32
    %639 = vbcast.lane.b32.xlu0 %v621, %s638
    %v640 = vpop.permute.xlu0 %639
    %s642 = sor.u32 256, 40
    %643 = vbcast.lane.b32.xlu0 %v621, %s642
    %v644 = vpop.permute.xlu0 %643
    %s646 = sor.u32 256, 48
    %647 = vbcast.lane.b32.xlu0 %v621, %s646
    %v648 = vpop.permute.xlu0 %647
    %s650 = sor.u32 256, 56
    %651 = vbcast.lane.b32.xlu0 %v621, %s650
    %v652 = vpop.permute.xlu0 %651
    %s654 = sor.u32 256, 64
    %655 = vbcast.lane.b32.xlu0 %v621, %s654
    %v656 = vpop.permute.xlu0 %655
    %s658 = sor.u32 256, 72
    %659 = vbcast.lane.b32.xlu0 %v621, %s658
    %v660 = vpop.permute.xlu0 %659
    %s662 = sor.u32 256, 80
    %663 = vbcast.lane.b32.xlu0 %v621, %s662
    %v664 = vpop.permute.xlu0 %663
    %s666 = sor.u32 256, 88
    %667 = vbcast.lane.b32.xlu0 %v621, %s666
    %v668 = vpop.permute.xlu0 %667
    %s670 = sor.u32 256, 96
    %671 = vbcast.lane.b32.xlu0 %v621, %s670
    %v672 = vpop.permute.xlu0 %671
    %s674 = sor.u32 256, 104
    %675 = vbcast.lane.b32.xlu0 %v621, %s674
    %v676 = vpop.permute.xlu0 %675
    %s678 = sor.u32 256, 112
    %679 = vbcast.lane.b32.xlu0 %v621, %s678
    %v680 = vpop.permute.xlu0 %679
    %s682 = sor.u32 256, 120
    %683 = vbcast.lane.b32.xlu0 %v621, %s682
    %v684 = vpop.permute.xlu0 %683
    %v685 = vlaneseq
    %v686 = vshrl.u32 %v685, 7
    %v687 = vsub.s32 4, %v686
    %v688 = vrot.slane %v48, %v687
    %690 = vbcast.lane.b32.xlu0 %v688, 256
    %v691 = vpop.permute.xlu0 %690
    %s693 = sor.u32 256, 8
    %694 = vbcast.lane.b32.xlu0 %v688, %s693
    %v695 = vpop.permute.xlu0 %694
    %s697 = sor.u32 256, 16
    %698 = vbcast.lane.b32.xlu0 %v688, %s697
    %v699 = vpop.permute.xlu0 %698
    %s701 = sor.u32 256, 24
    %702 = vbcast.lane.b32.xlu0 %v688, %s701
    %v703 = vpop.permute.xlu0 %702
    %s705 = sor.u32 256, 32
    %706 = vbcast.lane.b32.xlu0 %v688, %s705
    %v707 = vpop.permute.xlu0 %706
    %s709 = sor.u32 256, 40
    %710 = vbcast.lane.b32.xlu0 %v688, %s709
    %v711 = vpop.permute.xlu0 %710
    %s713 = sor.u32 256, 48
    %714 = vbcast.lane.b32.xlu0 %v688, %s713
    %v715 = vpop.permute.xlu0 %714
    %s717 = sor.u32 256, 56
    %718 = vbcast.lane.b32.xlu0 %v688, %s717
    %v719 = vpop.permute.xlu0 %718
    %s721 = sor.u32 256, 64
    %722 = vbcast.lane.b32.xlu0 %v688, %s721
    %v723 = vpop.permute.xlu0 %722
    %s725 = sor.u32 256, 72
    %726 = vbcast.lane.b32.xlu0 %v688, %s725
    %v727 = vpop.permute.xlu0 %726
    %s729 = sor.u32 256, 80
    %730 = vbcast.lane.b32.xlu0 %v688, %s729
    %v731 = vpop.permute.xlu0 %730
    %s733 = sor.u32 256, 88
    %734 = vbcast.lane.b32.xlu0 %v688, %s733
    %v735 = vpop.permute.xlu0 %734
    %s737 = sor.u32 256, 96
    %738 = vbcast.lane.b32.xlu0 %v688, %s737
    %v739 = vpop.permute.xlu0 %738
    %s741 = sor.u32 256, 104
    %742 = vbcast.lane.b32.xlu0 %v688, %s741
    %v743 = vpop.permute.xlu0 %742
    %s745 = sor.u32 256, 112
    %746 = vbcast.lane.b32.xlu0 %v688, %s745
    %v747 = vpop.permute.xlu0 %746
    %s749 = sor.u32 256, 120
    %750 = vbcast.lane.b32.xlu0 %v688, %s749
    %v751 = vpop.permute.xlu0 %750
    %v752 = vlaneseq
    %v753 = vshrl.u32 %v752, 7
    %v754 = vsub.s32 4, %v753
    %v755 = vrot.slane %v49, %v754
    %757 = vbcast.lane.b32.xlu0 %v755, 256
    %v758 = vpop.permute.xlu0 %757
    %s760 = sor.u32 256, 8
    %761 = vbcast.lane.b32.xlu0 %v755, %s760
    %v762 = vpop.permute.xlu0 %761
    %s764 = sor.u32 256, 16
    %765 = vbcast.lane.b32.xlu0 %v755, %s764
    %v766 = vpop.permute.xlu0 %765
    %s768 = sor.u32 256, 24
    %769 = vbcast.lane.b32.xlu0 %v755, %s768
    %v770 = vpop.permute.xlu0 %769
    %s772 = sor.u32 256, 32
    %773 = vbcast.lane.b32.xlu0 %v755, %s772
    %v774 = vpop.permute.xlu0 %773
    %s776 = sor.u32 256, 40
    %777 = vbcast.lane.b32.xlu0 %v755, %s776
    %v778 = vpop.permute.xlu0 %777
    %s780 = sor.u32 256, 48
    %781 = vbcast.lane.b32.xlu0 %v755, %s780
    %v782 = vpop.permute.xlu0 %781
    %s784 = sor.u32 256, 56
    %785 = vbcast.lane.b32.xlu0 %v755, %s784
    %v786 = vpop.permute.xlu0 %785
    %s788 = sor.u32 256, 64
    %789 = vbcast.lane.b32.xlu0 %v755, %s788
    %v790 = vpop.permute.xlu0 %789
    %s792 = sor.u32 256, 72
    %793 = vbcast.lane.b32.xlu0 %v755, %s792
    %v794 = vpop.permute.xlu0 %793
    %s796 = sor.u32 256, 80
    %797 = vbcast.lane.b32.xlu0 %v755, %s796
    %v798 = vpop.permute.xlu0 %797
    %s800 = sor.u32 256, 88
    %801 = vbcast.lane.b32.xlu0 %v755, %s800
    %v802 = vpop.permute.xlu0 %801
    %s804 = sor.u32 256, 96
    %805 = vbcast.lane.b32.xlu0 %v755, %s804
    %v806 = vpop.permute.xlu0 %805
    %s808 = sor.u32 256, 104
    %809 = vbcast.lane.b32.xlu0 %v755, %s808
    %v810 = vpop.permute.xlu0 %809
    %s812 = sor.u32 256, 112
    %813 = vbcast.lane.b32.xlu0 %v755, %s812
    %v814 = vpop.permute.xlu0 %813
    %s816 = sor.u32 256, 120
    %817 = vbcast.lane.b32.xlu0 %v755, %s816
    %v818 = vpop.permute.xlu0 %817
    %v819 = vlaneseq
    %v820 = vshrl.u32 %v819, 7
    %v821 = vsub.s32 5, %v820
    %v822 = vrot.slane %v48, %v821
    %824 = vbcast.lane.b32.xlu0 %v822, 256
    %v825 = vpop.permute.xlu0 %824
    %s827 = sor.u32 256, 8
    %828 = vbcast.lane.b32.xlu0 %v822, %s827
    %v829 = vpop.permute.xlu0 %828
    %s831 = sor.u32 256, 16
    %832 = vbcast.lane.b32.xlu0 %v822, %s831
    %v833 = vpop.permute.xlu0 %832
    %s835 = sor.u32 256, 24
    %836 = vbcast.lane.b32.xlu0 %v822, %s835
    %v837 = vpop.permute.xlu0 %836
    %s839 = sor.u32 256, 32
    %840 = vbcast.lane.b32.xlu0 %v822, %s839
    %v841 = vpop.permute.xlu0 %840
    %s843 = sor.u32 256, 40
    %844 = vbcast.lane.b32.xlu0 %v822, %s843
    %v845 = vpop.permute.xlu0 %844
    %s847 = sor.u32 256, 48
    %848 = vbcast.lane.b32.xlu0 %v822, %s847
    %v849 = vpop.permute.xlu0 %848
    %s851 = sor.u32 256, 56
    %852 = vbcast.lane.b32.xlu0 %v822, %s851
    %v853 = vpop.permute.xlu0 %852
    %s855 = sor.u32 256, 64
    %856 = vbcast.lane.b32.xlu0 %v822, %s855
    %v857 = vpop.permute.xlu0 %856
    %s859 = sor.u32 256, 72
    %860 = vbcast.lane.b32.xlu0 %v822, %s859
    %v861 = vpop.permute.xlu0 %860
    %s863 = sor.u32 256, 80
    %864 = vbcast.lane.b32.xlu0 %v822, %s863
    %v865 = vpop.permute.xlu0 %864
    %s867 = sor.u32 256, 88
    %868 = vbcast.lane.b32.xlu0 %v822, %s867
    %v869 = vpop.permute.xlu0 %868
    %s871 = sor.u32 256, 96
    %872 = vbcast.lane.b32.xlu0 %v822, %s871
    %v873 = vpop.permute.xlu0 %872
    %s875 = sor.u32 256, 104
    %876 = vbcast.lane.b32.xlu0 %v822, %s875
    %v877 = vpop.permute.xlu0 %876
    %s879 = sor.u32 256, 112
    %880 = vbcast.lane.b32.xlu0 %v822, %s879
    %v881 = vpop.permute.xlu0 %880
    %s883 = sor.u32 256, 120
    %884 = vbcast.lane.b32.xlu0 %v822, %s883
    %v885 = vpop.permute.xlu0 %884
    %v886 = vlaneseq
    %v887 = vshrl.u32 %v886, 7
    %v888 = vsub.s32 5, %v887
    %v889 = vrot.slane %v49, %v888
    %891 = vbcast.lane.b32.xlu0 %v889, 256
    %v892 = vpop.permute.xlu0 %891
    %s894 = sor.u32 256, 8
    %895 = vbcast.lane.b32.xlu0 %v889, %s894
    %v896 = vpop.permute.xlu0 %895
    %s898 = sor.u32 256, 16
    %899 = vbcast.lane.b32.xlu0 %v889, %s898
    %v900 = vpop.permute.xlu0 %899
    %s902 = sor.u32 256, 24
    %903 = vbcast.lane.b32.xlu0 %v889, %s902
    %v904 = vpop.permute.xlu0 %903
    %s906 = sor.u32 256, 32
    %907 = vbcast.lane.b32.xlu0 %v889, %s906
    %v908 = vpop.permute.xlu0 %907
    %s910 = sor.u32 256, 40
    %911 = vbcast.lane.b32.xlu0 %v889, %s910
    %v912 = vpop.permute.xlu0 %911
    %s914 = sor.u32 256, 48
    %915 = vbcast.lane.b32.xlu0 %v889, %s914
    %v916 = vpop.permute.xlu0 %915
    %s918 = sor.u32 256, 56
    %919 = vbcast.lane.b32.xlu0 %v889, %s918
    %v920 = vpop.permute.xlu0 %919
    %s922 = sor.u32 256, 64
    %923 = vbcast.lane.b32.xlu0 %v889, %s922
    %v924 = vpop.permute.xlu0 %923
    %s926 = sor.u32 256, 72
    %927 = vbcast.lane.b32.xlu0 %v889, %s926
    %v928 = vpop.permute.xlu0 %927
    %s930 = sor.u32 256, 80
    %931 = vbcast.lane.b32.xlu0 %v889, %s930
    %v932 = vpop.permute.xlu0 %931
    %s934 = sor.u32 256, 88
    %935 = vbcast.lane.b32.xlu0 %v889, %s934
    %v936 = vpop.permute.xlu0 %935
    %s938 = sor.u32 256, 96
    %939 = vbcast.lane.b32.xlu0 %v889, %s938
    %v940 = vpop.permute.xlu0 %939
    %s942 = sor.u32 256, 104
    %943 = vbcast.lane.b32.xlu0 %v889, %s942
    %v944 = vpop.permute.xlu0 %943
    %s946 = sor.u32 256, 112
    %947 = vbcast.lane.b32.xlu0 %v889, %s946
    %v948 = vpop.permute.xlu0 %947
    %s950 = sor.u32 256, 120
    %951 = vbcast.lane.b32.xlu0 %v889, %s950
    %v952 = vpop.permute.xlu0 %951
    %v953 = vlaneseq
    %v954 = vshrl.u32 %v953, 7
    %v955 = vsub.s32 6, %v954
    %v956 = vrot.slane %v48, %v955
    %958 = vbcast.lane.b32.xlu0 %v956, 256
    %v959 = vpop.permute.xlu0 %958
    %s961 = sor.u32 256, 8
    %962 = vbcast.lane.b32.xlu0 %v956, %s961
    %v963 = vpop.permute.xlu0 %962
    %s965 = sor.u32 256, 16
    %966 = vbcast.lane.b32.xlu0 %v956, %s965
    %v967 = vpop.permute.xlu0 %966
    %s969 = sor.u32 256, 24
    %970 = vbcast.lane.b32.xlu0 %v956, %s969
    %v971 = vpop.permute.xlu0 %970
    %s973 = sor.u32 256, 32
    %974 = vbcast.lane.b32.xlu0 %v956, %s973
    %v975 = vpop.permute.xlu0 %974
    %s977 = sor.u32 256, 40
    %978 = vbcast.lane.b32.xlu0 %v956, %s977
    %v979 = vpop.permute.xlu0 %978
    %s981 = sor.u32 256, 48
    %982 = vbcast.lane.b32.xlu0 %v956, %s981
    %v983 = vpop.permute.xlu0 %982
    %s985 = sor.u32 256, 56
    %986 = vbcast.lane.b32.xlu0 %v956, %s985
    %v987 = vpop.permute.xlu0 %986
    %s989 = sor.u32 256, 64
    %990 = vbcast.lane.b32.xlu0 %v956, %s989
    %v991 = vpop.permute.xlu0 %990
    %s993 = sor.u32 256, 72
    %994 = vbcast.lane.b32.xlu0 %v956, %s993
    %v995 = vpop.permute.xlu0 %994
    %s997 = sor.u32 256, 80
    %998 = vbcast.lane.b32.xlu0 %v956, %s997
    %v999 = vpop.permute.xlu0 %998
    %s1001 = sor.u32 256, 88
    %1002 = vbcast.lane.b32.xlu0 %v956, %s1001
    %v1003 = vpop.permute.xlu0 %1002
    %s1005 = sor.u32 256, 96
    %1006 = vbcast.lane.b32.xlu0 %v956, %s1005
    %v1007 = vpop.permute.xlu0 %1006
    %s1009 = sor.u32 256, 104
    %1010 = vbcast.lane.b32.xlu0 %v956, %s1009
    %v1011 = vpop.permute.xlu0 %1010
    %s1013 = sor.u32 256, 112
    %1014 = vbcast.lane.b32.xlu0 %v956, %s1013
    %v1015 = vpop.permute.xlu0 %1014
    %s1017 = sor.u32 256, 120
    %1018 = vbcast.lane.b32.xlu0 %v956, %s1017
    %v1019 = vpop.permute.xlu0 %1018
    %v1020 = vlaneseq
    %v1021 = vshrl.u32 %v1020, 7
    %v1022 = vsub.s32 6, %v1021
    %v1023 = vrot.slane %v49, %v1022
    %1025 = vbcast.lane.b32.xlu0 %v1023, 256
    %v1026 = vpop.permute.xlu0 %1025
    %s1028 = sor.u32 256, 8
    %1029 = vbcast.lane.b32.xlu0 %v1023, %s1028
    %v1030 = vpop.permute.xlu0 %1029
    %s1032 = sor.u32 256, 16
    %1033 = vbcast.lane.b32.xlu0 %v1023, %s1032
    %v1034 = vpop.permute.xlu0 %1033
    %s1036 = sor.u32 256, 24
    %1037 = vbcast.lane.b32.xlu0 %v1023, %s1036
    %v1038 = vpop.permute.xlu0 %1037
    %s1040 = sor.u32 256, 32
    %1041 = vbcast.lane.b32.xlu0 %v1023, %s1040
    %v1042 = vpop.permute.xlu0 %1041
    %s1044 = sor.u32 256, 40
    %1045 = vbcast.lane.b32.xlu0 %v1023, %s1044
    %v1046 = vpop.permute.xlu0 %1045
    %s1048 = sor.u32 256, 48
    %1049 = vbcast.lane.b32.xlu0 %v1023, %s1048
    %v1050 = vpop.permute.xlu0 %1049
    %s1052 = sor.u32 256, 56
    %1053 = vbcast.lane.b32.xlu0 %v1023, %s1052
    %v1054 = vpop.permute.xlu0 %1053
    %s1056 = sor.u32 256, 64
    %1057 = vbcast.lane.b32.xlu0 %v1023, %s1056
    %v1058 = vpop.permute.xlu0 %1057
    %s1060 = sor.u32 256, 72
    %1061 = vbcast.lane.b32.xlu0 %v1023, %s1060
    %v1062 = vpop.permute.xlu0 %1061
    %s1064 = sor.u32 256, 80
    %1065 = vbcast.lane.b32.xlu0 %v1023, %s1064
    %v1066 = vpop.permute.xlu0 %1065
    %s1068 = sor.u32 256, 88
    %1069 = vbcast.lane.b32.xlu0 %v1023, %s1068
    %v1070 = vpop.permute.xlu0 %1069
    %s1072 = sor.u32 256, 96
    %1073 = vbcast.lane.b32.xlu0 %v1023, %s1072
    %v1074 = vpop.permute.xlu0 %1073
    %s1076 = sor.u32 256, 104
    %1077 = vbcast.lane.b32.xlu0 %v1023, %s1076
    %v1078 = vpop.permute.xlu0 %1077
    %s1080 = sor.u32 256, 112
    %1081 = vbcast.lane.b32.xlu0 %v1023, %s1080
    %v1082 = vpop.permute.xlu0 %1081
    %s1084 = sor.u32 256, 120
    %1085 = vbcast.lane.b32.xlu0 %v1023, %s1084
    %v1086 = vpop.permute.xlu0 %1085
    %v1087 = vlaneseq
    %v1088 = vshrl.u32 %v1087, 7
    %v1089 = vsub.s32 7, %v1088
    %v1090 = vrot.slane %v48, %v1089
    %1092 = vbcast.lane.b32.xlu0 %v1090, 256
    %v1093 = vpop.permute.xlu0 %1092
    %s1095 = sor.u32 256, 8
    %1096 = vbcast.lane.b32.xlu0 %v1090, %s1095
    %v1097 = vpop.permute.xlu0 %1096
    %s1099 = sor.u32 256, 16
    %1100 = vbcast.lane.b32.xlu0 %v1090, %s1099
    %v1101 = vpop.permute.xlu0 %1100
    %s1103 = sor.u32 256, 24
    %1104 = vbcast.lane.b32.xlu0 %v1090, %s1103
    %v1105 = vpop.permute.xlu0 %1104
    %s1107 = sor.u32 256, 32
    %1108 = vbcast.lane.b32.xlu0 %v1090, %s1107
    %v1109 = vpop.permute.xlu0 %1108
    %s1111 = sor.u32 256, 40
    %1112 = vbcast.lane.b32.xlu0 %v1090, %s1111
    %v1113 = vpop.permute.xlu0 %1112
    %s1115 = sor.u32 256, 48
    %1116 = vbcast.lane.b32.xlu0 %v1090, %s1115
    %v1117 = vpop.permute.xlu0 %1116
    %s1119 = sor.u32 256, 56
    %1120 = vbcast.lane.b32.xlu0 %v1090, %s1119
    %v1121 = vpop.permute.xlu0 %1120
    %s1123 = sor.u32 256, 64
    %1124 = vbcast.lane.b32.xlu0 %v1090, %s1123
    %v1125 = vpop.permute.xlu0 %1124
    %s1127 = sor.u32 256, 72
    %1128 = vbcast.lane.b32.xlu0 %v1090, %s1127
    %v1129 = vpop.permute.xlu0 %1128
    %s1131 = sor.u32 256, 80
    %1132 = vbcast.lane.b32.xlu0 %v1090, %s1131
    %v1133 = vpop.permute.xlu0 %1132
    %s1135 = sor.u32 256, 88
    %1136 = vbcast.lane.b32.xlu0 %v1090, %s1135
    %v1137 = vpop.permute.xlu0 %1136
    %s1139 = sor.u32 256, 96
    %1140 = vbcast.lane.b32.xlu0 %v1090, %s1139
    %v1141 = vpop.permute.xlu0 %1140
    %s1143 = sor.u32 256, 104
    %1144 = vbcast.lane.b32.xlu0 %v1090, %s1143
    %v1145 = vpop.permute.xlu0 %1144
    %s1147 = sor.u32 256, 112
    %1148 = vbcast.lane.b32.xlu0 %v1090, %s1147
    %v1149 = vpop.permute.xlu0 %1148
    %s1151 = sor.u32 256, 120
    %1152 = vbcast.lane.b32.xlu0 %v1090, %s1151
    %v1153 = vpop.permute.xlu0 %1152
    %v1154 = vlaneseq
    %v1155 = vshrl.u32 %v1154, 7
    %v1156 = vsub.s32 7, %v1155
    %v1157 = vrot.slane %v49, %v1156
    %1159 = vbcast.lane.b32.xlu0 %v1157, 256
    %v1160 = vpop.permute.xlu0 %1159
    %s1162 = sor.u32 256, 8
    %1163 = vbcast.lane.b32.xlu0 %v1157, %s1162
    %v1164 = vpop.permute.xlu0 %1163
    %s1166 = sor.u32 256, 16
    %1167 = vbcast.lane.b32.xlu0 %v1157, %s1166
    %v1168 = vpop.permute.xlu0 %1167
    %s1170 = sor.u32 256, 24
    %1171 = vbcast.lane.b32.xlu0 %v1157, %s1170
    %v1172 = vpop.permute.xlu0 %1171
    %s1174 = sor.u32 256, 32
    %1175 = vbcast.lane.b32.xlu0 %v1157, %s1174
    %v1176 = vpop.permute.xlu0 %1175
    %s1178 = sor.u32 256, 40
    %1179 = vbcast.lane.b32.xlu0 %v1157, %s1178
    %v1180 = vpop.permute.xlu0 %1179
    %s1182 = sor.u32 256, 48
    %1183 = vbcast.lane.b32.xlu0 %v1157, %s1182
    %v1184 = vpop.permute.xlu0 %1183
    %s1186 = sor.u32 256, 56
    %1187 = vbcast.lane.b32.xlu0 %v1157, %s1186
    %v1188 = vpop.permute.xlu0 %1187
    %s1190 = sor.u32 256, 64
    %1191 = vbcast.lane.b32.xlu0 %v1157, %s1190
    %v1192 = vpop.permute.xlu0 %1191
    %s1194 = sor.u32 256, 72
    %1195 = vbcast.lane.b32.xlu0 %v1157, %s1194
    %v1196 = vpop.permute.xlu0 %1195
    %s1198 = sor.u32 256, 80
    %1199 = vbcast.lane.b32.xlu0 %v1157, %s1198
    %v1200 = vpop.permute.xlu0 %1199
    %s1202 = sor.u32 256, 88
    %1203 = vbcast.lane.b32.xlu0 %v1157, %s1202
    %v1204 = vpop.permute.xlu0 %1203
    %s1206 = sor.u32 256, 96
    %1207 = vbcast.lane.b32.xlu0 %v1157, %s1206
    %v1208 = vpop.permute.xlu0 %1207
    %s1210 = sor.u32 256, 104
    %1211 = vbcast.lane.b32.xlu0 %v1157, %s1210
    %v1212 = vpop.permute.xlu0 %1211
    %s1214 = sor.u32 256, 112
    %1215 = vbcast.lane.b32.xlu0 %v1157, %s1214
    %v1216 = vpop.permute.xlu0 %1215
    %s1218 = sor.u32 256, 120
    %1219 = vbcast.lane.b32.xlu0 %v1157, %s1218
    %v1220 = vpop.permute.xlu0 %1219
    %v1222 = vlaneseq
    %v1223 = vshrl.u32 %v1222, 7
    %v1224 = vsub.s32 0, %v1223
    %v1225 = vrot.slane %v146, %v1224
    %v1227 = vmul.f32 %v155, %v1225
    %v1228 = vmul.f32 %v159, %v1225
    %v1229 = vmul.f32 %v163, %v1225
    %v1230 = vmul.f32 %v167, %v1225
    %v1231 = vmul.f32 %v171, %v1225
    %v1232 = vmul.f32 %v175, %v1225
    %v1233 = vmul.f32 %v179, %v1225
    %v1234 = vmul.f32 %v183, %v1225
    %v1235 = vmul.f32 %v187, %v1225
    %v1236 = vmul.f32 %v191, %v1225
    %v1237 = vmul.f32 %v195, %v1225
    %v1238 = vmul.f32 %v199, %v1225
    %v1239 = vmul.f32 %v203, %v1225
    %v1240 = vmul.f32 %v207, %v1225
    %v1241 = vmul.f32 %v211, %v1225
    %v1242 = vmul.f32 %v215, %v1225
    %v1243 = vmul.f32 %v222, %v1225
    %v1244 = vmul.f32 %v226, %v1225
    %v1245 = vmul.f32 %v230, %v1225
    %v1246 = vmul.f32 %v234, %v1225
    %v1247 = vmul.f32 %v238, %v1225
    %v1248 = vmul.f32 %v242, %v1225
    %v1249 = vmul.f32 %v246, %v1225
    %v1250 = vmul.f32 %v250, %v1225
    %v1251 = vmul.f32 %v254, %v1225
    %v1252 = vmul.f32 %v258, %v1225
    %v1253 = vmul.f32 %v262, %v1225
    %v1254 = vmul.f32 %v266, %v1225
    %v1255 = vmul.f32 %v270, %v1225
    %v1256 = vmul.f32 %v274, %v1225
    %v1257 = vmul.f32 %v278, %v1225
    %v1258 = vmul.f32 %v282, %v1225
    %v1259 = vmul.f32 %v289, %v1225
    %v1260 = vmul.f32 %v293, %v1225
    %v1261 = vmul.f32 %v297, %v1225
    %v1262 = vmul.f32 %v301, %v1225
    %v1263 = vmul.f32 %v305, %v1225
    %v1264 = vmul.f32 %v309, %v1225
    %v1265 = vmul.f32 %v313, %v1225
    %v1266 = vmul.f32 %v317, %v1225
    %v1267 = vmul.f32 %v321, %v1225
    %v1268 = vmul.f32 %v325, %v1225
    %v1269 = vmul.f32 %v329, %v1225
    %v1270 = vmul.f32 %v333, %v1225
    %v1271 = vmul.f32 %v337, %v1225
    %v1272 = vmul.f32 %v341, %v1225
    %v1273 = vmul.f32 %v345, %v1225
    %v1274 = vmul.f32 %v349, %v1225
    %v1275 = vmul.f32 %v356, %v1225
    %v1276 = vmul.f32 %v360, %v1225
    %v1277 = vmul.f32 %v364, %v1225
    %v1278 = vmul.f32 %v368, %v1225
    %v1279 = vmul.f32 %v372, %v1225
    %v1280 = vmul.f32 %v376, %v1225
    %v1281 = vmul.f32 %v380, %v1225
    %v1282 = vmul.f32 %v384, %v1225
    %v1283 = vmul.f32 %v388, %v1225
    %v1284 = vmul.f32 %v392, %v1225
    %v1285 = vmul.f32 %v396, %v1225
    %v1286 = vmul.f32 %v400, %v1225
    %v1287 = vmul.f32 %v404, %v1225
    %v1288 = vmul.f32 %v408, %v1225
    %v1289 = vmul.f32 %v412, %v1225
    %v1290 = vmul.f32 %v416, %v1225
    %v1291 = vmul.f32 %v423, %v1225
    %v1292 = vmul.f32 %v427, %v1225
    %v1293 = vmul.f32 %v431, %v1225
    %v1294 = vmul.f32 %v435, %v1225
    %v1295 = vmul.f32 %v439, %v1225
    %v1296 = vmul.f32 %v443, %v1225
    %v1297 = vmul.f32 %v447, %v1225
    %v1298 = vmul.f32 %v451, %v1225
    %v1299 = vmul.f32 %v455, %v1225
    %v1300 = vmul.f32 %v459, %v1225
    %v1301 = vmul.f32 %v463, %v1225
    %v1302 = vmul.f32 %v467, %v1225
    %v1303 = vmul.f32 %v471, %v1225
    %v1304 = vmul.f32 %v475, %v1225
    %v1305 = vmul.f32 %v479, %v1225
    %v1306 = vmul.f32 %v483, %v1225
    %v1307 = vmul.f32 %v490, %v1225
    %v1308 = vmul.f32 %v494, %v1225
    %v1309 = vmul.f32 %v498, %v1225
    %v1310 = vmul.f32 %v502, %v1225
    %v1311 = vmul.f32 %v506, %v1225
    %v1312 = vmul.f32 %v510, %v1225
    %v1313 = vmul.f32 %v514, %v1225
    %v1314 = vmul.f32 %v518, %v1225
    %v1315 = vmul.f32 %v522, %v1225
    %v1316 = vmul.f32 %v526, %v1225
    %v1317 = vmul.f32 %v530, %v1225
    %v1318 = vmul.f32 %v534, %v1225
    %v1319 = vmul.f32 %v538, %v1225
    %v1320 = vmul.f32 %v542, %v1225
    %v1321 = vmul.f32 %v546, %v1225
    %v1322 = vmul.f32 %v550, %v1225
    %v1323 = vmul.f32 %v557, %v1225
    %v1324 = vmul.f32 %v561, %v1225
    %v1325 = vmul.f32 %v565, %v1225
    %v1326 = vmul.f32 %v569, %v1225
    %v1327 = vmul.f32 %v573, %v1225
    %v1328 = vmul.f32 %v577, %v1225
    %v1329 = vmul.f32 %v581, %v1225
    %v1330 = vmul.f32 %v585, %v1225
    %v1331 = vmul.f32 %v589, %v1225
    %v1332 = vmul.f32 %v593, %v1225
    %v1333 = vmul.f32 %v597, %v1225
    %v1334 = vmul.f32 %v601, %v1225
    %v1335 = vmul.f32 %v605, %v1225
    %v1336 = vmul.f32 %v609, %v1225
    %v1337 = vmul.f32 %v613, %v1225
    %v1338 = vmul.f32 %v617, %v1225
    %v1339 = vmul.f32 %v624, %v1225
    %v1340 = vmul.f32 %v628, %v1225
    %v1341 = vmul.f32 %v632, %v1225
    %v1342 = vmul.f32 %v636, %v1225
    %v1343 = vmul.f32 %v640, %v1225
    %v1344 = vmul.f32 %v644, %v1225
    %v1345 = vmul.f32 %v648, %v1225
    %v1346 = vmul.f32 %v652, %v1225
    %v1347 = vmul.f32 %v656, %v1225
    %v1348 = vmul.f32 %v660, %v1225
    %v1349 = vmul.f32 %v664, %v1225
    %v1350 = vmul.f32 %v668, %v1225
    %v1351 = vmul.f32 %v672, %v1225
    %v1352 = vmul.f32 %v676, %v1225
    %v1353 = vmul.f32 %v680, %v1225
    %v1354 = vmul.f32 %v684, %v1225
    %v1355 = vmul.f32 %v691, %v1225
    %v1356 = vmul.f32 %v695, %v1225
    %v1357 = vmul.f32 %v699, %v1225
    %v1358 = vmul.f32 %v703, %v1225
    %v1359 = vmul.f32 %v707, %v1225
    %v1360 = vmul.f32 %v711, %v1225
    %v1361 = vmul.f32 %v715, %v1225
    %v1362 = vmul.f32 %v719, %v1225
    %v1363 = vmul.f32 %v723, %v1225
    %v1364 = vmul.f32 %v727, %v1225
    %v1365 = vmul.f32 %v731, %v1225
    %v1366 = vmul.f32 %v735, %v1225
    %v1367 = vmul.f32 %v739, %v1225
    %v1368 = vmul.f32 %v743, %v1225
    %v1369 = vmul.f32 %v747, %v1225
    %v1370 = vmul.f32 %v751, %v1225
    %v1371 = vmul.f32 %v758, %v1225
    %v1372 = vmul.f32 %v762, %v1225
    %v1373 = vmul.f32 %v766, %v1225
    %v1374 = vmul.f32 %v770, %v1225
    %v1375 = vmul.f32 %v774, %v1225
    %v1376 = vmul.f32 %v778, %v1225
    %v1377 = vmul.f32 %v782, %v1225
    %v1378 = vmul.f32 %v786, %v1225
    %v1379 = vmul.f32 %v790, %v1225
    %v1380 = vmul.f32 %v794, %v1225
    %v1381 = vmul.f32 %v798, %v1225
    %v1382 = vmul.f32 %v802, %v1225
    %v1383 = vmul.f32 %v806, %v1225
    %v1384 = vmul.f32 %v810, %v1225
    %v1385 = vmul.f32 %v814, %v1225
    %v1386 = vmul.f32 %v818, %v1225
    %v1387 = vmul.f32 %v825, %v1225
    %v1388 = vmul.f32 %v829, %v1225
    %v1389 = vmul.f32 %v833, %v1225
    %v1390 = vmul.f32 %v837, %v1225
    %v1391 = vmul.f32 %v841, %v1225
    %v1392 = vmul.f32 %v845, %v1225
    %v1393 = vmul.f32 %v849, %v1225
    %v1394 = vmul.f32 %v853, %v1225
    %v1395 = vmul.f32 %v857, %v1225
    %v1396 = vmul.f32 %v861, %v1225
    %v1397 = vmul.f32 %v865, %v1225
    %v1398 = vmul.f32 %v869, %v1225
    %v1399 = vmul.f32 %v873, %v1225
    %v1400 = vmul.f32 %v877, %v1225
    %v1401 = vmul.f32 %v881, %v1225
    %v1402 = vmul.f32 %v885, %v1225
    %v1403 = vmul.f32 %v892, %v1225
    %v1404 = vmul.f32 %v896, %v1225
    %v1405 = vmul.f32 %v900, %v1225
    %v1406 = vmul.f32 %v904, %v1225
    %v1407 = vmul.f32 %v908, %v1225
    %v1408 = vmul.f32 %v912, %v1225
    %v1409 = vmul.f32 %v916, %v1225
    %v1410 = vmul.f32 %v920, %v1225
    %v1411 = vmul.f32 %v924, %v1225
    %v1412 = vmul.f32 %v928, %v1225
    %v1413 = vmul.f32 %v932, %v1225
    %v1414 = vmul.f32 %v936, %v1225
    %v1415 = vmul.f32 %v940, %v1225
    %v1416 = vmul.f32 %v944, %v1225
    %v1417 = vmul.f32 %v948, %v1225
    %v1418 = vmul.f32 %v952, %v1225
    %v1419 = vmul.f32 %v959, %v1225
    %v1420 = vmul.f32 %v963, %v1225
    %v1421 = vmul.f32 %v967, %v1225
    %v1422 = vmul.f32 %v971, %v1225
    %v1423 = vmul.f32 %v975, %v1225
    %v1424 = vmul.f32 %v979, %v1225
    %v1425 = vmul.f32 %v983, %v1225
    %v1426 = vmul.f32 %v987, %v1225
    %v1427 = vmul.f32 %v991, %v1225
    %v1428 = vmul.f32 %v995, %v1225
    %v1429 = vmul.f32 %v999, %v1225
    %v1430 = vmul.f32 %v1003, %v1225
    %v1431 = vmul.f32 %v1007, %v1225
    %v1432 = vmul.f32 %v1011, %v1225
    %v1433 = vmul.f32 %v1015, %v1225
    %v1434 = vmul.f32 %v1019, %v1225
    %v1435 = vmul.f32 %v1026, %v1225
    %v1436 = vmul.f32 %v1030, %v1225
    %v1437 = vmul.f32 %v1034, %v1225
    %v1438 = vmul.f32 %v1038, %v1225
    %v1439 = vmul.f32 %v1042, %v1225
    %v1440 = vmul.f32 %v1046, %v1225
    %v1441 = vmul.f32 %v1050, %v1225
    %v1442 = vmul.f32 %v1054, %v1225
    %v1443 = vmul.f32 %v1058, %v1225
    %v1444 = vmul.f32 %v1062, %v1225
    %v1445 = vmul.f32 %v1066, %v1225
    %v1446 = vmul.f32 %v1070, %v1225
    %v1447 = vmul.f32 %v1074, %v1225
    %v1448 = vmul.f32 %v1078, %v1225
    %v1449 = vmul.f32 %v1082, %v1225
    %v1450 = vmul.f32 %v1086, %v1225
    %v1451 = vmul.f32 %v1093, %v1225
    %v1452 = vmul.f32 %v1097, %v1225
    %v1453 = vmul.f32 %v1101, %v1225
    %v1454 = vmul.f32 %v1105, %v1225
    %v1455 = vmul.f32 %v1109, %v1225
    %v1456 = vmul.f32 %v1113, %v1225
    %v1457 = vmul.f32 %v1117, %v1225
    %v1458 = vmul.f32 %v1121, %v1225
    %v1459 = vmul.f32 %v1125, %v1225
    %v1460 = vmul.f32 %v1129, %v1225
    %v1461 = vmul.f32 %v1133, %v1225
    %v1462 = vmul.f32 %v1137, %v1225
    %v1463 = vmul.f32 %v1141, %v1225
    %v1464 = vmul.f32 %v1145, %v1225
    %v1465 = vmul.f32 %v1149, %v1225
    %v1466 = vmul.f32 %v1153, %v1225
    %v1467 = vmul.f32 %v1160, %v1225
    %v1468 = vmul.f32 %v1164, %v1225
    %v1469 = vmul.f32 %v1168, %v1225
    %v1470 = vmul.f32 %v1172, %v1225
    %v1471 = vmul.f32 %v1176, %v1225
    %v1472 = vmul.f32 %v1180, %v1225
    %v1473 = vmul.f32 %v1184, %v1225
    %v1474 = vmul.f32 %v1188, %v1225
    %v1475 = vmul.f32 %v1192, %v1225
    %v1476 = vmul.f32 %v1196, %v1225
    %v1477 = vmul.f32 %v1200, %v1225
    %v1478 = vmul.f32 %v1204, %v1225
    %v1479 = vmul.f32 %v1208, %v1225
    %v1480 = vmul.f32 %v1212, %v1225
    %v1481 = vmul.f32 %v1216, %v1225
    %v1482 = vmul.f32 %v1220, %v1225
    %v1483 = vadd.f32 %v1227, %v52
    %v1484 = vadd.f32 %v1228, %v53
    %v1485 = vadd.f32 %v1229, %v54
    %v1486 = vadd.f32 %v1230, %v55
    %v1487 = vadd.f32 %v1231, %v56
    %v1488 = vadd.f32 %v1232, %v57
    %v1489 = vadd.f32 %v1233, %v58
    %v1490 = vadd.f32 %v1234, %v59
    %v1491 = vadd.f32 %v1235, %v60
    %v1492 = vadd.f32 %v1236, %v61
    %v1493 = vadd.f32 %v1237, %v62
    %v1494 = vadd.f32 %v1238, %v63
    %v1495 = vadd.f32 %v1239, %v64
    %v1496 = vadd.f32 %v1240, %v65
    %v1497 = vadd.f32 %v1241, %v66
    %v1498 = vadd.f32 %v1242, %v67
    %v1499 = vadd.f32 %v1243, %v68
    %v1500 = vadd.f32 %v1244, %v69
    %v1501 = vadd.f32 %v1245, %v70
    %v1502 = vadd.f32 %v1246, %v71
    %v1503 = vadd.f32 %v1247, %v72
    %v1504 = vadd.f32 %v1248, %v73
    %v1505 = vadd.f32 %v1249, %v74
    %v1506 = vadd.f32 %v1250, %v75
    %v1507 = vadd.f32 %v1251, %v76
    %v1508 = vadd.f32 %v1252, %v77
    %v1509 = vadd.f32 %v1253, %v78
    %v1510 = vadd.f32 %v1254, %v79
    %v1511 = vadd.f32 %v1255, %v80
    %v1512 = vadd.f32 %v1256, %v81
    %v1513 = vadd.f32 %v1257, %v82
    %v1514 = vadd.f32 %v1258, %v83
    %v1515 = vadd.f32 %v1259, %v52
    %v1516 = vadd.f32 %v1260, %v53
    %v1517 = vadd.f32 %v1261, %v54
    %v1518 = vadd.f32 %v1262, %v55
    %v1519 = vadd.f32 %v1263, %v56
    %v1520 = vadd.f32 %v1264, %v57
    %v1521 = vadd.f32 %v1265, %v58
    %v1522 = vadd.f32 %v1266, %v59
    %v1523 = vadd.f32 %v1267, %v60
    %v1524 = vadd.f32 %v1268, %v61
    %v1525 = vadd.f32 %v1269, %v62
    %v1526 = vadd.f32 %v1270, %v63
    %v1527 = vadd.f32 %v1271, %v64
    %v1528 = vadd.f32 %v1272, %v65
    %v1529 = vadd.f32 %v1273, %v66
    %v1530 = vadd.f32 %v1274, %v67
    %v1531 = vadd.f32 %v1275, %v68
    %v1532 = vadd.f32 %v1276, %v69
    %v1533 = vadd.f32 %v1277, %v70
    %v1534 = vadd.f32 %v1278, %v71
    %v1535 = vadd.f32 %v1279, %v72
    %v1536 = vadd.f32 %v1280, %v73
    %v1537 = vadd.f32 %v1281, %v74
    %v1538 = vadd.f32 %v1282, %v75
    %v1539 = vadd.f32 %v1283, %v76
    %v1540 = vadd.f32 %v1284, %v77
    %v1541 = vadd.f32 %v1285, %v78
    %v1542 = vadd.f32 %v1286, %v79
    %v1543 = vadd.f32 %v1287, %v80
    %v1544 = vadd.f32 %v1288, %v81
    %v1545 = vadd.f32 %v1289, %v82
    %v1546 = vadd.f32 %v1290, %v83
    %v1547 = vadd.f32 %v1291, %v52
    %v1548 = vadd.f32 %v1292, %v53
    %v1549 = vadd.f32 %v1293, %v54
    %v1550 = vadd.f32 %v1294, %v55
    %v1551 = vadd.f32 %v1295, %v56
    %v1552 = vadd.f32 %v1296, %v57
    %v1553 = vadd.f32 %v1297, %v58
    %v1554 = vadd.f32 %v1298, %v59
    %v1555 = vadd.f32 %v1299, %v60
    %v1556 = vadd.f32 %v1300, %v61
    %v1557 = vadd.f32 %v1301, %v62
    %v1558 = vadd.f32 %v1302, %v63
    %v1559 = vadd.f32 %v1303, %v64
    %v1560 = vadd.f32 %v1304, %v65
    %v1561 = vadd.f32 %v1305, %v66
    %v1562 = vadd.f32 %v1306, %v67
    %v1563 = vadd.f32 %v1307, %v68
    %v1564 = vadd.f32 %v1308, %v69
    %v1565 = vadd.f32 %v1309, %v70
    %v1566 = vadd.f32 %v1310, %v71
    %v1567 = vadd.f32 %v1311, %v72
    %v1568 = vadd.f32 %v1312, %v73
    %v1569 = vadd.f32 %v1313, %v74
    %v1570 = vadd.f32 %v1314, %v75
    %v1571 = vadd.f32 %v1315, %v76
    %v1572 = vadd.f32 %v1316, %v77
    %v1573 = vadd.f32 %v1317, %v78
    %v1574 = vadd.f32 %v1318, %v79
    %v1575 = vadd.f32 %v1319, %v80
    %v1576 = vadd.f32 %v1320, %v81
    %v1577 = vadd.f32 %v1321, %v82
    %v1578 = vadd.f32 %v1322, %v83
    %v1579 = vadd.f32 %v1323, %v52
    %v1580 = vadd.f32 %v1324, %v53
    %v1581 = vadd.f32 %v1325, %v54
    %v1582 = vadd.f32 %v1326, %v55
    %v1583 = vadd.f32 %v1327, %v56
    %v1584 = vadd.f32 %v1328, %v57
    %v1585 = vadd.f32 %v1329, %v58
    %v1586 = vadd.f32 %v1330, %v59
    %v1587 = vadd.f32 %v1331, %v60
    %v1588 = vadd.f32 %v1332, %v61
    %v1589 = vadd.f32 %v1333, %v62
    %v1590 = vadd.f32 %v1334, %v63
    %v1591 = vadd.f32 %v1335, %v64
    %v1592 = vadd.f32 %v1336, %v65
    %v1593 = vadd.f32 %v1337, %v66
    %v1594 = vadd.f32 %v1338, %v67
    %v1595 = vadd.f32 %v1339, %v68
    %v1596 = vadd.f32 %v1340, %v69
    %v1597 = vadd.f32 %v1341, %v70
    %v1598 = vadd.f32 %v1342, %v71
    %v1599 = vadd.f32 %v1343, %v72
    %v1600 = vadd.f32 %v1344, %v73
    %v1601 = vadd.f32 %v1345, %v74
    %v1602 = vadd.f32 %v1346, %v75
    %v1603 = vadd.f32 %v1347, %v76
    %v1604 = vadd.f32 %v1348, %v77
    %v1605 = vadd.f32 %v1349, %v78
    %v1606 = vadd.f32 %v1350, %v79
    %v1607 = vadd.f32 %v1351, %v80
    %v1608 = vadd.f32 %v1352, %v81
    %v1609 = vadd.f32 %v1353, %v82
    %v1610 = vadd.f32 %v1354, %v83
    %v1611 = vadd.f32 %v1355, %v52
    %v1612 = vadd.f32 %v1356, %v53
    %v1613 = vadd.f32 %v1357, %v54
    %v1614 = vadd.f32 %v1358, %v55
    %v1615 = vadd.f32 %v1359, %v56
    %v1616 = vadd.f32 %v1360, %v57
    %v1617 = vadd.f32 %v1361, %v58
    %v1618 = vadd.f32 %v1362, %v59
    %v1619 = vadd.f32 %v1363, %v60
    %v1620 = vadd.f32 %v1364, %v61
    %v1621 = vadd.f32 %v1365, %v62
    %v1622 = vadd.f32 %v1366, %v63
    %v1623 = vadd.f32 %v1367, %v64
    %v1624 = vadd.f32 %v1368, %v65
    %v1625 = vadd.f32 %v1369, %v66
    %v1626 = vadd.f32 %v1370, %v67
    %v1627 = vadd.f32 %v1371, %v68
    %v1628 = vadd.f32 %v1372, %v69
    %v1629 = vadd.f32 %v1373, %v70
    %v1630 = vadd.f32 %v1374, %v71
    %v1631 = vadd.f32 %v1375, %v72
    %v1632 = vadd.f32 %v1376, %v73
    %v1633 = vadd.f32 %v1377, %v74
    %v1634 = vadd.f32 %v1378, %v75
    %v1635 = vadd.f32 %v1379, %v76
    %v1636 = vadd.f32 %v1380, %v77
    %v1637 = vadd.f32 %v1381, %v78
    %v1638 = vadd.f32 %v1382, %v79
    %v1639 = vadd.f32 %v1383, %v80
    %v1640 = vadd.f32 %v1384, %v81
    %v1641 = vadd.f32 %v1385, %v82
    %v1642 = vadd.f32 %v1386, %v83
    %v1643 = vadd.f32 %v1387, %v52
    %v1644 = vadd.f32 %v1388, %v53
    %v1645 = vadd.f32 %v1389, %v54
    %v1646 = vadd.f32 %v1390, %v55
    %v1647 = vadd.f32 %v1391, %v56
    %v1648 = vadd.f32 %v1392, %v57
    %v1649 = vadd.f32 %v1393, %v58
    %v1650 = vadd.f32 %v1394, %v59
    %v1651 = vadd.f32 %v1395, %v60
    %v1652 = vadd.f32 %v1396, %v61
    %v1653 = vadd.f32 %v1397, %v62
    %v1654 = vadd.f32 %v1398, %v63
    %v1655 = vadd.f32 %v1399, %v64
    %v1656 = vadd.f32 %v1400, %v65
    %v1657 = vadd.f32 %v1401, %v66
    %v1658 = vadd.f32 %v1402, %v67
    %v1659 = vadd.f32 %v1403, %v68
    %v1660 = vadd.f32 %v1404, %v69
    %v1661 = vadd.f32 %v1405, %v70
    %v1662 = vadd.f32 %v1406, %v71
    %v1663 = vadd.f32 %v1407, %v72
    %v1664 = vadd.f32 %v1408, %v73
    %v1665 = vadd.f32 %v1409, %v74
    %v1666 = vadd.f32 %v1410, %v75
    %v1667 = vadd.f32 %v1411, %v76
    %v1668 = vadd.f32 %v1412, %v77
    %v1669 = vadd.f32 %v1413, %v78
    %v1670 = vadd.f32 %v1414, %v79
    %v1671 = vadd.f32 %v1415, %v80
    %v1672 = vadd.f32 %v1416, %v81
    %v1673 = vadd.f32 %v1417, %v82
    %v1674 = vadd.f32 %v1418, %v83
    %v1675 = vadd.f32 %v1419, %v52
    %v1676 = vadd.f32 %v1420, %v53
    %v1677 = vadd.f32 %v1421, %v54
    %v1678 = vadd.f32 %v1422, %v55
    %v1679 = vadd.f32 %v1423, %v56
    %v1680 = vadd.f32 %v1424, %v57
    %v1681 = vadd.f32 %v1425, %v58
    %v1682 = vadd.f32 %v1426, %v59
    %v1683 = vadd.f32 %v1427, %v60
    %v1684 = vadd.f32 %v1428, %v61
    %v1685 = vadd.f32 %v1429, %v62
    %v1686 = vadd.f32 %v1430, %v63
    %v1687 = vadd.f32 %v1431, %v64
    %v1688 = vadd.f32 %v1432, %v65
    %v1689 = vadd.f32 %v1433, %v66
    %v1690 = vadd.f32 %v1434, %v67
    %v1691 = vadd.f32 %v1435, %v68
    %v1692 = vadd.f32 %v1436, %v69
    %v1693 = vadd.f32 %v1437, %v70
    %v1694 = vadd.f32 %v1438, %v71
    %v1695 = vadd.f32 %v1439, %v72
    %v1696 = vadd.f32 %v1440, %v73
    %v1697 = vadd.f32 %v1441, %v74
    %v1698 = vadd.f32 %v1442, %v75
    %v1699 = vadd.f32 %v1443, %v76
    %v1700 = vadd.f32 %v1444, %v77
    %v1701 = vadd.f32 %v1445, %v78
    %v1702 = vadd.f32 %v1446, %v79
    %v1703 = vadd.f32 %v1447, %v80
    %v1704 = vadd.f32 %v1448, %v81
    %v1705 = vadd.f32 %v1449, %v82
    %v1706 = vadd.f32 %v1450, %v83
    %v1707 = vadd.f32 %v1451, %v52
    %v1708 = vadd.f32 %v1452, %v53
    %v1709 = vadd.f32 %v1453, %v54
    %v1710 = vadd.f32 %v1454, %v55
    %v1711 = vadd.f32 %v1455, %v56
    %v1712 = vadd.f32 %v1456, %v57
    %v1713 = vadd.f32 %v1457, %v58
    %v1714 = vadd.f32 %v1458, %v59
    %v1715 = vadd.f32 %v1459, %v60
    %v1716 = vadd.f32 %v1460, %v61
    %v1717 = vadd.f32 %v1461, %v62
    %v1718 = vadd.f32 %v1462, %v63
    %v1719 = vadd.f32 %v1463, %v64
    %v1720 = vadd.f32 %v1464, %v65
    %v1721 = vadd.f32 %v1465, %v66
    %v1722 = vadd.f32 %v1466, %v67
    %v1723 = vadd.f32 %v1467, %v68
    %v1724 = vadd.f32 %v1468, %v69
    %v1725 = vadd.f32 %v1469, %v70
    %v1726 = vadd.f32 %v1470, %v71
    %v1727 = vadd.f32 %v1471, %v72
    %v1728 = vadd.f32 %v1472, %v73
    %v1729 = vadd.f32 %v1473, %v74
    %v1730 = vadd.f32 %v1474, %v75
    %v1731 = vadd.f32 %v1475, %v76
    %v1732 = vadd.f32 %v1476, %v77
    %v1733 = vadd.f32 %v1477, %v78
    %v1734 = vadd.f32 %v1478, %v79
    %v1735 = vadd.f32 %v1479, %v80
    %v1736 = vadd.f32 %v1480, %v81
    %v1737 = vadd.f32 %v1481, %v82
    %v1738 = vadd.f32 %v1482, %v83
    %v1739 = vlaneseq
    %v1740 = vshrl.u32 %v1739, 7
    %v1741 = vsub.s32 0, %v1740
    %v1742 = vrot.slane %v104, %v1741
    %1744 = vbcast.lane.b32.xlu0 %v1742, 256
    %v1745 = vpop.permute.xlu0 %1744
    %s1747 = sor.u32 256, 8
    %1748 = vbcast.lane.b32.xlu0 %v1742, %s1747
    %v1749 = vpop.permute.xlu0 %1748
    %s1751 = sor.u32 256, 16
    %1752 = vbcast.lane.b32.xlu0 %v1742, %s1751
    %v1753 = vpop.permute.xlu0 %1752
    %s1755 = sor.u32 256, 24
    %1756 = vbcast.lane.b32.xlu0 %v1742, %s1755
    %v1757 = vpop.permute.xlu0 %1756
    %s1759 = sor.u32 256, 32
    %1760 = vbcast.lane.b32.xlu0 %v1742, %s1759
    %v1761 = vpop.permute.xlu0 %1760
    %s1763 = sor.u32 256, 40
    %1764 = vbcast.lane.b32.xlu0 %v1742, %s1763
    %v1765 = vpop.permute.xlu0 %1764
    %s1767 = sor.u32 256, 48
    %1768 = vbcast.lane.b32.xlu0 %v1742, %s1767
    %v1769 = vpop.permute.xlu0 %1768
    %s1771 = sor.u32 256, 56
    %1772 = vbcast.lane.b32.xlu0 %v1742, %s1771
    %v1773 = vpop.permute.xlu0 %1772
    %s1775 = sor.u32 256, 64
    %1776 = vbcast.lane.b32.xlu0 %v1742, %s1775
    %v1777 = vpop.permute.xlu0 %1776
    %s1779 = sor.u32 256, 72
    %1780 = vbcast.lane.b32.xlu0 %v1742, %s1779
    %v1781 = vpop.permute.xlu0 %1780
    %s1783 = sor.u32 256, 80
    %1784 = vbcast.lane.b32.xlu0 %v1742, %s1783
    %v1785 = vpop.permute.xlu0 %1784
    %s1787 = sor.u32 256, 88
    %1788 = vbcast.lane.b32.xlu0 %v1742, %s1787
    %v1789 = vpop.permute.xlu0 %1788
    %s1791 = sor.u32 256, 96
    %1792 = vbcast.lane.b32.xlu0 %v1742, %s1791
    %v1793 = vpop.permute.xlu0 %1792
    %s1795 = sor.u32 256, 104
    %1796 = vbcast.lane.b32.xlu0 %v1742, %s1795
    %v1797 = vpop.permute.xlu0 %1796
    %s1799 = sor.u32 256, 112
    %1800 = vbcast.lane.b32.xlu0 %v1742, %s1799
    %v1801 = vpop.permute.xlu0 %1800
    %s1803 = sor.u32 256, 120
    %1804 = vbcast.lane.b32.xlu0 %v1742, %s1803
    %v1805 = vpop.permute.xlu0 %1804
    %v1806 = vlaneseq
    %v1807 = vshrl.u32 %v1806, 7
    %v1808 = vsub.s32 0, %v1807
    %v1809 = vrot.slane %v105, %v1808
    %1811 = vbcast.lane.b32.xlu0 %v1809, 256
    %v1812 = vpop.permute.xlu0 %1811
    %s1814 = sor.u32 256, 8
    %1815 = vbcast.lane.b32.xlu0 %v1809, %s1814
    %v1816 = vpop.permute.xlu0 %1815
    %s1818 = sor.u32 256, 16
    %1819 = vbcast.lane.b32.xlu0 %v1809, %s1818
    %v1820 = vpop.permute.xlu0 %1819
    %s1822 = sor.u32 256, 24
    %1823 = vbcast.lane.b32.xlu0 %v1809, %s1822
    %v1824 = vpop.permute.xlu0 %1823
    %s1826 = sor.u32 256, 32
    %1827 = vbcast.lane.b32.xlu0 %v1809, %s1826
    %v1828 = vpop.permute.xlu0 %1827
    %s1830 = sor.u32 256, 40
    %1831 = vbcast.lane.b32.xlu0 %v1809, %s1830
    %v1832 = vpop.permute.xlu0 %1831
    %s1834 = sor.u32 256, 48
    %1835 = vbcast.lane.b32.xlu0 %v1809, %s1834
    %v1836 = vpop.permute.xlu0 %1835
    %s1838 = sor.u32 256, 56
    %1839 = vbcast.lane.b32.xlu0 %v1809, %s1838
    %v1840 = vpop.permute.xlu0 %1839
    %s1842 = sor.u32 256, 64
    %1843 = vbcast.lane.b32.xlu0 %v1809, %s1842
    %v1844 = vpop.permute.xlu0 %1843
    %s1846 = sor.u32 256, 72
    %1847 = vbcast.lane.b32.xlu0 %v1809, %s1846
    %v1848 = vpop.permute.xlu0 %1847
    %s1850 = sor.u32 256, 80
    %1851 = vbcast.lane.b32.xlu0 %v1809, %s1850
    %v1852 = vpop.permute.xlu0 %1851
    %s1854 = sor.u32 256, 88
    %1855 = vbcast.lane.b32.xlu0 %v1809, %s1854
    %v1856 = vpop.permute.xlu0 %1855
    %s1858 = sor.u32 256, 96
    %1859 = vbcast.lane.b32.xlu0 %v1809, %s1858
    %v1860 = vpop.permute.xlu0 %1859
    %s1862 = sor.u32 256, 104
    %1863 = vbcast.lane.b32.xlu0 %v1809, %s1862
    %v1864 = vpop.permute.xlu0 %1863
    %s1866 = sor.u32 256, 112
    %1867 = vbcast.lane.b32.xlu0 %v1809, %s1866
    %v1868 = vpop.permute.xlu0 %1867
    %s1870 = sor.u32 256, 120
    %1871 = vbcast.lane.b32.xlu0 %v1809, %s1870
    %v1872 = vpop.permute.xlu0 %1871
    %v1873 = vlaneseq
    %v1874 = vshrl.u32 %v1873, 7
    %v1875 = vsub.s32 1, %v1874
    %v1876 = vrot.slane %v104, %v1875
    %1878 = vbcast.lane.b32.xlu0 %v1876, 256
    %v1879 = vpop.permute.xlu0 %1878
    %s1881 = sor.u32 256, 8
    %1882 = vbcast.lane.b32.xlu0 %v1876, %s1881
    %v1883 = vpop.permute.xlu0 %1882
    %s1885 = sor.u32 256, 16
    %1886 = vbcast.lane.b32.xlu0 %v1876, %s1885
    %v1887 = vpop.permute.xlu0 %1886
    %s1889 = sor.u32 256, 24
    %1890 = vbcast.lane.b32.xlu0 %v1876, %s1889
    %v1891 = vpop.permute.xlu0 %1890
    %s1893 = sor.u32 256, 32
    %1894 = vbcast.lane.b32.xlu0 %v1876, %s1893
    %v1895 = vpop.permute.xlu0 %1894
    %s1897 = sor.u32 256, 40
    %1898 = vbcast.lane.b32.xlu0 %v1876, %s1897
    %v1899 = vpop.permute.xlu0 %1898
    %s1901 = sor.u32 256, 48
    %1902 = vbcast.lane.b32.xlu0 %v1876, %s1901
    %v1903 = vpop.permute.xlu0 %1902
    %s1905 = sor.u32 256, 56
    %1906 = vbcast.lane.b32.xlu0 %v1876, %s1905
    %v1907 = vpop.permute.xlu0 %1906
    %s1909 = sor.u32 256, 64
    %1910 = vbcast.lane.b32.xlu0 %v1876, %s1909
    %v1911 = vpop.permute.xlu0 %1910
    %s1913 = sor.u32 256, 72
    %1914 = vbcast.lane.b32.xlu0 %v1876, %s1913
    %v1915 = vpop.permute.xlu0 %1914
    %s1917 = sor.u32 256, 80
    %1918 = vbcast.lane.b32.xlu0 %v1876, %s1917
    %v1919 = vpop.permute.xlu0 %1918
    %s1921 = sor.u32 256, 88
    %1922 = vbcast.lane.b32.xlu0 %v1876, %s1921
    %v1923 = vpop.permute.xlu0 %1922
    %s1925 = sor.u32 256, 96
    %1926 = vbcast.lane.b32.xlu0 %v1876, %s1925
    %v1927 = vpop.permute.xlu0 %1926
    %s1929 = sor.u32 256, 104
    %1930 = vbcast.lane.b32.xlu0 %v1876, %s1929
    %v1931 = vpop.permute.xlu0 %1930
    %s1933 = sor.u32 256, 112
    %1934 = vbcast.lane.b32.xlu0 %v1876, %s1933
    %v1935 = vpop.permute.xlu0 %1934
    %s1937 = sor.u32 256, 120
    %1938 = vbcast.lane.b32.xlu0 %v1876, %s1937
    %v1939 = vpop.permute.xlu0 %1938
    %v1940 = vlaneseq
    %v1941 = vshrl.u32 %v1940, 7
    %v1942 = vsub.s32 1, %v1941
    %v1943 = vrot.slane %v105, %v1942
    %1945 = vbcast.lane.b32.xlu0 %v1943, 256
    %v1946 = vpop.permute.xlu0 %1945
    %s1948 = sor.u32 256, 8
    %1949 = vbcast.lane.b32.xlu0 %v1943, %s1948
    %v1950 = vpop.permute.xlu0 %1949
    %s1952 = sor.u32 256, 16
    %1953 = vbcast.lane.b32.xlu0 %v1943, %s1952
    %v1954 = vpop.permute.xlu0 %1953
    %s1956 = sor.u32 256, 24
    %1957 = vbcast.lane.b32.xlu0 %v1943, %s1956
    %v1958 = vpop.permute.xlu0 %1957
    %s1960 = sor.u32 256, 32
    %1961 = vbcast.lane.b32.xlu0 %v1943, %s1960
    %v1962 = vpop.permute.xlu0 %1961
    %s1964 = sor.u32 256, 40
    %1965 = vbcast.lane.b32.xlu0 %v1943, %s1964
    %v1966 = vpop.permute.xlu0 %1965
    %s1968 = sor.u32 256, 48
    %1969 = vbcast.lane.b32.xlu0 %v1943, %s1968
    %v1970 = vpop.permute.xlu0 %1969
    %s1972 = sor.u32 256, 56
    %1973 = vbcast.lane.b32.xlu0 %v1943, %s1972
    %v1974 = vpop.permute.xlu0 %1973
    %s1976 = sor.u32 256, 64
    %1977 = vbcast.lane.b32.xlu0 %v1943, %s1976
    %v1978 = vpop.permute.xlu0 %1977
    %s1980 = sor.u32 256, 72
    %1981 = vbcast.lane.b32.xlu0 %v1943, %s1980
    %v1982 = vpop.permute.xlu0 %1981
    %s1984 = sor.u32 256, 80
    %1985 = vbcast.lane.b32.xlu0 %v1943, %s1984
    %v1986 = vpop.permute.xlu0 %1985
    %s1988 = sor.u32 256, 88
    %1989 = vbcast.lane.b32.xlu0 %v1943, %s1988
    %v1990 = vpop.permute.xlu0 %1989
    %s1992 = sor.u32 256, 96
    %1993 = vbcast.lane.b32.xlu0 %v1943, %s1992
    %v1994 = vpop.permute.xlu0 %1993
    %s1996 = sor.u32 256, 104
    %1997 = vbcast.lane.b32.xlu0 %v1943, %s1996
    %v1998 = vpop.permute.xlu0 %1997
    %s2000 = sor.u32 256, 112
    %2001 = vbcast.lane.b32.xlu0 %v1943, %s2000
    %v2002 = vpop.permute.xlu0 %2001
    %s2004 = sor.u32 256, 120
    %2005 = vbcast.lane.b32.xlu0 %v1943, %s2004
    %v2006 = vpop.permute.xlu0 %2005
    %v2007 = vlaneseq
    %v2008 = vshrl.u32 %v2007, 7
    %v2009 = vsub.s32 2, %v2008
    %v2010 = vrot.slane %v104, %v2009
    %2012 = vbcast.lane.b32.xlu0 %v2010, 256
    %v2013 = vpop.permute.xlu0 %2012
    %s2015 = sor.u32 256, 8
    %2016 = vbcast.lane.b32.xlu0 %v2010, %s2015
    %v2017 = vpop.permute.xlu0 %2016
    %s2019 = sor.u32 256, 16
    %2020 = vbcast.lane.b32.xlu0 %v2010, %s2019
    %v2021 = vpop.permute.xlu0 %2020
    %s2023 = sor.u32 256, 24
    %2024 = vbcast.lane.b32.xlu0 %v2010, %s2023
    %v2025 = vpop.permute.xlu0 %2024
    %s2027 = sor.u32 256, 32
    %2028 = vbcast.lane.b32.xlu0 %v2010, %s2027
    %v2029 = vpop.permute.xlu0 %2028
    %s2031 = sor.u32 256, 40
    %2032 = vbcast.lane.b32.xlu0 %v2010, %s2031
    %v2033 = vpop.permute.xlu0 %2032
    %s2035 = sor.u32 256, 48
    %2036 = vbcast.lane.b32.xlu0 %v2010, %s2035
    %v2037 = vpop.permute.xlu0 %2036
    %s2039 = sor.u32 256, 56
    %2040 = vbcast.lane.b32.xlu0 %v2010, %s2039
    %v2041 = vpop.permute.xlu0 %2040
    %s2043 = sor.u32 256, 64
    %2044 = vbcast.lane.b32.xlu0 %v2010, %s2043
    %v2045 = vpop.permute.xlu0 %2044
    %s2047 = sor.u32 256, 72
    %2048 = vbcast.lane.b32.xlu0 %v2010, %s2047
    %v2049 = vpop.permute.xlu0 %2048
    %s2051 = sor.u32 256, 80
    %2052 = vbcast.lane.b32.xlu0 %v2010, %s2051
    %v2053 = vpop.permute.xlu0 %2052
    %s2055 = sor.u32 256, 88
    %2056 = vbcast.lane.b32.xlu0 %v2010, %s2055
    %v2057 = vpop.permute.xlu0 %2056
    %s2059 = sor.u32 256, 96
    %2060 = vbcast.lane.b32.xlu0 %v2010, %s2059
    %v2061 = vpop.permute.xlu0 %2060
    %s2063 = sor.u32 256, 104
    %2064 = vbcast.lane.b32.xlu0 %v2010, %s2063
    %v2065 = vpop.permute.xlu0 %2064
    %s2067 = sor.u32 256, 112
    %2068 = vbcast.lane.b32.xlu0 %v2010, %s2067
    %v2069 = vpop.permute.xlu0 %2068
    %s2071 = sor.u32 256, 120
    %2072 = vbcast.lane.b32.xlu0 %v2010, %s2071
    %v2073 = vpop.permute.xlu0 %2072
    %v2074 = vlaneseq
    %v2075 = vshrl.u32 %v2074, 7
    %v2076 = vsub.s32 2, %v2075
    %v2077 = vrot.slane %v105, %v2076
    %2079 = vbcast.lane.b32.xlu0 %v2077, 256
    %v2080 = vpop.permute.xlu0 %2079
    %s2082 = sor.u32 256, 8
    %2083 = vbcast.lane.b32.xlu0 %v2077, %s2082
    %v2084 = vpop.permute.xlu0 %2083
    %s2086 = sor.u32 256, 16
    %2087 = vbcast.lane.b32.xlu0 %v2077, %s2086
    %v2088 = vpop.permute.xlu0 %2087
    %s2090 = sor.u32 256, 24
    %2091 = vbcast.lane.b32.xlu0 %v2077, %s2090
    %v2092 = vpop.permute.xlu0 %2091
    %s2094 = sor.u32 256, 32
    %2095 = vbcast.lane.b32.xlu0 %v2077, %s2094
    %v2096 = vpop.permute.xlu0 %2095
    %s2098 = sor.u32 256, 40
    %2099 = vbcast.lane.b32.xlu0 %v2077, %s2098
    %v2100 = vpop.permute.xlu0 %2099
    %s2102 = sor.u32 256, 48
    %2103 = vbcast.lane.b32.xlu0 %v2077, %s2102
    %v2104 = vpop.permute.xlu0 %2103
    %s2106 = sor.u32 256, 56
    %2107 = vbcast.lane.b32.xlu0 %v2077, %s2106
    %v2108 = vpop.permute.xlu0 %2107
    %s2110 = sor.u32 256, 64
    %2111 = vbcast.lane.b32.xlu0 %v2077, %s2110
    %v2112 = vpop.permute.xlu0 %2111
    %s2114 = sor.u32 256, 72
    %2115 = vbcast.lane.b32.xlu0 %v2077, %s2114
    %v2116 = vpop.permute.xlu0 %2115
    %s2118 = sor.u32 256, 80
    %2119 = vbcast.lane.b32.xlu0 %v2077, %s2118
    %v2120 = vpop.permute.xlu0 %2119
    %s2122 = sor.u32 256, 88
    %2123 = vbcast.lane.b32.xlu0 %v2077, %s2122
    %v2124 = vpop.permute.xlu0 %2123
    %s2126 = sor.u32 256, 96
    %2127 = vbcast.lane.b32.xlu0 %v2077, %s2126
    %v2128 = vpop.permute.xlu0 %2127
    %s2130 = sor.u32 256, 104
    %2131 = vbcast.lane.b32.xlu0 %v2077, %s2130
    %v2132 = vpop.permute.xlu0 %2131
    %s2134 = sor.u32 256, 112
    %2135 = vbcast.lane.b32.xlu0 %v2077, %s2134
    %v2136 = vpop.permute.xlu0 %2135
    %s2138 = sor.u32 256, 120
    %2139 = vbcast.lane.b32.xlu0 %v2077, %s2138
    %v2140 = vpop.permute.xlu0 %2139
    %v2141 = vlaneseq
    %v2142 = vshrl.u32 %v2141, 7
    %v2143 = vsub.s32 3, %v2142
    %v2144 = vrot.slane %v104, %v2143
    %2146 = vbcast.lane.b32.xlu0 %v2144, 256
    %v2147 = vpop.permute.xlu0 %2146
    %s2149 = sor.u32 256, 8
    %2150 = vbcast.lane.b32.xlu0 %v2144, %s2149
    %v2151 = vpop.permute.xlu0 %2150
    %s2153 = sor.u32 256, 16
    %2154 = vbcast.lane.b32.xlu0 %v2144, %s2153
    %v2155 = vpop.permute.xlu0 %2154
    %s2157 = sor.u32 256, 24
    %2158 = vbcast.lane.b32.xlu0 %v2144, %s2157
    %v2159 = vpop.permute.xlu0 %2158
    %s2161 = sor.u32 256, 32
    %2162 = vbcast.lane.b32.xlu0 %v2144, %s2161
    %v2163 = vpop.permute.xlu0 %2162
    %s2165 = sor.u32 256, 40
    %2166 = vbcast.lane.b32.xlu0 %v2144, %s2165
    %v2167 = vpop.permute.xlu0 %2166
    %s2169 = sor.u32 256, 48
    %2170 = vbcast.lane.b32.xlu0 %v2144, %s2169
    %v2171 = vpop.permute.xlu0 %2170
    %s2173 = sor.u32 256, 56
    %2174 = vbcast.lane.b32.xlu0 %v2144, %s2173
    %v2175 = vpop.permute.xlu0 %2174
    %s2177 = sor.u32 256, 64
    %2178 = vbcast.lane.b32.xlu0 %v2144, %s2177
    %v2179 = vpop.permute.xlu0 %2178
    %s2181 = sor.u32 256, 72
    %2182 = vbcast.lane.b32.xlu0 %v2144, %s2181
    %v2183 = vpop.permute.xlu0 %2182
    %s2185 = sor.u32 256, 80
    %2186 = vbcast.lane.b32.xlu0 %v2144, %s2185
    %v2187 = vpop.permute.xlu0 %2186
    %s2189 = sor.u32 256, 88
    %2190 = vbcast.lane.b32.xlu0 %v2144, %s2189
    %v2191 = vpop.permute.xlu0 %2190
    %s2193 = sor.u32 256, 96
    %2194 = vbcast.lane.b32.xlu0 %v2144, %s2193
    %v2195 = vpop.permute.xlu0 %2194
    %s2197 = sor.u32 256, 104
    %2198 = vbcast.lane.b32.xlu0 %v2144, %s2197
    %v2199 = vpop.permute.xlu0 %2198
    %s2201 = sor.u32 256, 112
    %2202 = vbcast.lane.b32.xlu0 %v2144, %s2201
    %v2203 = vpop.permute.xlu0 %2202
    %s2205 = sor.u32 256, 120
    %2206 = vbcast.lane.b32.xlu0 %v2144, %s2205
    %v2207 = vpop.permute.xlu0 %2206
    %v2208 = vlaneseq
    %v2209 = vshrl.u32 %v2208, 7
    %v2210 = vsub.s32 3, %v2209
    %v2211 = vrot.slane %v105, %v2210
    %2213 = vbcast.lane.b32.xlu0 %v2211, 256
    %v2214 = vpop.permute.xlu0 %2213
    %s2216 = sor.u32 256, 8
    %2217 = vbcast.lane.b32.xlu0 %v2211, %s2216
    %v2218 = vpop.permute.xlu0 %2217
    %s2220 = sor.u32 256, 16
    %2221 = vbcast.lane.b32.xlu0 %v2211, %s2220
    %v2222 = vpop.permute.xlu0 %2221
    %s2224 = sor.u32 256, 24
    %2225 = vbcast.lane.b32.xlu0 %v2211, %s2224
    %v2226 = vpop.permute.xlu0 %2225
    %s2228 = sor.u32 256, 32
    %2229 = vbcast.lane.b32.xlu0 %v2211, %s2228
    %v2230 = vpop.permute.xlu0 %2229
    %s2232 = sor.u32 256, 40
    %2233 = vbcast.lane.b32.xlu0 %v2211, %s2232
    %v2234 = vpop.permute.xlu0 %2233
    %s2236 = sor.u32 256, 48
    %2237 = vbcast.lane.b32.xlu0 %v2211, %s2236
    %v2238 = vpop.permute.xlu0 %2237
    %s2240 = sor.u32 256, 56
    %2241 = vbcast.lane.b32.xlu0 %v2211, %s2240
    %v2242 = vpop.permute.xlu0 %2241
    %s2244 = sor.u32 256, 64
    %2245 = vbcast.lane.b32.xlu0 %v2211, %s2244
    %v2246 = vpop.permute.xlu0 %2245
    %s2248 = sor.u32 256, 72
    %2249 = vbcast.lane.b32.xlu0 %v2211, %s2248
    %v2250 = vpop.permute.xlu0 %2249
    %s2252 = sor.u32 256, 80
    %2253 = vbcast.lane.b32.xlu0 %v2211, %s2252
    %v2254 = vpop.permute.xlu0 %2253
    %s2256 = sor.u32 256, 88
    %2257 = vbcast.lane.b32.xlu0 %v2211, %s2256
    %v2258 = vpop.permute.xlu0 %2257
    %s2260 = sor.u32 256, 96
    %2261 = vbcast.lane.b32.xlu0 %v2211, %s2260
    %v2262 = vpop.permute.xlu0 %2261
    %s2264 = sor.u32 256, 104
    %2265 = vbcast.lane.b32.xlu0 %v2211, %s2264
    %v2266 = vpop.permute.xlu0 %2265
    %s2268 = sor.u32 256, 112
    %2269 = vbcast.lane.b32.xlu0 %v2211, %s2268
    %v2270 = vpop.permute.xlu0 %2269
    %s2272 = sor.u32 256, 120
    %2273 = vbcast.lane.b32.xlu0 %v2211, %s2272
    %v2274 = vpop.permute.xlu0 %2273
    %v2275 = vlaneseq
    %v2276 = vshrl.u32 %v2275, 7
    %v2277 = vsub.s32 4, %v2276
    %v2278 = vrot.slane %v104, %v2277
    %2280 = vbcast.lane.b32.xlu0 %v2278, 256
    %v2281 = vpop.permute.xlu0 %2280
    %s2283 = sor.u32 256, 8
    %2284 = vbcast.lane.b32.xlu0 %v2278, %s2283
    %v2285 = vpop.permute.xlu0 %2284
    %s2287 = sor.u32 256, 16
    %2288 = vbcast.lane.b32.xlu0 %v2278, %s2287
    %v2289 = vpop.permute.xlu0 %2288
    %s2291 = sor.u32 256, 24
    %2292 = vbcast.lane.b32.xlu0 %v2278, %s2291
    %v2293 = vpop.permute.xlu0 %2292
    %s2295 = sor.u32 256, 32
    %2296 = vbcast.lane.b32.xlu0 %v2278, %s2295
    %v2297 = vpop.permute.xlu0 %2296
    %s2299 = sor.u32 256, 40
    %2300 = vbcast.lane.b32.xlu0 %v2278, %s2299
    %v2301 = vpop.permute.xlu0 %2300
    %s2303 = sor.u32 256, 48
    %2304 = vbcast.lane.b32.xlu0 %v2278, %s2303
    %v2305 = vpop.permute.xlu0 %2304
    %s2307 = sor.u32 256, 56
    %2308 = vbcast.lane.b32.xlu0 %v2278, %s2307
    %v2309 = vpop.permute.xlu0 %2308
    %s2311 = sor.u32 256, 64
    %2312 = vbcast.lane.b32.xlu0 %v2278, %s2311
    %v2313 = vpop.permute.xlu0 %2312
    %s2315 = sor.u32 256, 72
    %2316 = vbcast.lane.b32.xlu0 %v2278, %s2315
    %v2317 = vpop.permute.xlu0 %2316
    %s2319 = sor.u32 256, 80
    %2320 = vbcast.lane.b32.xlu0 %v2278, %s2319
    %v2321 = vpop.permute.xlu0 %2320
    %s2323 = sor.u32 256, 88
    %2324 = vbcast.lane.b32.xlu0 %v2278, %s2323
    %v2325 = vpop.permute.xlu0 %2324
    %s2327 = sor.u32 256, 96
    %2328 = vbcast.lane.b32.xlu0 %v2278, %s2327
    %v2329 = vpop.permute.xlu0 %2328
    %s2331 = sor.u32 256, 104
    %2332 = vbcast.lane.b32.xlu0 %v2278, %s2331
    %v2333 = vpop.permute.xlu0 %2332
    %s2335 = sor.u32 256, 112
    %2336 = vbcast.lane.b32.xlu0 %v2278, %s2335
    %v2337 = vpop.permute.xlu0 %2336
    %s2339 = sor.u32 256, 120
    %2340 = vbcast.lane.b32.xlu0 %v2278, %s2339
    %v2341 = vpop.permute.xlu0 %2340
    %v2342 = vlaneseq
    %v2343 = vshrl.u32 %v2342, 7
    %v2344 = vsub.s32 4, %v2343
    %v2345 = vrot.slane %v105, %v2344
    %2347 = vbcast.lane.b32.xlu0 %v2345, 256
    %v2348 = vpop.permute.xlu0 %2347
    %s2350 = sor.u32 256, 8
    %2351 = vbcast.lane.b32.xlu0 %v2345, %s2350
    %v2352 = vpop.permute.xlu0 %2351
    %s2354 = sor.u32 256, 16
    %2355 = vbcast.lane.b32.xlu0 %v2345, %s2354
    %v2356 = vpop.permute.xlu0 %2355
    %s2358 = sor.u32 256, 24
    %2359 = vbcast.lane.b32.xlu0 %v2345, %s2358
    %v2360 = vpop.permute.xlu0 %2359
    %s2362 = sor.u32 256, 32
    %2363 = vbcast.lane.b32.xlu0 %v2345, %s2362
    %v2364 = vpop.permute.xlu0 %2363
    %s2366 = sor.u32 256, 40
    %2367 = vbcast.lane.b32.xlu0 %v2345, %s2366
    %v2368 = vpop.permute.xlu0 %2367
    %s2370 = sor.u32 256, 48
    %2371 = vbcast.lane.b32.xlu0 %v2345, %s2370
    %v2372 = vpop.permute.xlu0 %2371
    %s2374 = sor.u32 256, 56
    %2375 = vbcast.lane.b32.xlu0 %v2345, %s2374
    %v2376 = vpop.permute.xlu0 %2375
    %s2378 = sor.u32 256, 64
    %2379 = vbcast.lane.b32.xlu0 %v2345, %s2378
    %v2380 = vpop.permute.xlu0 %2379
    %s2382 = sor.u32 256, 72
    %2383 = vbcast.lane.b32.xlu0 %v2345, %s2382
    %v2384 = vpop.permute.xlu0 %2383
    %s2386 = sor.u32 256, 80
    %2387 = vbcast.lane.b32.xlu0 %v2345, %s2386
    %v2388 = vpop.permute.xlu0 %2387
    %s2390 = sor.u32 256, 88
    %2391 = vbcast.lane.b32.xlu0 %v2345, %s2390
    %v2392 = vpop.permute.xlu0 %2391
    %s2394 = sor.u32 256, 96
    %2395 = vbcast.lane.b32.xlu0 %v2345, %s2394
    %v2396 = vpop.permute.xlu0 %2395
    %s2398 = sor.u32 256, 104
    %2399 = vbcast.lane.b32.xlu0 %v2345, %s2398
    %v2400 = vpop.permute.xlu0 %2399
    %s2402 = sor.u32 256, 112
    %2403 = vbcast.lane.b32.xlu0 %v2345, %s2402
    %v2404 = vpop.permute.xlu0 %2403
    %s2406 = sor.u32 256, 120
    %2407 = vbcast.lane.b32.xlu0 %v2345, %s2406
    %v2408 = vpop.permute.xlu0 %2407
    %v2409 = vlaneseq
    %v2410 = vshrl.u32 %v2409, 7
    %v2411 = vsub.s32 5, %v2410
    %v2412 = vrot.slane %v104, %v2411
    %2414 = vbcast.lane.b32.xlu0 %v2412, 256
    %v2415 = vpop.permute.xlu0 %2414
    %s2417 = sor.u32 256, 8
    %2418 = vbcast.lane.b32.xlu0 %v2412, %s2417
    %v2419 = vpop.permute.xlu0 %2418
    %s2421 = sor.u32 256, 16
    %2422 = vbcast.lane.b32.xlu0 %v2412, %s2421
    %v2423 = vpop.permute.xlu0 %2422
    %s2425 = sor.u32 256, 24
    %2426 = vbcast.lane.b32.xlu0 %v2412, %s2425
    %v2427 = vpop.permute.xlu0 %2426
    %s2429 = sor.u32 256, 32
    %2430 = vbcast.lane.b32.xlu0 %v2412, %s2429
    %v2431 = vpop.permute.xlu0 %2430
    %s2433 = sor.u32 256, 40
    %2434 = vbcast.lane.b32.xlu0 %v2412, %s2433
    %v2435 = vpop.permute.xlu0 %2434
    %s2437 = sor.u32 256, 48
    %2438 = vbcast.lane.b32.xlu0 %v2412, %s2437
    %v2439 = vpop.permute.xlu0 %2438
    %s2441 = sor.u32 256, 56
    %2442 = vbcast.lane.b32.xlu0 %v2412, %s2441
    %v2443 = vpop.permute.xlu0 %2442
    %s2445 = sor.u32 256, 64
    %2446 = vbcast.lane.b32.xlu0 %v2412, %s2445
    %v2447 = vpop.permute.xlu0 %2446
    %s2449 = sor.u32 256, 72
    %2450 = vbcast.lane.b32.xlu0 %v2412, %s2449
    %v2451 = vpop.permute.xlu0 %2450
    %s2453 = sor.u32 256, 80
    %2454 = vbcast.lane.b32.xlu0 %v2412, %s2453
    %v2455 = vpop.permute.xlu0 %2454
    %s2457 = sor.u32 256, 88
    %2458 = vbcast.lane.b32.xlu0 %v2412, %s2457
    %v2459 = vpop.permute.xlu0 %2458
    %s2461 = sor.u32 256, 96
    %2462 = vbcast.lane.b32.xlu0 %v2412, %s2461
    %v2463 = vpop.permute.xlu0 %2462
    %s2465 = sor.u32 256, 104
    %2466 = vbcast.lane.b32.xlu0 %v2412, %s2465
    %v2467 = vpop.permute.xlu0 %2466
    %s2469 = sor.u32 256, 112
    %2470 = vbcast.lane.b32.xlu0 %v2412, %s2469
    %v2471 = vpop.permute.xlu0 %2470
    %s2473 = sor.u32 256, 120
    %2474 = vbcast.lane.b32.xlu0 %v2412, %s2473
    %v2475 = vpop.permute.xlu0 %2474
    %v2476 = vlaneseq
    %v2477 = vshrl.u32 %v2476, 7
    %v2478 = vsub.s32 5, %v2477
    %v2479 = vrot.slane %v105, %v2478
    %2481 = vbcast.lane.b32.xlu0 %v2479, 256
    %v2482 = vpop.permute.xlu0 %2481
    %s2484 = sor.u32 256, 8
    %2485 = vbcast.lane.b32.xlu0 %v2479, %s2484
    %v2486 = vpop.permute.xlu0 %2485
    %s2488 = sor.u32 256, 16
    %2489 = vbcast.lane.b32.xlu0 %v2479, %s2488
    %v2490 = vpop.permute.xlu0 %2489
    %s2492 = sor.u32 256, 24
    %2493 = vbcast.lane.b32.xlu0 %v2479, %s2492
    %v2494 = vpop.permute.xlu0 %2493
    %s2496 = sor.u32 256, 32
    %2497 = vbcast.lane.b32.xlu0 %v2479, %s2496
    %v2498 = vpop.permute.xlu0 %2497
    %s2500 = sor.u32 256, 40
    %2501 = vbcast.lane.b32.xlu0 %v2479, %s2500
    %v2502 = vpop.permute.xlu0 %2501
    %s2504 = sor.u32 256, 48
    %2505 = vbcast.lane.b32.xlu0 %v2479, %s2504
    %v2506 = vpop.permute.xlu0 %2505
    %s2508 = sor.u32 256, 56
    %2509 = vbcast.lane.b32.xlu0 %v2479, %s2508
    %v2510 = vpop.permute.xlu0 %2509
    %s2512 = sor.u32 256, 64
    %2513 = vbcast.lane.b32.xlu0 %v2479, %s2512
    %v2514 = vpop.permute.xlu0 %2513
    %s2516 = sor.u32 256, 72
    %2517 = vbcast.lane.b32.xlu0 %v2479, %s2516
    %v2518 = vpop.permute.xlu0 %2517
    %s2520 = sor.u32 256, 80
    %2521 = vbcast.lane.b32.xlu0 %v2479, %s2520
    %v2522 = vpop.permute.xlu0 %2521
    %s2524 = sor.u32 256, 88
    %2525 = vbcast.lane.b32.xlu0 %v2479, %s2524
    %v2526 = vpop.permute.xlu0 %2525
    %s2528 = sor.u32 256, 96
    %2529 = vbcast.lane.b32.xlu0 %v2479, %s2528
    %v2530 = vpop.permute.xlu0 %2529
    %s2532 = sor.u32 256, 104
    %2533 = vbcast.lane.b32.xlu0 %v2479, %s2532
    %v2534 = vpop.permute.xlu0 %2533
    %s2536 = sor.u32 256, 112
    %2537 = vbcast.lane.b32.xlu0 %v2479, %s2536
    %v2538 = vpop.permute.xlu0 %2537
    %s2540 = sor.u32 256, 120
    %2541 = vbcast.lane.b32.xlu0 %v2479, %s2540
    %v2542 = vpop.permute.xlu0 %2541
    %v2543 = vlaneseq
    %v2544 = vshrl.u32 %v2543, 7
    %v2545 = vsub.s32 6, %v2544
    %v2546 = vrot.slane %v104, %v2545
    %2548 = vbcast.lane.b32.xlu0 %v2546, 256
    %v2549 = vpop.permute.xlu0 %2548
    %s2551 = sor.u32 256, 8
    %2552 = vbcast.lane.b32.xlu0 %v2546, %s2551
    %v2553 = vpop.permute.xlu0 %2552
    %s2555 = sor.u32 256, 16
    %2556 = vbcast.lane.b32.xlu0 %v2546, %s2555
    %v2557 = vpop.permute.xlu0 %2556
    %s2559 = sor.u32 256, 24
    %2560 = vbcast.lane.b32.xlu0 %v2546, %s2559
    %v2561 = vpop.permute.xlu0 %2560
    %s2563 = sor.u32 256, 32
    %2564 = vbcast.lane.b32.xlu0 %v2546, %s2563
    %v2565 = vpop.permute.xlu0 %2564
    %s2567 = sor.u32 256, 40
    %2568 = vbcast.lane.b32.xlu0 %v2546, %s2567
    %v2569 = vpop.permute.xlu0 %2568
    %s2571 = sor.u32 256, 48
    %2572 = vbcast.lane.b32.xlu0 %v2546, %s2571
    %v2573 = vpop.permute.xlu0 %2572
    %s2575 = sor.u32 256, 56
    %2576 = vbcast.lane.b32.xlu0 %v2546, %s2575
    %v2577 = vpop.permute.xlu0 %2576
    %s2579 = sor.u32 256, 64
    %2580 = vbcast.lane.b32.xlu0 %v2546, %s2579
    %v2581 = vpop.permute.xlu0 %2580
    %s2583 = sor.u32 256, 72
    %2584 = vbcast.lane.b32.xlu0 %v2546, %s2583
    %v2585 = vpop.permute.xlu0 %2584
    %s2587 = sor.u32 256, 80
    %2588 = vbcast.lane.b32.xlu0 %v2546, %s2587
    %v2589 = vpop.permute.xlu0 %2588
    %s2591 = sor.u32 256, 88
    %2592 = vbcast.lane.b32.xlu0 %v2546, %s2591
    %v2593 = vpop.permute.xlu0 %2592
    %s2595 = sor.u32 256, 96
    %2596 = vbcast.lane.b32.xlu0 %v2546, %s2595
    %v2597 = vpop.permute.xlu0 %2596
    %s2599 = sor.u32 256, 104
    %2600 = vbcast.lane.b32.xlu0 %v2546, %s2599
    %v2601 = vpop.permute.xlu0 %2600
    %s2603 = sor.u32 256, 112
    %2604 = vbcast.lane.b32.xlu0 %v2546, %s2603
    %v2605 = vpop.permute.xlu0 %2604
    %s2607 = sor.u32 256, 120
    %2608 = vbcast.lane.b32.xlu0 %v2546, %s2607
    %v2609 = vpop.permute.xlu0 %2608
    %v2610 = vlaneseq
    %v2611 = vshrl.u32 %v2610, 7
    %v2612 = vsub.s32 6, %v2611
    %v2613 = vrot.slane %v105, %v2612
    %2615 = vbcast.lane.b32.xlu0 %v2613, 256
    %v2616 = vpop.permute.xlu0 %2615
    %s2618 = sor.u32 256, 8
    %2619 = vbcast.lane.b32.xlu0 %v2613, %s2618
    %v2620 = vpop.permute.xlu0 %2619
    %s2622 = sor.u32 256, 16
    %2623 = vbcast.lane.b32.xlu0 %v2613, %s2622
    %v2624 = vpop.permute.xlu0 %2623
    %s2626 = sor.u32 256, 24
    %2627 = vbcast.lane.b32.xlu0 %v2613, %s2626
    %v2628 = vpop.permute.xlu0 %2627
    %s2630 = sor.u32 256, 32
    %2631 = vbcast.lane.b32.xlu0 %v2613, %s2630
    %v2632 = vpop.permute.xlu0 %2631
    %s2634 = sor.u32 256, 40
    %2635 = vbcast.lane.b32.xlu0 %v2613, %s2634
    %v2636 = vpop.permute.xlu0 %2635
    %s2638 = sor.u32 256, 48
    %2639 = vbcast.lane.b32.xlu0 %v2613, %s2638
    %v2640 = vpop.permute.xlu0 %2639
    %s2642 = sor.u32 256, 56
    %2643 = vbcast.lane.b32.xlu0 %v2613, %s2642
    %v2644 = vpop.permute.xlu0 %2643
    %s2646 = sor.u32 256, 64
    %2647 = vbcast.lane.b32.xlu0 %v2613, %s2646
    %v2648 = vpop.permute.xlu0 %2647
    %s2650 = sor.u32 256, 72
    %2651 = vbcast.lane.b32.xlu0 %v2613, %s2650
    %v2652 = vpop.permute.xlu0 %2651
    %s2654 = sor.u32 256, 80
    %2655 = vbcast.lane.b32.xlu0 %v2613, %s2654
    %v2656 = vpop.permute.xlu0 %2655
    %s2658 = sor.u32 256, 88
    %2659 = vbcast.lane.b32.xlu0 %v2613, %s2658
    %v2660 = vpop.permute.xlu0 %2659
    %s2662 = sor.u32 256, 96
    %2663 = vbcast.lane.b32.xlu0 %v2613, %s2662
    %v2664 = vpop.permute.xlu0 %2663
    %s2666 = sor.u32 256, 104
    %2667 = vbcast.lane.b32.xlu0 %v2613, %s2666
    %v2668 = vpop.permute.xlu0 %2667
    %s2670 = sor.u32 256, 112
    %2671 = vbcast.lane.b32.xlu0 %v2613, %s2670
    %v2672 = vpop.permute.xlu0 %2671
    %s2674 = sor.u32 256, 120
    %2675 = vbcast.lane.b32.xlu0 %v2613, %s2674
    %v2676 = vpop.permute.xlu0 %2675
    %v2677 = vlaneseq
    %v2678 = vshrl.u32 %v2677, 7
    %v2679 = vsub.s32 7, %v2678
    %v2680 = vrot.slane %v104, %v2679
    %2682 = vbcast.lane.b32.xlu0 %v2680, 256
    %v2683 = vpop.permute.xlu0 %2682
    %s2685 = sor.u32 256, 8
    %2686 = vbcast.lane.b32.xlu0 %v2680, %s2685
    %v2687 = vpop.permute.xlu0 %2686
    %s2689 = sor.u32 256, 16
    %2690 = vbcast.lane.b32.xlu0 %v2680, %s2689
    %v2691 = vpop.permute.xlu0 %2690
    %s2693 = sor.u32 256, 24
    %2694 = vbcast.lane.b32.xlu0 %v2680, %s2693
    %v2695 = vpop.permute.xlu0 %2694
    %s2697 = sor.u32 256, 32
    %2698 = vbcast.lane.b32.xlu0 %v2680, %s2697
    %v2699 = vpop.permute.xlu0 %2698
    %s2701 = sor.u32 256, 40
    %2702 = vbcast.lane.b32.xlu0 %v2680, %s2701
    %v2703 = vpop.permute.xlu0 %2702
    %s2705 = sor.u32 256, 48
    %2706 = vbcast.lane.b32.xlu0 %v2680, %s2705
    %v2707 = vpop.permute.xlu0 %2706
    %s2709 = sor.u32 256, 56
    %2710 = vbcast.lane.b32.xlu0 %v2680, %s2709
    %v2711 = vpop.permute.xlu0 %2710
    %s2713 = sor.u32 256, 64
    %2714 = vbcast.lane.b32.xlu0 %v2680, %s2713
    %v2715 = vpop.permute.xlu0 %2714
    %s2717 = sor.u32 256, 72
    %2718 = vbcast.lane.b32.xlu0 %v2680, %s2717
    %v2719 = vpop.permute.xlu0 %2718
    %s2721 = sor.u32 256, 80
    %2722 = vbcast.lane.b32.xlu0 %v2680, %s2721
    %v2723 = vpop.permute.xlu0 %2722
    %s2725 = sor.u32 256, 88
    %2726 = vbcast.lane.b32.xlu0 %v2680, %s2725
    %v2727 = vpop.permute.xlu0 %2726
    %s2729 = sor.u32 256, 96
    %2730 = vbcast.lane.b32.xlu0 %v2680, %s2729
    %v2731 = vpop.permute.xlu0 %2730
    %s2733 = sor.u32 256, 104
    %2734 = vbcast.lane.b32.xlu0 %v2680, %s2733
    %v2735 = vpop.permute.xlu0 %2734
    %s2737 = sor.u32 256, 112
    %2738 = vbcast.lane.b32.xlu0 %v2680, %s2737
    %v2739 = vpop.permute.xlu0 %2738
    %s2741 = sor.u32 256, 120
    %2742 = vbcast.lane.b32.xlu0 %v2680, %s2741
    %v2743 = vpop.permute.xlu0 %2742
    %v2744 = vlaneseq
    %v2745 = vshrl.u32 %v2744, 7
    %v2746 = vsub.s32 7, %v2745
    %v2747 = vrot.slane %v105, %v2746
    %2749 = vbcast.lane.b32.xlu0 %v2747, 256
    %v2750 = vpop.permute.xlu0 %2749
    %s2752 = sor.u32 256, 8
    %2753 = vbcast.lane.b32.xlu0 %v2747, %s2752
    %v2754 = vpop.permute.xlu0 %2753
    %s2756 = sor.u32 256, 16
    %2757 = vbcast.lane.b32.xlu0 %v2747, %s2756
    %v2758 = vpop.permute.xlu0 %2757
    %s2760 = sor.u32 256, 24
    %2761 = vbcast.lane.b32.xlu0 %v2747, %s2760
    %v2762 = vpop.permute.xlu0 %2761
    %s2764 = sor.u32 256, 32
    %2765 = vbcast.lane.b32.xlu0 %v2747, %s2764
    %v2766 = vpop.permute.xlu0 %2765
    %s2768 = sor.u32 256, 40
    %2769 = vbcast.lane.b32.xlu0 %v2747, %s2768
    %v2770 = vpop.permute.xlu0 %2769
    %s2772 = sor.u32 256, 48
    %2773 = vbcast.lane.b32.xlu0 %v2747, %s2772
    %v2774 = vpop.permute.xlu0 %2773
    %s2776 = sor.u32 256, 56
    %2777 = vbcast.lane.b32.xlu0 %v2747, %s2776
    %v2778 = vpop.permute.xlu0 %2777
    %s2780 = sor.u32 256, 64
    %2781 = vbcast.lane.b32.xlu0 %v2747, %s2780
    %v2782 = vpop.permute.xlu0 %2781
    %s2784 = sor.u32 256, 72
    %2785 = vbcast.lane.b32.xlu0 %v2747, %s2784
    %v2786 = vpop.permute.xlu0 %2785
    %s2788 = sor.u32 256, 80
    %2789 = vbcast.lane.b32.xlu0 %v2747, %s2788
    %v2790 = vpop.permute.xlu0 %2789
    %s2792 = sor.u32 256, 88
    %2793 = vbcast.lane.b32.xlu0 %v2747, %s2792
    %v2794 = vpop.permute.xlu0 %2793
    %s2796 = sor.u32 256, 96
    %2797 = vbcast.lane.b32.xlu0 %v2747, %s2796
    %v2798 = vpop.permute.xlu0 %2797
    %s2800 = sor.u32 256, 104
    %2801 = vbcast.lane.b32.xlu0 %v2747, %s2800
    %v2802 = vpop.permute.xlu0 %2801
    %s2804 = sor.u32 256, 112
    %2805 = vbcast.lane.b32.xlu0 %v2747, %s2804
    %v2806 = vpop.permute.xlu0 %2805
    %s2808 = sor.u32 256, 120
    %2809 = vbcast.lane.b32.xlu0 %v2747, %s2808
    %v2810 = vpop.permute.xlu0 %2809
    %v2811 = vsub.f32 %v1483, %v1745
    %v2812 = vsub.f32 %v1484, %v1749
    %v2813 = vsub.f32 %v1485, %v1753
    %v2814 = vsub.f32 %v1486, %v1757
    %v2815 = vsub.f32 %v1487, %v1761
    %v2816 = vsub.f32 %v1488, %v1765
    %v2817 = vsub.f32 %v1489, %v1769
    %v2818 = vsub.f32 %v1490, %v1773
    %v2819 = vsub.f32 %v1491, %v1777
    %v2820 = vsub.f32 %v1492, %v1781
    %v2821 = vsub.f32 %v1493, %v1785
    %v2822 = vsub.f32 %v1494, %v1789
    %v2823 = vsub.f32 %v1495, %v1793
    %v2824 = vsub.f32 %v1496, %v1797
    %v2825 = vsub.f32 %v1497, %v1801
    %v2826 = vsub.f32 %v1498, %v1805
    %v2827 = vsub.f32 %v1499, %v1812
    %v2828 = vsub.f32 %v1500, %v1816
    %v2829 = vsub.f32 %v1501, %v1820
    %v2830 = vsub.f32 %v1502, %v1824
    %v2831 = vsub.f32 %v1503, %v1828
    %v2832 = vsub.f32 %v1504, %v1832
    %v2833 = vsub.f32 %v1505, %v1836
    %v2834 = vsub.f32 %v1506, %v1840
    %v2835 = vsub.f32 %v1507, %v1844
    %v2836 = vsub.f32 %v1508, %v1848
    %v2837 = vsub.f32 %v1509, %v1852
    %v2838 = vsub.f32 %v1510, %v1856
    %v2839 = vsub.f32 %v1511, %v1860
    %v2840 = vsub.f32 %v1512, %v1864
    %v2841 = vsub.f32 %v1513, %v1868
    %v2842 = vsub.f32 %v1514, %v1872
    %v2843 = vsub.f32 %v1515, %v1879
    %v2844 = vsub.f32 %v1516, %v1883
    %v2845 = vsub.f32 %v1517, %v1887
    %v2846 = vsub.f32 %v1518, %v1891
    %v2847 = vsub.f32 %v1519, %v1895
    %v2848 = vsub.f32 %v1520, %v1899
    %v2849 = vsub.f32 %v1521, %v1903
    %v2850 = vsub.f32 %v1522, %v1907
    %v2851 = vsub.f32 %v1523, %v1911
    %v2852 = vsub.f32 %v1524, %v1915
    %v2853 = vsub.f32 %v1525, %v1919
    %v2854 = vsub.f32 %v1526, %v1923
    %v2855 = vsub.f32 %v1527, %v1927
    %v2856 = vsub.f32 %v1528, %v1931
    %v2857 = vsub.f32 %v1529, %v1935
    %v2858 = vsub.f32 %v1530, %v1939
    %v2859 = vsub.f32 %v1531, %v1946
    %v2860 = vsub.f32 %v1532, %v1950
    %v2861 = vsub.f32 %v1533, %v1954
    %v2862 = vsub.f32 %v1534, %v1958
    %v2863 = vsub.f32 %v1535, %v1962
    %v2864 = vsub.f32 %v1536, %v1966
    %v2865 = vsub.f32 %v1537, %v1970
    %v2866 = vsub.f32 %v1538, %v1974
    %v2867 = vsub.f32 %v1539, %v1978
    %v2868 = vsub.f32 %v1540, %v1982
    %v2869 = vsub.f32 %v1541, %v1986
    %v2870 = vsub.f32 %v1542, %v1990
    %v2871 = vsub.f32 %v1543, %v1994
    %v2872 = vsub.f32 %v1544, %v1998
    %v2873 = vsub.f32 %v1545, %v2002
    %v2874 = vsub.f32 %v1546, %v2006
    %v2875 = vsub.f32 %v1547, %v2013
    %v2876 = vsub.f32 %v1548, %v2017
    %v2877 = vsub.f32 %v1549, %v2021
    %v2878 = vsub.f32 %v1550, %v2025
    %v2879 = vsub.f32 %v1551, %v2029
    %v2880 = vsub.f32 %v1552, %v2033
    %v2881 = vsub.f32 %v1553, %v2037
    %v2882 = vsub.f32 %v1554, %v2041
    %v2883 = vsub.f32 %v1555, %v2045
    %v2884 = vsub.f32 %v1556, %v2049
    %v2885 = vsub.f32 %v1557, %v2053
    %v2886 = vsub.f32 %v1558, %v2057
    %v2887 = vsub.f32 %v1559, %v2061
    %v2888 = vsub.f32 %v1560, %v2065
    %v2889 = vsub.f32 %v1561, %v2069
    %v2890 = vsub.f32 %v1562, %v2073
    %v2891 = vsub.f32 %v1563, %v2080
    %v2892 = vsub.f32 %v1564, %v2084
    %v2893 = vsub.f32 %v1565, %v2088
    %v2894 = vsub.f32 %v1566, %v2092
    %v2895 = vsub.f32 %v1567, %v2096
    %v2896 = vsub.f32 %v1568, %v2100
    %v2897 = vsub.f32 %v1569, %v2104
    %v2898 = vsub.f32 %v1570, %v2108
    %v2899 = vsub.f32 %v1571, %v2112
    %v2900 = vsub.f32 %v1572, %v2116
    %v2901 = vsub.f32 %v1573, %v2120
    %v2902 = vsub.f32 %v1574, %v2124
    %v2903 = vsub.f32 %v1575, %v2128
    %v2904 = vsub.f32 %v1576, %v2132
    %v2905 = vsub.f32 %v1577, %v2136
    %v2906 = vsub.f32 %v1578, %v2140
    %v2907 = vsub.f32 %v1579, %v2147
    %v2908 = vsub.f32 %v1580, %v2151
    %v2909 = vsub.f32 %v1581, %v2155
    %v2910 = vsub.f32 %v1582, %v2159
    %v2911 = vsub.f32 %v1583, %v2163
    %v2912 = vsub.f32 %v1584, %v2167
    %v2913 = vsub.f32 %v1585, %v2171
    %v2914 = vsub.f32 %v1586, %v2175
    %v2915 = vsub.f32 %v1587, %v2179
    %v2916 = vsub.f32 %v1588, %v2183
    %v2917 = vsub.f32 %v1589, %v2187
    %v2918 = vsub.f32 %v1590, %v2191
    %v2919 = vsub.f32 %v1591, %v2195
    %v2920 = vsub.f32 %v1592, %v2199
    %v2921 = vsub.f32 %v1593, %v2203
    %v2922 = vsub.f32 %v1594, %v2207
    %v2923 = vsub.f32 %v1595, %v2214
    %v2924 = vsub.f32 %v1596, %v2218
    %v2925 = vsub.f32 %v1597, %v2222
    %v2926 = vsub.f32 %v1598, %v2226
    %v2927 = vsub.f32 %v1599, %v2230
    %v2928 = vsub.f32 %v1600, %v2234
    %v2929 = vsub.f32 %v1601, %v2238
    %v2930 = vsub.f32 %v1602, %v2242
    %v2931 = vsub.f32 %v1603, %v2246
    %v2932 = vsub.f32 %v1604, %v2250
    %v2933 = vsub.f32 %v1605, %v2254
    %v2934 = vsub.f32 %v1606, %v2258
    %v2935 = vsub.f32 %v1607, %v2262
    %v2936 = vsub.f32 %v1608, %v2266
    %v2937 = vsub.f32 %v1609, %v2270
    %v2938 = vsub.f32 %v1610, %v2274
    %v2939 = vsub.f32 %v1611, %v2281
    %v2940 = vsub.f32 %v1612, %v2285
    %v2941 = vsub.f32 %v1613, %v2289
    %v2942 = vsub.f32 %v1614, %v2293
    %v2943 = vsub.f32 %v1615, %v2297
    %v2944 = vsub.f32 %v1616, %v2301
    %v2945 = vsub.f32 %v1617, %v2305
    %v2946 = vsub.f32 %v1618, %v2309
    %v2947 = vsub.f32 %v1619, %v2313
    %v2948 = vsub.f32 %v1620, %v2317
    %v2949 = vsub.f32 %v1621, %v2321
    %v2950 = vsub.f32 %v1622, %v2325
    %v2951 = vsub.f32 %v1623, %v2329
    %v2952 = vsub.f32 %v1624, %v2333
    %v2953 = vsub.f32 %v1625, %v2337
    %v2954 = vsub.f32 %v1626, %v2341
    %v2955 = vsub.f32 %v1627, %v2348
    %v2956 = vsub.f32 %v1628, %v2352
    %v2957 = vsub.f32 %v1629, %v2356
    %v2958 = vsub.f32 %v1630, %v2360
    %v2959 = vsub.f32 %v1631, %v2364
    %v2960 = vsub.f32 %v1632, %v2368
    %v2961 = vsub.f32 %v1633, %v2372
    %v2962 = vsub.f32 %v1634, %v2376
    %v2963 = vsub.f32 %v1635, %v2380
    %v2964 = vsub.f32 %v1636, %v2384
    %v2965 = vsub.f32 %v1637, %v2388
    %v2966 = vsub.f32 %v1638, %v2392
    %v2967 = vsub.f32 %v1639, %v2396
    %v2968 = vsub.f32 %v1640, %v2400
    %v2969 = vsub.f32 %v1641, %v2404
    %v2970 = vsub.f32 %v1642, %v2408
    %v2971 = vsub.f32 %v1643, %v2415
    %v2972 = vsub.f32 %v1644, %v2419
    %v2973 = vsub.f32 %v1645, %v2423
    %v2974 = vsub.f32 %v1646, %v2427
    %v2975 = vsub.f32 %v1647, %v2431
    %v2976 = vsub.f32 %v1648, %v2435
    %v2977 = vsub.f32 %v1649, %v2439
    %v2978 = vsub.f32 %v1650, %v2443
    %v2979 = vsub.f32 %v1651, %v2447
    %v2980 = vsub.f32 %v1652, %v2451
    %v2981 = vsub.f32 %v1653, %v2455
    %v2982 = vsub.f32 %v1654, %v2459
    %v2983 = vsub.f32 %v1655, %v2463
    %v2984 = vsub.f32 %v1656, %v2467
    %v2985 = vsub.f32 %v1657, %v2471
    %v2986 = vsub.f32 %v1658, %v2475
    %v2987 = vsub.f32 %v1659, %v2482
    %v2988 = vsub.f32 %v1660, %v2486
    %v2989 = vsub.f32 %v1661, %v2490
    %v2990 = vsub.f32 %v1662, %v2494
    %v2991 = vsub.f32 %v1663, %v2498
    %v2992 = vsub.f32 %v1664, %v2502
    %v2993 = vsub.f32 %v1665, %v2506
    %v2994 = vsub.f32 %v1666, %v2510
    %v2995 = vsub.f32 %v1667, %v2514
    %v2996 = vsub.f32 %v1668, %v2518
    %v2997 = vsub.f32 %v1669, %v2522
    %v2998 = vsub.f32 %v1670, %v2526
    %v2999 = vsub.f32 %v1671, %v2530
    %v3000 = vsub.f32 %v1672, %v2534
    %v3001 = vsub.f32 %v1673, %v2538
    %v3002 = vsub.f32 %v1674, %v2542
    %v3003 = vsub.f32 %v1675, %v2549
    %v3004 = vsub.f32 %v1676, %v2553
    %v3005 = vsub.f32 %v1677, %v2557
    %v3006 = vsub.f32 %v1678, %v2561
    %v3007 = vsub.f32 %v1679, %v2565
    %v3008 = vsub.f32 %v1680, %v2569
    %v3009 = vsub.f32 %v1681, %v2573
    %v3010 = vsub.f32 %v1682, %v2577
    %v3011 = vsub.f32 %v1683, %v2581
    %v3012 = vsub.f32 %v1684, %v2585
    %v3013 = vsub.f32 %v1685, %v2589
    %v3014 = vsub.f32 %v1686, %v2593
    %v3015 = vsub.f32 %v1687, %v2597
    %v3016 = vsub.f32 %v1688, %v2601
    %v3017 = vsub.f32 %v1689, %v2605
    %v3018 = vsub.f32 %v1690, %v2609
    %v3019 = vsub.f32 %v1691, %v2616
    %v3020 = vsub.f32 %v1692, %v2620
    %v3021 = vsub.f32 %v1693, %v2624
    %v3022 = vsub.f32 %v1694, %v2628
    %v3023 = vsub.f32 %v1695, %v2632
    %v3024 = vsub.f32 %v1696, %v2636
    %v3025 = vsub.f32 %v1697, %v2640
    %v3026 = vsub.f32 %v1698, %v2644
    %v3027 = vsub.f32 %v1699, %v2648
    %v3028 = vsub.f32 %v1700, %v2652
    %v3029 = vsub.f32 %v1701, %v2656
    %v3030 = vsub.f32 %v1702, %v2660
    %v3031 = vsub.f32 %v1703, %v2664
    %v3032 = vsub.f32 %v1704, %v2668
    %v3033 = vsub.f32 %v1705, %v2672
    %v3034 = vsub.f32 %v1706, %v2676
    %v3035 = vsub.f32 %v1707, %v2683
    %v3036 = vsub.f32 %v1708, %v2687
    %v3037 = vsub.f32 %v1709, %v2691
    %v3038 = vsub.f32 %v1710, %v2695
    %v3039 = vsub.f32 %v1711, %v2699
    %v3040 = vsub.f32 %v1712, %v2703
    %v3041 = vsub.f32 %v1713, %v2707
    %v3042 = vsub.f32 %v1714, %v2711
    %v3043 = vsub.f32 %v1715, %v2715
    %v3044 = vsub.f32 %v1716, %v2719
    %v3045 = vsub.f32 %v1717, %v2723
    %v3046 = vsub.f32 %v1718, %v2727
    %v3047 = vsub.f32 %v1719, %v2731
    %v3048 = vsub.f32 %v1720, %v2735
    %v3049 = vsub.f32 %v1721, %v2739
    %v3050 = vsub.f32 %v1722, %v2743
    %v3051 = vsub.f32 %v1723, %v2750
    %v3052 = vsub.f32 %v1724, %v2754
    %v3053 = vsub.f32 %v1725, %v2758
    %v3054 = vsub.f32 %v1726, %v2762
    %v3055 = vsub.f32 %v1727, %v2766
    %v3056 = vsub.f32 %v1728, %v2770
    %v3057 = vsub.f32 %v1729, %v2774
    %v3058 = vsub.f32 %v1730, %v2778
    %v3059 = vsub.f32 %v1731, %v2782
    %v3060 = vsub.f32 %v1732, %v2786
    %v3061 = vsub.f32 %v1733, %v2790
    %v3062 = vsub.f32 %v1734, %v2794
    %v3063 = vsub.f32 %v1735, %v2798
    %v3064 = vsub.f32 %v1736, %v2802
    %v3065 = vsub.f32 %v1737, %v2806
    %v3066 = vsub.f32 %v1738, %v2810
    %v3067 = vlaneseq
    %v3068 = vshrl.u32 %v3067, 7
    %v3069 = vsub.s32 0, %v3068
    %v3070 = vrot.slane %v144, %v3069
    %3072 = vbcast.lane.b32.xlu0 %v3070, 256
    %v3073 = vpop.permute.xlu0 %3072
    %s3075 = sor.u32 256, 8
    %3076 = vbcast.lane.b32.xlu0 %v3070, %s3075
    %v3077 = vpop.permute.xlu0 %3076
    %s3079 = sor.u32 256, 16
    %3080 = vbcast.lane.b32.xlu0 %v3070, %s3079
    %v3081 = vpop.permute.xlu0 %3080
    %s3083 = sor.u32 256, 24
    %3084 = vbcast.lane.b32.xlu0 %v3070, %s3083
    %v3085 = vpop.permute.xlu0 %3084
    %s3087 = sor.u32 256, 32
    %3088 = vbcast.lane.b32.xlu0 %v3070, %s3087
    %v3089 = vpop.permute.xlu0 %3088
    %s3091 = sor.u32 256, 40
    %3092 = vbcast.lane.b32.xlu0 %v3070, %s3091
    %v3093 = vpop.permute.xlu0 %3092
    %s3095 = sor.u32 256, 48
    %3096 = vbcast.lane.b32.xlu0 %v3070, %s3095
    %v3097 = vpop.permute.xlu0 %3096
    %s3099 = sor.u32 256, 56
    %3100 = vbcast.lane.b32.xlu0 %v3070, %s3099
    %v3101 = vpop.permute.xlu0 %3100
    %s3103 = sor.u32 256, 64
    %3104 = vbcast.lane.b32.xlu0 %v3070, %s3103
    %v3105 = vpop.permute.xlu0 %3104
    %s3107 = sor.u32 256, 72
    %3108 = vbcast.lane.b32.xlu0 %v3070, %s3107
    %v3109 = vpop.permute.xlu0 %3108
    %s3111 = sor.u32 256, 80
    %3112 = vbcast.lane.b32.xlu0 %v3070, %s3111
    %v3113 = vpop.permute.xlu0 %3112
    %s3115 = sor.u32 256, 88
    %3116 = vbcast.lane.b32.xlu0 %v3070, %s3115
    %v3117 = vpop.permute.xlu0 %3116
    %s3119 = sor.u32 256, 96
    %3120 = vbcast.lane.b32.xlu0 %v3070, %s3119
    %v3121 = vpop.permute.xlu0 %3120
    %s3123 = sor.u32 256, 104
    %3124 = vbcast.lane.b32.xlu0 %v3070, %s3123
    %v3125 = vpop.permute.xlu0 %3124
    %s3127 = sor.u32 256, 112
    %3128 = vbcast.lane.b32.xlu0 %v3070, %s3127
    %v3129 = vpop.permute.xlu0 %3128
    %s3131 = sor.u32 256, 120
    %3132 = vbcast.lane.b32.xlu0 %v3070, %s3131
    %v3133 = vpop.permute.xlu0 %3132
    %v3134 = vlaneseq
    %v3135 = vshrl.u32 %v3134, 7
    %v3136 = vsub.s32 0, %v3135
    %v3137 = vrot.slane %v145, %v3136
    %3139 = vbcast.lane.b32.xlu0 %v3137, 256
    %v3140 = vpop.permute.xlu0 %3139
    %s3142 = sor.u32 256, 8
    %3143 = vbcast.lane.b32.xlu0 %v3137, %s3142
    %v3144 = vpop.permute.xlu0 %3143
    %s3146 = sor.u32 256, 16
    %3147 = vbcast.lane.b32.xlu0 %v3137, %s3146
    %v3148 = vpop.permute.xlu0 %3147
    %s3150 = sor.u32 256, 24
    %3151 = vbcast.lane.b32.xlu0 %v3137, %s3150
    %v3152 = vpop.permute.xlu0 %3151
    %s3154 = sor.u32 256, 32
    %3155 = vbcast.lane.b32.xlu0 %v3137, %s3154
    %v3156 = vpop.permute.xlu0 %3155
    %s3158 = sor.u32 256, 40
    %3159 = vbcast.lane.b32.xlu0 %v3137, %s3158
    %v3160 = vpop.permute.xlu0 %3159
    %s3162 = sor.u32 256, 48
    %3163 = vbcast.lane.b32.xlu0 %v3137, %s3162
    %v3164 = vpop.permute.xlu0 %3163
    %s3166 = sor.u32 256, 56
    %3167 = vbcast.lane.b32.xlu0 %v3137, %s3166
    %v3168 = vpop.permute.xlu0 %3167
    %s3170 = sor.u32 256, 64
    %3171 = vbcast.lane.b32.xlu0 %v3137, %s3170
    %v3172 = vpop.permute.xlu0 %3171
    %s3174 = sor.u32 256, 72
    %3175 = vbcast.lane.b32.xlu0 %v3137, %s3174
    %v3176 = vpop.permute.xlu0 %3175
    %s3178 = sor.u32 256, 80
    %3179 = vbcast.lane.b32.xlu0 %v3137, %s3178
    %v3180 = vpop.permute.xlu0 %3179
    %s3182 = sor.u32 256, 88
    %3183 = vbcast.lane.b32.xlu0 %v3137, %s3182
    %v3184 = vpop.permute.xlu0 %3183
    %s3186 = sor.u32 256, 96
    %3187 = vbcast.lane.b32.xlu0 %v3137, %s3186
    %v3188 = vpop.permute.xlu0 %3187
    %s3190 = sor.u32 256, 104
    %3191 = vbcast.lane.b32.xlu0 %v3137, %s3190
    %v3192 = vpop.permute.xlu0 %3191
    %s3194 = sor.u32 256, 112
    %3195 = vbcast.lane.b32.xlu0 %v3137, %s3194
    %v3196 = vpop.permute.xlu0 %3195
    %s3198 = sor.u32 256, 120
    %3199 = vbcast.lane.b32.xlu0 %v3137, %s3198
    %v3200 = vpop.permute.xlu0 %3199
    %v3201 = vlaneseq
    %v3202 = vshrl.u32 %v3201, 7
    %v3203 = vsub.s32 1, %v3202
    %v3204 = vrot.slane %v144, %v3203
    %3206 = vbcast.lane.b32.xlu0 %v3204, 256
    %v3207 = vpop.permute.xlu0 %3206
    %s3209 = sor.u32 256, 8
    %3210 = vbcast.lane.b32.xlu0 %v3204, %s3209
    %v3211 = vpop.permute.xlu0 %3210
    %s3213 = sor.u32 256, 16
    %3214 = vbcast.lane.b32.xlu0 %v3204, %s3213
    %v3215 = vpop.permute.xlu0 %3214
    %s3217 = sor.u32 256, 24
    %3218 = vbcast.lane.b32.xlu0 %v3204, %s3217
    %v3219 = vpop.permute.xlu0 %3218
    %s3221 = sor.u32 256, 32
    %3222 = vbcast.lane.b32.xlu0 %v3204, %s3221
    %v3223 = vpop.permute.xlu0 %3222
    %s3225 = sor.u32 256, 40
    %3226 = vbcast.lane.b32.xlu0 %v3204, %s3225
    %v3227 = vpop.permute.xlu0 %3226
    %s3229 = sor.u32 256, 48
    %3230 = vbcast.lane.b32.xlu0 %v3204, %s3229
    %v3231 = vpop.permute.xlu0 %3230
    %s3233 = sor.u32 256, 56
    %3234 = vbcast.lane.b32.xlu0 %v3204, %s3233
    %v3235 = vpop.permute.xlu0 %3234
    %s3237 = sor.u32 256, 64
    %3238 = vbcast.lane.b32.xlu0 %v3204, %s3237
    %v3239 = vpop.permute.xlu0 %3238
    %s3241 = sor.u32 256, 72
    %3242 = vbcast.lane.b32.xlu0 %v3204, %s3241
    %v3243 = vpop.permute.xlu0 %3242
    %s3245 = sor.u32 256, 80
    %3246 = vbcast.lane.b32.xlu0 %v3204, %s3245
    %v3247 = vpop.permute.xlu0 %3246
    %s3249 = sor.u32 256, 88
    %3250 = vbcast.lane.b32.xlu0 %v3204, %s3249
    %v3251 = vpop.permute.xlu0 %3250
    %s3253 = sor.u32 256, 96
    %3254 = vbcast.lane.b32.xlu0 %v3204, %s3253
    %v3255 = vpop.permute.xlu0 %3254
    %s3257 = sor.u32 256, 104
    %3258 = vbcast.lane.b32.xlu0 %v3204, %s3257
    %v3259 = vpop.permute.xlu0 %3258
    %s3261 = sor.u32 256, 112
    %3262 = vbcast.lane.b32.xlu0 %v3204, %s3261
    %v3263 = vpop.permute.xlu0 %3262
    %s3265 = sor.u32 256, 120
    %3266 = vbcast.lane.b32.xlu0 %v3204, %s3265
    %v3267 = vpop.permute.xlu0 %3266
    %v3268 = vlaneseq
    %v3269 = vshrl.u32 %v3268, 7
    %v3270 = vsub.s32 1, %v3269
    %v3271 = vrot.slane %v145, %v3270
    %3273 = vbcast.lane.b32.xlu0 %v3271, 256
    %v3274 = vpop.permute.xlu0 %3273
    %s3276 = sor.u32 256, 8
    %3277 = vbcast.lane.b32.xlu0 %v3271, %s3276
    %v3278 = vpop.permute.xlu0 %3277
    %s3280 = sor.u32 256, 16
    %3281 = vbcast.lane.b32.xlu0 %v3271, %s3280
    %v3282 = vpop.permute.xlu0 %3281
    %s3284 = sor.u32 256, 24
    %3285 = vbcast.lane.b32.xlu0 %v3271, %s3284
    %v3286 = vpop.permute.xlu0 %3285
    %s3288 = sor.u32 256, 32
    %3289 = vbcast.lane.b32.xlu0 %v3271, %s3288
    %v3290 = vpop.permute.xlu0 %3289
    %s3292 = sor.u32 256, 40
    %3293 = vbcast.lane.b32.xlu0 %v3271, %s3292
    %v3294 = vpop.permute.xlu0 %3293
    %s3296 = sor.u32 256, 48
    %3297 = vbcast.lane.b32.xlu0 %v3271, %s3296
    %v3298 = vpop.permute.xlu0 %3297
    %s3300 = sor.u32 256, 56
    %3301 = vbcast.lane.b32.xlu0 %v3271, %s3300
    %v3302 = vpop.permute.xlu0 %3301
    %s3304 = sor.u32 256, 64
    %3305 = vbcast.lane.b32.xlu0 %v3271, %s3304
    %v3306 = vpop.permute.xlu0 %3305
    %s3308 = sor.u32 256, 72
    %3309 = vbcast.lane.b32.xlu0 %v3271, %s3308
    %v3310 = vpop.permute.xlu0 %3309
    %s3312 = sor.u32 256, 80
    %3313 = vbcast.lane.b32.xlu0 %v3271, %s3312
    %v3314 = vpop.permute.xlu0 %3313
    %s3316 = sor.u32 256, 88
    %3317 = vbcast.lane.b32.xlu0 %v3271, %s3316
    %v3318 = vpop.permute.xlu0 %3317
    %s3320 = sor.u32 256, 96
    %3321 = vbcast.lane.b32.xlu0 %v3271, %s3320
    %v3322 = vpop.permute.xlu0 %3321
    %s3324 = sor.u32 256, 104
    %3325 = vbcast.lane.b32.xlu0 %v3271, %s3324
    %v3326 = vpop.permute.xlu0 %3325
    %s3328 = sor.u32 256, 112
    %3329 = vbcast.lane.b32.xlu0 %v3271, %s3328
    %v3330 = vpop.permute.xlu0 %3329
    %s3332 = sor.u32 256, 120
    %3333 = vbcast.lane.b32.xlu0 %v3271, %s3332
    %v3334 = vpop.permute.xlu0 %3333
    %v3335 = vlaneseq
    %v3336 = vshrl.u32 %v3335, 7
    %v3337 = vsub.s32 2, %v3336
    %v3338 = vrot.slane %v144, %v3337
    %3340 = vbcast.lane.b32.xlu0 %v3338, 256
    %v3341 = vpop.permute.xlu0 %3340
    %s3343 = sor.u32 256, 8
    %3344 = vbcast.lane.b32.xlu0 %v3338, %s3343
    %v3345 = vpop.permute.xlu0 %3344
    %s3347 = sor.u32 256, 16
    %3348 = vbcast.lane.b32.xlu0 %v3338, %s3347
    %v3349 = vpop.permute.xlu0 %3348
    %s3351 = sor.u32 256, 24
    %3352 = vbcast.lane.b32.xlu0 %v3338, %s3351
    %v3353 = vpop.permute.xlu0 %3352
    %s3355 = sor.u32 256, 32
    %3356 = vbcast.lane.b32.xlu0 %v3338, %s3355
    %v3357 = vpop.permute.xlu0 %3356
    %s3359 = sor.u32 256, 40
    %3360 = vbcast.lane.b32.xlu0 %v3338, %s3359
    %v3361 = vpop.permute.xlu0 %3360
    %s3363 = sor.u32 256, 48
    %3364 = vbcast.lane.b32.xlu0 %v3338, %s3363
    %v3365 = vpop.permute.xlu0 %3364
    %s3367 = sor.u32 256, 56
    %3368 = vbcast.lane.b32.xlu0 %v3338, %s3367
    %v3369 = vpop.permute.xlu0 %3368
    %s3371 = sor.u32 256, 64
    %3372 = vbcast.lane.b32.xlu0 %v3338, %s3371
    %v3373 = vpop.permute.xlu0 %3372
    %s3375 = sor.u32 256, 72
    %3376 = vbcast.lane.b32.xlu0 %v3338, %s3375
    %v3377 = vpop.permute.xlu0 %3376
    %s3379 = sor.u32 256, 80
    %3380 = vbcast.lane.b32.xlu0 %v3338, %s3379
    %v3381 = vpop.permute.xlu0 %3380
    %s3383 = sor.u32 256, 88
    %3384 = vbcast.lane.b32.xlu0 %v3338, %s3383
    %v3385 = vpop.permute.xlu0 %3384
    %s3387 = sor.u32 256, 96
    %3388 = vbcast.lane.b32.xlu0 %v3338, %s3387
    %v3389 = vpop.permute.xlu0 %3388
    %s3391 = sor.u32 256, 104
    %3392 = vbcast.lane.b32.xlu0 %v3338, %s3391
    %v3393 = vpop.permute.xlu0 %3392
    %s3395 = sor.u32 256, 112
    %3396 = vbcast.lane.b32.xlu0 %v3338, %s3395
    %v3397 = vpop.permute.xlu0 %3396
    %s3399 = sor.u32 256, 120
    %3400 = vbcast.lane.b32.xlu0 %v3338, %s3399
    %v3401 = vpop.permute.xlu0 %3400
    %v3402 = vlaneseq
    %v3403 = vshrl.u32 %v3402, 7
    %v3404 = vsub.s32 2, %v3403
    %v3405 = vrot.slane %v145, %v3404
    %3407 = vbcast.lane.b32.xlu0 %v3405, 256
    %v3408 = vpop.permute.xlu0 %3407
    %s3410 = sor.u32 256, 8
    %3411 = vbcast.lane.b32.xlu0 %v3405, %s3410
    %v3412 = vpop.permute.xlu0 %3411
    %s3414 = sor.u32 256, 16
    %3415 = vbcast.lane.b32.xlu0 %v3405, %s3414
    %v3416 = vpop.permute.xlu0 %3415
    %s3418 = sor.u32 256, 24
    %3419 = vbcast.lane.b32.xlu0 %v3405, %s3418
    %v3420 = vpop.permute.xlu0 %3419
    %s3422 = sor.u32 256, 32
    %3423 = vbcast.lane.b32.xlu0 %v3405, %s3422
    %v3424 = vpop.permute.xlu0 %3423
    %s3426 = sor.u32 256, 40
    %3427 = vbcast.lane.b32.xlu0 %v3405, %s3426
    %v3428 = vpop.permute.xlu0 %3427
    %s3430 = sor.u32 256, 48
    %3431 = vbcast.lane.b32.xlu0 %v3405, %s3430
    %v3432 = vpop.permute.xlu0 %3431
    %s3434 = sor.u32 256, 56
    %3435 = vbcast.lane.b32.xlu0 %v3405, %s3434
    %v3436 = vpop.permute.xlu0 %3435
    %s3438 = sor.u32 256, 64
    %3439 = vbcast.lane.b32.xlu0 %v3405, %s3438
    %v3440 = vpop.permute.xlu0 %3439
    %s3442 = sor.u32 256, 72
    %3443 = vbcast.lane.b32.xlu0 %v3405, %s3442
    %v3444 = vpop.permute.xlu0 %3443
    %s3446 = sor.u32 256, 80
    %3447 = vbcast.lane.b32.xlu0 %v3405, %s3446
    %v3448 = vpop.permute.xlu0 %3447
    %s3450 = sor.u32 256, 88
    %3451 = vbcast.lane.b32.xlu0 %v3405, %s3450
    %v3452 = vpop.permute.xlu0 %3451
    %s3454 = sor.u32 256, 96
    %3455 = vbcast.lane.b32.xlu0 %v3405, %s3454
    %v3456 = vpop.permute.xlu0 %3455
    %s3458 = sor.u32 256, 104
    %3459 = vbcast.lane.b32.xlu0 %v3405, %s3458
    %v3460 = vpop.permute.xlu0 %3459
    %s3462 = sor.u32 256, 112
    %3463 = vbcast.lane.b32.xlu0 %v3405, %s3462
    %v3464 = vpop.permute.xlu0 %3463
    %s3466 = sor.u32 256, 120
    %3467 = vbcast.lane.b32.xlu0 %v3405, %s3466
    %v3468 = vpop.permute.xlu0 %3467
    %v3469 = vlaneseq
    %v3470 = vshrl.u32 %v3469, 7
    %v3471 = vsub.s32 3, %v3470
    %v3472 = vrot.slane %v144, %v3471
    %3474 = vbcast.lane.b32.xlu0 %v3472, 256
    %v3475 = vpop.permute.xlu0 %3474
    %s3477 = sor.u32 256, 8
    %3478 = vbcast.lane.b32.xlu0 %v3472, %s3477
    %v3479 = vpop.permute.xlu0 %3478
    %s3481 = sor.u32 256, 16
    %3482 = vbcast.lane.b32.xlu0 %v3472, %s3481
    %v3483 = vpop.permute.xlu0 %3482
    %s3485 = sor.u32 256, 24
    %3486 = vbcast.lane.b32.xlu0 %v3472, %s3485
    %v3487 = vpop.permute.xlu0 %3486
    %s3489 = sor.u32 256, 32
    %3490 = vbcast.lane.b32.xlu0 %v3472, %s3489
    %v3491 = vpop.permute.xlu0 %3490
    %s3493 = sor.u32 256, 40
    %3494 = vbcast.lane.b32.xlu0 %v3472, %s3493
    %v3495 = vpop.permute.xlu0 %3494
    %s3497 = sor.u32 256, 48
    %3498 = vbcast.lane.b32.xlu0 %v3472, %s3497
    %v3499 = vpop.permute.xlu0 %3498
    %s3501 = sor.u32 256, 56
    %3502 = vbcast.lane.b32.xlu0 %v3472, %s3501
    %v3503 = vpop.permute.xlu0 %3502
    %s3505 = sor.u32 256, 64
    %3506 = vbcast.lane.b32.xlu0 %v3472, %s3505
    %v3507 = vpop.permute.xlu0 %3506
    %s3509 = sor.u32 256, 72
    %3510 = vbcast.lane.b32.xlu0 %v3472, %s3509
    %v3511 = vpop.permute.xlu0 %3510
    %s3513 = sor.u32 256, 80
    %3514 = vbcast.lane.b32.xlu0 %v3472, %s3513
    %v3515 = vpop.permute.xlu0 %3514
    %s3517 = sor.u32 256, 88
    %3518 = vbcast.lane.b32.xlu0 %v3472, %s3517
    %v3519 = vpop.permute.xlu0 %3518
    %s3521 = sor.u32 256, 96
    %3522 = vbcast.lane.b32.xlu0 %v3472, %s3521
    %v3523 = vpop.permute.xlu0 %3522
    %s3525 = sor.u32 256, 104
    %3526 = vbcast.lane.b32.xlu0 %v3472, %s3525
    %v3527 = vpop.permute.xlu0 %3526
    %s3529 = sor.u32 256, 112
    %3530 = vbcast.lane.b32.xlu0 %v3472, %s3529
    %v3531 = vpop.permute.xlu0 %3530
    %s3533 = sor.u32 256, 120
    %3534 = vbcast.lane.b32.xlu0 %v3472, %s3533
    %v3535 = vpop.permute.xlu0 %3534
    %v3536 = vlaneseq
    %v3537 = vshrl.u32 %v3536, 7
    %v3538 = vsub.s32 3, %v3537
    %v3539 = vrot.slane %v145, %v3538
    %3541 = vbcast.lane.b32.xlu0 %v3539, 256
    %v3542 = vpop.permute.xlu0 %3541
    %s3544 = sor.u32 256, 8
    %3545 = vbcast.lane.b32.xlu0 %v3539, %s3544
    %v3546 = vpop.permute.xlu0 %3545
    %s3548 = sor.u32 256, 16
    %3549 = vbcast.lane.b32.xlu0 %v3539, %s3548
    %v3550 = vpop.permute.xlu0 %3549
    %s3552 = sor.u32 256, 24
    %3553 = vbcast.lane.b32.xlu0 %v3539, %s3552
    %v3554 = vpop.permute.xlu0 %3553
    %s3556 = sor.u32 256, 32
    %3557 = vbcast.lane.b32.xlu0 %v3539, %s3556
    %v3558 = vpop.permute.xlu0 %3557
    %s3560 = sor.u32 256, 40
    %3561 = vbcast.lane.b32.xlu0 %v3539, %s3560
    %v3562 = vpop.permute.xlu0 %3561
    %s3564 = sor.u32 256, 48
    %3565 = vbcast.lane.b32.xlu0 %v3539, %s3564
    %v3566 = vpop.permute.xlu0 %3565
    %s3568 = sor.u32 256, 56
    %3569 = vbcast.lane.b32.xlu0 %v3539, %s3568
    %v3570 = vpop.permute.xlu0 %3569
    %s3572 = sor.u32 256, 64
    %3573 = vbcast.lane.b32.xlu0 %v3539, %s3572
    %v3574 = vpop.permute.xlu0 %3573
    %s3576 = sor.u32 256, 72
    %3577 = vbcast.lane.b32.xlu0 %v3539, %s3576
    %v3578 = vpop.permute.xlu0 %3577
    %s3580 = sor.u32 256, 80
    %3581 = vbcast.lane.b32.xlu0 %v3539, %s3580
    %v3582 = vpop.permute.xlu0 %3581
    %s3584 = sor.u32 256, 88
    %3585 = vbcast.lane.b32.xlu0 %v3539, %s3584
    %v3586 = vpop.permute.xlu0 %3585
    %s3588 = sor.u32 256, 96
    %3589 = vbcast.lane.b32.xlu0 %v3539, %s3588
    %v3590 = vpop.permute.xlu0 %3589
    %s3592 = sor.u32 256, 104
    %3593 = vbcast.lane.b32.xlu0 %v3539, %s3592
    %v3594 = vpop.permute.xlu0 %3593
    %s3596 = sor.u32 256, 112
    %3597 = vbcast.lane.b32.xlu0 %v3539, %s3596
    %v3598 = vpop.permute.xlu0 %3597
    %s3600 = sor.u32 256, 120
    %3601 = vbcast.lane.b32.xlu0 %v3539, %s3600
    %v3602 = vpop.permute.xlu0 %3601
    %v3603 = vlaneseq
    %v3604 = vshrl.u32 %v3603, 7
    %v3605 = vsub.s32 4, %v3604
    %v3606 = vrot.slane %v144, %v3605
    %3608 = vbcast.lane.b32.xlu0 %v3606, 256
    %v3609 = vpop.permute.xlu0 %3608
    %s3611 = sor.u32 256, 8
    %3612 = vbcast.lane.b32.xlu0 %v3606, %s3611
    %v3613 = vpop.permute.xlu0 %3612
    %s3615 = sor.u32 256, 16
    %3616 = vbcast.lane.b32.xlu0 %v3606, %s3615
    %v3617 = vpop.permute.xlu0 %3616
    %s3619 = sor.u32 256, 24
    %3620 = vbcast.lane.b32.xlu0 %v3606, %s3619
    %v3621 = vpop.permute.xlu0 %3620
    %s3623 = sor.u32 256, 32
    %3624 = vbcast.lane.b32.xlu0 %v3606, %s3623
    %v3625 = vpop.permute.xlu0 %3624
    %s3627 = sor.u32 256, 40
    %3628 = vbcast.lane.b32.xlu0 %v3606, %s3627
    %v3629 = vpop.permute.xlu0 %3628
    %s3631 = sor.u32 256, 48
    %3632 = vbcast.lane.b32.xlu0 %v3606, %s3631
    %v3633 = vpop.permute.xlu0 %3632
    %s3635 = sor.u32 256, 56
    %3636 = vbcast.lane.b32.xlu0 %v3606, %s3635
    %v3637 = vpop.permute.xlu0 %3636
    %s3639 = sor.u32 256, 64
    %3640 = vbcast.lane.b32.xlu0 %v3606, %s3639
    %v3641 = vpop.permute.xlu0 %3640
    %s3643 = sor.u32 256, 72
    %3644 = vbcast.lane.b32.xlu0 %v3606, %s3643
    %v3645 = vpop.permute.xlu0 %3644
    %s3647 = sor.u32 256, 80
    %3648 = vbcast.lane.b32.xlu0 %v3606, %s3647
    %v3649 = vpop.permute.xlu0 %3648
    %s3651 = sor.u32 256, 88
    %3652 = vbcast.lane.b32.xlu0 %v3606, %s3651
    %v3653 = vpop.permute.xlu0 %3652
    %s3655 = sor.u32 256, 96
    %3656 = vbcast.lane.b32.xlu0 %v3606, %s3655
    %v3657 = vpop.permute.xlu0 %3656
    %s3659 = sor.u32 256, 104
    %3660 = vbcast.lane.b32.xlu0 %v3606, %s3659
    %v3661 = vpop.permute.xlu0 %3660
    %s3663 = sor.u32 256, 112
    %3664 = vbcast.lane.b32.xlu0 %v3606, %s3663
    %v3665 = vpop.permute.xlu0 %3664
    %s3667 = sor.u32 256, 120
    %3668 = vbcast.lane.b32.xlu0 %v3606, %s3667
    %v3669 = vpop.permute.xlu0 %3668
    %v3670 = vlaneseq
    %v3671 = vshrl.u32 %v3670, 7
    %v3672 = vsub.s32 4, %v3671
    %v3673 = vrot.slane %v145, %v3672
    %3675 = vbcast.lane.b32.xlu0 %v3673, 256
    %v3676 = vpop.permute.xlu0 %3675
    %s3678 = sor.u32 256, 8
    %3679 = vbcast.lane.b32.xlu0 %v3673, %s3678
    %v3680 = vpop.permute.xlu0 %3679
    %s3682 = sor.u32 256, 16
    %3683 = vbcast.lane.b32.xlu0 %v3673, %s3682
    %v3684 = vpop.permute.xlu0 %3683
    %s3686 = sor.u32 256, 24
    %3687 = vbcast.lane.b32.xlu0 %v3673, %s3686
    %v3688 = vpop.permute.xlu0 %3687
    %s3690 = sor.u32 256, 32
    %3691 = vbcast.lane.b32.xlu0 %v3673, %s3690
    %v3692 = vpop.permute.xlu0 %3691
    %s3694 = sor.u32 256, 40
    %3695 = vbcast.lane.b32.xlu0 %v3673, %s3694
    %v3696 = vpop.permute.xlu0 %3695
    %s3698 = sor.u32 256, 48
    %3699 = vbcast.lane.b32.xlu0 %v3673, %s3698
    %v3700 = vpop.permute.xlu0 %3699
    %s3702 = sor.u32 256, 56
    %3703 = vbcast.lane.b32.xlu0 %v3673, %s3702
    %v3704 = vpop.permute.xlu0 %3703
    %s3706 = sor.u32 256, 64
    %3707 = vbcast.lane.b32.xlu0 %v3673, %s3706
    %v3708 = vpop.permute.xlu0 %3707
    %s3710 = sor.u32 256, 72
    %3711 = vbcast.lane.b32.xlu0 %v3673, %s3710
    %v3712 = vpop.permute.xlu0 %3711
    %s3714 = sor.u32 256, 80
    %3715 = vbcast.lane.b32.xlu0 %v3673, %s3714
    %v3716 = vpop.permute.xlu0 %3715
    %s3718 = sor.u32 256, 88
    %3719 = vbcast.lane.b32.xlu0 %v3673, %s3718
    %v3720 = vpop.permute.xlu0 %3719
    %s3722 = sor.u32 256, 96
    %3723 = vbcast.lane.b32.xlu0 %v3673, %s3722
    %v3724 = vpop.permute.xlu0 %3723
    %s3726 = sor.u32 256, 104
    %3727 = vbcast.lane.b32.xlu0 %v3673, %s3726
    %v3728 = vpop.permute.xlu0 %3727
    %s3730 = sor.u32 256, 112
    %3731 = vbcast.lane.b32.xlu0 %v3673, %s3730
    %v3732 = vpop.permute.xlu0 %3731
    %s3734 = sor.u32 256, 120
    %3735 = vbcast.lane.b32.xlu0 %v3673, %s3734
    %v3736 = vpop.permute.xlu0 %3735
    %v3737 = vlaneseq
    %v3738 = vshrl.u32 %v3737, 7
    %v3739 = vsub.s32 5, %v3738
    %v3740 = vrot.slane %v144, %v3739
    %3742 = vbcast.lane.b32.xlu0 %v3740, 256
    %v3743 = vpop.permute.xlu0 %3742
    %s3745 = sor.u32 256, 8
    %3746 = vbcast.lane.b32.xlu0 %v3740, %s3745
    %v3747 = vpop.permute.xlu0 %3746
    %s3749 = sor.u32 256, 16
    %3750 = vbcast.lane.b32.xlu0 %v3740, %s3749
    %v3751 = vpop.permute.xlu0 %3750
    %s3753 = sor.u32 256, 24
    %3754 = vbcast.lane.b32.xlu0 %v3740, %s3753
    %v3755 = vpop.permute.xlu0 %3754
    %s3757 = sor.u32 256, 32
    %3758 = vbcast.lane.b32.xlu0 %v3740, %s3757
    %v3759 = vpop.permute.xlu0 %3758
    %s3761 = sor.u32 256, 40
    %3762 = vbcast.lane.b32.xlu0 %v3740, %s3761
    %v3763 = vpop.permute.xlu0 %3762
    %s3765 = sor.u32 256, 48
    %3766 = vbcast.lane.b32.xlu0 %v3740, %s3765
    %v3767 = vpop.permute.xlu0 %3766
    %s3769 = sor.u32 256, 56
    %3770 = vbcast.lane.b32.xlu0 %v3740, %s3769
    %v3771 = vpop.permute.xlu0 %3770
    %s3773 = sor.u32 256, 64
    %3774 = vbcast.lane.b32.xlu0 %v3740, %s3773
    %v3775 = vpop.permute.xlu0 %3774
    %s3777 = sor.u32 256, 72
    %3778 = vbcast.lane.b32.xlu0 %v3740, %s3777
    %v3779 = vpop.permute.xlu0 %3778
    %s3781 = sor.u32 256, 80
    %3782 = vbcast.lane.b32.xlu0 %v3740, %s3781
    %v3783 = vpop.permute.xlu0 %3782
    %s3785 = sor.u32 256, 88
    %3786 = vbcast.lane.b32.xlu0 %v3740, %s3785
    %v3787 = vpop.permute.xlu0 %3786
    %s3789 = sor.u32 256, 96
    %3790 = vbcast.lane.b32.xlu0 %v3740, %s3789
    %v3791 = vpop.permute.xlu0 %3790
    %s3793 = sor.u32 256, 104
    %3794 = vbcast.lane.b32.xlu0 %v3740, %s3793
    %v3795 = vpop.permute.xlu0 %3794
    %s3797 = sor.u32 256, 112
    %3798 = vbcast.lane.b32.xlu0 %v3740, %s3797
    %v3799 = vpop.permute.xlu0 %3798
    %s3801 = sor.u32 256, 120
    %3802 = vbcast.lane.b32.xlu0 %v3740, %s3801
    %v3803 = vpop.permute.xlu0 %3802
    %v3804 = vlaneseq
    %v3805 = vshrl.u32 %v3804, 7
    %v3806 = vsub.s32 5, %v3805
    %v3807 = vrot.slane %v145, %v3806
    %3809 = vbcast.lane.b32.xlu0 %v3807, 256
    %v3810 = vpop.permute.xlu0 %3809
    %s3812 = sor.u32 256, 8
    %3813 = vbcast.lane.b32.xlu0 %v3807, %s3812
    %v3814 = vpop.permute.xlu0 %3813
    %s3816 = sor.u32 256, 16
    %3817 = vbcast.lane.b32.xlu0 %v3807, %s3816
    %v3818 = vpop.permute.xlu0 %3817
    %s3820 = sor.u32 256, 24
    %3821 = vbcast.lane.b32.xlu0 %v3807, %s3820
    %v3822 = vpop.permute.xlu0 %3821
    %s3824 = sor.u32 256, 32
    %3825 = vbcast.lane.b32.xlu0 %v3807, %s3824
    %v3826 = vpop.permute.xlu0 %3825
    %s3828 = sor.u32 256, 40
    %3829 = vbcast.lane.b32.xlu0 %v3807, %s3828
    %v3830 = vpop.permute.xlu0 %3829
    %s3832 = sor.u32 256, 48
    %3833 = vbcast.lane.b32.xlu0 %v3807, %s3832
    %v3834 = vpop.permute.xlu0 %3833
    %s3836 = sor.u32 256, 56
    %3837 = vbcast.lane.b32.xlu0 %v3807, %s3836
    %v3838 = vpop.permute.xlu0 %3837
    %s3840 = sor.u32 256, 64
    %3841 = vbcast.lane.b32.xlu0 %v3807, %s3840
    %v3842 = vpop.permute.xlu0 %3841
    %s3844 = sor.u32 256, 72
    %3845 = vbcast.lane.b32.xlu0 %v3807, %s3844
    %v3846 = vpop.permute.xlu0 %3845
    %s3848 = sor.u32 256, 80
    %3849 = vbcast.lane.b32.xlu0 %v3807, %s3848
    %v3850 = vpop.permute.xlu0 %3849
    %s3852 = sor.u32 256, 88
    %3853 = vbcast.lane.b32.xlu0 %v3807, %s3852
    %v3854 = vpop.permute.xlu0 %3853
    %s3856 = sor.u32 256, 96
    %3857 = vbcast.lane.b32.xlu0 %v3807, %s3856
    %v3858 = vpop.permute.xlu0 %3857
    %s3860 = sor.u32 256, 104
    %3861 = vbcast.lane.b32.xlu0 %v3807, %s3860
    %v3862 = vpop.permute.xlu0 %3861
    %s3864 = sor.u32 256, 112
    %3865 = vbcast.lane.b32.xlu0 %v3807, %s3864
    %v3866 = vpop.permute.xlu0 %3865
    %s3868 = sor.u32 256, 120
    %3869 = vbcast.lane.b32.xlu0 %v3807, %s3868
    %v3870 = vpop.permute.xlu0 %3869
    %v3871 = vlaneseq
    %v3872 = vshrl.u32 %v3871, 7
    %v3873 = vsub.s32 6, %v3872
    %v3874 = vrot.slane %v144, %v3873
    %3876 = vbcast.lane.b32.xlu0 %v3874, 256
    %v3877 = vpop.permute.xlu0 %3876
    %s3879 = sor.u32 256, 8
    %3880 = vbcast.lane.b32.xlu0 %v3874, %s3879
    %v3881 = vpop.permute.xlu0 %3880
    %s3883 = sor.u32 256, 16
    %3884 = vbcast.lane.b32.xlu0 %v3874, %s3883
    %v3885 = vpop.permute.xlu0 %3884
    %s3887 = sor.u32 256, 24
    %3888 = vbcast.lane.b32.xlu0 %v3874, %s3887
    %v3889 = vpop.permute.xlu0 %3888
    %s3891 = sor.u32 256, 32
    %3892 = vbcast.lane.b32.xlu0 %v3874, %s3891
    %v3893 = vpop.permute.xlu0 %3892
    %s3895 = sor.u32 256, 40
    %3896 = vbcast.lane.b32.xlu0 %v3874, %s3895
    %v3897 = vpop.permute.xlu0 %3896
    %s3899 = sor.u32 256, 48
    %3900 = vbcast.lane.b32.xlu0 %v3874, %s3899
    %v3901 = vpop.permute.xlu0 %3900
    %s3903 = sor.u32 256, 56
    %3904 = vbcast.lane.b32.xlu0 %v3874, %s3903
    %v3905 = vpop.permute.xlu0 %3904
    %s3907 = sor.u32 256, 64
    %3908 = vbcast.lane.b32.xlu0 %v3874, %s3907
    %v3909 = vpop.permute.xlu0 %3908
    %s3911 = sor.u32 256, 72
    %3912 = vbcast.lane.b32.xlu0 %v3874, %s3911
    %v3913 = vpop.permute.xlu0 %3912
    %s3915 = sor.u32 256, 80
    %3916 = vbcast.lane.b32.xlu0 %v3874, %s3915
    %v3917 = vpop.permute.xlu0 %3916
    %s3919 = sor.u32 256, 88
    %3920 = vbcast.lane.b32.xlu0 %v3874, %s3919
    %v3921 = vpop.permute.xlu0 %3920
    %s3923 = sor.u32 256, 96
    %3924 = vbcast.lane.b32.xlu0 %v3874, %s3923
    %v3925 = vpop.permute.xlu0 %3924
    %s3927 = sor.u32 256, 104
    %3928 = vbcast.lane.b32.xlu0 %v3874, %s3927
    %v3929 = vpop.permute.xlu0 %3928
    %s3931 = sor.u32 256, 112
    %3932 = vbcast.lane.b32.xlu0 %v3874, %s3931
    %v3933 = vpop.permute.xlu0 %3932
    %s3935 = sor.u32 256, 120
    %3936 = vbcast.lane.b32.xlu0 %v3874, %s3935
    %v3937 = vpop.permute.xlu0 %3936
    %v3938 = vlaneseq
    %v3939 = vshrl.u32 %v3938, 7
    %v3940 = vsub.s32 6, %v3939
    %v3941 = vrot.slane %v145, %v3940
    %3943 = vbcast.lane.b32.xlu0 %v3941, 256
    %v3944 = vpop.permute.xlu0 %3943
    %s3946 = sor.u32 256, 8
    %3947 = vbcast.lane.b32.xlu0 %v3941, %s3946
    %v3948 = vpop.permute.xlu0 %3947
    %s3950 = sor.u32 256, 16
    %3951 = vbcast.lane.b32.xlu0 %v3941, %s3950
    %v3952 = vpop.permute.xlu0 %3951
    %s3954 = sor.u32 256, 24
    %3955 = vbcast.lane.b32.xlu0 %v3941, %s3954
    %v3956 = vpop.permute.xlu0 %3955
    %s3958 = sor.u32 256, 32
    %3959 = vbcast.lane.b32.xlu0 %v3941, %s3958
    %v3960 = vpop.permute.xlu0 %3959
    %s3962 = sor.u32 256, 40
    %3963 = vbcast.lane.b32.xlu0 %v3941, %s3962
    %v3964 = vpop.permute.xlu0 %3963
    %s3966 = sor.u32 256, 48
    %3967 = vbcast.lane.b32.xlu0 %v3941, %s3966
    %v3968 = vpop.permute.xlu0 %3967
    %s3970 = sor.u32 256, 56
    %3971 = vbcast.lane.b32.xlu0 %v3941, %s3970
    %v3972 = vpop.permute.xlu0 %3971
    %s3974 = sor.u32 256, 64
    %3975 = vbcast.lane.b32.xlu0 %v3941, %s3974
    %v3976 = vpop.permute.xlu0 %3975
    %s3978 = sor.u32 256, 72
    %3979 = vbcast.lane.b32.xlu0 %v3941, %s3978
    %v3980 = vpop.permute.xlu0 %3979
    %s3982 = sor.u32 256, 80
    %3983 = vbcast.lane.b32.xlu0 %v3941, %s3982
    %v3984 = vpop.permute.xlu0 %3983
    %s3986 = sor.u32 256, 88
    %3987 = vbcast.lane.b32.xlu0 %v3941, %s3986
    %v3988 = vpop.permute.xlu0 %3987
    %s3990 = sor.u32 256, 96
    %3991 = vbcast.lane.b32.xlu0 %v3941, %s3990
    %v3992 = vpop.permute.xlu0 %3991
    %s3994 = sor.u32 256, 104
    %3995 = vbcast.lane.b32.xlu0 %v3941, %s3994
    %v3996 = vpop.permute.xlu0 %3995
    %s3998 = sor.u32 256, 112
    %3999 = vbcast.lane.b32.xlu0 %v3941, %s3998
    %v4000 = vpop.permute.xlu0 %3999
    %s4002 = sor.u32 256, 120
    %4003 = vbcast.lane.b32.xlu0 %v3941, %s4002
    %v4004 = vpop.permute.xlu0 %4003
    %v4005 = vlaneseq
    %v4006 = vshrl.u32 %v4005, 7
    %v4007 = vsub.s32 7, %v4006
    %v4008 = vrot.slane %v144, %v4007
    %4010 = vbcast.lane.b32.xlu0 %v4008, 256
    %v4011 = vpop.permute.xlu0 %4010
    %s4013 = sor.u32 256, 8
    %4014 = vbcast.lane.b32.xlu0 %v4008, %s4013
    %v4015 = vpop.permute.xlu0 %4014
    %s4017 = sor.u32 256, 16
    %4018 = vbcast.lane.b32.xlu0 %v4008, %s4017
    %v4019 = vpop.permute.xlu0 %4018
    %s4021 = sor.u32 256, 24
    %4022 = vbcast.lane.b32.xlu0 %v4008, %s4021
    %v4023 = vpop.permute.xlu0 %4022
    %s4025 = sor.u32 256, 32
    %4026 = vbcast.lane.b32.xlu0 %v4008, %s4025
    %v4027 = vpop.permute.xlu0 %4026
    %s4029 = sor.u32 256, 40
    %4030 = vbcast.lane.b32.xlu0 %v4008, %s4029
    %v4031 = vpop.permute.xlu0 %4030
    %s4033 = sor.u32 256, 48
    %4034 = vbcast.lane.b32.xlu0 %v4008, %s4033
    %v4035 = vpop.permute.xlu0 %4034
    %s4037 = sor.u32 256, 56
    %4038 = vbcast.lane.b32.xlu0 %v4008, %s4037
    %v4039 = vpop.permute.xlu0 %4038
    %s4041 = sor.u32 256, 64
    %4042 = vbcast.lane.b32.xlu0 %v4008, %s4041
    %v4043 = vpop.permute.xlu0 %4042
    %s4045 = sor.u32 256, 72
    %4046 = vbcast.lane.b32.xlu0 %v4008, %s4045
    %v4047 = vpop.permute.xlu0 %4046
    %s4049 = sor.u32 256, 80
    %4050 = vbcast.lane.b32.xlu0 %v4008, %s4049
    %v4051 = vpop.permute.xlu0 %4050
    %s4053 = sor.u32 256, 88
    %4054 = vbcast.lane.b32.xlu0 %v4008, %s4053
    %v4055 = vpop.permute.xlu0 %4054
    %s4057 = sor.u32 256, 96
    %4058 = vbcast.lane.b32.xlu0 %v4008, %s4057
    %v4059 = vpop.permute.xlu0 %4058
    %s4061 = sor.u32 256, 104
    %4062 = vbcast.lane.b32.xlu0 %v4008, %s4061
    %v4063 = vpop.permute.xlu0 %4062
    %s4065 = sor.u32 256, 112
    %4066 = vbcast.lane.b32.xlu0 %v4008, %s4065
    %v4067 = vpop.permute.xlu0 %4066
    %s4069 = sor.u32 256, 120
    %4070 = vbcast.lane.b32.xlu0 %v4008, %s4069
    %v4071 = vpop.permute.xlu0 %4070
    %v4072 = vlaneseq
    %v4073 = vshrl.u32 %v4072, 7
    %v4074 = vsub.s32 7, %v4073
    %v4075 = vrot.slane %v145, %v4074
    %4077 = vbcast.lane.b32.xlu0 %v4075, 256
    %v4078 = vpop.permute.xlu0 %4077
    %s4080 = sor.u32 256, 8
    %4081 = vbcast.lane.b32.xlu0 %v4075, %s4080
    %v4082 = vpop.permute.xlu0 %4081
    %s4084 = sor.u32 256, 16
    %4085 = vbcast.lane.b32.xlu0 %v4075, %s4084
    %v4086 = vpop.permute.xlu0 %4085
    %s4088 = sor.u32 256, 24
    %4089 = vbcast.lane.b32.xlu0 %v4075, %s4088
    %v4090 = vpop.permute.xlu0 %4089
    %s4092 = sor.u32 256, 32
    %4093 = vbcast.lane.b32.xlu0 %v4075, %s4092
    %v4094 = vpop.permute.xlu0 %4093
    %s4096 = sor.u32 256, 40
    %4097 = vbcast.lane.b32.xlu0 %v4075, %s4096
    %v4098 = vpop.permute.xlu0 %4097
    %s4100 = sor.u32 256, 48
    %4101 = vbcast.lane.b32.xlu0 %v4075, %s4100
    %v4102 = vpop.permute.xlu0 %4101
    %s4104 = sor.u32 256, 56
    %4105 = vbcast.lane.b32.xlu0 %v4075, %s4104
    %v4106 = vpop.permute.xlu0 %4105
    %s4108 = sor.u32 256, 64
    %4109 = vbcast.lane.b32.xlu0 %v4075, %s4108
    %v4110 = vpop.permute.xlu0 %4109
    %s4112 = sor.u32 256, 72
    %4113 = vbcast.lane.b32.xlu0 %v4075, %s4112
    %v4114 = vpop.permute.xlu0 %4113
    %s4116 = sor.u32 256, 80
    %4117 = vbcast.lane.b32.xlu0 %v4075, %s4116
    %v4118 = vpop.permute.xlu0 %4117
    %s4120 = sor.u32 256, 88
    %4121 = vbcast.lane.b32.xlu0 %v4075, %s4120
    %v4122 = vpop.permute.xlu0 %4121
    %s4124 = sor.u32 256, 96
    %4125 = vbcast.lane.b32.xlu0 %v4075, %s4124
    %v4126 = vpop.permute.xlu0 %4125
    %s4128 = sor.u32 256, 104
    %4129 = vbcast.lane.b32.xlu0 %v4075, %s4128
    %v4130 = vpop.permute.xlu0 %4129
    %s4132 = sor.u32 256, 112
    %4133 = vbcast.lane.b32.xlu0 %v4075, %s4132
    %v4134 = vpop.permute.xlu0 %4133
    %s4136 = sor.u32 256, 120
    %4137 = vbcast.lane.b32.xlu0 %v4075, %s4136
    %v4138 = vpop.permute.xlu0 %4137
    %v4139 = vmul.f32 %v2811, %v3073
    %v4140 = vmul.f32 %v2812, %v3077
    %v4141 = vmul.f32 %v2813, %v3081
    %v4142 = vmul.f32 %v2814, %v3085
    %v4143 = vmul.f32 %v2815, %v3089
    %v4144 = vmul.f32 %v2816, %v3093
    %v4145 = vmul.f32 %v2817, %v3097
    %v4146 = vmul.f32 %v2818, %v3101
    %v4147 = vmul.f32 %v2819, %v3105
    %v4148 = vmul.f32 %v2820, %v3109
    %v4149 = vmul.f32 %v2821, %v3113
    %v4150 = vmul.f32 %v2822, %v3117
    %v4151 = vmul.f32 %v2823, %v3121
    %v4152 = vmul.f32 %v2824, %v3125
    %v4153 = vmul.f32 %v2825, %v3129
    %v4154 = vmul.f32 %v2826, %v3133
    %v4155 = vmul.f32 %v2827, %v3140
    %v4156 = vmul.f32 %v2828, %v3144
    %v4157 = vmul.f32 %v2829, %v3148
    %v4158 = vmul.f32 %v2830, %v3152
    %v4159 = vmul.f32 %v2831, %v3156
    %v4160 = vmul.f32 %v2832, %v3160
    %v4161 = vmul.f32 %v2833, %v3164
    %v4162 = vmul.f32 %v2834, %v3168
    %v4163 = vmul.f32 %v2835, %v3172
    %v4164 = vmul.f32 %v2836, %v3176
    %v4165 = vmul.f32 %v2837, %v3180
    %v4166 = vmul.f32 %v2838, %v3184
    %v4167 = vmul.f32 %v2839, %v3188
    %v4168 = vmul.f32 %v2840, %v3192
    %v4169 = vmul.f32 %v2841, %v3196
    %v4170 = vmul.f32 %v2842, %v3200
    %v4171 = vmul.f32 %v2843, %v3207
    %v4172 = vmul.f32 %v2844, %v3211
    %v4173 = vmul.f32 %v2845, %v3215
    %v4174 = vmul.f32 %v2846, %v3219
    %v4175 = vmul.f32 %v2847, %v3223
    %v4176 = vmul.f32 %v2848, %v3227
    %v4177 = vmul.f32 %v2849, %v3231
    %v4178 = vmul.f32 %v2850, %v3235
    %v4179 = vmul.f32 %v2851, %v3239
    %v4180 = vmul.f32 %v2852, %v3243
    %v4181 = vmul.f32 %v2853, %v3247
    %v4182 = vmul.f32 %v2854, %v3251
    %v4183 = vmul.f32 %v2855, %v3255
    %v4184 = vmul.f32 %v2856, %v3259
    %v4185 = vmul.f32 %v2857, %v3263
    %v4186 = vmul.f32 %v2858, %v3267
    %v4187 = vmul.f32 %v2859, %v3274
    %v4188 = vmul.f32 %v2860, %v3278
    %v4189 = vmul.f32 %v2861, %v3282
    %v4190 = vmul.f32 %v2862, %v3286
    %v4191 = vmul.f32 %v2863, %v3290
    %v4192 = vmul.f32 %v2864, %v3294
    %v4193 = vmul.f32 %v2865, %v3298
    %v4194 = vmul.f32 %v2866, %v3302
    %v4195 = vmul.f32 %v2867, %v3306
    %v4196 = vmul.f32 %v2868, %v3310
    %v4197 = vmul.f32 %v2869, %v3314
    %v4198 = vmul.f32 %v2870, %v3318
    %v4199 = vmul.f32 %v2871, %v3322
    %v4200 = vmul.f32 %v2872, %v3326
    %v4201 = vmul.f32 %v2873, %v3330
    %v4202 = vmul.f32 %v2874, %v3334
    %v4203 = vmul.f32 %v2875, %v3341
    %v4204 = vmul.f32 %v2876, %v3345
    %v4205 = vmul.f32 %v2877, %v3349
    %v4206 = vmul.f32 %v2878, %v3353
    %v4207 = vmul.f32 %v2879, %v3357
    %v4208 = vmul.f32 %v2880, %v3361
    %v4209 = vmul.f32 %v2881, %v3365
    %v4210 = vmul.f32 %v2882, %v3369
    %v4211 = vmul.f32 %v2883, %v3373
    %v4212 = vmul.f32 %v2884, %v3377
    %v4213 = vmul.f32 %v2885, %v3381
    %v4214 = vmul.f32 %v2886, %v3385
    %v4215 = vmul.f32 %v2887, %v3389
    %v4216 = vmul.f32 %v2888, %v3393
    %v4217 = vmul.f32 %v2889, %v3397
    %v4218 = vmul.f32 %v2890, %v3401
    %v4219 = vmul.f32 %v2891, %v3408
    %v4220 = vmul.f32 %v2892, %v3412
    %v4221 = vmul.f32 %v2893, %v3416
    %v4222 = vmul.f32 %v2894, %v3420
    %v4223 = vmul.f32 %v2895, %v3424
    %v4224 = vmul.f32 %v2896, %v3428
    %v4225 = vmul.f32 %v2897, %v3432
    %v4226 = vmul.f32 %v2898, %v3436
    %v4227 = vmul.f32 %v2899, %v3440
    %v4228 = vmul.f32 %v2900, %v3444
    %v4229 = vmul.f32 %v2901, %v3448
    %v4230 = vmul.f32 %v2902, %v3452
    %v4231 = vmul.f32 %v2903, %v3456
    %v4232 = vmul.f32 %v2904, %v3460
    %v4233 = vmul.f32 %v2905, %v3464
    %v4234 = vmul.f32 %v2906, %v3468
    %v4235 = vmul.f32 %v2907, %v3475
    %v4236 = vmul.f32 %v2908, %v3479
    %v4237 = vmul.f32 %v2909, %v3483
    %v4238 = vmul.f32 %v2910, %v3487
    %v4239 = vmul.f32 %v2911, %v3491
    %v4240 = vmul.f32 %v2912, %v3495
    %v4241 = vmul.f32 %v2913, %v3499
    %v4242 = vmul.f32 %v2914, %v3503
    %v4243 = vmul.f32 %v2915, %v3507
    %v4244 = vmul.f32 %v2916, %v3511
    %v4245 = vmul.f32 %v2917, %v3515
    %v4246 = vmul.f32 %v2918, %v3519
    %v4247 = vmul.f32 %v2919, %v3523
    %v4248 = vmul.f32 %v2920, %v3527
    %v4249 = vmul.f32 %v2921, %v3531
    %v4250 = vmul.f32 %v2922, %v3535
    %v4251 = vmul.f32 %v2923, %v3542
    %v4252 = vmul.f32 %v2924, %v3546
    %v4253 = vmul.f32 %v2925, %v3550
    %v4254 = vmul.f32 %v2926, %v3554
    %v4255 = vmul.f32 %v2927, %v3558
    %v4256 = vmul.f32 %v2928, %v3562
    %v4257 = vmul.f32 %v2929, %v3566
    %v4258 = vmul.f32 %v2930, %v3570
    %v4259 = vmul.f32 %v2931, %v3574
    %v4260 = vmul.f32 %v2932, %v3578
    %v4261 = vmul.f32 %v2933, %v3582
    %v4262 = vmul.f32 %v2934, %v3586
    %v4263 = vmul.f32 %v2935, %v3590
    %v4264 = vmul.f32 %v2936, %v3594
    %v4265 = vmul.f32 %v2937, %v3598
    %v4266 = vmul.f32 %v2938, %v3602
    %v4267 = vmul.f32 %v2939, %v3609
    %v4268 = vmul.f32 %v2940, %v3613
    %v4269 = vmul.f32 %v2941, %v3617
    %v4270 = vmul.f32 %v2942, %v3621
    %v4271 = vmul.f32 %v2943, %v3625
    %v4272 = vmul.f32 %v2944, %v3629
    %v4273 = vmul.f32 %v2945, %v3633
    %v4274 = vmul.f32 %v2946, %v3637
    %v4275 = vmul.f32 %v2947, %v3641
    %v4276 = vmul.f32 %v2948, %v3645
    %v4277 = vmul.f32 %v2949, %v3649
    %v4278 = vmul.f32 %v2950, %v3653
    %v4279 = vmul.f32 %v2951, %v3657
    %v4280 = vmul.f32 %v2952, %v3661
    %v4281 = vmul.f32 %v2953, %v3665
    %v4282 = vmul.f32 %v2954, %v3669
    %v4283 = vmul.f32 %v2955, %v3676
    %v4284 = vmul.f32 %v2956, %v3680
    %v4285 = vmul.f32 %v2957, %v3684
    %v4286 = vmul.f32 %v2958, %v3688
    %v4287 = vmul.f32 %v2959, %v3692
    %v4288 = vmul.f32 %v2960, %v3696
    %v4289 = vmul.f32 %v2961, %v3700
    %v4290 = vmul.f32 %v2962, %v3704
    %v4291 = vmul.f32 %v2963, %v3708
    %v4292 = vmul.f32 %v2964, %v3712
    %v4293 = vmul.f32 %v2965, %v3716
    %v4294 = vmul.f32 %v2966, %v3720
    %v4295 = vmul.f32 %v2967, %v3724
    %v4296 = vmul.f32 %v2968, %v3728
    %v4297 = vmul.f32 %v2969, %v3732
    %v4298 = vmul.f32 %v2970, %v3736
    %v4299 = vmul.f32 %v2971, %v3743
    %v4300 = vmul.f32 %v2972, %v3747
    %v4301 = vmul.f32 %v2973, %v3751
    %v4302 = vmul.f32 %v2974, %v3755
    %v4303 = vmul.f32 %v2975, %v3759
    %v4304 = vmul.f32 %v2976, %v3763
    %v4305 = vmul.f32 %v2977, %v3767
    %v4306 = vmul.f32 %v2978, %v3771
    %v4307 = vmul.f32 %v2979, %v3775
    %v4308 = vmul.f32 %v2980, %v3779
    %v4309 = vmul.f32 %v2981, %v3783
    %v4310 = vmul.f32 %v2982, %v3787
    %v4311 = vmul.f32 %v2983, %v3791
    %v4312 = vmul.f32 %v2984, %v3795
    %v4313 = vmul.f32 %v2985, %v3799
    %v4314 = vmul.f32 %v2986, %v3803
    %v4315 = vmul.f32 %v2987, %v3810
    %v4316 = vmul.f32 %v2988, %v3814
    %v4317 = vmul.f32 %v2989, %v3818
    %v4318 = vmul.f32 %v2990, %v3822
    %v4319 = vmul.f32 %v2991, %v3826
    %v4320 = vmul.f32 %v2992, %v3830
    %v4321 = vmul.f32 %v2993, %v3834
    %v4322 = vmul.f32 %v2994, %v3838
    %v4323 = vmul.f32 %v2995, %v3842
    %v4324 = vmul.f32 %v2996, %v3846
    %v4325 = vmul.f32 %v2997, %v3850
    %v4326 = vmul.f32 %v2998, %v3854
    %v4327 = vmul.f32 %v2999, %v3858
    %v4328 = vmul.f32 %v3000, %v3862
    %v4329 = vmul.f32 %v3001, %v3866
    %v4330 = vmul.f32 %v3002, %v3870
    %v4331 = vmul.f32 %v3003, %v3877
    %v4332 = vmul.f32 %v3004, %v3881
    %v4333 = vmul.f32 %v3005, %v3885
    %v4334 = vmul.f32 %v3006, %v3889
    %v4335 = vmul.f32 %v3007, %v3893
    %v4336 = vmul.f32 %v3008, %v3897
    %v4337 = vmul.f32 %v3009, %v3901
    %v4338 = vmul.f32 %v3010, %v3905
    %v4339 = vmul.f32 %v3011, %v3909
    %v4340 = vmul.f32 %v3012, %v3913
    %v4341 = vmul.f32 %v3013, %v3917
    %v4342 = vmul.f32 %v3014, %v3921
    %v4343 = vmul.f32 %v3015, %v3925
    %v4344 = vmul.f32 %v3016, %v3929
    %v4345 = vmul.f32 %v3017, %v3933
    %v4346 = vmul.f32 %v3018, %v3937
    %v4347 = vmul.f32 %v3019, %v3944
    %v4348 = vmul.f32 %v3020, %v3948
    %v4349 = vmul.f32 %v3021, %v3952
    %v4350 = vmul.f32 %v3022, %v3956
    %v4351 = vmul.f32 %v3023, %v3960
    %v4352 = vmul.f32 %v3024, %v3964
    %v4353 = vmul.f32 %v3025, %v3968
    %v4354 = vmul.f32 %v3026, %v3972
    %v4355 = vmul.f32 %v3027, %v3976
    %v4356 = vmul.f32 %v3028, %v3980
    %v4357 = vmul.f32 %v3029, %v3984
    %v4358 = vmul.f32 %v3030, %v3988
    %v4359 = vmul.f32 %v3031, %v3992
    %v4360 = vmul.f32 %v3032, %v3996
    %v4361 = vmul.f32 %v3033, %v4000
    %v4362 = vmul.f32 %v3034, %v4004
    %v4363 = vmul.f32 %v3035, %v4011
    %v4364 = vmul.f32 %v3036, %v4015
    %v4365 = vmul.f32 %v3037, %v4019
    %v4366 = vmul.f32 %v3038, %v4023
    %v4367 = vmul.f32 %v3039, %v4027
    %v4368 = vmul.f32 %v3040, %v4031
    %v4369 = vmul.f32 %v3041, %v4035
    %v4370 = vmul.f32 %v3042, %v4039
    %v4371 = vmul.f32 %v3043, %v4043
    %v4372 = vmul.f32 %v3044, %v4047
    %v4373 = vmul.f32 %v3045, %v4051
    %v4374 = vmul.f32 %v3046, %v4055
    %v4375 = vmul.f32 %v3047, %v4059
    %v4376 = vmul.f32 %v3048, %v4063
    %v4377 = vmul.f32 %v3049, %v4067
    %v4378 = vmul.f32 %v3050, %v4071
    %v4379 = vmul.f32 %v3051, %v4078
    %v4380 = vmul.f32 %v3052, %v4082
    %v4381 = vmul.f32 %v3053, %v4086
    %v4382 = vmul.f32 %v3054, %v4090
    %v4383 = vmul.f32 %v3055, %v4094
    %v4384 = vmul.f32 %v3056, %v4098
    %v4385 = vmul.f32 %v3057, %v4102
    %v4386 = vmul.f32 %v3058, %v4106
    %v4387 = vmul.f32 %v3059, %v4110
    %v4388 = vmul.f32 %v3060, %v4114
    %v4389 = vmul.f32 %v3061, %v4118
    %v4390 = vmul.f32 %v3062, %v4122
    %v4391 = vmul.f32 %v3063, %v4126
    %v4392 = vmul.f32 %v3064, %v4130
    %v4393 = vmul.f32 %v3065, %v4134
    %v4394 = vmul.f32 %v3066, %v4138
    %v4395 = vlaneseq
    %v4396 = vshrl.u32 %v4395, 7
    %v4397 = vsub.s32 0, %v4396
    %v4398 = vrot.slane %v147, %v4397
    %v4399 = vmul.f32 %v4139, %v4398
    %v4400 = vmul.f32 %v4140, %v4398
    %v4401 = vmul.f32 %v4141, %v4398
    %v4402 = vmul.f32 %v4142, %v4398
    %v4403 = vmul.f32 %v4143, %v4398
    %v4404 = vmul.f32 %v4144, %v4398
    %v4405 = vmul.f32 %v4145, %v4398
    %v4406 = vmul.f32 %v4146, %v4398
    %v4407 = vmul.f32 %v4147, %v4398
    %v4408 = vmul.f32 %v4148, %v4398
    %v4409 = vmul.f32 %v4149, %v4398
    %v4410 = vmul.f32 %v4150, %v4398
    %v4411 = vmul.f32 %v4151, %v4398
    %v4412 = vmul.f32 %v4152, %v4398
    %v4413 = vmul.f32 %v4153, %v4398
    %v4414 = vmul.f32 %v4154, %v4398
    %v4415 = vmul.f32 %v4155, %v4398
    %v4416 = vmul.f32 %v4156, %v4398
    %v4417 = vmul.f32 %v4157, %v4398
    %v4418 = vmul.f32 %v4158, %v4398
    %v4419 = vmul.f32 %v4159, %v4398
    %v4420 = vmul.f32 %v4160, %v4398
    %v4421 = vmul.f32 %v4161, %v4398
    %v4422 = vmul.f32 %v4162, %v4398
    %v4423 = vmul.f32 %v4163, %v4398
    %v4424 = vmul.f32 %v4164, %v4398
    %v4425 = vmul.f32 %v4165, %v4398
    %v4426 = vmul.f32 %v4166, %v4398
    %v4427 = vmul.f32 %v4167, %v4398
    %v4428 = vmul.f32 %v4168, %v4398
    %v4429 = vmul.f32 %v4169, %v4398
    %v4430 = vmul.f32 %v4170, %v4398
    %v4431 = vmul.f32 %v4171, %v4398
    %v4432 = vmul.f32 %v4172, %v4398
    %v4433 = vmul.f32 %v4173, %v4398
    %v4434 = vmul.f32 %v4174, %v4398
    %v4435 = vmul.f32 %v4175, %v4398
    %v4436 = vmul.f32 %v4176, %v4398
    %v4437 = vmul.f32 %v4177, %v4398
    %v4438 = vmul.f32 %v4178, %v4398
    %v4439 = vmul.f32 %v4179, %v4398
    %v4440 = vmul.f32 %v4180, %v4398
    %v4441 = vmul.f32 %v4181, %v4398
    %v4442 = vmul.f32 %v4182, %v4398
    %v4443 = vmul.f32 %v4183, %v4398
    %v4444 = vmul.f32 %v4184, %v4398
    %v4445 = vmul.f32 %v4185, %v4398
    %v4446 = vmul.f32 %v4186, %v4398
    %v4447 = vmul.f32 %v4187, %v4398
    %v4448 = vmul.f32 %v4188, %v4398
    %v4449 = vmul.f32 %v4189, %v4398
    %v4450 = vmul.f32 %v4190, %v4398
    %v4451 = vmul.f32 %v4191, %v4398
    %v4452 = vmul.f32 %v4192, %v4398
    %v4453 = vmul.f32 %v4193, %v4398
    %v4454 = vmul.f32 %v4194, %v4398
    %v4455 = vmul.f32 %v4195, %v4398
    %v4456 = vmul.f32 %v4196, %v4398
    %v4457 = vmul.f32 %v4197, %v4398
    %v4458 = vmul.f32 %v4198, %v4398
    %v4459 = vmul.f32 %v4199, %v4398
    %v4460 = vmul.f32 %v4200, %v4398
    %v4461 = vmul.f32 %v4201, %v4398
    %v4462 = vmul.f32 %v4202, %v4398
    %v4463 = vmul.f32 %v4203, %v4398
    %v4464 = vmul.f32 %v4204, %v4398
    %v4465 = vmul.f32 %v4205, %v4398
    %v4466 = vmul.f32 %v4206, %v4398
    %v4467 = vmul.f32 %v4207, %v4398
    %v4468 = vmul.f32 %v4208, %v4398
    %v4469 = vmul.f32 %v4209, %v4398
    %v4470 = vmul.f32 %v4210, %v4398
    %v4471 = vmul.f32 %v4211, %v4398
    %v4472 = vmul.f32 %v4212, %v4398
    %v4473 = vmul.f32 %v4213, %v4398
    %v4474 = vmul.f32 %v4214, %v4398
    %v4475 = vmul.f32 %v4215, %v4398
    %v4476 = vmul.f32 %v4216, %v4398
    %v4477 = vmul.f32 %v4217, %v4398
    %v4478 = vmul.f32 %v4218, %v4398
    %v4479 = vmul.f32 %v4219, %v4398
    %v4480 = vmul.f32 %v4220, %v4398
    %v4481 = vmul.f32 %v4221, %v4398
    %v4482 = vmul.f32 %v4222, %v4398
    %v4483 = vmul.f32 %v4223, %v4398
    %v4484 = vmul.f32 %v4224, %v4398
    %v4485 = vmul.f32 %v4225, %v4398
    %v4486 = vmul.f32 %v4226, %v4398
    %v4487 = vmul.f32 %v4227, %v4398
    %v4488 = vmul.f32 %v4228, %v4398
    %v4489 = vmul.f32 %v4229, %v4398
    %v4490 = vmul.f32 %v4230, %v4398
    %v4491 = vmul.f32 %v4231, %v4398
    %v4492 = vmul.f32 %v4232, %v4398
    %v4493 = vmul.f32 %v4233, %v4398
    %v4494 = vmul.f32 %v4234, %v4398
    %v4495 = vmul.f32 %v4235, %v4398
    %v4496 = vmul.f32 %v4236, %v4398
    %v4497 = vmul.f32 %v4237, %v4398
    %v4498 = vmul.f32 %v4238, %v4398
    %v4499 = vmul.f32 %v4239, %v4398
    %v4500 = vmul.f32 %v4240, %v4398
    %v4501 = vmul.f32 %v4241, %v4398
    %v4502 = vmul.f32 %v4242, %v4398
    %v4503 = vmul.f32 %v4243, %v4398
    %v4504 = vmul.f32 %v4244, %v4398
    %v4505 = vmul.f32 %v4245, %v4398
    %v4506 = vmul.f32 %v4246, %v4398
    %v4507 = vmul.f32 %v4247, %v4398
    %v4508 = vmul.f32 %v4248, %v4398
    %v4509 = vmul.f32 %v4249, %v4398
    %v4510 = vmul.f32 %v4250, %v4398
    %v4511 = vmul.f32 %v4251, %v4398
    %v4512 = vmul.f32 %v4252, %v4398
    %v4513 = vmul.f32 %v4253, %v4398
    %v4514 = vmul.f32 %v4254, %v4398
    %v4515 = vmul.f32 %v4255, %v4398
    %v4516 = vmul.f32 %v4256, %v4398
    %v4517 = vmul.f32 %v4257, %v4398
    %v4518 = vmul.f32 %v4258, %v4398
    %v4519 = vmul.f32 %v4259, %v4398
    %v4520 = vmul.f32 %v4260, %v4398
    %v4521 = vmul.f32 %v4261, %v4398
    %v4522 = vmul.f32 %v4262, %v4398
    %v4523 = vmul.f32 %v4263, %v4398
    %v4524 = vmul.f32 %v4264, %v4398
    %v4525 = vmul.f32 %v4265, %v4398
    %v4526 = vmul.f32 %v4266, %v4398
    %v4527 = vmul.f32 %v4267, %v4398
    %v4528 = vmul.f32 %v4268, %v4398
    %v4529 = vmul.f32 %v4269, %v4398
    %v4530 = vmul.f32 %v4270, %v4398
    %v4531 = vmul.f32 %v4271, %v4398
    %v4532 = vmul.f32 %v4272, %v4398
    %v4533 = vmul.f32 %v4273, %v4398
    %v4534 = vmul.f32 %v4274, %v4398
    %v4535 = vmul.f32 %v4275, %v4398
    %v4536 = vmul.f32 %v4276, %v4398
    %v4537 = vmul.f32 %v4277, %v4398
    %v4538 = vmul.f32 %v4278, %v4398
    %v4539 = vmul.f32 %v4279, %v4398
    %v4540 = vmul.f32 %v4280, %v4398
    %v4541 = vmul.f32 %v4281, %v4398
    %v4542 = vmul.f32 %v4282, %v4398
    %v4543 = vmul.f32 %v4283, %v4398
    %v4544 = vmul.f32 %v4284, %v4398
    %v4545 = vmul.f32 %v4285, %v4398
    %v4546 = vmul.f32 %v4286, %v4398
    %v4547 = vmul.f32 %v4287, %v4398
    %v4548 = vmul.f32 %v4288, %v4398
    %v4549 = vmul.f32 %v4289, %v4398
    %v4550 = vmul.f32 %v4290, %v4398
    %v4551 = vmul.f32 %v4291, %v4398
    %v4552 = vmul.f32 %v4292, %v4398
    %v4553 = vmul.f32 %v4293, %v4398
    %v4554 = vmul.f32 %v4294, %v4398
    %v4555 = vmul.f32 %v4295, %v4398
    %v4556 = vmul.f32 %v4296, %v4398
    %v4557 = vmul.f32 %v4297, %v4398
    %v4558 = vmul.f32 %v4298, %v4398
    %v4559 = vmul.f32 %v4299, %v4398
    %v4560 = vmul.f32 %v4300, %v4398
    %v4561 = vmul.f32 %v4301, %v4398
    %v4562 = vmul.f32 %v4302, %v4398
    %v4563 = vmul.f32 %v4303, %v4398
    %v4564 = vmul.f32 %v4304, %v4398
    %v4565 = vmul.f32 %v4305, %v4398
    %v4566 = vmul.f32 %v4306, %v4398
    %v4567 = vmul.f32 %v4307, %v4398
    %v4568 = vmul.f32 %v4308, %v4398
    %v4569 = vmul.f32 %v4309, %v4398
    %v4570 = vmul.f32 %v4310, %v4398
    %v4571 = vmul.f32 %v4311, %v4398
    %v4572 = vmul.f32 %v4312, %v4398
    %v4573 = vmul.f32 %v4313, %v4398
    %v4574 = vmul.f32 %v4314, %v4398
    %v4575 = vmul.f32 %v4315, %v4398
    %v4576 = vmul.f32 %v4316, %v4398
    %v4577 = vmul.f32 %v4317, %v4398
    %v4578 = vmul.f32 %v4318, %v4398
    %v4579 = vmul.f32 %v4319, %v4398
    %v4580 = vmul.f32 %v4320, %v4398
    %v4581 = vmul.f32 %v4321, %v4398
    %v4582 = vmul.f32 %v4322, %v4398
    %v4583 = vmul.f32 %v4323, %v4398
    %v4584 = vmul.f32 %v4324, %v4398
    %v4585 = vmul.f32 %v4325, %v4398
    %v4586 = vmul.f32 %v4326, %v4398
    %v4587 = vmul.f32 %v4327, %v4398
    %v4588 = vmul.f32 %v4328, %v4398
    %v4589 = vmul.f32 %v4329, %v4398
    %v4590 = vmul.f32 %v4330, %v4398
    %v4591 = vmul.f32 %v4331, %v4398
    %v4592 = vmul.f32 %v4332, %v4398
    %v4593 = vmul.f32 %v4333, %v4398
    %v4594 = vmul.f32 %v4334, %v4398
    %v4595 = vmul.f32 %v4335, %v4398
    %v4596 = vmul.f32 %v4336, %v4398
    %v4597 = vmul.f32 %v4337, %v4398
    %v4598 = vmul.f32 %v4338, %v4398
    %v4599 = vmul.f32 %v4339, %v4398
    %v4600 = vmul.f32 %v4340, %v4398
    %v4601 = vmul.f32 %v4341, %v4398
    %v4602 = vmul.f32 %v4342, %v4398
    %v4603 = vmul.f32 %v4343, %v4398
    %v4604 = vmul.f32 %v4344, %v4398
    %v4605 = vmul.f32 %v4345, %v4398
    %v4606 = vmul.f32 %v4346, %v4398
    %v4607 = vmul.f32 %v4347, %v4398
    %v4608 = vmul.f32 %v4348, %v4398
    %v4609 = vmul.f32 %v4349, %v4398
    %v4610 = vmul.f32 %v4350, %v4398
    %v4611 = vmul.f32 %v4351, %v4398
    %v4612 = vmul.f32 %v4352, %v4398
    %v4613 = vmul.f32 %v4353, %v4398
    %v4614 = vmul.f32 %v4354, %v4398
    %v4615 = vmul.f32 %v4355, %v4398
    %v4616 = vmul.f32 %v4356, %v4398
    %v4617 = vmul.f32 %v4357, %v4398
    %v4618 = vmul.f32 %v4358, %v4398
    %v4619 = vmul.f32 %v4359, %v4398
    %v4620 = vmul.f32 %v4360, %v4398
    %v4621 = vmul.f32 %v4361, %v4398
    %v4622 = vmul.f32 %v4362, %v4398
    %v4623 = vmul.f32 %v4363, %v4398
    %v4624 = vmul.f32 %v4364, %v4398
    %v4625 = vmul.f32 %v4365, %v4398
    %v4626 = vmul.f32 %v4366, %v4398
    %v4627 = vmul.f32 %v4367, %v4398
    %v4628 = vmul.f32 %v4368, %v4398
    %v4629 = vmul.f32 %v4369, %v4398
    %v4630 = vmul.f32 %v4370, %v4398
    %v4631 = vmul.f32 %v4371, %v4398
    %v4632 = vmul.f32 %v4372, %v4398
    %v4633 = vmul.f32 %v4373, %v4398
    %v4634 = vmul.f32 %v4374, %v4398
    %v4635 = vmul.f32 %v4375, %v4398
    %v4636 = vmul.f32 %v4376, %v4398
    %v4637 = vmul.f32 %v4377, %v4398
    %v4638 = vmul.f32 %v4378, %v4398
    %v4639 = vmul.f32 %v4379, %v4398
    %v4640 = vmul.f32 %v4380, %v4398
    %v4641 = vmul.f32 %v4381, %v4398
    %v4642 = vmul.f32 %v4382, %v4398
    %v4643 = vmul.f32 %v4383, %v4398
    %v4644 = vmul.f32 %v4384, %v4398
    %v4645 = vmul.f32 %v4385, %v4398
    %v4646 = vmul.f32 %v4386, %v4398
    %v4647 = vmul.f32 %v4387, %v4398
    %v4648 = vmul.f32 %v4388, %v4398
    %v4649 = vmul.f32 %v4389, %v4398
    %v4650 = vmul.f32 %v4390, %v4398
    %v4651 = vmul.f32 %v4391, %v4398
    %v4652 = vmul.f32 %v4392, %v4398
    %v4653 = vmul.f32 %v4393, %v4398
    %v4654 = vmul.f32 %v4394, %v4398
    %v4655 = vlaneseq
    %v4656 = vshrl.u32 %v4655, 7
    %v4657 = vsub.s32 0, %v4656
    %v4658 = vrot.slane %v148, %v4657
    %v4659 = vadd.f32 %v4399, %v4658
    %v4660 = vadd.f32 %v4400, %v4658
    %v4661 = vadd.f32 %v4401, %v4658
    %v4662 = vadd.f32 %v4402, %v4658
    %v4663 = vadd.f32 %v4403, %v4658
    %v4664 = vadd.f32 %v4404, %v4658
    %v4665 = vadd.f32 %v4405, %v4658
    %v4666 = vadd.f32 %v4406, %v4658
    %v4667 = vadd.f32 %v4407, %v4658
    %v4668 = vadd.f32 %v4408, %v4658
    %v4669 = vadd.f32 %v4409, %v4658
    %v4670 = vadd.f32 %v4410, %v4658
    %v4671 = vadd.f32 %v4411, %v4658
    %v4672 = vadd.f32 %v4412, %v4658
    %v4673 = vadd.f32 %v4413, %v4658
    %v4674 = vadd.f32 %v4414, %v4658
    %v4675 = vadd.f32 %v4415, %v4658
    %v4676 = vadd.f32 %v4416, %v4658
    %v4677 = vadd.f32 %v4417, %v4658
    %v4678 = vadd.f32 %v4418, %v4658
    %v4679 = vadd.f32 %v4419, %v4658
    %v4680 = vadd.f32 %v4420, %v4658
    %v4681 = vadd.f32 %v4421, %v4658
    %v4682 = vadd.f32 %v4422, %v4658
    %v4683 = vadd.f32 %v4423, %v4658
    %v4684 = vadd.f32 %v4424, %v4658
    %v4685 = vadd.f32 %v4425, %v4658
    %v4686 = vadd.f32 %v4426, %v4658
    %v4687 = vadd.f32 %v4427, %v4658
    %v4688 = vadd.f32 %v4428, %v4658
    %v4689 = vadd.f32 %v4429, %v4658
    %v4690 = vadd.f32 %v4430, %v4658
    %v4691 = vadd.f32 %v4431, %v4658
    %v4692 = vadd.f32 %v4432, %v4658
    %v4693 = vadd.f32 %v4433, %v4658
    %v4694 = vadd.f32 %v4434, %v4658
    %v4695 = vadd.f32 %v4435, %v4658
    %v4696 = vadd.f32 %v4436, %v4658
    %v4697 = vadd.f32 %v4437, %v4658
    %v4698 = vadd.f32 %v4438, %v4658
    %v4699 = vadd.f32 %v4439, %v4658
    %v4700 = vadd.f32 %v4440, %v4658
    %v4701 = vadd.f32 %v4441, %v4658
    %v4702 = vadd.f32 %v4442, %v4658
    %v4703 = vadd.f32 %v4443, %v4658
    %v4704 = vadd.f32 %v4444, %v4658
    %v4705 = vadd.f32 %v4445, %v4658
    %v4706 = vadd.f32 %v4446, %v4658
    %v4707 = vadd.f32 %v4447, %v4658
    %v4708 = vadd.f32 %v4448, %v4658
    %v4709 = vadd.f32 %v4449, %v4658
    %v4710 = vadd.f32 %v4450, %v4658
    %v4711 = vadd.f32 %v4451, %v4658
    %v4712 = vadd.f32 %v4452, %v4658
    %v4713 = vadd.f32 %v4453, %v4658
    %v4714 = vadd.f32 %v4454, %v4658
    %v4715 = vadd.f32 %v4455, %v4658
    %v4716 = vadd.f32 %v4456, %v4658
    %v4717 = vadd.f32 %v4457, %v4658
    %v4718 = vadd.f32 %v4458, %v4658
    %v4719 = vadd.f32 %v4459, %v4658
    %v4720 = vadd.f32 %v4460, %v4658
    %v4721 = vadd.f32 %v4461, %v4658
    %v4722 = vadd.f32 %v4462, %v4658
    %v4723 = vadd.f32 %v4463, %v4658
    %v4724 = vadd.f32 %v4464, %v4658
    %v4725 = vadd.f32 %v4465, %v4658
    %v4726 = vadd.f32 %v4466, %v4658
    %v4727 = vadd.f32 %v4467, %v4658
    %v4728 = vadd.f32 %v4468, %v4658
    %v4729 = vadd.f32 %v4469, %v4658
    %v4730 = vadd.f32 %v4470, %v4658
    %v4731 = vadd.f32 %v4471, %v4658
    %v4732 = vadd.f32 %v4472, %v4658
    %v4733 = vadd.f32 %v4473, %v4658
    %v4734 = vadd.f32 %v4474, %v4658
    %v4735 = vadd.f32 %v4475, %v4658
    %v4736 = vadd.f32 %v4476, %v4658
    %v4737 = vadd.f32 %v4477, %v4658
    %v4738 = vadd.f32 %v4478, %v4658
    %v4739 = vadd.f32 %v4479, %v4658
    %v4740 = vadd.f32 %v4480, %v4658
    %v4741 = vadd.f32 %v4481, %v4658
    %v4742 = vadd.f32 %v4482, %v4658
    %v4743 = vadd.f32 %v4483, %v4658
    %v4744 = vadd.f32 %v4484, %v4658
    %v4745 = vadd.f32 %v4485, %v4658
    %v4746 = vadd.f32 %v4486, %v4658
    %v4747 = vadd.f32 %v4487, %v4658
    %v4748 = vadd.f32 %v4488, %v4658
    %v4749 = vadd.f32 %v4489, %v4658
    %v4750 = vadd.f32 %v4490, %v4658
    %v4751 = vadd.f32 %v4491, %v4658
    %v4752 = vadd.f32 %v4492, %v4658
    %v4753 = vadd.f32 %v4493, %v4658
    %v4754 = vadd.f32 %v4494, %v4658
    %v4755 = vadd.f32 %v4495, %v4658
    %v4756 = vadd.f32 %v4496, %v4658
    %v4757 = vadd.f32 %v4497, %v4658
    %v4758 = vadd.f32 %v4498, %v4658
    %v4759 = vadd.f32 %v4499, %v4658
    %v4760 = vadd.f32 %v4500, %v4658
    %v4761 = vadd.f32 %v4501, %v4658
    %v4762 = vadd.f32 %v4502, %v4658
    %v4763 = vadd.f32 %v4503, %v4658
    %v4764 = vadd.f32 %v4504, %v4658
    %v4765 = vadd.f32 %v4505, %v4658
    %v4766 = vadd.f32 %v4506, %v4658
    %v4767 = vadd.f32 %v4507, %v4658
    %v4768 = vadd.f32 %v4508, %v4658
    %v4769 = vadd.f32 %v4509, %v4658
    %v4770 = vadd.f32 %v4510, %v4658
    %v4771 = vadd.f32 %v4511, %v4658
    %v4772 = vadd.f32 %v4512, %v4658
    %v4773 = vadd.f32 %v4513, %v4658
    %v4774 = vadd.f32 %v4514, %v4658
    %v4775 = vadd.f32 %v4515, %v4658
    %v4776 = vadd.f32 %v4516, %v4658
    %v4777 = vadd.f32 %v4517, %v4658
    %v4778 = vadd.f32 %v4518, %v4658
    %v4779 = vadd.f32 %v4519, %v4658
    %v4780 = vadd.f32 %v4520, %v4658
    %v4781 = vadd.f32 %v4521, %v4658
    %v4782 = vadd.f32 %v4522, %v4658
    %v4783 = vadd.f32 %v4523, %v4658
    %v4784 = vadd.f32 %v4524, %v4658
    %v4785 = vadd.f32 %v4525, %v4658
    %v4786 = vadd.f32 %v4526, %v4658
    %v4787 = vadd.f32 %v4527, %v4658
    %v4788 = vadd.f32 %v4528, %v4658
    %v4789 = vadd.f32 %v4529, %v4658
    %v4790 = vadd.f32 %v4530, %v4658
    %v4791 = vadd.f32 %v4531, %v4658
    %v4792 = vadd.f32 %v4532, %v4658
    %v4793 = vadd.f32 %v4533, %v4658
    %v4794 = vadd.f32 %v4534, %v4658
    %v4795 = vadd.f32 %v4535, %v4658
    %v4796 = vadd.f32 %v4536, %v4658
    %v4797 = vadd.f32 %v4537, %v4658
    %v4798 = vadd.f32 %v4538, %v4658
    %v4799 = vadd.f32 %v4539, %v4658
    %v4800 = vadd.f32 %v4540, %v4658
    %v4801 = vadd.f32 %v4541, %v4658
    %v4802 = vadd.f32 %v4542, %v4658
    %v4803 = vadd.f32 %v4543, %v4658
    %v4804 = vadd.f32 %v4544, %v4658
    %v4805 = vadd.f32 %v4545, %v4658
    %v4806 = vadd.f32 %v4546, %v4658
    %v4807 = vadd.f32 %v4547, %v4658
    %v4808 = vadd.f32 %v4548, %v4658
    %v4809 = vadd.f32 %v4549, %v4658
    %v4810 = vadd.f32 %v4550, %v4658
    %v4811 = vadd.f32 %v4551, %v4658
    %v4812 = vadd.f32 %v4552, %v4658
    %v4813 = vadd.f32 %v4553, %v4658
    %v4814 = vadd.f32 %v4554, %v4658
    %v4815 = vadd.f32 %v4555, %v4658
    %v4816 = vadd.f32 %v4556, %v4658
    %v4817 = vadd.f32 %v4557, %v4658
    %v4818 = vadd.f32 %v4558, %v4658
    %v4819 = vadd.f32 %v4559, %v4658
    %v4820 = vadd.f32 %v4560, %v4658
    %v4821 = vadd.f32 %v4561, %v4658
    %v4822 = vadd.f32 %v4562, %v4658
    %v4823 = vadd.f32 %v4563, %v4658
    %v4824 = vadd.f32 %v4564, %v4658
    %v4825 = vadd.f32 %v4565, %v4658
    %v4826 = vadd.f32 %v4566, %v4658
    %v4827 = vadd.f32 %v4567, %v4658
    %v4828 = vadd.f32 %v4568, %v4658
    %v4829 = vadd.f32 %v4569, %v4658
    %v4830 = vadd.f32 %v4570, %v4658
    %v4831 = vadd.f32 %v4571, %v4658
    %v4832 = vadd.f32 %v4572, %v4658
    %v4833 = vadd.f32 %v4573, %v4658
    %v4834 = vadd.f32 %v4574, %v4658
    %v4835 = vadd.f32 %v4575, %v4658
    %v4836 = vadd.f32 %v4576, %v4658
    %v4837 = vadd.f32 %v4577, %v4658
    %v4838 = vadd.f32 %v4578, %v4658
    %v4839 = vadd.f32 %v4579, %v4658
    %v4840 = vadd.f32 %v4580, %v4658
    %v4841 = vadd.f32 %v4581, %v4658
    %v4842 = vadd.f32 %v4582, %v4658
    %v4843 = vadd.f32 %v4583, %v4658
    %v4844 = vadd.f32 %v4584, %v4658
    %v4845 = vadd.f32 %v4585, %v4658
    %v4846 = vadd.f32 %v4586, %v4658
    %v4847 = vadd.f32 %v4587, %v4658
    %v4848 = vadd.f32 %v4588, %v4658
    %v4849 = vadd.f32 %v4589, %v4658
    %v4850 = vadd.f32 %v4590, %v4658
    %v4851 = vadd.f32 %v4591, %v4658
    %v4852 = vadd.f32 %v4592, %v4658
    %v4853 = vadd.f32 %v4593, %v4658
    %v4854 = vadd.f32 %v4594, %v4658
    %v4855 = vadd.f32 %v4595, %v4658
    %v4856 = vadd.f32 %v4596, %v4658
    %v4857 = vadd.f32 %v4597, %v4658
    %v4858 = vadd.f32 %v4598, %v4658
    %v4859 = vadd.f32 %v4599, %v4658
    %v4860 = vadd.f32 %v4600, %v4658
    %v4861 = vadd.f32 %v4601, %v4658
    %v4862 = vadd.f32 %v4602, %v4658
    %v4863 = vadd.f32 %v4603, %v4658
    %v4864 = vadd.f32 %v4604, %v4658
    %v4865 = vadd.f32 %v4605, %v4658
    %v4866 = vadd.f32 %v4606, %v4658
    %v4867 = vadd.f32 %v4607, %v4658
    %v4868 = vadd.f32 %v4608, %v4658
    %v4869 = vadd.f32 %v4609, %v4658
    %v4870 = vadd.f32 %v4610, %v4658
    %v4871 = vadd.f32 %v4611, %v4658
    %v4872 = vadd.f32 %v4612, %v4658
    %v4873 = vadd.f32 %v4613, %v4658
    %v4874 = vadd.f32 %v4614, %v4658
    %v4875 = vadd.f32 %v4615, %v4658
    %v4876 = vadd.f32 %v4616, %v4658
    %v4877 = vadd.f32 %v4617, %v4658
    %v4878 = vadd.f32 %v4618, %v4658
    %v4879 = vadd.f32 %v4619, %v4658
    %v4880 = vadd.f32 %v4620, %v4658
    %v4881 = vadd.f32 %v4621, %v4658
    %v4882 = vadd.f32 %v4622, %v4658
    %v4883 = vadd.f32 %v4623, %v4658
    %v4884 = vadd.f32 %v4624, %v4658
    %v4885 = vadd.f32 %v4625, %v4658
    %v4886 = vadd.f32 %v4626, %v4658
    %v4887 = vadd.f32 %v4627, %v4658
    %v4888 = vadd.f32 %v4628, %v4658
    %v4889 = vadd.f32 %v4629, %v4658
    %v4890 = vadd.f32 %v4630, %v4658
    %v4891 = vadd.f32 %v4631, %v4658
    %v4892 = vadd.f32 %v4632, %v4658
    %v4893 = vadd.f32 %v4633, %v4658
    %v4894 = vadd.f32 %v4634, %v4658
    %v4895 = vadd.f32 %v4635, %v4658
    %v4896 = vadd.f32 %v4636, %v4658
    %v4897 = vadd.f32 %v4637, %v4658
    %v4898 = vadd.f32 %v4638, %v4658
    %v4899 = vadd.f32 %v4639, %v4658
    %v4900 = vadd.f32 %v4640, %v4658
    %v4901 = vadd.f32 %v4641, %v4658
    %v4902 = vadd.f32 %v4642, %v4658
    %v4903 = vadd.f32 %v4643, %v4658
    %v4904 = vadd.f32 %v4644, %v4658
    %v4905 = vadd.f32 %v4645, %v4658
    %v4906 = vadd.f32 %v4646, %v4658
    %v4907 = vadd.f32 %v4647, %v4658
    %v4908 = vadd.f32 %v4648, %v4658
    %v4909 = vadd.f32 %v4649, %v4658
    %v4910 = vadd.f32 %v4650, %v4658
    %v4911 = vadd.f32 %v4651, %v4658
    %v4912 = vadd.f32 %v4652, %v4658
    %v4913 = vadd.f32 %v4653, %v4658
    %v4914 = vadd.f32 %v4654, %v4658
    %v4915 = vmax.f32 %v4659, 0.0
    %v4916 = vmax.f32 %v4660, 0.0
    %v4917 = vmax.f32 %v4661, 0.0
    %v4918 = vmax.f32 %v4662, 0.0
    %v4919 = vmax.f32 %v4663, 0.0
    %v4920 = vmax.f32 %v4664, 0.0
    %v4921 = vmax.f32 %v4665, 0.0
    %v4922 = vmax.f32 %v4666, 0.0
    %v4923 = vmax.f32 %v4667, 0.0
    %v4924 = vmax.f32 %v4668, 0.0
    %v4925 = vmax.f32 %v4669, 0.0
    %v4926 = vmax.f32 %v4670, 0.0
    %v4927 = vmax.f32 %v4671, 0.0
    %v4928 = vmax.f32 %v4672, 0.0
    %v4929 = vmax.f32 %v4673, 0.0
    %v4930 = vmax.f32 %v4674, 0.0
    %v4931 = vmax.f32 %v4675, 0.0
    %v4932 = vmax.f32 %v4676, 0.0
    %v4933 = vmax.f32 %v4677, 0.0
    %v4934 = vmax.f32 %v4678, 0.0
    %v4935 = vmax.f32 %v4679, 0.0
    %v4936 = vmax.f32 %v4680, 0.0
    %v4937 = vmax.f32 %v4681, 0.0
    %v4938 = vmax.f32 %v4682, 0.0
    %v4939 = vmax.f32 %v4683, 0.0
    %v4940 = vmax.f32 %v4684, 0.0
    %v4941 = vmax.f32 %v4685, 0.0
    %v4942 = vmax.f32 %v4686, 0.0
    %v4943 = vmax.f32 %v4687, 0.0
    %v4944 = vmax.f32 %v4688, 0.0
    %v4945 = vmax.f32 %v4689, 0.0
    %v4946 = vmax.f32 %v4690, 0.0
    %v4947 = vmax.f32 %v4691, 0.0
    %v4948 = vmax.f32 %v4692, 0.0
    %v4949 = vmax.f32 %v4693, 0.0
    %v4950 = vmax.f32 %v4694, 0.0
    %v4951 = vmax.f32 %v4695, 0.0
    %v4952 = vmax.f32 %v4696, 0.0
    %v4953 = vmax.f32 %v4697, 0.0
    %v4954 = vmax.f32 %v4698, 0.0
    %v4955 = vmax.f32 %v4699, 0.0
    %v4956 = vmax.f32 %v4700, 0.0
    %v4957 = vmax.f32 %v4701, 0.0
    %v4958 = vmax.f32 %v4702, 0.0
    %v4959 = vmax.f32 %v4703, 0.0
    %v4960 = vmax.f32 %v4704, 0.0
    %v4961 = vmax.f32 %v4705, 0.0
    %v4962 = vmax.f32 %v4706, 0.0
    %v4963 = vmax.f32 %v4707, 0.0
    %v4964 = vmax.f32 %v4708, 0.0
    %v4965 = vmax.f32 %v4709, 0.0
    %v4966 = vmax.f32 %v4710, 0.0
    %v4967 = vmax.f32 %v4711, 0.0
    %v4968 = vmax.f32 %v4712, 0.0
    %v4969 = vmax.f32 %v4713, 0.0
    %v4970 = vmax.f32 %v4714, 0.0
    %v4971 = vmax.f32 %v4715, 0.0
    %v4972 = vmax.f32 %v4716, 0.0
    %v4973 = vmax.f32 %v4717, 0.0
    %v4974 = vmax.f32 %v4718, 0.0
    %v4975 = vmax.f32 %v4719, 0.0
    %v4976 = vmax.f32 %v4720, 0.0
    %v4977 = vmax.f32 %v4721, 0.0
    %v4978 = vmax.f32 %v4722, 0.0
    %v4979 = vmax.f32 %v4723, 0.0
    %v4980 = vmax.f32 %v4724, 0.0
    %v4981 = vmax.f32 %v4725, 0.0
    %v4982 = vmax.f32 %v4726, 0.0
    %v4983 = vmax.f32 %v4727, 0.0
    %v4984 = vmax.f32 %v4728, 0.0
    %v4985 = vmax.f32 %v4729, 0.0
    %v4986 = vmax.f32 %v4730, 0.0
    %v4987 = vmax.f32 %v4731, 0.0
    %v4988 = vmax.f32 %v4732, 0.0
    %v4989 = vmax.f32 %v4733, 0.0
    %v4990 = vmax.f32 %v4734, 0.0
    %v4991 = vmax.f32 %v4735, 0.0
    %v4992 = vmax.f32 %v4736, 0.0
    %v4993 = vmax.f32 %v4737, 0.0
    %v4994 = vmax.f32 %v4738, 0.0
    %v4995 = vmax.f32 %v4739, 0.0
    %v4996 = vmax.f32 %v4740, 0.0
    %v4997 = vmax.f32 %v4741, 0.0
    %v4998 = vmax.f32 %v4742, 0.0
    %v4999 = vmax.f32 %v4743, 0.0
    %v5000 = vmax.f32 %v4744, 0.0
    %v5001 = vmax.f32 %v4745, 0.0
    %v5002 = vmax.f32 %v4746, 0.0
    %v5003 = vmax.f32 %v4747, 0.0
    %v5004 = vmax.f32 %v4748, 0.0
    %v5005 = vmax.f32 %v4749, 0.0
    %v5006 = vmax.f32 %v4750, 0.0
    %v5007 = vmax.f32 %v4751, 0.0
    %v5008 = vmax.f32 %v4752, 0.0
    %v5009 = vmax.f32 %v4753, 0.0
    %v5010 = vmax.f32 %v4754, 0.0
    %v5011 = vmax.f32 %v4755, 0.0
    %v5012 = vmax.f32 %v4756, 0.0
    %v5013 = vmax.f32 %v4757, 0.0
    %v5014 = vmax.f32 %v4758, 0.0
    %v5015 = vmax.f32 %v4759, 0.0
    %v5016 = vmax.f32 %v4760, 0.0
    %v5017 = vmax.f32 %v4761, 0.0
    %v5018 = vmax.f32 %v4762, 0.0
    %v5019 = vmax.f32 %v4763, 0.0
    %v5020 = vmax.f32 %v4764, 0.0
    %v5021 = vmax.f32 %v4765, 0.0
    %v5022 = vmax.f32 %v4766, 0.0
    %v5023 = vmax.f32 %v4767, 0.0
    %v5024 = vmax.f32 %v4768, 0.0
    %v5025 = vmax.f32 %v4769, 0.0
    %v5026 = vmax.f32 %v4770, 0.0
    %v5027 = vmax.f32 %v4771, 0.0
    %v5028 = vmax.f32 %v4772, 0.0
    %v5029 = vmax.f32 %v4773, 0.0
    %v5030 = vmax.f32 %v4774, 0.0
    %v5031 = vmax.f32 %v4775, 0.0
    %v5032 = vmax.f32 %v4776, 0.0
    %v5033 = vmax.f32 %v4777, 0.0
    %v5034 = vmax.f32 %v4778, 0.0
    %v5035 = vmax.f32 %v4779, 0.0
    %v5036 = vmax.f32 %v4780, 0.0
    %v5037 = vmax.f32 %v4781, 0.0
    %v5038 = vmax.f32 %v4782, 0.0
    %v5039 = vmax.f32 %v4783, 0.0
    %v5040 = vmax.f32 %v4784, 0.0
    %v5041 = vmax.f32 %v4785, 0.0
    %v5042 = vmax.f32 %v4786, 0.0
    %v5043 = vmax.f32 %v4787, 0.0
    %v5044 = vmax.f32 %v4788, 0.0
    %v5045 = vmax.f32 %v4789, 0.0
    %v5046 = vmax.f32 %v4790, 0.0
    %v5047 = vmax.f32 %v4791, 0.0
    %v5048 = vmax.f32 %v4792, 0.0
    %v5049 = vmax.f32 %v4793, 0.0
    %v5050 = vmax.f32 %v4794, 0.0
    %v5051 = vmax.f32 %v4795, 0.0
    %v5052 = vmax.f32 %v4796, 0.0
    %v5053 = vmax.f32 %v4797, 0.0
    %v5054 = vmax.f32 %v4798, 0.0
    %v5055 = vmax.f32 %v4799, 0.0
    %v5056 = vmax.f32 %v4800, 0.0
    %v5057 = vmax.f32 %v4801, 0.0
    %v5058 = vmax.f32 %v4802, 0.0
    %v5059 = vmax.f32 %v4803, 0.0
    %v5060 = vmax.f32 %v4804, 0.0
    %v5061 = vmax.f32 %v4805, 0.0
    %v5062 = vmax.f32 %v4806, 0.0
    %v5063 = vmax.f32 %v4807, 0.0
    %v5064 = vmax.f32 %v4808, 0.0
    %v5065 = vmax.f32 %v4809, 0.0
    %v5066 = vmax.f32 %v4810, 0.0
    %v5067 = vmax.f32 %v4811, 0.0
    %v5068 = vmax.f32 %v4812, 0.0
    %v5069 = vmax.f32 %v4813, 0.0
    %v5070 = vmax.f32 %v4814, 0.0
    %v5071 = vmax.f32 %v4815, 0.0
    %v5072 = vmax.f32 %v4816, 0.0
    %v5073 = vmax.f32 %v4817, 0.0
    %v5074 = vmax.f32 %v4818, 0.0
    %v5075 = vmax.f32 %v4819, 0.0
    %v5076 = vmax.f32 %v4820, 0.0
    %v5077 = vmax.f32 %v4821, 0.0
    %v5078 = vmax.f32 %v4822, 0.0
    %v5079 = vmax.f32 %v4823, 0.0
    %v5080 = vmax.f32 %v4824, 0.0
    %v5081 = vmax.f32 %v4825, 0.0
    %v5082 = vmax.f32 %v4826, 0.0
    %v5083 = vmax.f32 %v4827, 0.0
    %v5084 = vmax.f32 %v4828, 0.0
    %v5085 = vmax.f32 %v4829, 0.0
    %v5086 = vmax.f32 %v4830, 0.0
    %v5087 = vmax.f32 %v4831, 0.0
    %v5088 = vmax.f32 %v4832, 0.0
    %v5089 = vmax.f32 %v4833, 0.0
    %v5090 = vmax.f32 %v4834, 0.0
    %v5091 = vmax.f32 %v4835, 0.0
    %v5092 = vmax.f32 %v4836, 0.0
    %v5093 = vmax.f32 %v4837, 0.0
    %v5094 = vmax.f32 %v4838, 0.0
    %v5095 = vmax.f32 %v4839, 0.0
    %v5096 = vmax.f32 %v4840, 0.0
    %v5097 = vmax.f32 %v4841, 0.0
    %v5098 = vmax.f32 %v4842, 0.0
    %v5099 = vmax.f32 %v4843, 0.0
    %v5100 = vmax.f32 %v4844, 0.0
    %v5101 = vmax.f32 %v4845, 0.0
    %v5102 = vmax.f32 %v4846, 0.0
    %v5103 = vmax.f32 %v4847, 0.0
    %v5104 = vmax.f32 %v4848, 0.0
    %v5105 = vmax.f32 %v4849, 0.0
    %v5106 = vmax.f32 %v4850, 0.0
    %v5107 = vmax.f32 %v4851, 0.0
    %v5108 = vmax.f32 %v4852, 0.0
    %v5109 = vmax.f32 %v4853, 0.0
    %v5110 = vmax.f32 %v4854, 0.0
    %v5111 = vmax.f32 %v4855, 0.0
    %v5112 = vmax.f32 %v4856, 0.0
    %v5113 = vmax.f32 %v4857, 0.0
    %v5114 = vmax.f32 %v4858, 0.0
    %v5115 = vmax.f32 %v4859, 0.0
    %v5116 = vmax.f32 %v4860, 0.0
    %v5117 = vmax.f32 %v4861, 0.0
    %v5118 = vmax.f32 %v4862, 0.0
    %v5119 = vmax.f32 %v4863, 0.0
    %v5120 = vmax.f32 %v4864, 0.0
    %v5121 = vmax.f32 %v4865, 0.0
    %v5122 = vmax.f32 %v4866, 0.0
    %v5123 = vmax.f32 %v4867, 0.0
    %v5124 = vmax.f32 %v4868, 0.0
    %v5125 = vmax.f32 %v4869, 0.0
    %v5126 = vmax.f32 %v4870, 0.0
    %v5127 = vmax.f32 %v4871, 0.0
    %v5128 = vmax.f32 %v4872, 0.0
    %v5129 = vmax.f32 %v4873, 0.0
    %v5130 = vmax.f32 %v4874, 0.0
    %v5131 = vmax.f32 %v4875, 0.0
    %v5132 = vmax.f32 %v4876, 0.0
    %v5133 = vmax.f32 %v4877, 0.0
    %v5134 = vmax.f32 %v4878, 0.0
    %v5135 = vmax.f32 %v4879, 0.0
    %v5136 = vmax.f32 %v4880, 0.0
    %v5137 = vmax.f32 %v4881, 0.0
    %v5138 = vmax.f32 %v4882, 0.0
    %v5139 = vmax.f32 %v4883, 0.0
    %v5140 = vmax.f32 %v4884, 0.0
    %v5141 = vmax.f32 %v4885, 0.0
    %v5142 = vmax.f32 %v4886, 0.0
    %v5143 = vmax.f32 %v4887, 0.0
    %v5144 = vmax.f32 %v4888, 0.0
    %v5145 = vmax.f32 %v4889, 0.0
    %v5146 = vmax.f32 %v4890, 0.0
    %v5147 = vmax.f32 %v4891, 0.0
    %v5148 = vmax.f32 %v4892, 0.0
    %v5149 = vmax.f32 %v4893, 0.0
    %v5150 = vmax.f32 %v4894, 0.0
    %v5151 = vmax.f32 %v4895, 0.0
    %v5152 = vmax.f32 %v4896, 0.0
    %v5153 = vmax.f32 %v4897, 0.0
    %v5154 = vmax.f32 %v4898, 0.0
    %v5155 = vmax.f32 %v4899, 0.0
    %v5156 = vmax.f32 %v4900, 0.0
    %v5157 = vmax.f32 %v4901, 0.0
    %v5158 = vmax.f32 %v4902, 0.0
    %v5159 = vmax.f32 %v4903, 0.0
    %v5160 = vmax.f32 %v4904, 0.0
    %v5161 = vmax.f32 %v4905, 0.0
    %v5162 = vmax.f32 %v4906, 0.0
    %v5163 = vmax.f32 %v4907, 0.0
    %v5164 = vmax.f32 %v4908, 0.0
    %v5165 = vmax.f32 %v4909, 0.0
    %v5166 = vmax.f32 %v4910, 0.0
    %v5167 = vmax.f32 %v4911, 0.0
    %v5168 = vmax.f32 %v4912, 0.0
    %v5169 = vmax.f32 %v4913, 0.0
    %v5170 = vmax.f32 %v4914, 0.0
    %v5171 = vld [vmem:[%s7] sm:$0x1]
    %v5172 = vld [vmem:[%s7 + $0x1] sm:$0x1]
    %v5173 = vld [vmem:[%s7 + $0x2] sm:$0x1]
    %v5174 = vld [vmem:[%s6] sm:$0xff]
    %v5175 = vld [vmem:[%s6 + $0x8] sm:$0xff]
    %v5176 = vld [vmem:[%s6 + $0x10] sm:$0xff]
    %v5177 = vld [vmem:[%s6 + $0x18] sm:$0xff]
    %v5178 = vld [vmem:[%s6 + $0x20] sm:$0xff]
    %v5179 = vld [vmem:[%s6 + $0x28] sm:$0xff]
    %v5180 = vld [vmem:[%s6 + $0x30] sm:$0xff]
    %v5181 = vld [vmem:[%s6 + $0x38] sm:$0xff]
    %v5182 = vlaneseq
    %v5183 = vshrl.u32 %v5182, 7
    %v5184 = vsub.s32 0, %v5183
    %v5185 = vrot.slane %v5171, %v5184
    %vm5186 = vcmask 523264
    %v5188 = vsel %vm5186, %v4915, 0
    %v5191 = vsel %vm5186, %v4916, 0
    %v5194 = vsel %vm5186, %v4917, 0
    %v5197 = vsel %vm5186, %v4918, 0
    %v5200 = vsel %vm5186, %v4919, 0
    %v5203 = vsel %vm5186, %v4920, 0
    %v5206 = vsel %vm5186, %v4921, 0
    %v5209 = vsel %vm5186, %v4922, 0
    %v5212 = vsel %vm5186, %v4923, 0
    %v5215 = vsel %vm5186, %v4924, 0
    %v5218 = vsel %vm5186, %v4925, 0
    %v5221 = vsel %vm5186, %v4926, 0
    %v5224 = vsel %vm5186, %v4927, 0
    %v5227 = vsel %vm5186, %v4928, 0
    %v5230 = vsel %vm5186, %v4929, 0
    %v5233 = vsel %vm5186, %v4930, 0
    %v5236 = vsel %vm5186, %v4931, 0
    %v5239 = vsel %vm5186, %v4932, 0
    %v5242 = vsel %vm5186, %v4933, 0
    %v5245 = vsel %vm5186, %v4934, 0
    %v5248 = vsel %vm5186, %v4935, 0
    %v5251 = vsel %vm5186, %v4936, 0
    %v5254 = vsel %vm5186, %v4937, 0
    %v5257 = vsel %vm5186, %v4938, 0
    %v5260 = vsel %vm5186, %v4939, 0
    %v5263 = vsel %vm5186, %v4940, 0
    %v5266 = vsel %vm5186, %v4941, 0
    %v5269 = vsel %vm5186, %v4942, 0
    %v5272 = vsel %vm5186, %v4943, 0
    %v5275 = vsel %vm5186, %v4944, 0
    %v5278 = vsel %vm5186, %v4945, 0
    %v5281 = vsel %vm5186, %v4946, 0
    %v5284 = vsel %vm5186, %v4947, 0
    %v5287 = vsel %vm5186, %v4948, 0
    %v5290 = vsel %vm5186, %v4949, 0
    %v5293 = vsel %vm5186, %v4950, 0
    %v5296 = vsel %vm5186, %v4951, 0
    %v5299 = vsel %vm5186, %v4952, 0
    %v5302 = vsel %vm5186, %v4953, 0
    %v5305 = vsel %vm5186, %v4954, 0
    %v5308 = vsel %vm5186, %v4955, 0
    %v5311 = vsel %vm5186, %v4956, 0
    %v5314 = vsel %vm5186, %v4957, 0
    %v5317 = vsel %vm5186, %v4958, 0
    %v5320 = vsel %vm5186, %v4959, 0
    %v5323 = vsel %vm5186, %v4960, 0
    %v5326 = vsel %vm5186, %v4961, 0
    %v5329 = vsel %vm5186, %v4962, 0
    %v5332 = vsel %vm5186, %v4963, 0
    %v5335 = vsel %vm5186, %v4964, 0
    %v5338 = vsel %vm5186, %v4965, 0
    %v5341 = vsel %vm5186, %v4966, 0
    %v5344 = vsel %vm5186, %v4967, 0
    %v5347 = vsel %vm5186, %v4968, 0
    %v5350 = vsel %vm5186, %v4969, 0
    %v5353 = vsel %vm5186, %v4970, 0
    %v5356 = vsel %vm5186, %v4971, 0
    %v5359 = vsel %vm5186, %v4972, 0
    %v5362 = vsel %vm5186, %v4973, 0
    %v5365 = vsel %vm5186, %v4974, 0
    %v5368 = vsel %vm5186, %v4975, 0
    %v5371 = vsel %vm5186, %v4976, 0
    %v5374 = vsel %vm5186, %v4977, 0
    %v5377 = vsel %vm5186, %v4978, 0
    %v5380 = vsel %vm5186, %v4979, 0
    %v5383 = vsel %vm5186, %v4980, 0
    %v5386 = vsel %vm5186, %v4981, 0
    %v5389 = vsel %vm5186, %v4982, 0
    %v5392 = vsel %vm5186, %v4983, 0
    %v5395 = vsel %vm5186, %v4984, 0
    %v5398 = vsel %vm5186, %v4985, 0
    %v5401 = vsel %vm5186, %v4986, 0
    %v5404 = vsel %vm5186, %v4987, 0
    %v5407 = vsel %vm5186, %v4988, 0
    %v5410 = vsel %vm5186, %v4989, 0
    %v5413 = vsel %vm5186, %v4990, 0
    %v5416 = vsel %vm5186, %v4991, 0
    %v5419 = vsel %vm5186, %v4992, 0
    %v5422 = vsel %vm5186, %v4993, 0
    %v5425 = vsel %vm5186, %v4994, 0
    %v5428 = vsel %vm5186, %v4995, 0
    %v5431 = vsel %vm5186, %v4996, 0
    %v5434 = vsel %vm5186, %v4997, 0
    %v5437 = vsel %vm5186, %v4998, 0
    %v5440 = vsel %vm5186, %v4999, 0
    %v5443 = vsel %vm5186, %v5000, 0
    %v5446 = vsel %vm5186, %v5001, 0
    %v5449 = vsel %vm5186, %v5002, 0
    %v5452 = vsel %vm5186, %v5003, 0
    %v5455 = vsel %vm5186, %v5004, 0
    %v5458 = vsel %vm5186, %v5005, 0
    %v5461 = vsel %vm5186, %v5006, 0
    %v5464 = vsel %vm5186, %v5007, 0
    %v5467 = vsel %vm5186, %v5008, 0
    %v5470 = vsel %vm5186, %v5009, 0
    %v5473 = vsel %vm5186, %v5010, 0
    %v5476 = vsel %vm5186, %v5011, 0
    %v5479 = vsel %vm5186, %v5012, 0
    %v5482 = vsel %vm5186, %v5013, 0
    %v5485 = vsel %vm5186, %v5014, 0
    %v5488 = vsel %vm5186, %v5015, 0
    %v5491 = vsel %vm5186, %v5016, 0
    %v5494 = vsel %vm5186, %v5017, 0
    %v5497 = vsel %vm5186, %v5018, 0
    %v5500 = vsel %vm5186, %v5019, 0
    %v5503 = vsel %vm5186, %v5020, 0
    %v5506 = vsel %vm5186, %v5021, 0
    %v5509 = vsel %vm5186, %v5022, 0
    %v5512 = vsel %vm5186, %v5023, 0
    %v5515 = vsel %vm5186, %v5024, 0
    %v5518 = vsel %vm5186, %v5025, 0
    %v5521 = vsel %vm5186, %v5026, 0
    %v5524 = vsel %vm5186, %v5027, 0
    %v5527 = vsel %vm5186, %v5028, 0
    %v5530 = vsel %vm5186, %v5029, 0
    %v5533 = vsel %vm5186, %v5030, 0
    %v5536 = vsel %vm5186, %v5031, 0
    %v5539 = vsel %vm5186, %v5032, 0
    %v5542 = vsel %vm5186, %v5033, 0
    %v5545 = vsel %vm5186, %v5034, 0
    %v5548 = vsel %vm5186, %v5035, 0
    %v5551 = vsel %vm5186, %v5036, 0
    %v5554 = vsel %vm5186, %v5037, 0
    %v5557 = vsel %vm5186, %v5038, 0
    %v5560 = vsel %vm5186, %v5039, 0
    %v5563 = vsel %vm5186, %v5040, 0
    %v5566 = vsel %vm5186, %v5041, 0
    %v5569 = vsel %vm5186, %v5042, 0
    %v5572 = vsel %vm5186, %v5043, 0
    %v5575 = vsel %vm5186, %v5044, 0
    %v5578 = vsel %vm5186, %v5045, 0
    %v5581 = vsel %vm5186, %v5046, 0
    %v5584 = vsel %vm5186, %v5047, 0
    %v5587 = vsel %vm5186, %v5048, 0
    %v5590 = vsel %vm5186, %v5049, 0
    %v5593 = vsel %vm5186, %v5050, 0
    %v5596 = vsel %vm5186, %v5051, 0
    %v5599 = vsel %vm5186, %v5052, 0
    %v5602 = vsel %vm5186, %v5053, 0
    %v5605 = vsel %vm5186, %v5054, 0
    %v5608 = vsel %vm5186, %v5055, 0
    %v5611 = vsel %vm5186, %v5056, 0
    %v5614 = vsel %vm5186, %v5057, 0
    %v5617 = vsel %vm5186, %v5058, 0
    %v5620 = vsel %vm5186, %v5059, 0
    %v5623 = vsel %vm5186, %v5060, 0
    %v5626 = vsel %vm5186, %v5061, 0
    %v5629 = vsel %vm5186, %v5062, 0
    %v5632 = vsel %vm5186, %v5063, 0
    %v5635 = vsel %vm5186, %v5064, 0
    %v5638 = vsel %vm5186, %v5065, 0
    %v5641 = vsel %vm5186, %v5066, 0
    %v5644 = vsel %vm5186, %v5067, 0
    %v5647 = vsel %vm5186, %v5068, 0
    %v5650 = vsel %vm5186, %v5069, 0
    %v5653 = vsel %vm5186, %v5070, 0
    %v5656 = vsel %vm5186, %v5071, 0
    %v5659 = vsel %vm5186, %v5072, 0
    %v5662 = vsel %vm5186, %v5073, 0
    %v5665 = vsel %vm5186, %v5074, 0
    %v5668 = vsel %vm5186, %v5075, 0
    %v5671 = vsel %vm5186, %v5076, 0
    %v5674 = vsel %vm5186, %v5077, 0
    %v5677 = vsel %vm5186, %v5078, 0
    %v5680 = vsel %vm5186, %v5079, 0
    %v5683 = vsel %vm5186, %v5080, 0
    %v5686 = vsel %vm5186, %v5081, 0
    %v5689 = vsel %vm5186, %v5082, 0
    %v5692 = vsel %vm5186, %v5083, 0
    %v5695 = vsel %vm5186, %v5084, 0
    %v5698 = vsel %vm5186, %v5085, 0
    %v5701 = vsel %vm5186, %v5086, 0
    %v5704 = vsel %vm5186, %v5087, 0
    %v5707 = vsel %vm5186, %v5088, 0
    %v5710 = vsel %vm5186, %v5089, 0
    %v5713 = vsel %vm5186, %v5090, 0
    %v5716 = vsel %vm5186, %v5091, 0
    %v5719 = vsel %vm5186, %v5092, 0
    %v5722 = vsel %vm5186, %v5093, 0
    %v5725 = vsel %vm5186, %v5094, 0
    %v5728 = vsel %vm5186, %v5095, 0
    %v5731 = vsel %vm5186, %v5096, 0
    %v5734 = vsel %vm5186, %v5097, 0
    %v5737 = vsel %vm5186, %v5098, 0
    %v5740 = vsel %vm5186, %v5099, 0
    %v5743 = vsel %vm5186, %v5100, 0
    %v5746 = vsel %vm5186, %v5101, 0
    %v5749 = vsel %vm5186, %v5102, 0
    %v5752 = vsel %vm5186, %v5103, 0
    %v5755 = vsel %vm5186, %v5104, 0
    %v5758 = vsel %vm5186, %v5105, 0
    %v5761 = vsel %vm5186, %v5106, 0
    %v5764 = vsel %vm5186, %v5107, 0
    %v5767 = vsel %vm5186, %v5108, 0
    %v5770 = vsel %vm5186, %v5109, 0
    %v5773 = vsel %vm5186, %v5110, 0
    %v5776 = vsel %vm5186, %v5111, 0
    %v5779 = vsel %vm5186, %v5112, 0
    %v5782 = vsel %vm5186, %v5113, 0
    %v5785 = vsel %vm5186, %v5114, 0
    %v5788 = vsel %vm5186, %v5115, 0
    %v5791 = vsel %vm5186, %v5116, 0
    %v5794 = vsel %vm5186, %v5117, 0
    %v5797 = vsel %vm5186, %v5118, 0
    %v5800 = vsel %vm5186, %v5119, 0
    %v5803 = vsel %vm5186, %v5120, 0
    %v5806 = vsel %vm5186, %v5121, 0
    %v5809 = vsel %vm5186, %v5122, 0
    %v5812 = vsel %vm5186, %v5123, 0
    %v5815 = vsel %vm5186, %v5124, 0
    %v5818 = vsel %vm5186, %v5125, 0
    %v5821 = vsel %vm5186, %v5126, 0
    %v5824 = vsel %vm5186, %v5127, 0
    %v5827 = vsel %vm5186, %v5128, 0
    %v5830 = vsel %vm5186, %v5129, 0
    %v5833 = vsel %vm5186, %v5130, 0
    %v5836 = vsel %vm5186, %v5131, 0
    %v5839 = vsel %vm5186, %v5132, 0
    %v5842 = vsel %vm5186, %v5133, 0
    %v5845 = vsel %vm5186, %v5134, 0
    %v5848 = vsel %vm5186, %v5135, 0
    %v5851 = vsel %vm5186, %v5136, 0
    %v5854 = vsel %vm5186, %v5137, 0
    %v5857 = vsel %vm5186, %v5138, 0
    %v5860 = vsel %vm5186, %v5139, 0
    %v5863 = vsel %vm5186, %v5140, 0
    %v5866 = vsel %vm5186, %v5141, 0
    %v5869 = vsel %vm5186, %v5142, 0
    %v5872 = vsel %vm5186, %v5143, 0
    %v5875 = vsel %vm5186, %v5144, 0
    %v5878 = vsel %vm5186, %v5145, 0
    %v5881 = vsel %vm5186, %v5146, 0
    %v5884 = vsel %vm5186, %v5147, 0
    %v5887 = vsel %vm5186, %v5148, 0
    %v5890 = vsel %vm5186, %v5149, 0
    %v5893 = vsel %vm5186, %v5150, 0
    %v5896 = vsel %vm5186, %v5151, 0
    %v5899 = vsel %vm5186, %v5152, 0
    %v5902 = vsel %vm5186, %v5153, 0
    %v5905 = vsel %vm5186, %v5154, 0
    %v5908 = vsel %vm5186, %v5155, 0
    %v5911 = vsel %vm5186, %v5156, 0
    %v5914 = vsel %vm5186, %v5157, 0
    %v5917 = vsel %vm5186, %v5158, 0
    %v5920 = vsel %vm5186, %v5159, 0
    %v5923 = vsel %vm5186, %v5160, 0
    %v5926 = vsel %vm5186, %v5161, 0
    %v5929 = vsel %vm5186, %v5162, 0
    %v5932 = vsel %vm5186, %v5163, 0
    %v5935 = vsel %vm5186, %v5164, 0
    %v5938 = vsel %vm5186, %v5165, 0
    %v5941 = vsel %vm5186, %v5166, 0
    %v5944 = vsel %vm5186, %v5167, 0
    %v5947 = vsel %vm5186, %v5168, 0
    %v5950 = vsel %vm5186, %v5169, 0
    %v5953 = vsel %vm5186, %v5170, 0
    %5955 = vmatprep.subr.mxu0 0.0
    %5956 = vmatpush1.msra.mxu0 %v5174
    %5957 = vmatprep.subr.mxu0 0.0
    %5958 = vmatpush1.msra.mxu0 %v5175
    %5959 = vmatprep.subr.mxu0 0.0
    %5960 = vmatpush1.msra.mxu0 %v5176
    %5961 = vmatprep.subr.mxu0 0.0
    %5962 = vmatpush1.msra.mxu0 %v5177
    %5963 = vmatprep.subr.mxu0 0.0
    %5964 = vmatpush1.msra.mxu0 %v5178
    %5965 = vmatprep.subr.mxu0 0.0
    %5966 = vmatpush1.msra.mxu0 %v5179
    %5967 = vmatprep.subr.mxu0 0.0
    %5968 = vmatpush1.msra.mxu0 %v5180
    %5969 = vmatprep.subr.mxu0 0.0
    %5970 = vmatpush1.msra.mxu0 %v5181
    %5971 = vmatprep.subr.mxu0 0.0
    %5972 = vmatpush1.msra.mxu0 0.0
    %5973 = vmatprep.subr.mxu0 0.0
    %5974 = vmatpush1.msra.mxu0 0.0
    %5975 = vmatprep.subr.mxu0 0.0
    %5976 = vmatpush1.msra.mxu0 0.0
    %5977 = vmatprep.subr.mxu0 0.0
    %5978 = vmatpush1.msra.mxu0 0.0
    %5979 = vmatprep.subr.mxu0 0.0
    %5980 = vmatpush1.msra.mxu0 0.0
    %5981 = vmatprep.subr.mxu0 0.0
    %5982 = vmatpush1.msra.mxu0 0.0
    %5983 = vmatprep.subr.mxu0 0.0
    %5984 = vmatpush1.msra.mxu0 0.0
    %5985 = vmatprep.subr.mxu0 0.0
    %5986 = vmatpush1.msra.mxu0 0.0
    %5987 = vmatprep.subr.mxu0 0.0
    %5988 = vmatpush1.msra.mxu0 0.0
    %5989 = vmatprep.subr.mxu0 0.0
    %5990 = vmatpush1.msra.mxu0 0.0
    %5991 = vmatprep.subr.mxu0 0.0
    %5992 = vmatpush1.msra.mxu0 0.0
    %5993 = vmatprep.subr.mxu0 0.0
    %5994 = vmatpush1.msra.mxu0 0.0
    %5995 = vmatprep.subr.mxu0 0.0
    %5996 = vmatpush1.msra.mxu0 0.0
    %5997 = vmatprep.subr.mxu0 0.0
    %5998 = vmatpush1.msra.mxu0 0.0
    %5999 = vmatprep.subr.mxu0 0.0
    %6000 = vmatpush1.msra.mxu0 0.0
    %6001 = vmatprep.subr.mxu0 0.0
    %6002 = vmatpush1.msra.mxu0 0.0
    %6003 = vmatprep.subr.mxu0 0.0
    %6004 = vmatpush1.msra.mxu0 0.0
    %6005 = vmatprep.subr.mxu0 0.0
    %6006 = vmatpush1.msra.mxu0 0.0
    %6007 = vmatprep.subr.mxu0 0.0
    %6008 = vmatpush1.msra.mxu0 0.0
    %6009 = vmatprep.subr.mxu0 0.0
    %6010 = vmatpush1.msra.mxu0 0.0
    %6011 = vmatprep.subr.mxu0 0.0
    %6012 = vmatpush1.msra.mxu0 0.0
    %6013 = vmatprep.subr.mxu0 0.0
    %6014 = vmatpush1.msra.mxu0 0.0
    %6015 = vmatprep.subr.mxu0 0.0
    %6016 = vmatpush1.msra.mxu0 0.0
    %6017 = vmatprep.subr.mxu0 0.0
    %6018 = vmatpush1.msra.mxu0 0.0
    %6019 = vmatprep.mubr.f32.mxu0 0.0
    %6020 = vmatmul.mubr.f32.gmra.mrb[0].mxu0 %v5188
    %v6021 = vpop.f32.mrb[0].mxu0
    %v6022 = vadd.f32 %v5185, %v6021
    %v6023 = vpop.f32.mrb[0].mxu0
    %6024 = vmatprep.mubr.f32.mxu0 0.0
    %6025 = vmatmul.mubr.f32.gmra.mrb[0].mxu0 %v5191
    %v6026 = vpop.f32.mrb[0].mxu0
    %v6027 = vadd.f32 %v5185, %v6026
    %v6028 = vpop.f32.mrb[0].mxu0
    %6029 = vmatprep.mubr.f32.mxu0 0.0
    %6030 = vmatmul.mubr.f32.gmra.mrb[0].mxu0 %v5194
    %v6031 = vpop.f32.mrb[0].mxu0
    %v6032 = vadd.f32 %v5185, %v6031
    %v6033 = vpop.f32.mrb[0].mxu0
    %6034 = vmatprep.mubr.f32.mxu0 0.0
    %6035 = vmatmul.mubr.f32.gmra.mrb[0].mxu0 %v5197
    %v6036 = vpop.f32.mrb[0].mxu0
    %v6037 = vadd.f32 %v5185, %v6036
    %v6038 = vpop.f32.mrb[0].mxu0
    %6039 = vmatprep.mubr.f32.mxu0 0.0
    %6040 = vmatmul.mubr.f32.gmra.mrb[0].mxu0 %v5200
    %v6041 = vpop.f32.mrb[0].mxu0
    %v6042 = vadd.f32 %v5185, %v6041
    %v6043 = vpop.f32.mrb[0].mxu0
    %6044 = vmatprep.mubr.f32.mxu0 0.0
    %6045 = vmatmul.mubr.f32.gmra.mrb[0].mxu0 %v5203
    %v6046 = vpop.f32.mrb[0].mxu0
    %v6047 = vadd.f32 %v5185, %v6046
    %v6048 = vpop.f32.mrb[0].mxu0
    %6049 = vmatprep.mubr.f32.mxu0 0.0
    %6050 = vmatmul.mubr.f32.gmra.mrb[0].mxu0 %v5206
    %v6051 = vpop.f32.mrb[0].mxu0
    %v6052 = vadd.f32 %v5185, %v6051
    %v6053 = vpop.f32.mrb[0].mxu0
    %6054 = vmatprep.mubr.f32.mxu0 0.0
    %6055 = vmatmul.mubr.f32.gmra.mrb[0].mxu0 %v5209
    %v6056 = vpop.f32.mrb[0].mxu0
    %v6057 = vadd.f32 %v5185, %v6056
    %v6058 = vpop.f32.mrb[0].mxu0
    %6059 = vmatprep.mubr.f32.mxu0 0.0
    %6060 = vmatmul.mubr.f32.gmra.mrb[0].mxu0 %v5212
    %v6061 = vpop.f32.mrb[0].mxu0
    %v6062 = vadd.f32 %v5185, %v6061
    %v6063 = vpop.f32.mrb[0].mxu0
    %6064 = vmatprep.mubr.f32.mxu0 0.0
    %6065 = vmatmul.mubr.f32.gmra.mrb[0].mxu0 %v5215
    %v6066 = vpop.f32.mrb[0].mxu0
    %v6067 = vadd.f32 %v5185, %v6066
    %v6068 = vpop.f32.mrb[0].mxu0
    %6069 = vmatprep.mubr.f32.mxu0 0.0
    %6070 = vmatmul.mubr.f32.gmra.mrb[0].mxu0 %v5218
    %v6071 = vpop.f32.mrb[0].mxu0
    %v6072 = vadd.f32 %v5185, %v6071
    %v6073 = vpop.f32.mrb[0].mxu0
    %6074 = vmatprep.mubr.f32.mxu0 0.0
    %6075 = vmatmul.mubr.f32.gmra.mrb[0].mxu0 %v5221
    %v6076 = vpop.f32.mrb[0].mxu0
    %v6077 = vadd.f32 %v5185, %v6076
    %v6078 = vpop.f32.mrb[0].mxu0
    %6079 = vmatprep.mubr.f32.mxu0 0.0
    %6080 = vmatmul.mubr.f32.gmra.mrb[0].mxu0 %v5224
    %v6081 = vpop.f32.mrb[0].mxu0
    %v6082 = vadd.f32 %v5185, %v6081
    %v6083 = vpop.f32.mrb[0].mxu0
    %6084 = vmatprep.mubr.f32.mxu0 0.0
    %6085 = vmatmul.mubr.f32.gmra.mrb[0].mxu0 %v5227
    %v6086 = vpop.f32.mrb[0].mxu0
    %v6087 = vadd.f32 %v5185, %v6086
    %v6088 = vpop.f32.mrb[0].mxu0
    %6089 = vmatprep.mubr.f32.mxu0 0.0
    %6090 = vmatmul.mubr.f32.gmra.mrb[0].mxu0 %v5230
    %v6091 = vpop.f32.mrb[0].mxu0
    %v6092 = vadd.f32 %v5185, %v6091
    %v6093 = vpop.f32.mrb[0].mxu0
    %6094 = vmatprep.mubr.f32.mxu0 0.0
    %6095 = vmatmul.mubr.f32.gmra.mrb[0].mxu0 %v5233
    %v6096 = vpop.f32.mrb[0].mxu0
    %v6097 = vadd.f32 %v5185, %v6096
    %v6098 = vpop.f32.mrb[0].mxu0
    %6099 = vmatprep.mubr.f32.mxu0 0.0
    %6100 = vmatmul.mubr.f32.gmra.mrb[0].mxu0 %v5236
    %v6101 = vpop.f32.mrb[0].mxu0
    %v6102 = vadd.f32 %v5185, %v6101
    %v6103 = vpop.f32.mrb[0].mxu0
    %6104 = vmatprep.mubr.f32.mxu0 0.0
    %6105 = vmatmul.mubr.f32.gmra.mrb[0].mxu0 %v5239
    %v6106 = vpop.f32.mrb[0].mxu0
    %v6107 = vadd.f32 %v5185, %v6106
    %v6108 = vpop.f32.mrb[0].mxu0
    %6109 = vmatprep.mubr.f32.mxu0 0.0
    %6110 = vmatmul.mubr.f32.gmra.mrb[0].mxu0 %v5242
    %v6111 = vpop.f32.mrb[0].mxu0
    %v6112 = vadd.f32 %v5185, %v6111
    %v6113 = vpop.f32.mrb[0].mxu0
    %6114 = vmatprep.mubr.f32.mxu0 0.0
    %6115 = vmatmul.mubr.f32.gmra.mrb[0].mxu0 %v5245
    %v6116 = vpop.f32.mrb[0].mxu0
    %v6117 = vadd.f32 %v5185, %v6116
    %v6118 = vpop.f32.mrb[0].mxu0
    %6119 = vmatprep.mubr.f32.mxu0 0.0
    %6120 = vmatmul.mubr.f32.gmra.mrb[0].mxu0 %v5248
    %v6121 = vpop.f32.mrb[0].mxu0
    %v6122 = vadd.f32 %v5185, %v6121
    %v6123 = vpop.f32.mrb[0].mxu0
    %6124 = vmatprep.mubr.f32.mxu0 0.0
    %6125 = vmatmul.mubr.f32.gmra.mrb[0].mxu0 %v5251
    %v6126 = vpop.f32.mrb[0].mxu0
    %v6127 = vadd.f32 %v5185, %v6126
    %v6128 = vpop.f32.mrb[0].mxu0
    %6129 = vmatprep.mubr.f32.mxu0 0.0
    %6130 = vmatmul.mubr.f32.gmra.mrb[0].mxu0 %v5254
    %v6131 = vpop.f32.mrb[0].mxu0
    %v6132 = vadd.f32 %v5185, %v6131
    %v6133 = vpop.f32.mrb[0].mxu0
    %6134 = vmatprep.mubr.f32.mxu0 0.0
    %6135 = vmatmul.mubr.f32.gmra.mrb[0].mxu0 %v5257
    %v6136 = vpop.f32.mrb[0].mxu0
    %v6137 = vadd.f32 %v5185, %v6136
    %v6138 = vpop.f32.mrb[0].mxu0
    %6139 = vmatprep.mubr.f32.mxu0 0.0
    %6140 = vmatmul.mubr.f32.gmra.mrb[0].mxu0 %v5260
    %v6141 = vpop.f32.mrb[0].mxu0
    %v6142 = vadd.f32 %v5185, %v6141
    %v6143 = vpop.f32.mrb[0].mxu0
    %6144 = vmatprep.mubr.f32.mxu0 0.0
    %6145 = vmatmul.mubr.f32.gmra.mrb[0].mxu0 %v5263
    %v6146 = vpop.f32.mrb[0].mxu0
    %v6147 = vadd.f32 %v5185, %v6146
    %v6148 = vpop.f32.mrb[0].mxu0
    %6149 = vmatprep.mubr.f32.mxu0 0.0
    %6150 = vmatmul.mubr.f32.gmra.mrb[0].mxu0 %v5266
    %v6151 = vpop.f32.mrb[0].mxu0
    %v6152 = vadd.f32 %v5185, %v6151
    %v6153 = vpop.f32.mrb[0].mxu0
    %6154 = vmatprep.mubr.f32.mxu0 0.0
    %6155 = vmatmul.mubr.f32.gmra.mrb[0].mxu0 %v5269
    %v6156 = vpop.f32.mrb[0].mxu0
    %v6157 = vadd.f32 %v5185, %v6156
    %v6158 = vpop.f32.mrb[0].mxu0
    %6159 = vmatprep.mubr.f32.mxu0 0.0
    %6160 = vmatmul.mubr.f32.gmra.mrb[0].mxu0 %v5272
    %v6161 = vpop.f32.mrb[0].mxu0
    %v6162 = vadd.f32 %v5185, %v6161
    %v6163 = vpop.f32.mrb[0].mxu0
    %6164 = vmatprep.mubr.f32.mxu0 0.0
    %6165 = vmatmul.mubr.f32.gmra.mrb[0].mxu0 %v5275
    %v6166 = vpop.f32.mrb[0].mxu0
    %v6167 = vadd.f32 %v5185, %v6166
    %v6168 = vpop.f32.mrb[0].mxu0
    %6169 = vmatprep.mubr.f32.mxu0 0.0
    %6170 = vmatmul.mubr.f32.gmra.mrb[0].mxu0 %v5278
    %v6171 = vpop.f32.mrb[0].mxu0
    %v6172 = vadd.f32 %v5185, %v6171
    %v6173 = vpop.f32.mrb[0].mxu0
    %6174 = vmatprep.mubr.f32.mxu0 0.0
    %6175 = vmatmul.mubr.f32.gmra.mrb[0].mxu0 %v5281
    %v6176 = vpop.f32.mrb[0].mxu0
    %v6177 = vadd.f32 %v5185, %v6176
    %v6178 = vpop.f32.mrb[0].mxu0
    %6179 = vmatprep.mubr.f32.mxu0 0.0
    %6180 = vmatmul.mubr.f32.gmra.mrb[0].mxu0 %v5284
    %v6181 = vpop.f32.mrb[0].mxu0
    %v6182 = vadd.f32 %v5185, %v6181
    %v6183 = vpop.f32.mrb[0].mxu0
    %6184 = vmatprep.mubr.f32.mxu0 0.0
    %6185 = vmatmul.mubr.f32.gmra.mrb[0].mxu0 %v5287
    %v6186 = vpop.f32.mrb[0].mxu0
    %v6187 = vadd.f32 %v5185, %v6186
    %v6188 = vpop.f32.mrb[0].mxu0
    %6189 = vmatprep.mubr.f32.mxu0 0.0
    %6190 = vmatmul.mubr.f32.gmra.mrb[0].mxu0 %v5290
    %v6191 = vpop.f32.mrb[0].mxu0
    %v6192 = vadd.f32 %v5185, %v6191
    %v6193 = vpop.f32.mrb[0].mxu0
    %6194 = vmatprep.mubr.f32.mxu0 0.0
    %6195 = vmatmul.mubr.f32.gmra.mrb[0].mxu0 %v5293
    %v6196 = vpop.f32.mrb[0].mxu0
    %v6197 = vadd.f32 %v5185, %v6196
    %v6198 = vpop.f32.mrb[0].mxu0
    %6199 = vmatprep.mubr.f32.mxu0 0.0
    %6200 = vmatmul.mubr.f32.gmra.mrb[0].mxu0 %v5296
    %v6201 = vpop.f32.mrb[0].mxu0
    %v6202 = vadd.f32 %v5185, %v6201
    %v6203 = vpop.f32.mrb[0].mxu0
    %6204 = vmatprep.mubr.f32.mxu0 0.0
    %6205 = vmatmul.mubr.f32.gmra.mrb[0].mxu0 %v5299
    %v6206 = vpop.f32.mrb[0].mxu0
    %v6207 = vadd.f32 %v5185, %v6206
    %v6208 = vpop.f32.mrb[0].mxu0
    %6209 = vmatprep.mubr.f32.mxu0 0.0
    %6210 = vmatmul.mubr.f32.gmra.mrb[0].mxu0 %v5302
    %v6211 = vpop.f32.mrb[0].mxu0
    %v6212 = vadd.f32 %v5185, %v6211
    %v6213 = vpop.f32.mrb[0].mxu0
    %6214 = vmatprep.mubr.f32.mxu0 0.0
    %6215 = vmatmul.mubr.f32.gmra.mrb[0].mxu0 %v5305
    %v6216 = vpop.f32.mrb[0].mxu0
    %v6217 = vadd.f32 %v5185, %v6216
    %v6218 = vpop.f32.mrb[0].mxu0
    %6219 = vmatprep.mubr.f32.mxu0 0.0
    %6220 = vmatmul.mubr.f32.gmra.mrb[0].mxu0 %v5308
    %v6221 = vpop.f32.mrb[0].mxu0
    %v6222 = vadd.f32 %v5185, %v6221
    %v6223 = vpop.f32.mrb[0].mxu0
    %6224 = vmatprep.mubr.f32.mxu0 0.0
    %6225 = vmatmul.mubr.f32.gmra.mrb[0].mxu0 %v5311
    %v6226 = vpop.f32.mrb[0].mxu0
    %v6227 = vadd.f32 %v5185, %v6226
    %v6228 = vpop.f32.mrb[0].mxu0
    %6229 = vmatprep.mubr.f32.mxu0 0.0
    %6230 = vmatmul.mubr.f32.gmra.mrb[0].mxu0 %v5314
    %v6231 = vpop.f32.mrb[0].mxu0
    %v6232 = vadd.f32 %v5185, %v6231
    %v6233 = vpop.f32.mrb[0].mxu0
    %6234 = vmatprep.mubr.f32.mxu0 0.0
    %6235 = vmatmul.mubr.f32.gmra.mrb[0].mxu0 %v5317
    %v6236 = vpop.f32.mrb[0].mxu0
    %v6237 = vadd.f32 %v5185, %v6236
    %v6238 = vpop.f32.mrb[0].mxu0
    %6239 = vmatprep.mubr.f32.mxu0 0.0
    %6240 = vmatmul.mubr.f32.gmra.mrb[0].mxu0 %v5320
    %v6241 = vpop.f32.mrb[0].mxu0
    %v6242 = vadd.f32 %v5185, %v6241
    %v6243 = vpop.f32.mrb[0].mxu0
    %6244 = vmatprep.mubr.f32.mxu0 0.0
    %6245 = vmatmul.mubr.f32.gmra.mrb[0].mxu0 %v5323
    %v6246 = vpop.f32.mrb[0].mxu0
    %v6247 = vadd.f32 %v5185, %v6246
    %v6248 = vpop.f32.mrb[0].mxu0
    %6249 = vmatprep.mubr.f32.mxu0 0.0
    %6250 = vmatmul.mubr.f32.gmra.mrb[0].mxu0 %v5326
    %v6251 = vpop.f32.mrb[0].mxu0
    %v6252 = vadd.f32 %v5185, %v6251
    %v6253 = vpop.f32.mrb[0].mxu0
    %6254 = vmatprep.mubr.f32.mxu0 0.0
    %6255 = vmatmul.mubr.f32.gmra.mrb[0].mxu0 %v5329
    %v6256 = vpop.f32.mrb[0].mxu0
    %v6257 = vadd.f32 %v5185, %v6256
    %v6258 = vpop.f32.mrb[0].mxu0
    %6259 = vmatprep.mubr.f32.mxu0 0.0
    %6260 = vmatmul.mubr.f32.gmra.mrb[0].mxu0 %v5332
    %v6261 = vpop.f32.mrb[0].mxu0
    %v6262 = vadd.f32 %v5185, %v6261
    %v6263 = vpop.f32.mrb[0].mxu0
    %6264 = vmatprep.mubr.f32.mxu0 0.0
    %6265 = vmatmul.mubr.f32.gmra.mrb[0].mxu0 %v5335
    %v6266 = vpop.f32.mrb[0].mxu0
    %v6267 = vadd.f32 %v5185, %v6266
    %v6268 = vpop.f32.mrb[0].mxu0
    %6269 = vmatprep.mubr.f32.mxu0 0.0
    %6270 = vmatmul.mubr.f32.gmra.mrb[0].mxu0 %v5338
    %v6271 = vpop.f32.mrb[0].mxu0
    %v6272 = vadd.f32 %v5185, %v6271
    %v6273 = vpop.f32.mrb[0].mxu0
    %6274 = vmatprep.mubr.f32.mxu0 0.0
    %6275 = vmatmul.mubr.f32.gmra.mrb[0].mxu0 %v5341
    %v6276 = vpop.f32.mrb[0].mxu0
    %v6277 = vadd.f32 %v5185, %v6276
    %v6278 = vpop.f32.mrb[0].mxu0
    %6279 = vmatprep.mubr.f32.mxu0 0.0
    %6280 = vmatmul.mubr.f32.gmra.mrb[0].mxu0 %v5344
    %v6281 = vpop.f32.mrb[0].mxu0
    %v6282 = vadd.f32 %v5185, %v6281
    %v6283 = vpop.f32.mrb[0].mxu0
    %6284 = vmatprep.mubr.f32.mxu0 0.0
    %6285 = vmatmul.mubr.f32.gmra.mrb[0].mxu0 %v5347
    %v6286 = vpop.f32.mrb[0].mxu0
    %v6287 = vadd.f32 %v5185, %v6286
    %v6288 = vpop.f32.mrb[0].mxu0
    %6289 = vmatprep.mubr.f32.mxu0 0.0
    %6290 = vmatmul.mubr.f32.gmra.mrb[0].mxu0 %v5350
    %v6291 = vpop.f32.mrb[0].mxu0
    %v6292 = vadd.f32 %v5185, %v6291
    %v6293 = vpop.f32.mrb[0].mxu0
    %6294 = vmatprep.mubr.f32.mxu0 0.0
    %6295 = vmatmul.mubr.f32.gmra.mrb[0].mxu0 %v5353
    %v6296 = vpop.f32.mrb[0].mxu0
    %v6297 = vadd.f32 %v5185, %v6296
    %v6298 = vpop.f32.mrb[0].mxu0
    %6299 = vmatprep.mubr.f32.mxu0 0.0
    %6300 = vmatmul.mubr.f32.gmra.mrb[0].mxu0 %v5356
    %v6301 = vpop.f32.mrb[0].mxu0
    %v6302 = vadd.f32 %v5185, %v6301
    %v6303 = vpop.f32.mrb[0].mxu0
    %6304 = vmatprep.mubr.f32.mxu0 0.0
    %6305 = vmatmul.mubr.f32.gmra.mrb[0].mxu0 %v5359
    %v6306 = vpop.f32.mrb[0].mxu0
    %v6307 = vadd.f32 %v5185, %v6306
    %v6308 = vpop.f32.mrb[0].mxu0
    %6309 = vmatprep.mubr.f32.mxu0 0.0
    %6310 = vmatmul.mubr.f32.gmra.mrb[0].mxu0 %v5362
    %v6311 = vpop.f32.mrb[0].mxu0
    %v6312 = vadd.f32 %v5185, %v6311
    %v6313 = vpop.f32.mrb[0].mxu0
    %6314 = vmatprep.mubr.f32.mxu0 0.0
    %6315 = vmatmul.mubr.f32.gmra.mrb[0].mxu0 %v5365
    %v6316 = vpop.f32.mrb[0].mxu0
    %v6317 = vadd.f32 %v5185, %v6316
    %v6318 = vpop.f32.mrb[0].mxu0
    %6319 = vmatprep.mubr.f32.mxu0 0.0
    %6320 = vmatmul.mubr.f32.gmra.mrb[0].mxu0 %v5368
    %v6321 = vpop.f32.mrb[0].mxu0
    %v6322 = vadd.f32 %v5185, %v6321
    %v6323 = vpop.f32.mrb[0].mxu0
    %6324 = vmatprep.mubr.f32.mxu0 0.0
    %6325 = vmatmul.mubr.f32.gmra.mrb[0].mxu0 %v5371
    %v6326 = vpop.f32.mrb[0].mxu0
    %v6327 = vadd.f32 %v5185, %v6326
    %v6328 = vpop.f32.mrb[0].mxu0
    %6329 = vmatprep.mubr.f32.mxu0 0.0
    %6330 = vmatmul.mubr.f32.gmra.mrb[0].mxu0 %v5374
    %v6331 = vpop.f32.mrb[0].mxu0
    %v6332 = vadd.f32 %v5185, %v6331
    %v6333 = vpop.f32.mrb[0].mxu0
    %6334 = vmatprep.mubr.f32.mxu0 0.0
    %6335 = vmatmul.mubr.f32.gmra.mrb[0].mxu0 %v5377
    %v6336 = vpop.f32.mrb[0].mxu0
    %v6337 = vadd.f32 %v5185, %v6336
    %v6338 = vpop.f32.mrb[0].mxu0
    %6339 = vmatprep.mubr.f32.mxu0 0.0
    %6340 = vmatmul.mubr.f32.gmra.mrb[0].mxu0 %v5380
    %v6341 = vpop.f32.mrb[0].mxu0
    %v6342 = vadd.f32 %v5185, %v6341
    %v6343 = vpop.f32.mrb[0].mxu0
    %6344 = vmatprep.mubr.f32.mxu0 0.0
    %6345 = vmatmul.mubr.f32.gmra.mrb[0].mxu0 %v5383
    %v6346 = vpop.f32.mrb[0].mxu0
    %v6347 = vadd.f32 %v5185, %v6346
    %v6348 = vpop.f32.mrb[0].mxu0
    %6349 = vmatprep.mubr.f32.mxu0 0.0
    %6350 = vmatmul.mubr.f32.gmra.mrb[0].mxu0 %v5386
    %v6351 = vpop.f32.mrb[0].mxu0
    %v6352 = vadd.f32 %v5185, %v6351
    %v6353 = vpop.f32.mrb[0].mxu0
    %6354 = vmatprep.mubr.f32.mxu0 0.0
    %6355 = vmatmul.mubr.f32.gmra.mrb[0].mxu0 %v5389
    %v6356 = vpop.f32.mrb[0].mxu0
    %v6357 = vadd.f32 %v5185, %v6356
    %v6358 = vpop.f32.mrb[0].mxu0
    %6359 = vmatprep.mubr.f32.mxu0 0.0
    %6360 = vmatmul.mubr.f32.gmra.mrb[0].mxu0 %v5392
    %v6361 = vpop.f32.mrb[0].mxu0
    %v6362 = vadd.f32 %v5185, %v6361
    %v6363 = vpop.f32.mrb[0].mxu0
    %6364 = vmatprep.mubr.f32.mxu0 0.0
    %6365 = vmatmul.mubr.f32.gmra.mrb[0].mxu0 %v5395
    %v6366 = vpop.f32.mrb[0].mxu0
    %v6367 = vadd.f32 %v5185, %v6366
    %v6368 = vpop.f32.mrb[0].mxu0
    %6369 = vmatprep.mubr.f32.mxu0 0.0
    %6370 = vmatmul.mubr.f32.gmra.mrb[0].mxu0 %v5398
    %v6371 = vpop.f32.mrb[0].mxu0
    %v6372 = vadd.f32 %v5185, %v6371
    %v6373 = vpop.f32.mrb[0].mxu0
    %6374 = vmatprep.mubr.f32.mxu0 0.0
    %6375 = vmatmul.mubr.f32.gmra.mrb[0].mxu0 %v5401
    %v6376 = vpop.f32.mrb[0].mxu0
    %v6377 = vadd.f32 %v5185, %v6376
    %v6378 = vpop.f32.mrb[0].mxu0
    %6379 = vmatprep.mubr.f32.mxu0 0.0
    %6380 = vmatmul.mubr.f32.gmra.mrb[0].mxu0 %v5404
    %v6381 = vpop.f32.mrb[0].mxu0
    %v6382 = vadd.f32 %v5185, %v6381
    %v6383 = vpop.f32.mrb[0].mxu0
    %6384 = vmatprep.mubr.f32.mxu0 0.0
    %6385 = vmatmul.mubr.f32.gmra.mrb[0].mxu0 %v5407
    %v6386 = vpop.f32.mrb[0].mxu0
    %v6387 = vadd.f32 %v5185, %v6386
    %v6388 = vpop.f32.mrb[0].mxu0
    %6389 = vmatprep.mubr.f32.mxu0 0.0
    %6390 = vmatmul.mubr.f32.gmra.mrb[0].mxu0 %v5410
    %v6391 = vpop.f32.mrb[0].mxu0
    %v6392 = vadd.f32 %v5185, %v6391
    %v6393 = vpop.f32.mrb[0].mxu0
    %6394 = vmatprep.mubr.f32.mxu0 0.0
    %6395 = vmatmul.mubr.f32.gmra.mrb[0].mxu0 %v5413
    %v6396 = vpop.f32.mrb[0].mxu0
    %v6397 = vadd.f32 %v5185, %v6396
    %v6398 = vpop.f32.mrb[0].mxu0
    %6399 = vmatprep.mubr.f32.mxu0 0.0
    %6400 = vmatmul.mubr.f32.gmra.mrb[0].mxu0 %v5416
    %v6401 = vpop.f32.mrb[0].mxu0
    %v6402 = vadd.f32 %v5185, %v6401
    %v6403 = vpop.f32.mrb[0].mxu0
    %6404 = vmatprep.mubr.f32.mxu0 0.0
    %6405 = vmatmul.mubr.f32.gmra.mrb[0].mxu0 %v5419
    %v6406 = vpop.f32.mrb[0].mxu0
    %v6407 = vadd.f32 %v5185, %v6406
    %v6408 = vpop.f32.mrb[0].mxu0
    %6409 = vmatprep.mubr.f32.mxu0 0.0
    %6410 = vmatmul.mubr.f32.gmra.mrb[0].mxu0 %v5422
    %v6411 = vpop.f32.mrb[0].mxu0
    %v6412 = vadd.f32 %v5185, %v6411
    %v6413 = vpop.f32.mrb[0].mxu0
    %6414 = vmatprep.mubr.f32.mxu0 0.0
    %6415 = vmatmul.mubr.f32.gmra.mrb[0].mxu0 %v5425
    %v6416 = vpop.f32.mrb[0].mxu0
    %v6417 = vadd.f32 %v5185, %v6416
    %v6418 = vpop.f32.mrb[0].mxu0
    %6419 = vmatprep.mubr.f32.mxu0 0.0
    %6420 = vmatmul.mubr.f32.gmra.mrb[0].mxu0 %v5428
    %v6421 = vpop.f32.mrb[0].mxu0
    %v6422 = vadd.f32 %v5185, %v6421
    %v6423 = vpop.f32.mrb[0].mxu0
    %6424 = vmatprep.mubr.f32.mxu0 0.0
    %6425 = vmatmul.mubr.f32.gmra.mrb[0].mxu0 %v5431
    %v6426 = vpop.f32.mrb[0].mxu0
    %v6427 = vadd.f32 %v5185, %v6426
    %v6428 = vpop.f32.mrb[0].mxu0
    %6429 = vmatprep.mubr.f32.mxu0 0.0
    %6430 = vmatmul.mubr.f32.gmra.mrb[0].mxu0 %v5434
    %v6431 = vpop.f32.mrb[0].mxu0
    %v6432 = vadd.f32 %v5185, %v6431
    %v6433 = vpop.f32.mrb[0].mxu0
    %6434 = vmatprep.mubr.f32.mxu0 0.0
    %6435 = vmatmul.mubr.f32.gmra.mrb[0].mxu0 %v5437
    %v6436 = vpop.f32.mrb[0].mxu0
    %v6437 = vadd.f32 %v5185, %v6436
    %v6438 = vpop.f32.mrb[0].mxu0
    %6439 = vmatprep.mubr.f32.mxu0 0.0
    %6440 = vmatmul.mubr.f32.gmra.mrb[0].mxu0 %v5440
    %v6441 = vpop.f32.mrb[0].mxu0
    %v6442 = vadd.f32 %v5185, %v6441
    %v6443 = vpop.f32.mrb[0].mxu0
    %6444 = vmatprep.mubr.f32.mxu0 0.0
    %6445 = vmatmul.mubr.f32.gmra.mrb[0].mxu0 %v5443
    %v6446 = vpop.f32.mrb[0].mxu0
    %v6447 = vadd.f32 %v5185, %v6446
    %v6448 = vpop.f32.mrb[0].mxu0
    %6449 = vmatprep.mubr.f32.mxu0 0.0
    %6450 = vmatmul.mubr.f32.gmra.mrb[0].mxu0 %v5446
    %v6451 = vpop.f32.mrb[0].mxu0
    %v6452 = vadd.f32 %v5185, %v6451
    %v6453 = vpop.f32.mrb[0].mxu0
    %6454 = vmatprep.mubr.f32.mxu0 0.0
    %6455 = vmatmul.mubr.f32.gmra.mrb[0].mxu0 %v5449
    %v6456 = vpop.f32.mrb[0].mxu0
    %v6457 = vadd.f32 %v5185, %v6456
    %v6458 = vpop.f32.mrb[0].mxu0
    %6459 = vmatprep.mubr.f32.mxu0 0.0
    %6460 = vmatmul.mubr.f32.gmra.mrb[0].mxu0 %v5452
    %v6461 = vpop.f32.mrb[0].mxu0
    %v6462 = vadd.f32 %v5185, %v6461
    %v6463 = vpop.f32.mrb[0].mxu0
    %6464 = vmatprep.mubr.f32.mxu0 0.0
    %6465 = vmatmul.mubr.f32.gmra.mrb[0].mxu0 %v5455
    %v6466 = vpop.f32.mrb[0].mxu0
    %v6467 = vadd.f32 %v5185, %v6466
    %v6468 = vpop.f32.mrb[0].mxu0
    %6469 = vmatprep.mubr.f32.mxu0 0.0
    %6470 = vmatmul.mubr.f32.gmra.mrb[0].mxu0 %v5458
    %v6471 = vpop.f32.mrb[0].mxu0
    %v6472 = vadd.f32 %v5185, %v6471
    %v6473 = vpop.f32.mrb[0].mxu0
    %6474 = vmatprep.mubr.f32.mxu0 0.0
    %6475 = vmatmul.mubr.f32.gmra.mrb[0].mxu0 %v5461
    %v6476 = vpop.f32.mrb[0].mxu0
    %v6477 = vadd.f32 %v5185, %v6476
    %v6478 = vpop.f32.mrb[0].mxu0
    %6479 = vmatprep.mubr.f32.mxu0 0.0
    %6480 = vmatmul.mubr.f32.gmra.mrb[0].mxu0 %v5464
    %v6481 = vpop.f32.mrb[0].mxu0
    %v6482 = vadd.f32 %v5185, %v6481
    %v6483 = vpop.f32.mrb[0].mxu0
    %6484 = vmatprep.mubr.f32.mxu0 0.0
    %6485 = vmatmul.mubr.f32.gmra.mrb[0].mxu0 %v5467
    %v6486 = vpop.f32.mrb[0].mxu0
    %v6487 = vadd.f32 %v5185, %v6486
    %v6488 = vpop.f32.mrb[0].mxu0
    %6489 = vmatprep.mubr.f32.mxu0 0.0
    %6490 = vmatmul.mubr.f32.gmra.mrb[0].mxu0 %v5470
    %v6491 = vpop.f32.mrb[0].mxu0
    %v6492 = vadd.f32 %v5185, %v6491
    %v6493 = vpop.f32.mrb[0].mxu0
    %6494 = vmatprep.mubr.f32.mxu0 0.0
    %6495 = vmatmul.mubr.f32.gmra.mrb[0].mxu0 %v5473
    %v6496 = vpop.f32.mrb[0].mxu0
    %v6497 = vadd.f32 %v5185, %v6496
    %v6498 = vpop.f32.mrb[0].mxu0
    %6499 = vmatprep.mubr.f32.mxu0 0.0
    %6500 = vmatmul.mubr.f32.gmra.mrb[0].mxu0 %v5476
    %v6501 = vpop.f32.mrb[0].mxu0
    %v6502 = vadd.f32 %v5185, %v6501
    %v6503 = vpop.f32.mrb[0].mxu0
    %6504 = vmatprep.mubr.f32.mxu0 0.0
    %6505 = vmatmul.mubr.f32.gmra.mrb[0].mxu0 %v5479
    %v6506 = vpop.f32.mrb[0].mxu0
    %v6507 = vadd.f32 %v5185, %v6506
    %v6508 = vpop.f32.mrb[0].mxu0
    %6509 = vmatprep.mubr.f32.mxu0 0.0
    %6510 = vmatmul.mubr.f32.gmra.mrb[0].mxu0 %v5482
    %v6511 = vpop.f32.mrb[0].mxu0
    %v6512 = vadd.f32 %v5185, %v6511
    %v6513 = vpop.f32.mrb[0].mxu0
    %6514 = vmatprep.mubr.f32.mxu0 0.0
    %6515 = vmatmul.mubr.f32.gmra.mrb[0].mxu0 %v5485
    %v6516 = vpop.f32.mrb[0].mxu0
    %v6517 = vadd.f32 %v5185, %v6516
    %v6518 = vpop.f32.mrb[0].mxu0
    %6519 = vmatprep.mubr.f32.mxu0 0.0
    %6520 = vmatmul.mubr.f32.gmra.mrb[0].mxu0 %v5488
    %v6521 = vpop.f32.mrb[0].mxu0
    %v6522 = vadd.f32 %v5185, %v6521
    %v6523 = vpop.f32.mrb[0].mxu0
    %6524 = vmatprep.mubr.f32.mxu0 0.0
    %6525 = vmatmul.mubr.f32.gmra.mrb[0].mxu0 %v5491
    %v6526 = vpop.f32.mrb[0].mxu0
    %v6527 = vadd.f32 %v5185, %v6526
    %v6528 = vpop.f32.mrb[0].mxu0
    %6529 = vmatprep.mubr.f32.mxu0 0.0
    %6530 = vmatmul.mubr.f32.gmra.mrb[0].mxu0 %v5494
    %v6531 = vpop.f32.mrb[0].mxu0
    %v6532 = vadd.f32 %v5185, %v6531
    %v6533 = vpop.f32.mrb[0].mxu0
    %6534 = vmatprep.mubr.f32.mxu0 0.0
    %6535 = vmatmul.mubr.f32.gmra.mrb[0].mxu0 %v5497
    %v6536 = vpop.f32.mrb[0].mxu0
    %v6537 = vadd.f32 %v5185, %v6536
    %v6538 = vpop.f32.mrb[0].mxu0
    %6539 = vmatprep.mubr.f32.mxu0 0.0
    %6540 = vmatmul.mubr.f32.gmra.mrb[0].mxu0 %v5500
    %v6541 = vpop.f32.mrb[0].mxu0
    %v6542 = vadd.f32 %v5185, %v6541
    %v6543 = vpop.f32.mrb[0].mxu0
    %6544 = vmatprep.mubr.f32.mxu0 0.0
    %6545 = vmatmul.mubr.f32.gmra.mrb[0].mxu0 %v5503
    %v6546 = vpop.f32.mrb[0].mxu0
    %v6547 = vadd.f32 %v5185, %v6546
    %v6548 = vpop.f32.mrb[0].mxu0
    %6549 = vmatprep.mubr.f32.mxu0 0.0
    %6550 = vmatmul.mubr.f32.gmra.mrb[0].mxu0 %v5506
    %v6551 = vpop.f32.mrb[0].mxu0
    %v6552 = vadd.f32 %v5185, %v6551
    %v6553 = vpop.f32.mrb[0].mxu0
    %6554 = vmatprep.mubr.f32.mxu0 0.0
    %6555 = vmatmul.mubr.f32.gmra.mrb[0].mxu0 %v5509
    %v6556 = vpop.f32.mrb[0].mxu0
    %v6557 = vadd.f32 %v5185, %v6556
    %v6558 = vpop.f32.mrb[0].mxu0
    %6559 = vmatprep.mubr.f32.mxu0 0.0
    %6560 = vmatmul.mubr.f32.gmra.mrb[0].mxu0 %v5512
    %v6561 = vpop.f32.mrb[0].mxu0
    %v6562 = vadd.f32 %v5185, %v6561
    %v6563 = vpop.f32.mrb[0].mxu0
    %6564 = vmatprep.mubr.f32.mxu0 0.0
    %6565 = vmatmul.mubr.f32.gmra.mrb[0].mxu0 %v5515
    %v6566 = vpop.f32.mrb[0].mxu0
    %v6567 = vadd.f32 %v5185, %v6566
    %v6568 = vpop.f32.mrb[0].mxu0
    %6569 = vmatprep.mubr.f32.mxu0 0.0
    %6570 = vmatmul.mubr.f32.gmra.mrb[0].mxu0 %v5518
    %v6571 = vpop.f32.mrb[0].mxu0
    %v6572 = vadd.f32 %v5185, %v6571
    %v6573 = vpop.f32.mrb[0].mxu0
    %6574 = vmatprep.mubr.f32.mxu0 0.0
    %6575 = vmatmul.mubr.f32.gmra.mrb[0].mxu0 %v5521
    %v6576 = vpop.f32.mrb[0].mxu0
    %v6577 = vadd.f32 %v5185, %v6576
    %v6578 = vpop.f32.mrb[0].mxu0
    %6579 = vmatprep.mubr.f32.mxu0 0.0
    %6580 = vmatmul.mubr.f32.gmra.mrb[0].mxu0 %v5524
    %v6581 = vpop.f32.mrb[0].mxu0
    %v6582 = vadd.f32 %v5185, %v6581
    %v6583 = vpop.f32.mrb[0].mxu0
    %6584 = vmatprep.mubr.f32.mxu0 0.0
    %6585 = vmatmul.mubr.f32.gmra.mrb[0].mxu0 %v5527
    %v6586 = vpop.f32.mrb[0].mxu0
    %v6587 = vadd.f32 %v5185, %v6586
    %v6588 = vpop.f32.mrb[0].mxu0
    %6589 = vmatprep.mubr.f32.mxu0 0.0
    %6590 = vmatmul.mubr.f32.gmra.mrb[0].mxu0 %v5530
    %v6591 = vpop.f32.mrb[0].mxu0
    %v6592 = vadd.f32 %v5185, %v6591
    %v6593 = vpop.f32.mrb[0].mxu0
    %6594 = vmatprep.mubr.f32.mxu0 0.0
    %6595 = vmatmul.mubr.f32.gmra.mrb[0].mxu0 %v5533
    %v6596 = vpop.f32.mrb[0].mxu0
    %v6597 = vadd.f32 %v5185, %v6596
    %v6598 = vpop.f32.mrb[0].mxu0
    %6599 = vmatprep.mubr.f32.mxu0 0.0
    %6600 = vmatmul.mubr.f32.gmra.mrb[0].mxu0 %v5536
    %v6601 = vpop.f32.mrb[0].mxu0
    %v6602 = vadd.f32 %v5185, %v6601
    %v6603 = vpop.f32.mrb[0].mxu0
    %6604 = vmatprep.mubr.f32.mxu0 0.0
    %6605 = vmatmul.mubr.f32.gmra.mrb[0].mxu0 %v5539
    %v6606 = vpop.f32.mrb[0].mxu0
    %v6607 = vadd.f32 %v5185, %v6606
    %v6608 = vpop.f32.mrb[0].mxu0
    %6609 = vmatprep.mubr.f32.mxu0 0.0
    %6610 = vmatmul.mubr.f32.gmra.mrb[0].mxu0 %v5542
    %v6611 = vpop.f32.mrb[0].mxu0
    %v6612 = vadd.f32 %v5185, %v6611
    %v6613 = vpop.f32.mrb[0].mxu0
    %6614 = vmatprep.mubr.f32.mxu0 0.0
    %6615 = vmatmul.mubr.f32.gmra.mrb[0].mxu0 %v5545
    %v6616 = vpop.f32.mrb[0].mxu0
    %v6617 = vadd.f32 %v5185, %v6616
    %v6618 = vpop.f32.mrb[0].mxu0
    %6619 = vmatprep.mubr.f32.mxu0 0.0
    %6620 = vmatmul.mubr.f32.gmra.mrb[0].mxu0 %v5548
    %v6621 = vpop.f32.mrb[0].mxu0
    %v6622 = vadd.f32 %v5185, %v6621
    %v6623 = vpop.f32.mrb[0].mxu0
    %6624 = vmatprep.mubr.f32.mxu0 0.0
    %6625 = vmatmul.mubr.f32.gmra.mrb[0].mxu0 %v5551
    %v6626 = vpop.f32.mrb[0].mxu0
    %v6627 = vadd.f32 %v5185, %v6626
    %v6628 = vpop.f32.mrb[0].mxu0
    %6629 = vmatprep.mubr.f32.mxu0 0.0
    %6630 = vmatmul.mubr.f32.gmra.mrb[0].mxu0 %v5554
    %v6631 = vpop.f32.mrb[0].mxu0
    %v6632 = vadd.f32 %v5185, %v6631
    %v6633 = vpop.f32.mrb[0].mxu0
    %6634 = vmatprep.mubr.f32.mxu0 0.0
    %6635 = vmatmul.mubr.f32.gmra.mrb[0].mxu0 %v5557
    %v6636 = vpop.f32.mrb[0].mxu0
    %v6637 = vadd.f32 %v5185, %v6636
    %v6638 = vpop.f32.mrb[0].mxu0
    %6639 = vmatprep.mubr.f32.mxu0 0.0
    %6640 = vmatmul.mubr.f32.gmra.mrb[0].mxu0 %v5560
    %v6641 = vpop.f32.mrb[0].mxu0
    %v6642 = vadd.f32 %v5185, %v6641
    %v6643 = vpop.f32.mrb[0].mxu0
    %6644 = vmatprep.mubr.f32.mxu0 0.0
    %6645 = vmatmul.mubr.f32.gmra.mrb[0].mxu0 %v5563
    %v6646 = vpop.f32.mrb[0].mxu0
    %v6647 = vadd.f32 %v5185, %v6646
    %v6648 = vpop.f32.mrb[0].mxu0
    %6649 = vmatprep.mubr.f32.mxu0 0.0
    %6650 = vmatmul.mubr.f32.gmra.mrb[0].mxu0 %v5566
    %v6651 = vpop.f32.mrb[0].mxu0
    %v6652 = vadd.f32 %v5185, %v6651
    %v6653 = vpop.f32.mrb[0].mxu0
    %6654 = vmatprep.mubr.f32.mxu0 0.0
    %6655 = vmatmul.mubr.f32.gmra.mrb[0].mxu0 %v5569
    %v6656 = vpop.f32.mrb[0].mxu0
    %v6657 = vadd.f32 %v5185, %v6656
    %v6658 = vpop.f32.mrb[0].mxu0
    %6659 = vmatprep.mubr.f32.mxu0 0.0
    %6660 = vmatmul.mubr.f32.gmra.mrb[0].mxu0 %v5572
    %v6661 = vpop.f32.mrb[0].mxu0
    %v6662 = vadd.f32 %v5185, %v6661
    %v6663 = vpop.f32.mrb[0].mxu0
    %6664 = vmatprep.mubr.f32.mxu0 0.0
    %6665 = vmatmul.mubr.f32.gmra.mrb[0].mxu0 %v5575
    %v6666 = vpop.f32.mrb[0].mxu0
    %v6667 = vadd.f32 %v5185, %v6666
    %v6668 = vpop.f32.mrb[0].mxu0
    %6669 = vmatprep.mubr.f32.mxu0 0.0
    %6670 = vmatmul.mubr.f32.gmra.mrb[0].mxu0 %v5578
    %v6671 = vpop.f32.mrb[0].mxu0
    %v6672 = vadd.f32 %v5185, %v6671
    %v6673 = vpop.f32.mrb[0].mxu0
    %6674 = vmatprep.mubr.f32.mxu0 0.0
    %6675 = vmatmul.mubr.f32.gmra.mrb[0].mxu0 %v5581
    %v6676 = vpop.f32.mrb[0].mxu0
    %v6677 = vadd.f32 %v5185, %v6676
    %v6678 = vpop.f32.mrb[0].mxu0
    %6679 = vmatprep.mubr.f32.mxu0 0.0
    %6680 = vmatmul.mubr.f32.gmra.mrb[0].mxu0 %v5584
    %v6681 = vpop.f32.mrb[0].mxu0
    %v6682 = vadd.f32 %v5185, %v6681
    %v6683 = vpop.f32.mrb[0].mxu0
    %6684 = vmatprep.mubr.f32.mxu0 0.0
    %6685 = vmatmul.mubr.f32.gmra.mrb[0].mxu0 %v5587
    %v6686 = vpop.f32.mrb[0].mxu0
    %v6687 = vadd.f32 %v5185, %v6686
    %v6688 = vpop.f32.mrb[0].mxu0
    %6689 = vmatprep.mubr.f32.mxu0 0.0
    %6690 = vmatmul.mubr.f32.gmra.mrb[0].mxu0 %v5590
    %v6691 = vpop.f32.mrb[0].mxu0
    %v6692 = vadd.f32 %v5185, %v6691
    %v6693 = vpop.f32.mrb[0].mxu0
    %6694 = vmatprep.mubr.f32.mxu0 0.0
    %6695 = vmatmul.mubr.f32.gmra.mrb[0].mxu0 %v5593
    %v6696 = vpop.f32.mrb[0].mxu0
    %v6697 = vadd.f32 %v5185, %v6696
    %v6698 = vpop.f32.mrb[0].mxu0
    %6699 = vmatprep.mubr.f32.mxu0 0.0
    %6700 = vmatmul.mubr.f32.gmra.mrb[0].mxu0 %v5596
    %v6701 = vpop.f32.mrb[0].mxu0
    %v6702 = vadd.f32 %v5185, %v6701
    %v6703 = vpop.f32.mrb[0].mxu0
    %6704 = vmatprep.mubr.f32.mxu0 0.0
    %6705 = vmatmul.mubr.f32.gmra.mrb[0].mxu0 %v5599
    %v6706 = vpop.f32.mrb[0].mxu0
    %v6707 = vadd.f32 %v5185, %v6706
    %v6708 = vpop.f32.mrb[0].mxu0
    %6709 = vmatprep.mubr.f32.mxu0 0.0
    %6710 = vmatmul.mubr.f32.gmra.mrb[0].mxu0 %v5602
    %v6711 = vpop.f32.mrb[0].mxu0
    %v6712 = vadd.f32 %v5185, %v6711
    %v6713 = vpop.f32.mrb[0].mxu0
    %6714 = vmatprep.mubr.f32.mxu0 0.0
    %6715 = vmatmul.mubr.f32.gmra.mrb[0].mxu0 %v5605
    %v6716 = vpop.f32.mrb[0].mxu0
    %v6717 = vadd.f32 %v5185, %v6716
    %v6718 = vpop.f32.mrb[0].mxu0
    %6719 = vmatprep.mubr.f32.mxu0 0.0
    %6720 = vmatmul.mubr.f32.gmra.mrb[0].mxu0 %v5608
    %v6721 = vpop.f32.mrb[0].mxu0
    %v6722 = vadd.f32 %v5185, %v6721
    %v6723 = vpop.f32.mrb[0].mxu0
    %6724 = vmatprep.mubr.f32.mxu0 0.0
    %6725 = vmatmul.mubr.f32.gmra.mrb[0].mxu0 %v5611
    %v6726 = vpop.f32.mrb[0].mxu0
    %v6727 = vadd.f32 %v5185, %v6726
    %v6728 = vpop.f32.mrb[0].mxu0
    %6729 = vmatprep.mubr.f32.mxu0 0.0
    %6730 = vmatmul.mubr.f32.gmra.mrb[0].mxu0 %v5614
    %v6731 = vpop.f32.mrb[0].mxu0
    %v6732 = vadd.f32 %v5185, %v6731
    %v6733 = vpop.f32.mrb[0].mxu0
    %6734 = vmatprep.mubr.f32.mxu0 0.0
    %6735 = vmatmul.mubr.f32.gmra.mrb[0].mxu0 %v5617
    %v6736 = vpop.f32.mrb[0].mxu0
    %v6737 = vadd.f32 %v5185, %v6736
    %v6738 = vpop.f32.mrb[0].mxu0
    %6739 = vmatprep.mubr.f32.mxu0 0.0
    %6740 = vmatmul.mubr.f32.gmra.mrb[0].mxu0 %v5620
    %v6741 = vpop.f32.mrb[0].mxu0
    %v6742 = vadd.f32 %v5185, %v6741
    %v6743 = vpop.f32.mrb[0].mxu0
    %6744 = vmatprep.mubr.f32.mxu0 0.0
    %6745 = vmatmul.mubr.f32.gmra.mrb[0].mxu0 %v5623
    %v6746 = vpop.f32.mrb[0].mxu0
    %v6747 = vadd.f32 %v5185, %v6746
    %v6748 = vpop.f32.mrb[0].mxu0
    %6749 = vmatprep.mubr.f32.mxu0 0.0
    %6750 = vmatmul.mubr.f32.gmra.mrb[0].mxu0 %v5626
    %v6751 = vpop.f32.mrb[0].mxu0
    %v6752 = vadd.f32 %v5185, %v6751
    %v6753 = vpop.f32.mrb[0].mxu0
    %6754 = vmatprep.mubr.f32.mxu0 0.0
    %6755 = vmatmul.mubr.f32.gmra.mrb[0].mxu0 %v5629
    %v6756 = vpop.f32.mrb[0].mxu0
    %v6757 = vadd.f32 %v5185, %v6756
    %v6758 = vpop.f32.mrb[0].mxu0
    %6759 = vmatprep.mubr.f32.mxu0 0.0
    %6760 = vmatmul.mubr.f32.gmra.mrb[0].mxu0 %v5632
    %v6761 = vpop.f32.mrb[0].mxu0
    %v6762 = vadd.f32 %v5185, %v6761
    %v6763 = vpop.f32.mrb[0].mxu0
    %6764 = vmatprep.mubr.f32.mxu0 0.0
    %6765 = vmatmul.mubr.f32.gmra.mrb[0].mxu0 %v5635
    %v6766 = vpop.f32.mrb[0].mxu0
    %v6767 = vadd.f32 %v5185, %v6766
    %v6768 = vpop.f32.mrb[0].mxu0
    %6769 = vmatprep.mubr.f32.mxu0 0.0
    %6770 = vmatmul.mubr.f32.gmra.mrb[0].mxu0 %v5638
    %v6771 = vpop.f32.mrb[0].mxu0
    %v6772 = vadd.f32 %v5185, %v6771
    %v6773 = vpop.f32.mrb[0].mxu0
    %6774 = vmatprep.mubr.f32.mxu0 0.0
    %6775 = vmatmul.mubr.f32.gmra.mrb[0].mxu0 %v5641
    %v6776 = vpop.f32.mrb[0].mxu0
    %v6777 = vadd.f32 %v5185, %v6776
    %v6778 = vpop.f32.mrb[0].mxu0
    %6779 = vmatprep.mubr.f32.mxu0 0.0
    %6780 = vmatmul.mubr.f32.gmra.mrb[0].mxu0 %v5644
    %v6781 = vpop.f32.mrb[0].mxu0
    %v6782 = vadd.f32 %v5185, %v6781
    %v6783 = vpop.f32.mrb[0].mxu0
    %6784 = vmatprep.mubr.f32.mxu0 0.0
    %6785 = vmatmul.mubr.f32.gmra.mrb[0].mxu0 %v5647
    %v6786 = vpop.f32.mrb[0].mxu0
    %v6787 = vadd.f32 %v5185, %v6786
    %v6788 = vpop.f32.mrb[0].mxu0
    %6789 = vmatprep.mubr.f32.mxu0 0.0
    %6790 = vmatmul.mubr.f32.gmra.mrb[0].mxu0 %v5650
    %v6791 = vpop.f32.mrb[0].mxu0
    %v6792 = vadd.f32 %v5185, %v6791
    %v6793 = vpop.f32.mrb[0].mxu0
    %6794 = vmatprep.mubr.f32.mxu0 0.0
    %6795 = vmatmul.mubr.f32.gmra.mrb[0].mxu0 %v5653
    %v6796 = vpop.f32.mrb[0].mxu0
    %v6797 = vadd.f32 %v5185, %v6796
    %v6798 = vpop.f32.mrb[0].mxu0
    %6799 = vmatprep.mubr.f32.mxu0 0.0
    %6800 = vmatmul.mubr.f32.gmra.mrb[0].mxu0 %v5656
    %v6801 = vpop.f32.mrb[0].mxu0
    %v6802 = vadd.f32 %v5185, %v6801
    %v6803 = vpop.f32.mrb[0].mxu0
    %6804 = vmatprep.mubr.f32.mxu0 0.0
    %6805 = vmatmul.mubr.f32.gmra.mrb[0].mxu0 %v5659
    %v6806 = vpop.f32.mrb[0].mxu0
    %v6807 = vadd.f32 %v5185, %v6806
    %v6808 = vpop.f32.mrb[0].mxu0
    %6809 = vmatprep.mubr.f32.mxu0 0.0
    %6810 = vmatmul.mubr.f32.gmra.mrb[0].mxu0 %v5662
    %v6811 = vpop.f32.mrb[0].mxu0
    %v6812 = vadd.f32 %v5185, %v6811
    %v6813 = vpop.f32.mrb[0].mxu0
    %6814 = vmatprep.mubr.f32.mxu0 0.0
    %6815 = vmatmul.mubr.f32.gmra.mrb[0].mxu0 %v5665
    %v6816 = vpop.f32.mrb[0].mxu0
    %v6817 = vadd.f32 %v5185, %v6816
    %v6818 = vpop.f32.mrb[0].mxu0
    %6819 = vmatprep.mubr.f32.mxu0 0.0
    %6820 = vmatmul.mubr.f32.gmra.mrb[0].mxu0 %v5668
    %v6821 = vpop.f32.mrb[0].mxu0
    %v6822 = vadd.f32 %v5185, %v6821
    %v6823 = vpop.f32.mrb[0].mxu0
    %6824 = vmatprep.mubr.f32.mxu0 0.0
    %6825 = vmatmul.mubr.f32.gmra.mrb[0].mxu0 %v5671
    %v6826 = vpop.f32.mrb[0].mxu0
    %v6827 = vadd.f32 %v5185, %v6826
    %v6828 = vpop.f32.mrb[0].mxu0
    %6829 = vmatprep.mubr.f32.mxu0 0.0
    %6830 = vmatmul.mubr.f32.gmra.mrb[0].mxu0 %v5674
    %v6831 = vpop.f32.mrb[0].mxu0
    %v6832 = vadd.f32 %v5185, %v6831
    %v6833 = vpop.f32.mrb[0].mxu0
    %6834 = vmatprep.mubr.f32.mxu0 0.0
    %6835 = vmatmul.mubr.f32.gmra.mrb[0].mxu0 %v5677
    %v6836 = vpop.f32.mrb[0].mxu0
    %v6837 = vadd.f32 %v5185, %v6836
    %v6838 = vpop.f32.mrb[0].mxu0
    %6839 = vmatprep.mubr.f32.mxu0 0.0
    %6840 = vmatmul.mubr.f32.gmra.mrb[0].mxu0 %v5680
    %v6841 = vpop.f32.mrb[0].mxu0
    %v6842 = vadd.f32 %v5185, %v6841
    %v6843 = vpop.f32.mrb[0].mxu0
    %6844 = vmatprep.mubr.f32.mxu0 0.0
    %6845 = vmatmul.mubr.f32.gmra.mrb[0].mxu0 %v5683
    %v6846 = vpop.f32.mrb[0].mxu0
    %v6847 = vadd.f32 %v5185, %v6846
    %v6848 = vpop.f32.mrb[0].mxu0
    %6849 = vmatprep.mubr.f32.mxu0 0.0
    %6850 = vmatmul.mubr.f32.gmra.mrb[0].mxu0 %v5686
    %v6851 = vpop.f32.mrb[0].mxu0
    %v6852 = vadd.f32 %v5185, %v6851
    %v6853 = vpop.f32.mrb[0].mxu0
    %6854 = vmatprep.mubr.f32.mxu0 0.0
    %6855 = vmatmul.mubr.f32.gmra.mrb[0].mxu0 %v5689
    %v6856 = vpop.f32.mrb[0].mxu0
    %v6857 = vadd.f32 %v5185, %v6856
    %v6858 = vpop.f32.mrb[0].mxu0
    %6859 = vmatprep.mubr.f32.mxu0 0.0
    %6860 = vmatmul.mubr.f32.gmra.mrb[0].mxu0 %v5692
    %v6861 = vpop.f32.mrb[0].mxu0
    %v6862 = vadd.f32 %v5185, %v6861
    %v6863 = vpop.f32.mrb[0].mxu0
    %6864 = vmatprep.mubr.f32.mxu0 0.0
    %6865 = vmatmul.mubr.f32.gmra.mrb[0].mxu0 %v5695
    %v6866 = vpop.f32.mrb[0].mxu0
    %v6867 = vadd.f32 %v5185, %v6866
    %v6868 = vpop.f32.mrb[0].mxu0
    %6869 = vmatprep.mubr.f32.mxu0 0.0
    %6870 = vmatmul.mubr.f32.gmra.mrb[0].mxu0 %v5698
    %v6871 = vpop.f32.mrb[0].mxu0
    %v6872 = vadd.f32 %v5185, %v6871
    %v6873 = vpop.f32.mrb[0].mxu0
    %6874 = vmatprep.mubr.f32.mxu0 0.0
    %6875 = vmatmul.mubr.f32.gmra.mrb[0].mxu0 %v5701
    %v6876 = vpop.f32.mrb[0].mxu0
    %v6877 = vadd.f32 %v5185, %v6876
    %v6878 = vpop.f32.mrb[0].mxu0
    %6879 = vmatprep.mubr.f32.mxu0 0.0
    %6880 = vmatmul.mubr.f32.gmra.mrb[0].mxu0 %v5704
    %v6881 = vpop.f32.mrb[0].mxu0
    %v6882 = vadd.f32 %v5185, %v6881
    %v6883 = vpop.f32.mrb[0].mxu0
    %6884 = vmatprep.mubr.f32.mxu0 0.0
    %6885 = vmatmul.mubr.f32.gmra.mrb[0].mxu0 %v5707
    %v6886 = vpop.f32.mrb[0].mxu0
    %v6887 = vadd.f32 %v5185, %v6886
    %v6888 = vpop.f32.mrb[0].mxu0
    %6889 = vmatprep.mubr.f32.mxu0 0.0
    %6890 = vmatmul.mubr.f32.gmra.mrb[0].mxu0 %v5710
    %v6891 = vpop.f32.mrb[0].mxu0
    %v6892 = vadd.f32 %v5185, %v6891
    %v6893 = vpop.f32.mrb[0].mxu0
    %6894 = vmatprep.mubr.f32.mxu0 0.0
    %6895 = vmatmul.mubr.f32.gmra.mrb[0].mxu0 %v5713
    %v6896 = vpop.f32.mrb[0].mxu0
    %v6897 = vadd.f32 %v5185, %v6896
    %v6898 = vpop.f32.mrb[0].mxu0
    %6899 = vmatprep.mubr.f32.mxu0 0.0
    %6900 = vmatmul.mubr.f32.gmra.mrb[0].mxu0 %v5716
    %v6901 = vpop.f32.mrb[0].mxu0
    %v6902 = vadd.f32 %v5185, %v6901
    %v6903 = vpop.f32.mrb[0].mxu0
    %6904 = vmatprep.mubr.f32.mxu0 0.0
    %6905 = vmatmul.mubr.f32.gmra.mrb[0].mxu0 %v5719
    %v6906 = vpop.f32.mrb[0].mxu0
    %v6907 = vadd.f32 %v5185, %v6906
    %v6908 = vpop.f32.mrb[0].mxu0
    %6909 = vmatprep.mubr.f32.mxu0 0.0
    %6910 = vmatmul.mubr.f32.gmra.mrb[0].mxu0 %v5722
    %v6911 = vpop.f32.mrb[0].mxu0
    %v6912 = vadd.f32 %v5185, %v6911
    %v6913 = vpop.f32.mrb[0].mxu0
    %6914 = vmatprep.mubr.f32.mxu0 0.0
    %6915 = vmatmul.mubr.f32.gmra.mrb[0].mxu0 %v5725
    %v6916 = vpop.f32.mrb[0].mxu0
    %v6917 = vadd.f32 %v5185, %v6916
    %v6918 = vpop.f32.mrb[0].mxu0
    %6919 = vmatprep.mubr.f32.mxu0 0.0
    %6920 = vmatmul.mubr.f32.gmra.mrb[0].mxu0 %v5728
    %v6921 = vpop.f32.mrb[0].mxu0
    %v6922 = vadd.f32 %v5185, %v6921
    %v6923 = vpop.f32.mrb[0].mxu0
    %6924 = vmatprep.mubr.f32.mxu0 0.0
    %6925 = vmatmul.mubr.f32.gmra.mrb[0].mxu0 %v5731
    %v6926 = vpop.f32.mrb[0].mxu0
    %v6927 = vadd.f32 %v5185, %v6926
    %v6928 = vpop.f32.mrb[0].mxu0
    %6929 = vmatprep.mubr.f32.mxu0 0.0
    %6930 = vmatmul.mubr.f32.gmra.mrb[0].mxu0 %v5734
    %v6931 = vpop.f32.mrb[0].mxu0
    %v6932 = vadd.f32 %v5185, %v6931
    %v6933 = vpop.f32.mrb[0].mxu0
    %6934 = vmatprep.mubr.f32.mxu0 0.0
    %6935 = vmatmul.mubr.f32.gmra.mrb[0].mxu0 %v5737
    %v6936 = vpop.f32.mrb[0].mxu0
    %v6937 = vadd.f32 %v5185, %v6936
    %v6938 = vpop.f32.mrb[0].mxu0
    %6939 = vmatprep.mubr.f32.mxu0 0.0
    %6940 = vmatmul.mubr.f32.gmra.mrb[0].mxu0 %v5740
    %v6941 = vpop.f32.mrb[0].mxu0
    %v6942 = vadd.f32 %v5185, %v6941
    %v6943 = vpop.f32.mrb[0].mxu0
    %6944 = vmatprep.mubr.f32.mxu0 0.0
    %6945 = vmatmul.mubr.f32.gmra.mrb[0].mxu0 %v5743
    %v6946 = vpop.f32.mrb[0].mxu0
    %v6947 = vadd.f32 %v5185, %v6946
    %v6948 = vpop.f32.mrb[0].mxu0
    %6949 = vmatprep.mubr.f32.mxu0 0.0
    %6950 = vmatmul.mubr.f32.gmra.mrb[0].mxu0 %v5746
    %v6951 = vpop.f32.mrb[0].mxu0
    %v6952 = vadd.f32 %v5185, %v6951
    %v6953 = vpop.f32.mrb[0].mxu0
    %6954 = vmatprep.mubr.f32.mxu0 0.0
    %6955 = vmatmul.mubr.f32.gmra.mrb[0].mxu0 %v5749
    %v6956 = vpop.f32.mrb[0].mxu0
    %v6957 = vadd.f32 %v5185, %v6956
    %v6958 = vpop.f32.mrb[0].mxu0
    %6959 = vmatprep.mubr.f32.mxu0 0.0
    %6960 = vmatmul.mubr.f32.gmra.mrb[0].mxu0 %v5752
    %v6961 = vpop.f32.mrb[0].mxu0
    %v6962 = vadd.f32 %v5185, %v6961
    %v6963 = vpop.f32.mrb[0].mxu0
    %6964 = vmatprep.mubr.f32.mxu0 0.0
    %6965 = vmatmul.mubr.f32.gmra.mrb[0].mxu0 %v5755
    %v6966 = vpop.f32.mrb[0].mxu0
    %v6967 = vadd.f32 %v5185, %v6966
    %v6968 = vpop.f32.mrb[0].mxu0
    %6969 = vmatprep.mubr.f32.mxu0 0.0
    %6970 = vmatmul.mubr.f32.gmra.mrb[0].mxu0 %v5758
    %v6971 = vpop.f32.mrb[0].mxu0
    %v6972 = vadd.f32 %v5185, %v6971
    %v6973 = vpop.f32.mrb[0].mxu0
    %6974 = vmatprep.mubr.f32.mxu0 0.0
    %6975 = vmatmul.mubr.f32.gmra.mrb[0].mxu0 %v5761
    %v6976 = vpop.f32.mrb[0].mxu0
    %v6977 = vadd.f32 %v5185, %v6976
    %v6978 = vpop.f32.mrb[0].mxu0
    %6979 = vmatprep.mubr.f32.mxu0 0.0
    %6980 = vmatmul.mubr.f32.gmra.mrb[0].mxu0 %v5764
    %v6981 = vpop.f32.mrb[0].mxu0
    %v6982 = vadd.f32 %v5185, %v6981
    %v6983 = vpop.f32.mrb[0].mxu0
    %6984 = vmatprep.mubr.f32.mxu0 0.0
    %6985 = vmatmul.mubr.f32.gmra.mrb[0].mxu0 %v5767
    %v6986 = vpop.f32.mrb[0].mxu0
    %v6987 = vadd.f32 %v5185, %v6986
    %v6988 = vpop.f32.mrb[0].mxu0
    %6989 = vmatprep.mubr.f32.mxu0 0.0
    %6990 = vmatmul.mubr.f32.gmra.mrb[0].mxu0 %v5770
    %v6991 = vpop.f32.mrb[0].mxu0
    %v6992 = vadd.f32 %v5185, %v6991
    %v6993 = vpop.f32.mrb[0].mxu0
    %6994 = vmatprep.mubr.f32.mxu0 0.0
    %6995 = vmatmul.mubr.f32.gmra.mrb[0].mxu0 %v5773
    %v6996 = vpop.f32.mrb[0].mxu0
    %v6997 = vadd.f32 %v5185, %v6996
    %v6998 = vpop.f32.mrb[0].mxu0
    %6999 = vmatprep.mubr.f32.mxu0 0.0
    %7000 = vmatmul.mubr.f32.gmra.mrb[0].mxu0 %v5776
    %v7001 = vpop.f32.mrb[0].mxu0
    %v7002 = vadd.f32 %v5185, %v7001
    %v7003 = vpop.f32.mrb[0].mxu0
    %7004 = vmatprep.mubr.f32.mxu0 0.0
    %7005 = vmatmul.mubr.f32.gmra.mrb[0].mxu0 %v5779
    %v7006 = vpop.f32.mrb[0].mxu0
    %v7007 = vadd.f32 %v5185, %v7006
    %v7008 = vpop.f32.mrb[0].mxu0
    %7009 = vmatprep.mubr.f32.mxu0 0.0
    %7010 = vmatmul.mubr.f32.gmra.mrb[0].mxu0 %v5782
    %v7011 = vpop.f32.mrb[0].mxu0
    %v7012 = vadd.f32 %v5185, %v7011
    %v7013 = vpop.f32.mrb[0].mxu0
    %7014 = vmatprep.mubr.f32.mxu0 0.0
    %7015 = vmatmul.mubr.f32.gmra.mrb[0].mxu0 %v5785
    %v7016 = vpop.f32.mrb[0].mxu0
    %v7017 = vadd.f32 %v5185, %v7016
    %v7018 = vpop.f32.mrb[0].mxu0
    %7019 = vmatprep.mubr.f32.mxu0 0.0
    %7020 = vmatmul.mubr.f32.gmra.mrb[0].mxu0 %v5788
    %v7021 = vpop.f32.mrb[0].mxu0
    %v7022 = vadd.f32 %v5185, %v7021
    %v7023 = vpop.f32.mrb[0].mxu0
    %7024 = vmatprep.mubr.f32.mxu0 0.0
    %7025 = vmatmul.mubr.f32.gmra.mrb[0].mxu0 %v5791
    %v7026 = vpop.f32.mrb[0].mxu0
    %v7027 = vadd.f32 %v5185, %v7026
    %v7028 = vpop.f32.mrb[0].mxu0
    %7029 = vmatprep.mubr.f32.mxu0 0.0
    %7030 = vmatmul.mubr.f32.gmra.mrb[0].mxu0 %v5794
    %v7031 = vpop.f32.mrb[0].mxu0
    %v7032 = vadd.f32 %v5185, %v7031
    %v7033 = vpop.f32.mrb[0].mxu0
    %7034 = vmatprep.mubr.f32.mxu0 0.0
    %7035 = vmatmul.mubr.f32.gmra.mrb[0].mxu0 %v5797
    %v7036 = vpop.f32.mrb[0].mxu0
    %v7037 = vadd.f32 %v5185, %v7036
    %v7038 = vpop.f32.mrb[0].mxu0
    %7039 = vmatprep.mubr.f32.mxu0 0.0
    %7040 = vmatmul.mubr.f32.gmra.mrb[0].mxu0 %v5800
    %v7041 = vpop.f32.mrb[0].mxu0
    %v7042 = vadd.f32 %v5185, %v7041
    %v7043 = vpop.f32.mrb[0].mxu0
    %7044 = vmatprep.mubr.f32.mxu0 0.0
    %7045 = vmatmul.mubr.f32.gmra.mrb[0].mxu0 %v5803
    %v7046 = vpop.f32.mrb[0].mxu0
    %v7047 = vadd.f32 %v5185, %v7046
    %v7048 = vpop.f32.mrb[0].mxu0
    %7049 = vmatprep.mubr.f32.mxu0 0.0
    %7050 = vmatmul.mubr.f32.gmra.mrb[0].mxu0 %v5806
    %v7051 = vpop.f32.mrb[0].mxu0
    %v7052 = vadd.f32 %v5185, %v7051
    %v7053 = vpop.f32.mrb[0].mxu0
    %7054 = vmatprep.mubr.f32.mxu0 0.0
    %7055 = vmatmul.mubr.f32.gmra.mrb[0].mxu0 %v5809
    %v7056 = vpop.f32.mrb[0].mxu0
    %v7057 = vadd.f32 %v5185, %v7056
    %v7058 = vpop.f32.mrb[0].mxu0
    %7059 = vmatprep.mubr.f32.mxu0 0.0
    %7060 = vmatmul.mubr.f32.gmra.mrb[0].mxu0 %v5812
    %v7061 = vpop.f32.mrb[0].mxu0
    %v7062 = vadd.f32 %v5185, %v7061
    %v7063 = vpop.f32.mrb[0].mxu0
    %7064 = vmatprep.mubr.f32.mxu0 0.0
    %7065 = vmatmul.mubr.f32.gmra.mrb[0].mxu0 %v5815
    %v7066 = vpop.f32.mrb[0].mxu0
    %v7067 = vadd.f32 %v5185, %v7066
    %v7068 = vpop.f32.mrb[0].mxu0
    %7069 = vmatprep.mubr.f32.mxu0 0.0
    %7070 = vmatmul.mubr.f32.gmra.mrb[0].mxu0 %v5818
    %v7071 = vpop.f32.mrb[0].mxu0
    %v7072 = vadd.f32 %v5185, %v7071
    %v7073 = vpop.f32.mrb[0].mxu0
    %7074 = vmatprep.mubr.f32.mxu0 0.0
    %7075 = vmatmul.mubr.f32.gmra.mrb[0].mxu0 %v5821
    %v7076 = vpop.f32.mrb[0].mxu0
    %v7077 = vadd.f32 %v5185, %v7076
    %v7078 = vpop.f32.mrb[0].mxu0
    %7079 = vmatprep.mubr.f32.mxu0 0.0
    %7080 = vmatmul.mubr.f32.gmra.mrb[0].mxu0 %v5824
    %v7081 = vpop.f32.mrb[0].mxu0
    %v7082 = vadd.f32 %v5185, %v7081
    %v7083 = vpop.f32.mrb[0].mxu0
    %7084 = vmatprep.mubr.f32.mxu0 0.0
    %7085 = vmatmul.mubr.f32.gmra.mrb[0].mxu0 %v5827
    %v7086 = vpop.f32.mrb[0].mxu0
    %v7087 = vadd.f32 %v5185, %v7086
    %v7088 = vpop.f32.mrb[0].mxu0
    %7089 = vmatprep.mubr.f32.mxu0 0.0
    %7090 = vmatmul.mubr.f32.gmra.mrb[0].mxu0 %v5830
    %v7091 = vpop.f32.mrb[0].mxu0
    %v7092 = vadd.f32 %v5185, %v7091
    %v7093 = vpop.f32.mrb[0].mxu0
    %7094 = vmatprep.mubr.f32.mxu0 0.0
    %7095 = vmatmul.mubr.f32.gmra.mrb[0].mxu0 %v5833
    %v7096 = vpop.f32.mrb[0].mxu0
    %v7097 = vadd.f32 %v5185, %v7096
    %v7098 = vpop.f32.mrb[0].mxu0
    %7099 = vmatprep.mubr.f32.mxu0 0.0
    %7100 = vmatmul.mubr.f32.gmra.mrb[0].mxu0 %v5836
    %v7101 = vpop.f32.mrb[0].mxu0
    %v7102 = vadd.f32 %v5185, %v7101
    %v7103 = vpop.f32.mrb[0].mxu0
    %7104 = vmatprep.mubr.f32.mxu0 0.0
    %7105 = vmatmul.mubr.f32.gmra.mrb[0].mxu0 %v5839
    %v7106 = vpop.f32.mrb[0].mxu0
    %v7107 = vadd.f32 %v5185, %v7106
    %v7108 = vpop.f32.mrb[0].mxu0
    %7109 = vmatprep.mubr.f32.mxu0 0.0
    %7110 = vmatmul.mubr.f32.gmra.mrb[0].mxu0 %v5842
    %v7111 = vpop.f32.mrb[0].mxu0
    %v7112 = vadd.f32 %v5185, %v7111
    %v7113 = vpop.f32.mrb[0].mxu0
    %7114 = vmatprep.mubr.f32.mxu0 0.0
    %7115 = vmatmul.mubr.f32.gmra.mrb[0].mxu0 %v5845
    %v7116 = vpop.f32.mrb[0].mxu0
    %v7117 = vadd.f32 %v5185, %v7116
    %v7118 = vpop.f32.mrb[0].mxu0
    %7119 = vmatprep.mubr.f32.mxu0 0.0
    %7120 = vmatmul.mubr.f32.gmra.mrb[0].mxu0 %v5848
    %v7121 = vpop.f32.mrb[0].mxu0
    %v7122 = vadd.f32 %v5185, %v7121
    %v7123 = vpop.f32.mrb[0].mxu0
    %7124 = vmatprep.mubr.f32.mxu0 0.0
    %7125 = vmatmul.mubr.f32.gmra.mrb[0].mxu0 %v5851
    %v7126 = vpop.f32.mrb[0].mxu0
    %v7127 = vadd.f32 %v5185, %v7126
    %v7128 = vpop.f32.mrb[0].mxu0
    %7129 = vmatprep.mubr.f32.mxu0 0.0
    %7130 = vmatmul.mubr.f32.gmra.mrb[0].mxu0 %v5854
    %v7131 = vpop.f32.mrb[0].mxu0
    %v7132 = vadd.f32 %v5185, %v7131
    %v7133 = vpop.f32.mrb[0].mxu0
    %7134 = vmatprep.mubr.f32.mxu0 0.0
    %7135 = vmatmul.mubr.f32.gmra.mrb[0].mxu0 %v5857
    %v7136 = vpop.f32.mrb[0].mxu0
    %v7137 = vadd.f32 %v5185, %v7136
    %v7138 = vpop.f32.mrb[0].mxu0
    %7139 = vmatprep.mubr.f32.mxu0 0.0
    %7140 = vmatmul.mubr.f32.gmra.mrb[0].mxu0 %v5860
    %v7141 = vpop.f32.mrb[0].mxu0
    %v7142 = vadd.f32 %v5185, %v7141
    %v7143 = vpop.f32.mrb[0].mxu0
    %7144 = vmatprep.mubr.f32.mxu0 0.0
    %7145 = vmatmul.mubr.f32.gmra.mrb[0].mxu0 %v5863
    %v7146 = vpop.f32.mrb[0].mxu0
    %v7147 = vadd.f32 %v5185, %v7146
    %v7148 = vpop.f32.mrb[0].mxu0
    %7149 = vmatprep.mubr.f32.mxu0 0.0
    %7150 = vmatmul.mubr.f32.gmra.mrb[0].mxu0 %v5866
    %v7151 = vpop.f32.mrb[0].mxu0
    %v7152 = vadd.f32 %v5185, %v7151
    %v7153 = vpop.f32.mrb[0].mxu0
    %7154 = vmatprep.mubr.f32.mxu0 0.0
    %7155 = vmatmul.mubr.f32.gmra.mrb[0].mxu0 %v5869
    %v7156 = vpop.f32.mrb[0].mxu0
    %v7157 = vadd.f32 %v5185, %v7156
    %v7158 = vpop.f32.mrb[0].mxu0
    %7159 = vmatprep.mubr.f32.mxu0 0.0
    %7160 = vmatmul.mubr.f32.gmra.mrb[0].mxu0 %v5872
    %v7161 = vpop.f32.mrb[0].mxu0
    %v7162 = vadd.f32 %v5185, %v7161
    %v7163 = vpop.f32.mrb[0].mxu0
    %7164 = vmatprep.mubr.f32.mxu0 0.0
    %7165 = vmatmul.mubr.f32.gmra.mrb[0].mxu0 %v5875
    %v7166 = vpop.f32.mrb[0].mxu0
    %v7167 = vadd.f32 %v5185, %v7166
    %v7168 = vpop.f32.mrb[0].mxu0
    %7169 = vmatprep.mubr.f32.mxu0 0.0
    %7170 = vmatmul.mubr.f32.gmra.mrb[0].mxu0 %v5878
    %v7171 = vpop.f32.mrb[0].mxu0
    %v7172 = vadd.f32 %v5185, %v7171
    %v7173 = vpop.f32.mrb[0].mxu0
    %7174 = vmatprep.mubr.f32.mxu0 0.0
    %7175 = vmatmul.mubr.f32.gmra.mrb[0].mxu0 %v5881
    %v7176 = vpop.f32.mrb[0].mxu0
    %v7177 = vadd.f32 %v5185, %v7176
    %v7178 = vpop.f32.mrb[0].mxu0
    %7179 = vmatprep.mubr.f32.mxu0 0.0
    %7180 = vmatmul.mubr.f32.gmra.mrb[0].mxu0 %v5884
    %v7181 = vpop.f32.mrb[0].mxu0
    %v7182 = vadd.f32 %v5185, %v7181
    %v7183 = vpop.f32.mrb[0].mxu0
    %7184 = vmatprep.mubr.f32.mxu0 0.0
    %7185 = vmatmul.mubr.f32.gmra.mrb[0].mxu0 %v5887
    %v7186 = vpop.f32.mrb[0].mxu0
    %v7187 = vadd.f32 %v5185, %v7186
    %v7188 = vpop.f32.mrb[0].mxu0
    %7189 = vmatprep.mubr.f32.mxu0 0.0
    %7190 = vmatmul.mubr.f32.gmra.mrb[0].mxu0 %v5890
    %v7191 = vpop.f32.mrb[0].mxu0
    %v7192 = vadd.f32 %v5185, %v7191
    %v7193 = vpop.f32.mrb[0].mxu0
    %7194 = vmatprep.mubr.f32.mxu0 0.0
    %7195 = vmatmul.mubr.f32.gmra.mrb[0].mxu0 %v5893
    %v7196 = vpop.f32.mrb[0].mxu0
    %v7197 = vadd.f32 %v5185, %v7196
    %v7198 = vpop.f32.mrb[0].mxu0
    %7199 = vmatprep.mubr.f32.mxu0 0.0
    %7200 = vmatmul.mubr.f32.gmra.mrb[0].mxu0 %v5896
    %v7201 = vpop.f32.mrb[0].mxu0
    %v7202 = vadd.f32 %v5185, %v7201
    %v7203 = vpop.f32.mrb[0].mxu0
    %7204 = vmatprep.mubr.f32.mxu0 0.0
    %7205 = vmatmul.mubr.f32.gmra.mrb[0].mxu0 %v5899
    %v7206 = vpop.f32.mrb[0].mxu0
    %v7207 = vadd.f32 %v5185, %v7206
    %v7208 = vpop.f32.mrb[0].mxu0
    %7209 = vmatprep.mubr.f32.mxu0 0.0
    %7210 = vmatmul.mubr.f32.gmra.mrb[0].mxu0 %v5902
    %v7211 = vpop.f32.mrb[0].mxu0
    %v7212 = vadd.f32 %v5185, %v7211
    %v7213 = vpop.f32.mrb[0].mxu0
    %7214 = vmatprep.mubr.f32.mxu0 0.0
    %7215 = vmatmul.mubr.f32.gmra.mrb[0].mxu0 %v5905
    %v7216 = vpop.f32.mrb[0].mxu0
    %v7217 = vadd.f32 %v5185, %v7216
    %v7218 = vpop.f32.mrb[0].mxu0
    %7219 = vmatprep.mubr.f32.mxu0 0.0
    %7220 = vmatmul.mubr.f32.gmra.mrb[0].mxu0 %v5908
    %v7221 = vpop.f32.mrb[0].mxu0
    %v7222 = vadd.f32 %v5185, %v7221
    %v7223 = vpop.f32.mrb[0].mxu0
    %7224 = vmatprep.mubr.f32.mxu0 0.0
    %7225 = vmatmul.mubr.f32.gmra.mrb[0].mxu0 %v5911
    %v7226 = vpop.f32.mrb[0].mxu0
    %v7227 = vadd.f32 %v5185, %v7226
    %v7228 = vpop.f32.mrb[0].mxu0
    %7229 = vmatprep.mubr.f32.mxu0 0.0
    %7230 = vmatmul.mubr.f32.gmra.mrb[0].mxu0 %v5914
    %v7231 = vpop.f32.mrb[0].mxu0
    %v7232 = vadd.f32 %v5185, %v7231
    %v7233 = vpop.f32.mrb[0].mxu0
    %7234 = vmatprep.mubr.f32.mxu0 0.0
    %7235 = vmatmul.mubr.f32.gmra.mrb[0].mxu0 %v5917
    %v7236 = vpop.f32.mrb[0].mxu0
    %v7237 = vadd.f32 %v5185, %v7236
    %v7238 = vpop.f32.mrb[0].mxu0
    %7239 = vmatprep.mubr.f32.mxu0 0.0
    %7240 = vmatmul.mubr.f32.gmra.mrb[0].mxu0 %v5920
    %v7241 = vpop.f32.mrb[0].mxu0
    %v7242 = vadd.f32 %v5185, %v7241
    %v7243 = vpop.f32.mrb[0].mxu0
    %7244 = vmatprep.mubr.f32.mxu0 0.0
    %7245 = vmatmul.mubr.f32.gmra.mrb[0].mxu0 %v5923
    %v7246 = vpop.f32.mrb[0].mxu0
    %v7247 = vadd.f32 %v5185, %v7246
    %v7248 = vpop.f32.mrb[0].mxu0
    %7249 = vmatprep.mubr.f32.mxu0 0.0
    %7250 = vmatmul.mubr.f32.gmra.mrb[0].mxu0 %v5926
    %v7251 = vpop.f32.mrb[0].mxu0
    %v7252 = vadd.f32 %v5185, %v7251
    %v7253 = vpop.f32.mrb[0].mxu0
    %7254 = vmatprep.mubr.f32.mxu0 0.0
    %7255 = vmatmul.mubr.f32.gmra.mrb[0].mxu0 %v5929
    %v7256 = vpop.f32.mrb[0].mxu0
    %v7257 = vadd.f32 %v5185, %v7256
    %v7258 = vpop.f32.mrb[0].mxu0
    %7259 = vmatprep.mubr.f32.mxu0 0.0
    %7260 = vmatmul.mubr.f32.gmra.mrb[0].mxu0 %v5932
    %v7261 = vpop.f32.mrb[0].mxu0
    %v7262 = vadd.f32 %v5185, %v7261
    %v7263 = vpop.f32.mrb[0].mxu0
    %7264 = vmatprep.mubr.f32.mxu0 0.0
    %7265 = vmatmul.mubr.f32.gmra.mrb[0].mxu0 %v5935
    %v7266 = vpop.f32.mrb[0].mxu0
    %v7267 = vadd.f32 %v5185, %v7266
    %v7268 = vpop.f32.mrb[0].mxu0
    %7269 = vmatprep.mubr.f32.mxu0 0.0
    %7270 = vmatmul.mubr.f32.gmra.mrb[0].mxu0 %v5938
    %v7271 = vpop.f32.mrb[0].mxu0
    %v7272 = vadd.f32 %v5185, %v7271
    %v7273 = vpop.f32.mrb[0].mxu0
    %7274 = vmatprep.mubr.f32.mxu0 0.0
    %7275 = vmatmul.mubr.f32.gmra.mrb[0].mxu0 %v5941
    %v7276 = vpop.f32.mrb[0].mxu0
    %v7277 = vadd.f32 %v5185, %v7276
    %v7278 = vpop.f32.mrb[0].mxu0
    %7279 = vmatprep.mubr.f32.mxu0 0.0
    %7280 = vmatmul.mubr.f32.gmra.mrb[0].mxu0 %v5944
    %v7281 = vpop.f32.mrb[0].mxu0
    %v7282 = vadd.f32 %v5185, %v7281
    %v7283 = vpop.f32.mrb[0].mxu0
    %7284 = vmatprep.mubr.f32.mxu0 0.0
    %7285 = vmatmul.mubr.f32.gmra.mrb[0].mxu0 %v5947
    %v7286 = vpop.f32.mrb[0].mxu0
    %v7287 = vadd.f32 %v5185, %v7286
    %v7288 = vpop.f32.mrb[0].mxu0
    %7289 = vmatprep.mubr.f32.mxu0 0.0
    %7290 = vmatmul.mubr.f32.gmra.mrb[0].mxu0 %v5950
    %v7291 = vpop.f32.mrb[0].mxu0
    %v7292 = vadd.f32 %v5185, %v7291
    %v7293 = vpop.f32.mrb[0].mxu0
    %7294 = vmatprep.mubr.f32.mxu0 0.0
    %7295 = vmatmul.mubr.f32.gmra.mrb[0].mxu0 %v5953
    %v7296 = vpop.f32.mrb[0].mxu0
    %v7297 = vadd.f32 %v5185, %v7296
    %v7298 = vpop.f32.mrb[0].mxu0
    %7299 = vdwg.mxu0
    %vm7300 = vcmask 261120
    %v7301 = vsel %vm7300, %v6022, 0.0
    %7302 = vadd.xlane.f32.xlu0 %v7301
    %v7303 = vpop.xlane.xlu0 %7302
    %v7304 = vsel %vm7300, %v6027, 0.0
    %7305 = vadd.xlane.f32.xlu0 %v7304
    %v7306 = vpop.xlane.xlu0 %7305
    %v7307 = vsel %vm7300, %v6032, 0.0
    %7308 = vadd.xlane.f32.xlu0 %v7307
    %v7309 = vpop.xlane.xlu0 %7308
    %v7310 = vsel %vm7300, %v6037, 0.0
    %7311 = vadd.xlane.f32.xlu0 %v7310
    %v7312 = vpop.xlane.xlu0 %7311
    %v7313 = vsel %vm7300, %v6042, 0.0
    %7314 = vadd.xlane.f32.xlu0 %v7313
    %v7315 = vpop.xlane.xlu0 %7314
    %v7316 = vsel %vm7300, %v6047, 0.0
    %7317 = vadd.xlane.f32.xlu0 %v7316
    %v7318 = vpop.xlane.xlu0 %7317
    %v7319 = vsel %vm7300, %v6052, 0.0
    %7320 = vadd.xlane.f32.xlu0 %v7319
    %v7321 = vpop.xlane.xlu0 %7320
    %v7322 = vsel %vm7300, %v6057, 0.0
    %7323 = vadd.xlane.f32.xlu0 %v7322
    %v7324 = vpop.xlane.xlu0 %7323
    %v7325 = vsel %vm7300, %v6062, 0.0
    %7326 = vadd.xlane.f32.xlu0 %v7325
    %v7327 = vpop.xlane.xlu0 %7326
    %v7328 = vsel %vm7300, %v6067, 0.0
    %7329 = vadd.xlane.f32.xlu0 %v7328
    %v7330 = vpop.xlane.xlu0 %7329
    %v7331 = vsel %vm7300, %v6072, 0.0
    %7332 = vadd.xlane.f32.xlu0 %v7331
    %v7333 = vpop.xlane.xlu0 %7332
    %v7334 = vsel %vm7300, %v6077, 0.0
    %7335 = vadd.xlane.f32.xlu0 %v7334
    %v7336 = vpop.xlane.xlu0 %7335
    %v7337 = vsel %vm7300, %v6082, 0.0
    %7338 = vadd.xlane.f32.xlu0 %v7337
    %v7339 = vpop.xlane.xlu0 %7338
    %v7340 = vsel %vm7300, %v6087, 0.0
    %7341 = vadd.xlane.f32.xlu0 %v7340
    %v7342 = vpop.xlane.xlu0 %7341
    %v7343 = vsel %vm7300, %v6092, 0.0
    %7344 = vadd.xlane.f32.xlu0 %v7343
    %v7345 = vpop.xlane.xlu0 %7344
    %v7346 = vsel %vm7300, %v6097, 0.0
    %7347 = vadd.xlane.f32.xlu0 %v7346
    %v7348 = vpop.xlane.xlu0 %7347
    %v7349 = vsel %vm7300, %v6102, 0.0
    %7350 = vadd.xlane.f32.xlu0 %v7349
    %v7351 = vpop.xlane.xlu0 %7350
    %v7352 = vsel %vm7300, %v6107, 0.0
    %7353 = vadd.xlane.f32.xlu0 %v7352
    %v7354 = vpop.xlane.xlu0 %7353
    %v7355 = vsel %vm7300, %v6112, 0.0
    %7356 = vadd.xlane.f32.xlu0 %v7355
    %v7357 = vpop.xlane.xlu0 %7356
    %v7358 = vsel %vm7300, %v6117, 0.0
    %7359 = vadd.xlane.f32.xlu0 %v7358
    %v7360 = vpop.xlane.xlu0 %7359
    %v7361 = vsel %vm7300, %v6122, 0.0
    %7362 = vadd.xlane.f32.xlu0 %v7361
    %v7363 = vpop.xlane.xlu0 %7362
    %v7364 = vsel %vm7300, %v6127, 0.0
    %7365 = vadd.xlane.f32.xlu0 %v7364
    %v7366 = vpop.xlane.xlu0 %7365
    %v7367 = vsel %vm7300, %v6132, 0.0
    %7368 = vadd.xlane.f32.xlu0 %v7367
    %v7369 = vpop.xlane.xlu0 %7368
    %v7370 = vsel %vm7300, %v6137, 0.0
    %7371 = vadd.xlane.f32.xlu0 %v7370
    %v7372 = vpop.xlane.xlu0 %7371
    %v7373 = vsel %vm7300, %v6142, 0.0
    %7374 = vadd.xlane.f32.xlu0 %v7373
    %v7375 = vpop.xlane.xlu0 %7374
    %v7376 = vsel %vm7300, %v6147, 0.0
    %7377 = vadd.xlane.f32.xlu0 %v7376
    %v7378 = vpop.xlane.xlu0 %7377
    %v7379 = vsel %vm7300, %v6152, 0.0
    %7380 = vadd.xlane.f32.xlu0 %v7379
    %v7381 = vpop.xlane.xlu0 %7380
    %v7382 = vsel %vm7300, %v6157, 0.0
    %7383 = vadd.xlane.f32.xlu0 %v7382
    %v7384 = vpop.xlane.xlu0 %7383
    %v7385 = vsel %vm7300, %v6162, 0.0
    %7386 = vadd.xlane.f32.xlu0 %v7385
    %v7387 = vpop.xlane.xlu0 %7386
    %v7388 = vsel %vm7300, %v6167, 0.0
    %7389 = vadd.xlane.f32.xlu0 %v7388
    %v7390 = vpop.xlane.xlu0 %7389
    %v7391 = vsel %vm7300, %v6172, 0.0
    %7392 = vadd.xlane.f32.xlu0 %v7391
    %v7393 = vpop.xlane.xlu0 %7392
    %v7394 = vsel %vm7300, %v6177, 0.0
    %7395 = vadd.xlane.f32.xlu0 %v7394
    %v7396 = vpop.xlane.xlu0 %7395
    %v7397 = vsel %vm7300, %v6182, 0.0
    %7398 = vadd.xlane.f32.xlu0 %v7397
    %v7399 = vpop.xlane.xlu0 %7398
    %v7400 = vsel %vm7300, %v6187, 0.0
    %7401 = vadd.xlane.f32.xlu0 %v7400
    %v7402 = vpop.xlane.xlu0 %7401
    %v7403 = vsel %vm7300, %v6192, 0.0
    %7404 = vadd.xlane.f32.xlu0 %v7403
    %v7405 = vpop.xlane.xlu0 %7404
    %v7406 = vsel %vm7300, %v6197, 0.0
    %7407 = vadd.xlane.f32.xlu0 %v7406
    %v7408 = vpop.xlane.xlu0 %7407
    %v7409 = vsel %vm7300, %v6202, 0.0
    %7410 = vadd.xlane.f32.xlu0 %v7409
    %v7411 = vpop.xlane.xlu0 %7410
    %v7412 = vsel %vm7300, %v6207, 0.0
    %7413 = vadd.xlane.f32.xlu0 %v7412
    %v7414 = vpop.xlane.xlu0 %7413
    %v7415 = vsel %vm7300, %v6212, 0.0
    %7416 = vadd.xlane.f32.xlu0 %v7415
    %v7417 = vpop.xlane.xlu0 %7416
    %v7418 = vsel %vm7300, %v6217, 0.0
    %7419 = vadd.xlane.f32.xlu0 %v7418
    %v7420 = vpop.xlane.xlu0 %7419
    %v7421 = vsel %vm7300, %v6222, 0.0
    %7422 = vadd.xlane.f32.xlu0 %v7421
    %v7423 = vpop.xlane.xlu0 %7422
    %v7424 = vsel %vm7300, %v6227, 0.0
    %7425 = vadd.xlane.f32.xlu0 %v7424
    %v7426 = vpop.xlane.xlu0 %7425
    %v7427 = vsel %vm7300, %v6232, 0.0
    %7428 = vadd.xlane.f32.xlu0 %v7427
    %v7429 = vpop.xlane.xlu0 %7428
    %v7430 = vsel %vm7300, %v6237, 0.0
    %7431 = vadd.xlane.f32.xlu0 %v7430
    %v7432 = vpop.xlane.xlu0 %7431
    %v7433 = vsel %vm7300, %v6242, 0.0
    %7434 = vadd.xlane.f32.xlu0 %v7433
    %v7435 = vpop.xlane.xlu0 %7434
    %v7436 = vsel %vm7300, %v6247, 0.0
    %7437 = vadd.xlane.f32.xlu0 %v7436
    %v7438 = vpop.xlane.xlu0 %7437
    %v7439 = vsel %vm7300, %v6252, 0.0
    %7440 = vadd.xlane.f32.xlu0 %v7439
    %v7441 = vpop.xlane.xlu0 %7440
    %v7442 = vsel %vm7300, %v6257, 0.0
    %7443 = vadd.xlane.f32.xlu0 %v7442
    %v7444 = vpop.xlane.xlu0 %7443
    %v7445 = vsel %vm7300, %v6262, 0.0
    %7446 = vadd.xlane.f32.xlu0 %v7445
    %v7447 = vpop.xlane.xlu0 %7446
    %v7448 = vsel %vm7300, %v6267, 0.0
    %7449 = vadd.xlane.f32.xlu0 %v7448
    %v7450 = vpop.xlane.xlu0 %7449
    %v7451 = vsel %vm7300, %v6272, 0.0
    %7452 = vadd.xlane.f32.xlu0 %v7451
    %v7453 = vpop.xlane.xlu0 %7452
    %v7454 = vsel %vm7300, %v6277, 0.0
    %7455 = vadd.xlane.f32.xlu0 %v7454
    %v7456 = vpop.xlane.xlu0 %7455
    %v7457 = vsel %vm7300, %v6282, 0.0
    %7458 = vadd.xlane.f32.xlu0 %v7457
    %v7459 = vpop.xlane.xlu0 %7458
    %v7460 = vsel %vm7300, %v6287, 0.0
    %7461 = vadd.xlane.f32.xlu0 %v7460
    %v7462 = vpop.xlane.xlu0 %7461
    %v7463 = vsel %vm7300, %v6292, 0.0
    %7464 = vadd.xlane.f32.xlu0 %v7463
    %v7465 = vpop.xlane.xlu0 %7464
    %v7466 = vsel %vm7300, %v6297, 0.0
    %7467 = vadd.xlane.f32.xlu0 %v7466
    %v7468 = vpop.xlane.xlu0 %7467
    %v7469 = vsel %vm7300, %v6302, 0.0
    %7470 = vadd.xlane.f32.xlu0 %v7469
    %v7471 = vpop.xlane.xlu0 %7470
    %v7472 = vsel %vm7300, %v6307, 0.0
    %7473 = vadd.xlane.f32.xlu0 %v7472
    %v7474 = vpop.xlane.xlu0 %7473
    %v7475 = vsel %vm7300, %v6312, 0.0
    %7476 = vadd.xlane.f32.xlu0 %v7475
    %v7477 = vpop.xlane.xlu0 %7476
    %v7478 = vsel %vm7300, %v6317, 0.0
    %7479 = vadd.xlane.f32.xlu0 %v7478
    %v7480 = vpop.xlane.xlu0 %7479
    %v7481 = vsel %vm7300, %v6322, 0.0
    %7482 = vadd.xlane.f32.xlu0 %v7481
    %v7483 = vpop.xlane.xlu0 %7482
    %v7484 = vsel %vm7300, %v6327, 0.0
    %7485 = vadd.xlane.f32.xlu0 %v7484
    %v7486 = vpop.xlane.xlu0 %7485
    %v7487 = vsel %vm7300, %v6332, 0.0
    %7488 = vadd.xlane.f32.xlu0 %v7487
    %v7489 = vpop.xlane.xlu0 %7488
    %v7490 = vsel %vm7300, %v6337, 0.0
    %7491 = vadd.xlane.f32.xlu0 %v7490
    %v7492 = vpop.xlane.xlu0 %7491
    %v7493 = vsel %vm7300, %v6342, 0.0
    %7494 = vadd.xlane.f32.xlu0 %v7493
    %v7495 = vpop.xlane.xlu0 %7494
    %v7496 = vsel %vm7300, %v6347, 0.0
    %7497 = vadd.xlane.f32.xlu0 %v7496
    %v7498 = vpop.xlane.xlu0 %7497
    %v7499 = vsel %vm7300, %v6352, 0.0
    %7500 = vadd.xlane.f32.xlu0 %v7499
    %v7501 = vpop.xlane.xlu0 %7500
    %v7502 = vsel %vm7300, %v6357, 0.0
    %7503 = vadd.xlane.f32.xlu0 %v7502
    %v7504 = vpop.xlane.xlu0 %7503
    %v7505 = vsel %vm7300, %v6362, 0.0
    %7506 = vadd.xlane.f32.xlu0 %v7505
    %v7507 = vpop.xlane.xlu0 %7506
    %v7508 = vsel %vm7300, %v6367, 0.0
    %7509 = vadd.xlane.f32.xlu0 %v7508
    %v7510 = vpop.xlane.xlu0 %7509
    %v7511 = vsel %vm7300, %v6372, 0.0
    %7512 = vadd.xlane.f32.xlu0 %v7511
    %v7513 = vpop.xlane.xlu0 %7512
    %v7514 = vsel %vm7300, %v6377, 0.0
    %7515 = vadd.xlane.f32.xlu0 %v7514
    %v7516 = vpop.xlane.xlu0 %7515
    %v7517 = vsel %vm7300, %v6382, 0.0
    %7518 = vadd.xlane.f32.xlu0 %v7517
    %v7519 = vpop.xlane.xlu0 %7518
    %v7520 = vsel %vm7300, %v6387, 0.0
    %7521 = vadd.xlane.f32.xlu0 %v7520
    %v7522 = vpop.xlane.xlu0 %7521
    %v7523 = vsel %vm7300, %v6392, 0.0
    %7524 = vadd.xlane.f32.xlu0 %v7523
    %v7525 = vpop.xlane.xlu0 %7524
    %v7526 = vsel %vm7300, %v6397, 0.0
    %7527 = vadd.xlane.f32.xlu0 %v7526
    %v7528 = vpop.xlane.xlu0 %7527
    %v7529 = vsel %vm7300, %v6402, 0.0
    %7530 = vadd.xlane.f32.xlu0 %v7529
    %v7531 = vpop.xlane.xlu0 %7530
    %v7532 = vsel %vm7300, %v6407, 0.0
    %7533 = vadd.xlane.f32.xlu0 %v7532
    %v7534 = vpop.xlane.xlu0 %7533
    %v7535 = vsel %vm7300, %v6412, 0.0
    %7536 = vadd.xlane.f32.xlu0 %v7535
    %v7537 = vpop.xlane.xlu0 %7536
    %v7538 = vsel %vm7300, %v6417, 0.0
    %7539 = vadd.xlane.f32.xlu0 %v7538
    %v7540 = vpop.xlane.xlu0 %7539
    %v7541 = vsel %vm7300, %v6422, 0.0
    %7542 = vadd.xlane.f32.xlu0 %v7541
    %v7543 = vpop.xlane.xlu0 %7542
    %v7544 = vsel %vm7300, %v6427, 0.0
    %7545 = vadd.xlane.f32.xlu0 %v7544
    %v7546 = vpop.xlane.xlu0 %7545
    %v7547 = vsel %vm7300, %v6432, 0.0
    %7548 = vadd.xlane.f32.xlu0 %v7547
    %v7549 = vpop.xlane.xlu0 %7548
    %v7550 = vsel %vm7300, %v6437, 0.0
    %7551 = vadd.xlane.f32.xlu0 %v7550
    %v7552 = vpop.xlane.xlu0 %7551
    %v7553 = vsel %vm7300, %v6442, 0.0
    %7554 = vadd.xlane.f32.xlu0 %v7553
    %v7555 = vpop.xlane.xlu0 %7554
    %v7556 = vsel %vm7300, %v6447, 0.0
    %7557 = vadd.xlane.f32.xlu0 %v7556
    %v7558 = vpop.xlane.xlu0 %7557
    %v7559 = vsel %vm7300, %v6452, 0.0
    %7560 = vadd.xlane.f32.xlu0 %v7559
    %v7561 = vpop.xlane.xlu0 %7560
    %v7562 = vsel %vm7300, %v6457, 0.0
    %7563 = vadd.xlane.f32.xlu0 %v7562
    %v7564 = vpop.xlane.xlu0 %7563
    %v7565 = vsel %vm7300, %v6462, 0.0
    %7566 = vadd.xlane.f32.xlu0 %v7565
    %v7567 = vpop.xlane.xlu0 %7566
    %v7568 = vsel %vm7300, %v6467, 0.0
    %7569 = vadd.xlane.f32.xlu0 %v7568
    %v7570 = vpop.xlane.xlu0 %7569
    %v7571 = vsel %vm7300, %v6472, 0.0
    %7572 = vadd.xlane.f32.xlu0 %v7571
    %v7573 = vpop.xlane.xlu0 %7572
    %v7574 = vsel %vm7300, %v6477, 0.0
    %7575 = vadd.xlane.f32.xlu0 %v7574
    %v7576 = vpop.xlane.xlu0 %7575
    %v7577 = vsel %vm7300, %v6482, 0.0
    %7578 = vadd.xlane.f32.xlu0 %v7577
    %v7579 = vpop.xlane.xlu0 %7578
    %v7580 = vsel %vm7300, %v6487, 0.0
    %7581 = vadd.xlane.f32.xlu0 %v7580
    %v7582 = vpop.xlane.xlu0 %7581
    %v7583 = vsel %vm7300, %v6492, 0.0
    %7584 = vadd.xlane.f32.xlu0 %v7583
    %v7585 = vpop.xlane.xlu0 %7584
    %v7586 = vsel %vm7300, %v6497, 0.0
    %7587 = vadd.xlane.f32.xlu0 %v7586
    %v7588 = vpop.xlane.xlu0 %7587
    %v7589 = vsel %vm7300, %v6502, 0.0
    %7590 = vadd.xlane.f32.xlu0 %v7589
    %v7591 = vpop.xlane.xlu0 %7590
    %v7592 = vsel %vm7300, %v6507, 0.0
    %7593 = vadd.xlane.f32.xlu0 %v7592
    %v7594 = vpop.xlane.xlu0 %7593
    %v7595 = vsel %vm7300, %v6512, 0.0
    %7596 = vadd.xlane.f32.xlu0 %v7595
    %v7597 = vpop.xlane.xlu0 %7596
    %v7598 = vsel %vm7300, %v6517, 0.0
    %7599 = vadd.xlane.f32.xlu0 %v7598
    %v7600 = vpop.xlane.xlu0 %7599
    %v7601 = vsel %vm7300, %v6522, 0.0
    %7602 = vadd.xlane.f32.xlu0 %v7601
    %v7603 = vpop.xlane.xlu0 %7602
    %v7604 = vsel %vm7300, %v6527, 0.0
    %7605 = vadd.xlane.f32.xlu0 %v7604
    %v7606 = vpop.xlane.xlu0 %7605
    %v7607 = vsel %vm7300, %v6532, 0.0
    %7608 = vadd.xlane.f32.xlu0 %v7607
    %v7609 = vpop.xlane.xlu0 %7608
    %v7610 = vsel %vm7300, %v6537, 0.0
    %7611 = vadd.xlane.f32.xlu0 %v7610
    %v7612 = vpop.xlane.xlu0 %7611
    %v7613 = vsel %vm7300, %v6542, 0.0
    %7614 = vadd.xlane.f32.xlu0 %v7613
    %v7615 = vpop.xlane.xlu0 %7614
    %v7616 = vsel %vm7300, %v6547, 0.0
    %7617 = vadd.xlane.f32.xlu0 %v7616
    %v7618 = vpop.xlane.xlu0 %7617
    %v7619 = vsel %vm7300, %v6552, 0.0
    %7620 = vadd.xlane.f32.xlu0 %v7619
    %v7621 = vpop.xlane.xlu0 %7620
    %v7622 = vsel %vm7300, %v6557, 0.0
    %7623 = vadd.xlane.f32.xlu0 %v7622
    %v7624 = vpop.xlane.xlu0 %7623
    %v7625 = vsel %vm7300, %v6562, 0.0
    %7626 = vadd.xlane.f32.xlu0 %v7625
    %v7627 = vpop.xlane.xlu0 %7626
    %v7628 = vsel %vm7300, %v6567, 0.0
    %7629 = vadd.xlane.f32.xlu0 %v7628
    %v7630 = vpop.xlane.xlu0 %7629
    %v7631 = vsel %vm7300, %v6572, 0.0
    %7632 = vadd.xlane.f32.xlu0 %v7631
    %v7633 = vpop.xlane.xlu0 %7632
    %v7634 = vsel %vm7300, %v6577, 0.0
    %7635 = vadd.xlane.f32.xlu0 %v7634
    %v7636 = vpop.xlane.xlu0 %7635
    %v7637 = vsel %vm7300, %v6582, 0.0
    %7638 = vadd.xlane.f32.xlu0 %v7637
    %v7639 = vpop.xlane.xlu0 %7638
    %v7640 = vsel %vm7300, %v6587, 0.0
    %7641 = vadd.xlane.f32.xlu0 %v7640
    %v7642 = vpop.xlane.xlu0 %7641
    %v7643 = vsel %vm7300, %v6592, 0.0
    %7644 = vadd.xlane.f32.xlu0 %v7643
    %v7645 = vpop.xlane.xlu0 %7644
    %v7646 = vsel %vm7300, %v6597, 0.0
    %7647 = vadd.xlane.f32.xlu0 %v7646
    %v7648 = vpop.xlane.xlu0 %7647
    %v7649 = vsel %vm7300, %v6602, 0.0
    %7650 = vadd.xlane.f32.xlu0 %v7649
    %v7651 = vpop.xlane.xlu0 %7650
    %v7652 = vsel %vm7300, %v6607, 0.0
    %7653 = vadd.xlane.f32.xlu0 %v7652
    %v7654 = vpop.xlane.xlu0 %7653
    %v7655 = vsel %vm7300, %v6612, 0.0
    %7656 = vadd.xlane.f32.xlu0 %v7655
    %v7657 = vpop.xlane.xlu0 %7656
    %v7658 = vsel %vm7300, %v6617, 0.0
    %7659 = vadd.xlane.f32.xlu0 %v7658
    %v7660 = vpop.xlane.xlu0 %7659
    %v7661 = vsel %vm7300, %v6622, 0.0
    %7662 = vadd.xlane.f32.xlu0 %v7661
    %v7663 = vpop.xlane.xlu0 %7662
    %v7664 = vsel %vm7300, %v6627, 0.0
    %7665 = vadd.xlane.f32.xlu0 %v7664
    %v7666 = vpop.xlane.xlu0 %7665
    %v7667 = vsel %vm7300, %v6632, 0.0
    %7668 = vadd.xlane.f32.xlu0 %v7667
    %v7669 = vpop.xlane.xlu0 %7668
    %v7670 = vsel %vm7300, %v6637, 0.0
    %7671 = vadd.xlane.f32.xlu0 %v7670
    %v7672 = vpop.xlane.xlu0 %7671
    %v7673 = vsel %vm7300, %v6642, 0.0
    %7674 = vadd.xlane.f32.xlu0 %v7673
    %v7675 = vpop.xlane.xlu0 %7674
    %v7676 = vsel %vm7300, %v6647, 0.0
    %7677 = vadd.xlane.f32.xlu0 %v7676
    %v7678 = vpop.xlane.xlu0 %7677
    %v7679 = vsel %vm7300, %v6652, 0.0
    %7680 = vadd.xlane.f32.xlu0 %v7679
    %v7681 = vpop.xlane.xlu0 %7680
    %v7682 = vsel %vm7300, %v6657, 0.0
    %7683 = vadd.xlane.f32.xlu0 %v7682
    %v7684 = vpop.xlane.xlu0 %7683
    %v7685 = vsel %vm7300, %v6662, 0.0
    %7686 = vadd.xlane.f32.xlu0 %v7685
    %v7687 = vpop.xlane.xlu0 %7686
    %v7688 = vsel %vm7300, %v6667, 0.0
    %7689 = vadd.xlane.f32.xlu0 %v7688
    %v7690 = vpop.xlane.xlu0 %7689
    %v7691 = vsel %vm7300, %v6672, 0.0
    %7692 = vadd.xlane.f32.xlu0 %v7691
    %v7693 = vpop.xlane.xlu0 %7692
    %v7694 = vsel %vm7300, %v6677, 0.0
    %7695 = vadd.xlane.f32.xlu0 %v7694
    %v7696 = vpop.xlane.xlu0 %7695
    %v7697 = vsel %vm7300, %v6682, 0.0
    %7698 = vadd.xlane.f32.xlu0 %v7697
    %v7699 = vpop.xlane.xlu0 %7698
    %v7700 = vsel %vm7300, %v6687, 0.0
    %7701 = vadd.xlane.f32.xlu0 %v7700
    %v7702 = vpop.xlane.xlu0 %7701
    %v7703 = vsel %vm7300, %v6692, 0.0
    %7704 = vadd.xlane.f32.xlu0 %v7703
    %v7705 = vpop.xlane.xlu0 %7704
    %v7706 = vsel %vm7300, %v6697, 0.0
    %7707 = vadd.xlane.f32.xlu0 %v7706
    %v7708 = vpop.xlane.xlu0 %7707
    %v7709 = vsel %vm7300, %v6702, 0.0
    %7710 = vadd.xlane.f32.xlu0 %v7709
    %v7711 = vpop.xlane.xlu0 %7710
    %v7712 = vsel %vm7300, %v6707, 0.0
    %7713 = vadd.xlane.f32.xlu0 %v7712
    %v7714 = vpop.xlane.xlu0 %7713
    %v7715 = vsel %vm7300, %v6712, 0.0
    %7716 = vadd.xlane.f32.xlu0 %v7715
    %v7717 = vpop.xlane.xlu0 %7716
    %v7718 = vsel %vm7300, %v6717, 0.0
    %7719 = vadd.xlane.f32.xlu0 %v7718
    %v7720 = vpop.xlane.xlu0 %7719
    %v7721 = vsel %vm7300, %v6722, 0.0
    %7722 = vadd.xlane.f32.xlu0 %v7721
    %v7723 = vpop.xlane.xlu0 %7722
    %v7724 = vsel %vm7300, %v6727, 0.0
    %7725 = vadd.xlane.f32.xlu0 %v7724
    %v7726 = vpop.xlane.xlu0 %7725
    %v7727 = vsel %vm7300, %v6732, 0.0
    %7728 = vadd.xlane.f32.xlu0 %v7727
    %v7729 = vpop.xlane.xlu0 %7728
    %v7730 = vsel %vm7300, %v6737, 0.0
    %7731 = vadd.xlane.f32.xlu0 %v7730
    %v7732 = vpop.xlane.xlu0 %7731
    %v7733 = vsel %vm7300, %v6742, 0.0
    %7734 = vadd.xlane.f32.xlu0 %v7733
    %v7735 = vpop.xlane.xlu0 %7734
    %v7736 = vsel %vm7300, %v6747, 0.0
    %7737 = vadd.xlane.f32.xlu0 %v7736
    %v7738 = vpop.xlane.xlu0 %7737
    %v7739 = vsel %vm7300, %v6752, 0.0
    %7740 = vadd.xlane.f32.xlu0 %v7739
    %v7741 = vpop.xlane.xlu0 %7740
    %v7742 = vsel %vm7300, %v6757, 0.0
    %7743 = vadd.xlane.f32.xlu0 %v7742
    %v7744 = vpop.xlane.xlu0 %7743
    %v7745 = vsel %vm7300, %v6762, 0.0
    %7746 = vadd.xlane.f32.xlu0 %v7745
    %v7747 = vpop.xlane.xlu0 %7746
    %v7748 = vsel %vm7300, %v6767, 0.0
    %7749 = vadd.xlane.f32.xlu0 %v7748
    %v7750 = vpop.xlane.xlu0 %7749
    %v7751 = vsel %vm7300, %v6772, 0.0
    %7752 = vadd.xlane.f32.xlu0 %v7751
    %v7753 = vpop.xlane.xlu0 %7752
    %v7754 = vsel %vm7300, %v6777, 0.0
    %7755 = vadd.xlane.f32.xlu0 %v7754
    %v7756 = vpop.xlane.xlu0 %7755
    %v7757 = vsel %vm7300, %v6782, 0.0
    %7758 = vadd.xlane.f32.xlu0 %v7757
    %v7759 = vpop.xlane.xlu0 %7758
    %v7760 = vsel %vm7300, %v6787, 0.0
    %7761 = vadd.xlane.f32.xlu0 %v7760
    %v7762 = vpop.xlane.xlu0 %7761
    %v7763 = vsel %vm7300, %v6792, 0.0
    %7764 = vadd.xlane.f32.xlu0 %v7763
    %v7765 = vpop.xlane.xlu0 %7764
    %v7766 = vsel %vm7300, %v6797, 0.0
    %7767 = vadd.xlane.f32.xlu0 %v7766
    %v7768 = vpop.xlane.xlu0 %7767
    %v7769 = vsel %vm7300, %v6802, 0.0
    %7770 = vadd.xlane.f32.xlu0 %v7769
    %v7771 = vpop.xlane.xlu0 %7770
    %v7772 = vsel %vm7300, %v6807, 0.0
    %7773 = vadd.xlane.f32.xlu0 %v7772
    %v7774 = vpop.xlane.xlu0 %7773
    %v7775 = vsel %vm7300, %v6812, 0.0
    %7776 = vadd.xlane.f32.xlu0 %v7775
    %v7777 = vpop.xlane.xlu0 %7776
    %v7778 = vsel %vm7300, %v6817, 0.0
    %7779 = vadd.xlane.f32.xlu0 %v7778
    %v7780 = vpop.xlane.xlu0 %7779
    %v7781 = vsel %vm7300, %v6822, 0.0
    %7782 = vadd.xlane.f32.xlu0 %v7781
    %v7783 = vpop.xlane.xlu0 %7782
    %v7784 = vsel %vm7300, %v6827, 0.0
    %7785 = vadd.xlane.f32.xlu0 %v7784
    %v7786 = vpop.xlane.xlu0 %7785
    %v7787 = vsel %vm7300, %v6832, 0.0
    %7788 = vadd.xlane.f32.xlu0 %v7787
    %v7789 = vpop.xlane.xlu0 %7788
    %v7790 = vsel %vm7300, %v6837, 0.0
    %7791 = vadd.xlane.f32.xlu0 %v7790
    %v7792 = vpop.xlane.xlu0 %7791
    %v7793 = vsel %vm7300, %v6842, 0.0
    %7794 = vadd.xlane.f32.xlu0 %v7793
    %v7795 = vpop.xlane.xlu0 %7794
    %v7796 = vsel %vm7300, %v6847, 0.0
    %7797 = vadd.xlane.f32.xlu0 %v7796
    %v7798 = vpop.xlane.xlu0 %7797
    %v7799 = vsel %vm7300, %v6852, 0.0
    %7800 = vadd.xlane.f32.xlu0 %v7799
    %v7801 = vpop.xlane.xlu0 %7800
    %v7802 = vsel %vm7300, %v6857, 0.0
    %7803 = vadd.xlane.f32.xlu0 %v7802
    %v7804 = vpop.xlane.xlu0 %7803
    %v7805 = vsel %vm7300, %v6862, 0.0
    %7806 = vadd.xlane.f32.xlu0 %v7805
    %v7807 = vpop.xlane.xlu0 %7806
    %v7808 = vsel %vm7300, %v6867, 0.0
    %7809 = vadd.xlane.f32.xlu0 %v7808
    %v7810 = vpop.xlane.xlu0 %7809
    %v7811 = vsel %vm7300, %v6872, 0.0
    %7812 = vadd.xlane.f32.xlu0 %v7811
    %v7813 = vpop.xlane.xlu0 %7812
    %v7814 = vsel %vm7300, %v6877, 0.0
    %7815 = vadd.xlane.f32.xlu0 %v7814
    %v7816 = vpop.xlane.xlu0 %7815
    %v7817 = vsel %vm7300, %v6882, 0.0
    %7818 = vadd.xlane.f32.xlu0 %v7817
    %v7819 = vpop.xlane.xlu0 %7818
    %v7820 = vsel %vm7300, %v6887, 0.0
    %7821 = vadd.xlane.f32.xlu0 %v7820
    %v7822 = vpop.xlane.xlu0 %7821
    %v7823 = vsel %vm7300, %v6892, 0.0
    %7824 = vadd.xlane.f32.xlu0 %v7823
    %v7825 = vpop.xlane.xlu0 %7824
    %v7826 = vsel %vm7300, %v6897, 0.0
    %7827 = vadd.xlane.f32.xlu0 %v7826
    %v7828 = vpop.xlane.xlu0 %7827
    %v7829 = vsel %vm7300, %v6902, 0.0
    %7830 = vadd.xlane.f32.xlu0 %v7829
    %v7831 = vpop.xlane.xlu0 %7830
    %v7832 = vsel %vm7300, %v6907, 0.0
    %7833 = vadd.xlane.f32.xlu0 %v7832
    %v7834 = vpop.xlane.xlu0 %7833
    %v7835 = vsel %vm7300, %v6912, 0.0
    %7836 = vadd.xlane.f32.xlu0 %v7835
    %v7837 = vpop.xlane.xlu0 %7836
    %v7838 = vsel %vm7300, %v6917, 0.0
    %7839 = vadd.xlane.f32.xlu0 %v7838
    %v7840 = vpop.xlane.xlu0 %7839
    %v7841 = vsel %vm7300, %v6922, 0.0
    %7842 = vadd.xlane.f32.xlu0 %v7841
    %v7843 = vpop.xlane.xlu0 %7842
    %v7844 = vsel %vm7300, %v6927, 0.0
    %7845 = vadd.xlane.f32.xlu0 %v7844
    %v7846 = vpop.xlane.xlu0 %7845
    %v7847 = vsel %vm7300, %v6932, 0.0
    %7848 = vadd.xlane.f32.xlu0 %v7847
    %v7849 = vpop.xlane.xlu0 %7848
    %v7850 = vsel %vm7300, %v6937, 0.0
    %7851 = vadd.xlane.f32.xlu0 %v7850
    %v7852 = vpop.xlane.xlu0 %7851
    %v7853 = vsel %vm7300, %v6942, 0.0
    %7854 = vadd.xlane.f32.xlu0 %v7853
    %v7855 = vpop.xlane.xlu0 %7854
    %v7856 = vsel %vm7300, %v6947, 0.0
    %7857 = vadd.xlane.f32.xlu0 %v7856
    %v7858 = vpop.xlane.xlu0 %7857
    %v7859 = vsel %vm7300, %v6952, 0.0
    %7860 = vadd.xlane.f32.xlu0 %v7859
    %v7861 = vpop.xlane.xlu0 %7860
    %v7862 = vsel %vm7300, %v6957, 0.0
    %7863 = vadd.xlane.f32.xlu0 %v7862
    %v7864 = vpop.xlane.xlu0 %7863
    %v7865 = vsel %vm7300, %v6962, 0.0
    %7866 = vadd.xlane.f32.xlu0 %v7865
    %v7867 = vpop.xlane.xlu0 %7866
    %v7868 = vsel %vm7300, %v6967, 0.0
    %7869 = vadd.xlane.f32.xlu0 %v7868
    %v7870 = vpop.xlane.xlu0 %7869
    %v7871 = vsel %vm7300, %v6972, 0.0
    %7872 = vadd.xlane.f32.xlu0 %v7871
    %v7873 = vpop.xlane.xlu0 %7872
    %v7874 = vsel %vm7300, %v6977, 0.0
    %7875 = vadd.xlane.f32.xlu0 %v7874
    %v7876 = vpop.xlane.xlu0 %7875
    %v7877 = vsel %vm7300, %v6982, 0.0
    %7878 = vadd.xlane.f32.xlu0 %v7877
    %v7879 = vpop.xlane.xlu0 %7878
    %v7880 = vsel %vm7300, %v6987, 0.0
    %7881 = vadd.xlane.f32.xlu0 %v7880
    %v7882 = vpop.xlane.xlu0 %7881
    %v7883 = vsel %vm7300, %v6992, 0.0
    %7884 = vadd.xlane.f32.xlu0 %v7883
    %v7885 = vpop.xlane.xlu0 %7884
    %v7886 = vsel %vm7300, %v6997, 0.0
    %7887 = vadd.xlane.f32.xlu0 %v7886
    %v7888 = vpop.xlane.xlu0 %7887
    %v7889 = vsel %vm7300, %v7002, 0.0
    %7890 = vadd.xlane.f32.xlu0 %v7889
    %v7891 = vpop.xlane.xlu0 %7890
    %v7892 = vsel %vm7300, %v7007, 0.0
    %7893 = vadd.xlane.f32.xlu0 %v7892
    %v7894 = vpop.xlane.xlu0 %7893
    %v7895 = vsel %vm7300, %v7012, 0.0
    %7896 = vadd.xlane.f32.xlu0 %v7895
    %v7897 = vpop.xlane.xlu0 %7896
    %v7898 = vsel %vm7300, %v7017, 0.0
    %7899 = vadd.xlane.f32.xlu0 %v7898
    %v7900 = vpop.xlane.xlu0 %7899
    %v7901 = vsel %vm7300, %v7022, 0.0
    %7902 = vadd.xlane.f32.xlu0 %v7901
    %v7903 = vpop.xlane.xlu0 %7902
    %v7904 = vsel %vm7300, %v7027, 0.0
    %7905 = vadd.xlane.f32.xlu0 %v7904
    %v7906 = vpop.xlane.xlu0 %7905
    %v7907 = vsel %vm7300, %v7032, 0.0
    %7908 = vadd.xlane.f32.xlu0 %v7907
    %v7909 = vpop.xlane.xlu0 %7908
    %v7910 = vsel %vm7300, %v7037, 0.0
    %7911 = vadd.xlane.f32.xlu0 %v7910
    %v7912 = vpop.xlane.xlu0 %7911
    %v7913 = vsel %vm7300, %v7042, 0.0
    %7914 = vadd.xlane.f32.xlu0 %v7913
    %v7915 = vpop.xlane.xlu0 %7914
    %v7916 = vsel %vm7300, %v7047, 0.0
    %7917 = vadd.xlane.f32.xlu0 %v7916
    %v7918 = vpop.xlane.xlu0 %7917
    %v7919 = vsel %vm7300, %v7052, 0.0
    %7920 = vadd.xlane.f32.xlu0 %v7919
    %v7921 = vpop.xlane.xlu0 %7920
    %v7922 = vsel %vm7300, %v7057, 0.0
    %7923 = vadd.xlane.f32.xlu0 %v7922
    %v7924 = vpop.xlane.xlu0 %7923
    %v7925 = vsel %vm7300, %v7062, 0.0
    %7926 = vadd.xlane.f32.xlu0 %v7925
    %v7927 = vpop.xlane.xlu0 %7926
    %v7928 = vsel %vm7300, %v7067, 0.0
    %7929 = vadd.xlane.f32.xlu0 %v7928
    %v7930 = vpop.xlane.xlu0 %7929
    %v7931 = vsel %vm7300, %v7072, 0.0
    %7932 = vadd.xlane.f32.xlu0 %v7931
    %v7933 = vpop.xlane.xlu0 %7932
    %v7934 = vsel %vm7300, %v7077, 0.0
    %7935 = vadd.xlane.f32.xlu0 %v7934
    %v7936 = vpop.xlane.xlu0 %7935
    %v7937 = vsel %vm7300, %v7082, 0.0
    %7938 = vadd.xlane.f32.xlu0 %v7937
    %v7939 = vpop.xlane.xlu0 %7938
    %v7940 = vsel %vm7300, %v7087, 0.0
    %7941 = vadd.xlane.f32.xlu0 %v7940
    %v7942 = vpop.xlane.xlu0 %7941
    %v7943 = vsel %vm7300, %v7092, 0.0
    %7944 = vadd.xlane.f32.xlu0 %v7943
    %v7945 = vpop.xlane.xlu0 %7944
    %v7946 = vsel %vm7300, %v7097, 0.0
    %7947 = vadd.xlane.f32.xlu0 %v7946
    %v7948 = vpop.xlane.xlu0 %7947
    %v7949 = vsel %vm7300, %v7102, 0.0
    %7950 = vadd.xlane.f32.xlu0 %v7949
    %v7951 = vpop.xlane.xlu0 %7950
    %v7952 = vsel %vm7300, %v7107, 0.0
    %7953 = vadd.xlane.f32.xlu0 %v7952
    %v7954 = vpop.xlane.xlu0 %7953
    %v7955 = vsel %vm7300, %v7112, 0.0
    %7956 = vadd.xlane.f32.xlu0 %v7955
    %v7957 = vpop.xlane.xlu0 %7956
    %v7958 = vsel %vm7300, %v7117, 0.0
    %7959 = vadd.xlane.f32.xlu0 %v7958
    %v7960 = vpop.xlane.xlu0 %7959
    %v7961 = vsel %vm7300, %v7122, 0.0
    %7962 = vadd.xlane.f32.xlu0 %v7961
    %v7963 = vpop.xlane.xlu0 %7962
    %v7964 = vsel %vm7300, %v7127, 0.0
    %7965 = vadd.xlane.f32.xlu0 %v7964
    %v7966 = vpop.xlane.xlu0 %7965
    %v7967 = vsel %vm7300, %v7132, 0.0
    %7968 = vadd.xlane.f32.xlu0 %v7967
    %v7969 = vpop.xlane.xlu0 %7968
    %v7970 = vsel %vm7300, %v7137, 0.0
    %7971 = vadd.xlane.f32.xlu0 %v7970
    %v7972 = vpop.xlane.xlu0 %7971
    %v7973 = vsel %vm7300, %v7142, 0.0
    %7974 = vadd.xlane.f32.xlu0 %v7973
    %v7975 = vpop.xlane.xlu0 %7974
    %v7976 = vsel %vm7300, %v7147, 0.0
    %7977 = vadd.xlane.f32.xlu0 %v7976
    %v7978 = vpop.xlane.xlu0 %7977
    %v7979 = vsel %vm7300, %v7152, 0.0
    %7980 = vadd.xlane.f32.xlu0 %v7979
    %v7981 = vpop.xlane.xlu0 %7980
    %v7982 = vsel %vm7300, %v7157, 0.0
    %7983 = vadd.xlane.f32.xlu0 %v7982
    %v7984 = vpop.xlane.xlu0 %7983
    %v7985 = vsel %vm7300, %v7162, 0.0
    %7986 = vadd.xlane.f32.xlu0 %v7985
    %v7987 = vpop.xlane.xlu0 %7986
    %v7988 = vsel %vm7300, %v7167, 0.0
    %7989 = vadd.xlane.f32.xlu0 %v7988
    %v7990 = vpop.xlane.xlu0 %7989
    %v7991 = vsel %vm7300, %v7172, 0.0
    %7992 = vadd.xlane.f32.xlu0 %v7991
    %v7993 = vpop.xlane.xlu0 %7992
    %v7994 = vsel %vm7300, %v7177, 0.0
    %7995 = vadd.xlane.f32.xlu0 %v7994
    %v7996 = vpop.xlane.xlu0 %7995
    %v7997 = vsel %vm7300, %v7182, 0.0
    %7998 = vadd.xlane.f32.xlu0 %v7997
    %v7999 = vpop.xlane.xlu0 %7998
    %v8000 = vsel %vm7300, %v7187, 0.0
    %8001 = vadd.xlane.f32.xlu0 %v8000
    %v8002 = vpop.xlane.xlu0 %8001
    %v8003 = vsel %vm7300, %v7192, 0.0
    %8004 = vadd.xlane.f32.xlu0 %v8003
    %v8005 = vpop.xlane.xlu0 %8004
    %v8006 = vsel %vm7300, %v7197, 0.0
    %8007 = vadd.xlane.f32.xlu0 %v8006
    %v8008 = vpop.xlane.xlu0 %8007
    %v8009 = vsel %vm7300, %v7202, 0.0
    %8010 = vadd.xlane.f32.xlu0 %v8009
    %v8011 = vpop.xlane.xlu0 %8010
    %v8012 = vsel %vm7300, %v7207, 0.0
    %8013 = vadd.xlane.f32.xlu0 %v8012
    %v8014 = vpop.xlane.xlu0 %8013
    %v8015 = vsel %vm7300, %v7212, 0.0
    %8016 = vadd.xlane.f32.xlu0 %v8015
    %v8017 = vpop.xlane.xlu0 %8016
    %v8018 = vsel %vm7300, %v7217, 0.0
    %8019 = vadd.xlane.f32.xlu0 %v8018
    %v8020 = vpop.xlane.xlu0 %8019
    %v8021 = vsel %vm7300, %v7222, 0.0
    %8022 = vadd.xlane.f32.xlu0 %v8021
    %v8023 = vpop.xlane.xlu0 %8022
    %v8024 = vsel %vm7300, %v7227, 0.0
    %8025 = vadd.xlane.f32.xlu0 %v8024
    %v8026 = vpop.xlane.xlu0 %8025
    %v8027 = vsel %vm7300, %v7232, 0.0
    %8028 = vadd.xlane.f32.xlu0 %v8027
    %v8029 = vpop.xlane.xlu0 %8028
    %v8030 = vsel %vm7300, %v7237, 0.0
    %8031 = vadd.xlane.f32.xlu0 %v8030
    %v8032 = vpop.xlane.xlu0 %8031
    %v8033 = vsel %vm7300, %v7242, 0.0
    %8034 = vadd.xlane.f32.xlu0 %v8033
    %v8035 = vpop.xlane.xlu0 %8034
    %v8036 = vsel %vm7300, %v7247, 0.0
    %8037 = vadd.xlane.f32.xlu0 %v8036
    %v8038 = vpop.xlane.xlu0 %8037
    %v8039 = vsel %vm7300, %v7252, 0.0
    %8040 = vadd.xlane.f32.xlu0 %v8039
    %v8041 = vpop.xlane.xlu0 %8040
    %v8042 = vsel %vm7300, %v7257, 0.0
    %8043 = vadd.xlane.f32.xlu0 %v8042
    %v8044 = vpop.xlane.xlu0 %8043
    %v8045 = vsel %vm7300, %v7262, 0.0
    %8046 = vadd.xlane.f32.xlu0 %v8045
    %v8047 = vpop.xlane.xlu0 %8046
    %v8048 = vsel %vm7300, %v7267, 0.0
    %8049 = vadd.xlane.f32.xlu0 %v8048
    %v8050 = vpop.xlane.xlu0 %8049
    %v8051 = vsel %vm7300, %v7272, 0.0
    %8052 = vadd.xlane.f32.xlu0 %v8051
    %v8053 = vpop.xlane.xlu0 %8052
    %v8054 = vsel %vm7300, %v7277, 0.0
    %8055 = vadd.xlane.f32.xlu0 %v8054
    %v8056 = vpop.xlane.xlu0 %8055
    %v8057 = vsel %vm7300, %v7282, 0.0
    %8058 = vadd.xlane.f32.xlu0 %v8057
    %v8059 = vpop.xlane.xlu0 %8058
    %v8060 = vsel %vm7300, %v7287, 0.0
    %8061 = vadd.xlane.f32.xlu0 %v8060
    %v8062 = vpop.xlane.xlu0 %8061
    %v8063 = vsel %vm7300, %v7292, 0.0
    %8064 = vadd.xlane.f32.xlu0 %v8063
    %v8065 = vpop.xlane.xlu0 %8064
    %v8066 = vsel %vm7300, %v7297, 0.0
    %8067 = vadd.xlane.f32.xlu0 %v8066
    %v8068 = vpop.xlane.xlu0 %8067
    %v8069 = vrcp.pop 32.0
    %v8070 = vmul.f32 %v7303, %v8069
    %v8071 = vmul.f32 %v7306, %v8069
    %v8072 = vmul.f32 %v7309, %v8069
    %v8073 = vmul.f32 %v7312, %v8069
    %v8074 = vmul.f32 %v7315, %v8069
    %v8075 = vmul.f32 %v7318, %v8069
    %v8076 = vmul.f32 %v7321, %v8069
    %v8077 = vmul.f32 %v7324, %v8069
    %v8078 = vmul.f32 %v7327, %v8069
    %v8079 = vmul.f32 %v7330, %v8069
    %v8080 = vmul.f32 %v7333, %v8069
    %v8081 = vmul.f32 %v7336, %v8069
    %v8082 = vmul.f32 %v7339, %v8069
    %v8083 = vmul.f32 %v7342, %v8069
    %v8084 = vmul.f32 %v7345, %v8069
    %v8085 = vmul.f32 %v7348, %v8069
    %v8086 = vmul.f32 %v7351, %v8069
    %v8087 = vmul.f32 %v7354, %v8069
    %v8088 = vmul.f32 %v7357, %v8069
    %v8089 = vmul.f32 %v7360, %v8069
    %v8090 = vmul.f32 %v7363, %v8069
    %v8091 = vmul.f32 %v7366, %v8069
    %v8092 = vmul.f32 %v7369, %v8069
    %v8093 = vmul.f32 %v7372, %v8069
    %v8094 = vmul.f32 %v7375, %v8069
    %v8095 = vmul.f32 %v7378, %v8069
    %v8096 = vmul.f32 %v7381, %v8069
    %v8097 = vmul.f32 %v7384, %v8069
    %v8098 = vmul.f32 %v7387, %v8069
    %v8099 = vmul.f32 %v7390, %v8069
    %v8100 = vmul.f32 %v7393, %v8069
    %v8101 = vmul.f32 %v7396, %v8069
    %v8102 = vmul.f32 %v7399, %v8069
    %v8103 = vmul.f32 %v7402, %v8069
    %v8104 = vmul.f32 %v7405, %v8069
    %v8105 = vmul.f32 %v7408, %v8069
    %v8106 = vmul.f32 %v7411, %v8069
    %v8107 = vmul.f32 %v7414, %v8069
    %v8108 = vmul.f32 %v7417, %v8069
    %v8109 = vmul.f32 %v7420, %v8069
    %v8110 = vmul.f32 %v7423, %v8069
    %v8111 = vmul.f32 %v7426, %v8069
    %v8112 = vmul.f32 %v7429, %v8069
    %v8113 = vmul.f32 %v7432, %v8069
    %v8114 = vmul.f32 %v7435, %v8069
    %v8115 = vmul.f32 %v7438, %v8069
    %v8116 = vmul.f32 %v7441, %v8069
    %v8117 = vmul.f32 %v7444, %v8069
    %v8118 = vmul.f32 %v7447, %v8069
    %v8119 = vmul.f32 %v7450, %v8069
    %v8120 = vmul.f32 %v7453, %v8069
    %v8121 = vmul.f32 %v7456, %v8069
    %v8122 = vmul.f32 %v7459, %v8069
    %v8123 = vmul.f32 %v7462, %v8069
    %v8124 = vmul.f32 %v7465, %v8069
    %v8125 = vmul.f32 %v7468, %v8069
    %v8126 = vmul.f32 %v7471, %v8069
    %v8127 = vmul.f32 %v7474, %v8069
    %v8128 = vmul.f32 %v7477, %v8069
    %v8129 = vmul.f32 %v7480, %v8069
    %v8130 = vmul.f32 %v7483, %v8069
    %v8131 = vmul.f32 %v7486, %v8069
    %v8132 = vmul.f32 %v7489, %v8069
    %v8133 = vmul.f32 %v7492, %v8069
    %v8134 = vmul.f32 %v7495, %v8069
    %v8135 = vmul.f32 %v7498, %v8069
    %v8136 = vmul.f32 %v7501, %v8069
    %v8137 = vmul.f32 %v7504, %v8069
    %v8138 = vmul.f32 %v7507, %v8069
    %v8139 = vmul.f32 %v7510, %v8069
    %v8140 = vmul.f32 %v7513, %v8069
    %v8141 = vmul.f32 %v7516, %v8069
    %v8142 = vmul.f32 %v7519, %v8069
    %v8143 = vmul.f32 %v7522, %v8069
    %v8144 = vmul.f32 %v7525, %v8069
    %v8145 = vmul.f32 %v7528, %v8069
    %v8146 = vmul.f32 %v7531, %v8069
    %v8147 = vmul.f32 %v7534, %v8069
    %v8148 = vmul.f32 %v7537, %v8069
    %v8149 = vmul.f32 %v7540, %v8069
    %v8150 = vmul.f32 %v7543, %v8069
    %v8151 = vmul.f32 %v7546, %v8069
    %v8152 = vmul.f32 %v7549, %v8069
    %v8153 = vmul.f32 %v7552, %v8069
    %v8154 = vmul.f32 %v7555, %v8069
    %v8155 = vmul.f32 %v7558, %v8069
    %v8156 = vmul.f32 %v7561, %v8069
    %v8157 = vmul.f32 %v7564, %v8069
    %v8158 = vmul.f32 %v7567, %v8069
    %v8159 = vmul.f32 %v7570, %v8069
    %v8160 = vmul.f32 %v7573, %v8069
    %v8161 = vmul.f32 %v7576, %v8069
    %v8162 = vmul.f32 %v7579, %v8069
    %v8163 = vmul.f32 %v7582, %v8069
    %v8164 = vmul.f32 %v7585, %v8069
    %v8165 = vmul.f32 %v7588, %v8069
    %v8166 = vmul.f32 %v7591, %v8069
    %v8167 = vmul.f32 %v7594, %v8069
    %v8168 = vmul.f32 %v7597, %v8069
    %v8169 = vmul.f32 %v7600, %v8069
    %v8170 = vmul.f32 %v7603, %v8069
    %v8171 = vmul.f32 %v7606, %v8069
    %v8172 = vmul.f32 %v7609, %v8069
    %v8173 = vmul.f32 %v7612, %v8069
    %v8174 = vmul.f32 %v7615, %v8069
    %v8175 = vmul.f32 %v7618, %v8069
    %v8176 = vmul.f32 %v7621, %v8069
    %v8177 = vmul.f32 %v7624, %v8069
    %v8178 = vmul.f32 %v7627, %v8069
    %v8179 = vmul.f32 %v7630, %v8069
    %v8180 = vmul.f32 %v7633, %v8069
    %v8181 = vmul.f32 %v7636, %v8069
    %v8182 = vmul.f32 %v7639, %v8069
    %v8183 = vmul.f32 %v7642, %v8069
    %v8184 = vmul.f32 %v7645, %v8069
    %v8185 = vmul.f32 %v7648, %v8069
    %v8186 = vmul.f32 %v7651, %v8069
    %v8187 = vmul.f32 %v7654, %v8069
    %v8188 = vmul.f32 %v7657, %v8069
    %v8189 = vmul.f32 %v7660, %v8069
    %v8190 = vmul.f32 %v7663, %v8069
    %v8191 = vmul.f32 %v7666, %v8069
    %v8192 = vmul.f32 %v7669, %v8069
    %v8193 = vmul.f32 %v7672, %v8069
    %v8194 = vmul.f32 %v7675, %v8069
    %v8195 = vmul.f32 %v7678, %v8069
    %v8196 = vmul.f32 %v7681, %v8069
    %v8197 = vmul.f32 %v7684, %v8069
    %v8198 = vmul.f32 %v7687, %v8069
    %v8199 = vmul.f32 %v7690, %v8069
    %v8200 = vmul.f32 %v7693, %v8069
    %v8201 = vmul.f32 %v7696, %v8069
    %v8202 = vmul.f32 %v7699, %v8069
    %v8203 = vmul.f32 %v7702, %v8069
    %v8204 = vmul.f32 %v7705, %v8069
    %v8205 = vmul.f32 %v7708, %v8069
    %v8206 = vmul.f32 %v7711, %v8069
    %v8207 = vmul.f32 %v7714, %v8069
    %v8208 = vmul.f32 %v7717, %v8069
    %v8209 = vmul.f32 %v7720, %v8069
    %v8210 = vmul.f32 %v7723, %v8069
    %v8211 = vmul.f32 %v7726, %v8069
    %v8212 = vmul.f32 %v7729, %v8069
    %v8213 = vmul.f32 %v7732, %v8069
    %v8214 = vmul.f32 %v7735, %v8069
    %v8215 = vmul.f32 %v7738, %v8069
    %v8216 = vmul.f32 %v7741, %v8069
    %v8217 = vmul.f32 %v7744, %v8069
    %v8218 = vmul.f32 %v7747, %v8069
    %v8219 = vmul.f32 %v7750, %v8069
    %v8220 = vmul.f32 %v7753, %v8069
    %v8221 = vmul.f32 %v7756, %v8069
    %v8222 = vmul.f32 %v7759, %v8069
    %v8223 = vmul.f32 %v7762, %v8069
    %v8224 = vmul.f32 %v7765, %v8069
    %v8225 = vmul.f32 %v7768, %v8069
    %v8226 = vmul.f32 %v7771, %v8069
    %v8227 = vmul.f32 %v7774, %v8069
    %v8228 = vmul.f32 %v7777, %v8069
    %v8229 = vmul.f32 %v7780, %v8069
    %v8230 = vmul.f32 %v7783, %v8069
    %v8231 = vmul.f32 %v7786, %v8069
    %v8232 = vmul.f32 %v7789, %v8069
    %v8233 = vmul.f32 %v7792, %v8069
    %v8234 = vmul.f32 %v7795, %v8069
    %v8235 = vmul.f32 %v7798, %v8069
    %v8236 = vmul.f32 %v7801, %v8069
    %v8237 = vmul.f32 %v7804, %v8069
    %v8238 = vmul.f32 %v7807, %v8069
    %v8239 = vmul.f32 %v7810, %v8069
    %v8240 = vmul.f32 %v7813, %v8069
    %v8241 = vmul.f32 %v7816, %v8069
    %v8242 = vmul.f32 %v7819, %v8069
    %v8243 = vmul.f32 %v7822, %v8069
    %v8244 = vmul.f32 %v7825, %v8069
    %v8245 = vmul.f32 %v7828, %v8069
    %v8246 = vmul.f32 %v7831, %v8069
    %v8247 = vmul.f32 %v7834, %v8069
    %v8248 = vmul.f32 %v7837, %v8069
    %v8249 = vmul.f32 %v7840, %v8069
    %v8250 = vmul.f32 %v7843, %v8069
    %v8251 = vmul.f32 %v7846, %v8069
    %v8252 = vmul.f32 %v7849, %v8069
    %v8253 = vmul.f32 %v7852, %v8069
    %v8254 = vmul.f32 %v7855, %v8069
    %v8255 = vmul.f32 %v7858, %v8069
    %v8256 = vmul.f32 %v7861, %v8069
    %v8257 = vmul.f32 %v7864, %v8069
    %v8258 = vmul.f32 %v7867, %v8069
    %v8259 = vmul.f32 %v7870, %v8069
    %v8260 = vmul.f32 %v7873, %v8069
    %v8261 = vmul.f32 %v7876, %v8069
    %v8262 = vmul.f32 %v7879, %v8069
    %v8263 = vmul.f32 %v7882, %v8069
    %v8264 = vmul.f32 %v7885, %v8069
    %v8265 = vmul.f32 %v7888, %v8069
    %v8266 = vmul.f32 %v7891, %v8069
    %v8267 = vmul.f32 %v7894, %v8069
    %v8268 = vmul.f32 %v7897, %v8069
    %v8269 = vmul.f32 %v7900, %v8069
    %v8270 = vmul.f32 %v7903, %v8069
    %v8271 = vmul.f32 %v7906, %v8069
    %v8272 = vmul.f32 %v7909, %v8069
    %v8273 = vmul.f32 %v7912, %v8069
    %v8274 = vmul.f32 %v7915, %v8069
    %v8275 = vmul.f32 %v7918, %v8069
    %v8276 = vmul.f32 %v7921, %v8069
    %v8277 = vmul.f32 %v7924, %v8069
    %v8278 = vmul.f32 %v7927, %v8069
    %v8279 = vmul.f32 %v7930, %v8069
    %v8280 = vmul.f32 %v7933, %v8069
    %v8281 = vmul.f32 %v7936, %v8069
    %v8282 = vmul.f32 %v7939, %v8069
    %v8283 = vmul.f32 %v7942, %v8069
    %v8284 = vmul.f32 %v7945, %v8069
    %v8285 = vmul.f32 %v7948, %v8069
    %v8286 = vmul.f32 %v7951, %v8069
    %v8287 = vmul.f32 %v7954, %v8069
    %v8288 = vmul.f32 %v7957, %v8069
    %v8289 = vmul.f32 %v7960, %v8069
    %v8290 = vmul.f32 %v7963, %v8069
    %v8291 = vmul.f32 %v7966, %v8069
    %v8292 = vmul.f32 %v7969, %v8069
    %v8293 = vmul.f32 %v7972, %v8069
    %v8294 = vmul.f32 %v7975, %v8069
    %v8295 = vmul.f32 %v7978, %v8069
    %v8296 = vmul.f32 %v7981, %v8069
    %v8297 = vmul.f32 %v7984, %v8069
    %v8298 = vmul.f32 %v7987, %v8069
    %v8299 = vmul.f32 %v7990, %v8069
    %v8300 = vmul.f32 %v7993, %v8069
    %v8301 = vmul.f32 %v7996, %v8069
    %v8302 = vmul.f32 %v7999, %v8069
    %v8303 = vmul.f32 %v8002, %v8069
    %v8304 = vmul.f32 %v8005, %v8069
    %v8305 = vmul.f32 %v8008, %v8069
    %v8306 = vmul.f32 %v8011, %v8069
    %v8307 = vmul.f32 %v8014, %v8069
    %v8308 = vmul.f32 %v8017, %v8069
    %v8309 = vmul.f32 %v8020, %v8069
    %v8310 = vmul.f32 %v8023, %v8069
    %v8311 = vmul.f32 %v8026, %v8069
    %v8312 = vmul.f32 %v8029, %v8069
    %v8313 = vmul.f32 %v8032, %v8069
    %v8314 = vmul.f32 %v8035, %v8069
    %v8315 = vmul.f32 %v8038, %v8069
    %v8316 = vmul.f32 %v8041, %v8069
    %v8317 = vmul.f32 %v8044, %v8069
    %v8318 = vmul.f32 %v8047, %v8069
    %v8319 = vmul.f32 %v8050, %v8069
    %v8320 = vmul.f32 %v8053, %v8069
    %v8321 = vmul.f32 %v8056, %v8069
    %v8322 = vmul.f32 %v8059, %v8069
    %v8323 = vmul.f32 %v8062, %v8069
    %v8324 = vmul.f32 %v8065, %v8069
    %v8325 = vmul.f32 %v8068, %v8069
    %v8326 = vsub.f32 %v6022, %v8070
    %v8327 = vsub.f32 %v6027, %v8071
    %v8328 = vsub.f32 %v6032, %v8072
    %v8329 = vsub.f32 %v6037, %v8073
    %v8330 = vsub.f32 %v6042, %v8074
    %v8331 = vsub.f32 %v6047, %v8075
    %v8332 = vsub.f32 %v6052, %v8076
    %v8333 = vsub.f32 %v6057, %v8077
    %v8334 = vsub.f32 %v6062, %v8078
    %v8335 = vsub.f32 %v6067, %v8079
    %v8336 = vsub.f32 %v6072, %v8080
    %v8337 = vsub.f32 %v6077, %v8081
    %v8338 = vsub.f32 %v6082, %v8082
    %v8339 = vsub.f32 %v6087, %v8083
    %v8340 = vsub.f32 %v6092, %v8084
    %v8341 = vsub.f32 %v6097, %v8085
    %v8342 = vsub.f32 %v6102, %v8086
    %v8343 = vsub.f32 %v6107, %v8087
    %v8344 = vsub.f32 %v6112, %v8088
    %v8345 = vsub.f32 %v6117, %v8089
    %v8346 = vsub.f32 %v6122, %v8090
    %v8347 = vsub.f32 %v6127, %v8091
    %v8348 = vsub.f32 %v6132, %v8092
    %v8349 = vsub.f32 %v6137, %v8093
    %v8350 = vsub.f32 %v6142, %v8094
    %v8351 = vsub.f32 %v6147, %v8095
    %v8352 = vsub.f32 %v6152, %v8096
    %v8353 = vsub.f32 %v6157, %v8097
    %v8354 = vsub.f32 %v6162, %v8098
    %v8355 = vsub.f32 %v6167, %v8099
    %v8356 = vsub.f32 %v6172, %v8100
    %v8357 = vsub.f32 %v6177, %v8101
    %v8358 = vsub.f32 %v6182, %v8102
    %v8359 = vsub.f32 %v6187, %v8103
    %v8360 = vsub.f32 %v6192, %v8104
    %v8361 = vsub.f32 %v6197, %v8105
    %v8362 = vsub.f32 %v6202, %v8106
    %v8363 = vsub.f32 %v6207, %v8107
    %v8364 = vsub.f32 %v6212, %v8108
    %v8365 = vsub.f32 %v6217, %v8109
    %v8366 = vsub.f32 %v6222, %v8110
    %v8367 = vsub.f32 %v6227, %v8111
    %v8368 = vsub.f32 %v6232, %v8112
    %v8369 = vsub.f32 %v6237, %v8113
    %v8370 = vsub.f32 %v6242, %v8114
    %v8371 = vsub.f32 %v6247, %v8115
    %v8372 = vsub.f32 %v6252, %v8116
    %v8373 = vsub.f32 %v6257, %v8117
    %v8374 = vsub.f32 %v6262, %v8118
    %v8375 = vsub.f32 %v6267, %v8119
    %v8376 = vsub.f32 %v6272, %v8120
    %v8377 = vsub.f32 %v6277, %v8121
    %v8378 = vsub.f32 %v6282, %v8122
    %v8379 = vsub.f32 %v6287, %v8123
    %v8380 = vsub.f32 %v6292, %v8124
    %v8381 = vsub.f32 %v6297, %v8125
    %v8382 = vsub.f32 %v6302, %v8126
    %v8383 = vsub.f32 %v6307, %v8127
    %v8384 = vsub.f32 %v6312, %v8128
    %v8385 = vsub.f32 %v6317, %v8129
    %v8386 = vsub.f32 %v6322, %v8130
    %v8387 = vsub.f32 %v6327, %v8131
    %v8388 = vsub.f32 %v6332, %v8132
    %v8389 = vsub.f32 %v6337, %v8133
    %v8390 = vsub.f32 %v6342, %v8134
    %v8391 = vsub.f32 %v6347, %v8135
    %v8392 = vsub.f32 %v6352, %v8136
    %v8393 = vsub.f32 %v6357, %v8137
    %v8394 = vsub.f32 %v6362, %v8138
    %v8395 = vsub.f32 %v6367, %v8139
    %v8396 = vsub.f32 %v6372, %v8140
    %v8397 = vsub.f32 %v6377, %v8141
    %v8398 = vsub.f32 %v6382, %v8142
    %v8399 = vsub.f32 %v6387, %v8143
    %v8400 = vsub.f32 %v6392, %v8144
    %v8401 = vsub.f32 %v6397, %v8145
    %v8402 = vsub.f32 %v6402, %v8146
    %v8403 = vsub.f32 %v6407, %v8147
    %v8404 = vsub.f32 %v6412, %v8148
    %v8405 = vsub.f32 %v6417, %v8149
    %v8406 = vsub.f32 %v6422, %v8150
    %v8407 = vsub.f32 %v6427, %v8151
    %v8408 = vsub.f32 %v6432, %v8152
    %v8409 = vsub.f32 %v6437, %v8153
    %v8410 = vsub.f32 %v6442, %v8154
    %v8411 = vsub.f32 %v6447, %v8155
    %v8412 = vsub.f32 %v6452, %v8156
    %v8413 = vsub.f32 %v6457, %v8157
    %v8414 = vsub.f32 %v6462, %v8158
    %v8415 = vsub.f32 %v6467, %v8159
    %v8416 = vsub.f32 %v6472, %v8160
    %v8417 = vsub.f32 %v6477, %v8161
    %v8418 = vsub.f32 %v6482, %v8162
    %v8419 = vsub.f32 %v6487, %v8163
    %v8420 = vsub.f32 %v6492, %v8164
    %v8421 = vsub.f32 %v6497, %v8165
    %v8422 = vsub.f32 %v6502, %v8166
    %v8423 = vsub.f32 %v6507, %v8167
    %v8424 = vsub.f32 %v6512, %v8168
    %v8425 = vsub.f32 %v6517, %v8169
    %v8426 = vsub.f32 %v6522, %v8170
    %v8427 = vsub.f32 %v6527, %v8171
    %v8428 = vsub.f32 %v6532, %v8172
    %v8429 = vsub.f32 %v6537, %v8173
    %v8430 = vsub.f32 %v6542, %v8174
    %v8431 = vsub.f32 %v6547, %v8175
    %v8432 = vsub.f32 %v6552, %v8176
    %v8433 = vsub.f32 %v6557, %v8177
    %v8434 = vsub.f32 %v6562, %v8178
    %v8435 = vsub.f32 %v6567, %v8179
    %v8436 = vsub.f32 %v6572, %v8180
    %v8437 = vsub.f32 %v6577, %v8181
    %v8438 = vsub.f32 %v6582, %v8182
    %v8439 = vsub.f32 %v6587, %v8183
    %v8440 = vsub.f32 %v6592, %v8184
    %v8441 = vsub.f32 %v6597, %v8185
    %v8442 = vsub.f32 %v6602, %v8186
    %v8443 = vsub.f32 %v6607, %v8187
    %v8444 = vsub.f32 %v6612, %v8188
    %v8445 = vsub.f32 %v6617, %v8189
    %v8446 = vsub.f32 %v6622, %v8190
    %v8447 = vsub.f32 %v6627, %v8191
    %v8448 = vsub.f32 %v6632, %v8192
    %v8449 = vsub.f32 %v6637, %v8193
    %v8450 = vsub.f32 %v6642, %v8194
    %v8451 = vsub.f32 %v6647, %v8195
    %v8452 = vsub.f32 %v6652, %v8196
    %v8453 = vsub.f32 %v6657, %v8197
    %v8454 = vsub.f32 %v6662, %v8198
    %v8455 = vsub.f32 %v6667, %v8199
    %v8456 = vsub.f32 %v6672, %v8200
    %v8457 = vsub.f32 %v6677, %v8201
    %v8458 = vsub.f32 %v6682, %v8202
    %v8459 = vsub.f32 %v6687, %v8203
    %v8460 = vsub.f32 %v6692, %v8204
    %v8461 = vsub.f32 %v6697, %v8205
    %v8462 = vsub.f32 %v6702, %v8206
    %v8463 = vsub.f32 %v6707, %v8207
    %v8464 = vsub.f32 %v6712, %v8208
    %v8465 = vsub.f32 %v6717, %v8209
    %v8466 = vsub.f32 %v6722, %v8210
    %v8467 = vsub.f32 %v6727, %v8211
    %v8468 = vsub.f32 %v6732, %v8212
    %v8469 = vsub.f32 %v6737, %v8213
    %v8470 = vsub.f32 %v6742, %v8214
    %v8471 = vsub.f32 %v6747, %v8215
    %v8472 = vsub.f32 %v6752, %v8216
    %v8473 = vsub.f32 %v6757, %v8217
    %v8474 = vsub.f32 %v6762, %v8218
    %v8475 = vsub.f32 %v6767, %v8219
    %v8476 = vsub.f32 %v6772, %v8220
    %v8477 = vsub.f32 %v6777, %v8221
    %v8478 = vsub.f32 %v6782, %v8222
    %v8479 = vsub.f32 %v6787, %v8223
    %v8480 = vsub.f32 %v6792, %v8224
    %v8481 = vsub.f32 %v6797, %v8225
    %v8482 = vsub.f32 %v6802, %v8226
    %v8483 = vsub.f32 %v6807, %v8227
    %v8484 = vsub.f32 %v6812, %v8228
    %v8485 = vsub.f32 %v6817, %v8229
    %v8486 = vsub.f32 %v6822, %v8230
    %v8487 = vsub.f32 %v6827, %v8231
    %v8488 = vsub.f32 %v6832, %v8232
    %v8489 = vsub.f32 %v6837, %v8233
    %v8490 = vsub.f32 %v6842, %v8234
    %v8491 = vsub.f32 %v6847, %v8235
    %v8492 = vsub.f32 %v6852, %v8236
    %v8493 = vsub.f32 %v6857, %v8237
    %v8494 = vsub.f32 %v6862, %v8238
    %v8495 = vsub.f32 %v6867, %v8239
    %v8496 = vsub.f32 %v6872, %v8240
    %v8497 = vsub.f32 %v6877, %v8241
    %v8498 = vsub.f32 %v6882, %v8242
    %v8499 = vsub.f32 %v6887, %v8243
    %v8500 = vsub.f32 %v6892, %v8244
    %v8501 = vsub.f32 %v6897, %v8245
    %v8502 = vsub.f32 %v6902, %v8246
    %v8503 = vsub.f32 %v6907, %v8247
    %v8504 = vsub.f32 %v6912, %v8248
    %v8505 = vsub.f32 %v6917, %v8249
    %v8506 = vsub.f32 %v6922, %v8250
    %v8507 = vsub.f32 %v6927, %v8251
    %v8508 = vsub.f32 %v6932, %v8252
    %v8509 = vsub.f32 %v6937, %v8253
    %v8510 = vsub.f32 %v6942, %v8254
    %v8511 = vsub.f32 %v6947, %v8255
    %v8512 = vsub.f32 %v6952, %v8256
    %v8513 = vsub.f32 %v6957, %v8257
    %v8514 = vsub.f32 %v6962, %v8258
    %v8515 = vsub.f32 %v6967, %v8259
    %v8516 = vsub.f32 %v6972, %v8260
    %v8517 = vsub.f32 %v6977, %v8261
    %v8518 = vsub.f32 %v6982, %v8262
    %v8519 = vsub.f32 %v6987, %v8263
    %v8520 = vsub.f32 %v6992, %v8264
    %v8521 = vsub.f32 %v6997, %v8265
    %v8522 = vsub.f32 %v7002, %v8266
    %v8523 = vsub.f32 %v7007, %v8267
    %v8524 = vsub.f32 %v7012, %v8268
    %v8525 = vsub.f32 %v7017, %v8269
    %v8526 = vsub.f32 %v7022, %v8270
    %v8527 = vsub.f32 %v7027, %v8271
    %v8528 = vsub.f32 %v7032, %v8272
    %v8529 = vsub.f32 %v7037, %v8273
    %v8530 = vsub.f32 %v7042, %v8274
    %v8531 = vsub.f32 %v7047, %v8275
    %v8532 = vsub.f32 %v7052, %v8276
    %v8533 = vsub.f32 %v7057, %v8277
    %v8534 = vsub.f32 %v7062, %v8278
    %v8535 = vsub.f32 %v7067, %v8279
    %v8536 = vsub.f32 %v7072, %v8280
    %v8537 = vsub.f32 %v7077, %v8281
    %v8538 = vsub.f32 %v7082, %v8282
    %v8539 = vsub.f32 %v7087, %v8283
    %v8540 = vsub.f32 %v7092, %v8284
    %v8541 = vsub.f32 %v7097, %v8285
    %v8542 = vsub.f32 %v7102, %v8286
    %v8543 = vsub.f32 %v7107, %v8287
    %v8544 = vsub.f32 %v7112, %v8288
    %v8545 = vsub.f32 %v7117, %v8289
    %v8546 = vsub.f32 %v7122, %v8290
    %v8547 = vsub.f32 %v7127, %v8291
    %v8548 = vsub.f32 %v7132, %v8292
    %v8549 = vsub.f32 %v7137, %v8293
    %v8550 = vsub.f32 %v7142, %v8294
    %v8551 = vsub.f32 %v7147, %v8295
    %v8552 = vsub.f32 %v7152, %v8296
    %v8553 = vsub.f32 %v7157, %v8297
    %v8554 = vsub.f32 %v7162, %v8298
    %v8555 = vsub.f32 %v7167, %v8299
    %v8556 = vsub.f32 %v7172, %v8300
    %v8557 = vsub.f32 %v7177, %v8301
    %v8558 = vsub.f32 %v7182, %v8302
    %v8559 = vsub.f32 %v7187, %v8303
    %v8560 = vsub.f32 %v7192, %v8304
    %v8561 = vsub.f32 %v7197, %v8305
    %v8562 = vsub.f32 %v7202, %v8306
    %v8563 = vsub.f32 %v7207, %v8307
    %v8564 = vsub.f32 %v7212, %v8308
    %v8565 = vsub.f32 %v7217, %v8309
    %v8566 = vsub.f32 %v7222, %v8310
    %v8567 = vsub.f32 %v7227, %v8311
    %v8568 = vsub.f32 %v7232, %v8312
    %v8569 = vsub.f32 %v7237, %v8313
    %v8570 = vsub.f32 %v7242, %v8314
    %v8571 = vsub.f32 %v7247, %v8315
    %v8572 = vsub.f32 %v7252, %v8316
    %v8573 = vsub.f32 %v7257, %v8317
    %v8574 = vsub.f32 %v7262, %v8318
    %v8575 = vsub.f32 %v7267, %v8319
    %v8576 = vsub.f32 %v7272, %v8320
    %v8577 = vsub.f32 %v7277, %v8321
    %v8578 = vsub.f32 %v7282, %v8322
    %v8579 = vsub.f32 %v7287, %v8323
    %v8580 = vsub.f32 %v7292, %v8324
    %v8581 = vsub.f32 %v7297, %v8325
    %v8582 = vmul.f32 %v8326, %v8326
    %v8583 = vmul.f32 %v8327, %v8327
    %v8584 = vmul.f32 %v8328, %v8328
    %v8585 = vmul.f32 %v8329, %v8329
    %v8586 = vmul.f32 %v8330, %v8330
    %v8587 = vmul.f32 %v8331, %v8331
    %v8588 = vmul.f32 %v8332, %v8332
    %v8589 = vmul.f32 %v8333, %v8333
    %v8590 = vmul.f32 %v8334, %v8334
    %v8591 = vmul.f32 %v8335, %v8335
    %v8592 = vmul.f32 %v8336, %v8336
    %v8593 = vmul.f32 %v8337, %v8337
    %v8594 = vmul.f32 %v8338, %v8338
    %v8595 = vmul.f32 %v8339, %v8339
    %v8596 = vmul.f32 %v8340, %v8340
    %v8597 = vmul.f32 %v8341, %v8341
    %v8598 = vmul.f32 %v8342, %v8342
    %v8599 = vmul.f32 %v8343, %v8343
    %v8600 = vmul.f32 %v8344, %v8344
    %v8601 = vmul.f32 %v8345, %v8345
    %v8602 = vmul.f32 %v8346, %v8346
    %v8603 = vmul.f32 %v8347, %v8347
    %v8604 = vmul.f32 %v8348, %v8348
    %v8605 = vmul.f32 %v8349, %v8349
    %v8606 = vmul.f32 %v8350, %v8350
    %v8607 = vmul.f32 %v8351, %v8351
    %v8608 = vmul.f32 %v8352, %v8352
    %v8609 = vmul.f32 %v8353, %v8353
    %v8610 = vmul.f32 %v8354, %v8354
    %v8611 = vmul.f32 %v8355, %v8355
    %v8612 = vmul.f32 %v8356, %v8356
    %v8613 = vmul.f32 %v8357, %v8357
    %v8614 = vmul.f32 %v8358, %v8358
    %v8615 = vmul.f32 %v8359, %v8359
    %v8616 = vmul.f32 %v8360, %v8360
    %v8617 = vmul.f32 %v8361, %v8361
    %v8618 = vmul.f32 %v8362, %v8362
    %v8619 = vmul.f32 %v8363, %v8363
    %v8620 = vmul.f32 %v8364, %v8364
    %v8621 = vmul.f32 %v8365, %v8365
    %v8622 = vmul.f32 %v8366, %v8366
    %v8623 = vmul.f32 %v8367, %v8367
    %v8624 = vmul.f32 %v8368, %v8368
    %v8625 = vmul.f32 %v8369, %v8369
    %v8626 = vmul.f32 %v8370, %v8370
    %v8627 = vmul.f32 %v8371, %v8371
    %v8628 = vmul.f32 %v8372, %v8372
    %v8629 = vmul.f32 %v8373, %v8373
    %v8630 = vmul.f32 %v8374, %v8374
    %v8631 = vmul.f32 %v8375, %v8375
    %v8632 = vmul.f32 %v8376, %v8376
    %v8633 = vmul.f32 %v8377, %v8377
    %v8634 = vmul.f32 %v8378, %v8378
    %v8635 = vmul.f32 %v8379, %v8379
    %v8636 = vmul.f32 %v8380, %v8380
    %v8637 = vmul.f32 %v8381, %v8381
    %v8638 = vmul.f32 %v8382, %v8382
    %v8639 = vmul.f32 %v8383, %v8383
    %v8640 = vmul.f32 %v8384, %v8384
    %v8641 = vmul.f32 %v8385, %v8385
    %v8642 = vmul.f32 %v8386, %v8386
    %v8643 = vmul.f32 %v8387, %v8387
    %v8644 = vmul.f32 %v8388, %v8388
    %v8645 = vmul.f32 %v8389, %v8389
    %v8646 = vmul.f32 %v8390, %v8390
    %v8647 = vmul.f32 %v8391, %v8391
    %v8648 = vmul.f32 %v8392, %v8392
    %v8649 = vmul.f32 %v8393, %v8393
    %v8650 = vmul.f32 %v8394, %v8394
    %v8651 = vmul.f32 %v8395, %v8395
    %v8652 = vmul.f32 %v8396, %v8396
    %v8653 = vmul.f32 %v8397, %v8397
    %v8654 = vmul.f32 %v8398, %v8398
    %v8655 = vmul.f32 %v8399, %v8399
    %v8656 = vmul.f32 %v8400, %v8400
    %v8657 = vmul.f32 %v8401, %v8401
    %v8658 = vmul.f32 %v8402, %v8402
    %v8659 = vmul.f32 %v8403, %v8403
    %v8660 = vmul.f32 %v8404, %v8404
    %v8661 = vmul.f32 %v8405, %v8405
    %v8662 = vmul.f32 %v8406, %v8406
    %v8663 = vmul.f32 %v8407, %v8407
    %v8664 = vmul.f32 %v8408, %v8408
    %v8665 = vmul.f32 %v8409, %v8409
    %v8666 = vmul.f32 %v8410, %v8410
    %v8667 = vmul.f32 %v8411, %v8411
    %v8668 = vmul.f32 %v8412, %v8412
    %v8669 = vmul.f32 %v8413, %v8413
    %v8670 = vmul.f32 %v8414, %v8414
    %v8671 = vmul.f32 %v8415, %v8415
    %v8672 = vmul.f32 %v8416, %v8416
    %v8673 = vmul.f32 %v8417, %v8417
    %v8674 = vmul.f32 %v8418, %v8418
    %v8675 = vmul.f32 %v8419, %v8419
    %v8676 = vmul.f32 %v8420, %v8420
    %v8677 = vmul.f32 %v8421, %v8421
    %v8678 = vmul.f32 %v8422, %v8422
    %v8679 = vmul.f32 %v8423, %v8423
    %v8680 = vmul.f32 %v8424, %v8424
    %v8681 = vmul.f32 %v8425, %v8425
    %v8682 = vmul.f32 %v8426, %v8426
    %v8683 = vmul.f32 %v8427, %v8427
    %v8684 = vmul.f32 %v8428, %v8428
    %v8685 = vmul.f32 %v8429, %v8429
    %v8686 = vmul.f32 %v8430, %v8430
    %v8687 = vmul.f32 %v8431, %v8431
    %v8688 = vmul.f32 %v8432, %v8432
    %v8689 = vmul.f32 %v8433, %v8433
    %v8690 = vmul.f32 %v8434, %v8434
    %v8691 = vmul.f32 %v8435, %v8435
    %v8692 = vmul.f32 %v8436, %v8436
    %v8693 = vmul.f32 %v8437, %v8437
    %v8694 = vmul.f32 %v8438, %v8438
    %v8695 = vmul.f32 %v8439, %v8439
    %v8696 = vmul.f32 %v8440, %v8440
    %v8697 = vmul.f32 %v8441, %v8441
    %v8698 = vmul.f32 %v8442, %v8442
    %v8699 = vmul.f32 %v8443, %v8443
    %v8700 = vmul.f32 %v8444, %v8444
    %v8701 = vmul.f32 %v8445, %v8445
    %v8702 = vmul.f32 %v8446, %v8446
    %v8703 = vmul.f32 %v8447, %v8447
    %v8704 = vmul.f32 %v8448, %v8448
    %v8705 = vmul.f32 %v8449, %v8449
    %v8706 = vmul.f32 %v8450, %v8450
    %v8707 = vmul.f32 %v8451, %v8451
    %v8708 = vmul.f32 %v8452, %v8452
    %v8709 = vmul.f32 %v8453, %v8453
    %v8710 = vmul.f32 %v8454, %v8454
    %v8711 = vmul.f32 %v8455, %v8455
    %v8712 = vmul.f32 %v8456, %v8456
    %v8713 = vmul.f32 %v8457, %v8457
    %v8714 = vmul.f32 %v8458, %v8458
    %v8715 = vmul.f32 %v8459, %v8459
    %v8716 = vmul.f32 %v8460, %v8460
    %v8717 = vmul.f32 %v8461, %v8461
    %v8718 = vmul.f32 %v8462, %v8462
    %v8719 = vmul.f32 %v8463, %v8463
    %v8720 = vmul.f32 %v8464, %v8464
    %v8721 = vmul.f32 %v8465, %v8465
    %v8722 = vmul.f32 %v8466, %v8466
    %v8723 = vmul.f32 %v8467, %v8467
    %v8724 = vmul.f32 %v8468, %v8468
    %v8725 = vmul.f32 %v8469, %v8469
    %v8726 = vmul.f32 %v8470, %v8470
    %v8727 = vmul.f32 %v8471, %v8471
    %v8728 = vmul.f32 %v8472, %v8472
    %v8729 = vmul.f32 %v8473, %v8473
    %v8730 = vmul.f32 %v8474, %v8474
    %v8731 = vmul.f32 %v8475, %v8475
    %v8732 = vmul.f32 %v8476, %v8476
    %v8733 = vmul.f32 %v8477, %v8477
    %v8734 = vmul.f32 %v8478, %v8478
    %v8735 = vmul.f32 %v8479, %v8479
    %v8736 = vmul.f32 %v8480, %v8480
    %v8737 = vmul.f32 %v8481, %v8481
    %v8738 = vmul.f32 %v8482, %v8482
    %v8739 = vmul.f32 %v8483, %v8483
    %v8740 = vmul.f32 %v8484, %v8484
    %v8741 = vmul.f32 %v8485, %v8485
    %v8742 = vmul.f32 %v8486, %v8486
    %v8743 = vmul.f32 %v8487, %v8487
    %v8744 = vmul.f32 %v8488, %v8488
    %v8745 = vmul.f32 %v8489, %v8489
    %v8746 = vmul.f32 %v8490, %v8490
    %v8747 = vmul.f32 %v8491, %v8491
    %v8748 = vmul.f32 %v8492, %v8492
    %v8749 = vmul.f32 %v8493, %v8493
    %v8750 = vmul.f32 %v8494, %v8494
    %v8751 = vmul.f32 %v8495, %v8495
    %v8752 = vmul.f32 %v8496, %v8496
    %v8753 = vmul.f32 %v8497, %v8497
    %v8754 = vmul.f32 %v8498, %v8498
    %v8755 = vmul.f32 %v8499, %v8499
    %v8756 = vmul.f32 %v8500, %v8500
    %v8757 = vmul.f32 %v8501, %v8501
    %v8758 = vmul.f32 %v8502, %v8502
    %v8759 = vmul.f32 %v8503, %v8503
    %v8760 = vmul.f32 %v8504, %v8504
    %v8761 = vmul.f32 %v8505, %v8505
    %v8762 = vmul.f32 %v8506, %v8506
    %v8763 = vmul.f32 %v8507, %v8507
    %v8764 = vmul.f32 %v8508, %v8508
    %v8765 = vmul.f32 %v8509, %v8509
    %v8766 = vmul.f32 %v8510, %v8510
    %v8767 = vmul.f32 %v8511, %v8511
    %v8768 = vmul.f32 %v8512, %v8512
    %v8769 = vmul.f32 %v8513, %v8513
    %v8770 = vmul.f32 %v8514, %v8514
    %v8771 = vmul.f32 %v8515, %v8515
    %v8772 = vmul.f32 %v8516, %v8516
    %v8773 = vmul.f32 %v8517, %v8517
    %v8774 = vmul.f32 %v8518, %v8518
    %v8775 = vmul.f32 %v8519, %v8519
    %v8776 = vmul.f32 %v8520, %v8520
    %v8777 = vmul.f32 %v8521, %v8521
    %v8778 = vmul.f32 %v8522, %v8522
    %v8779 = vmul.f32 %v8523, %v8523
    %v8780 = vmul.f32 %v8524, %v8524
    %v8781 = vmul.f32 %v8525, %v8525
    %v8782 = vmul.f32 %v8526, %v8526
    %v8783 = vmul.f32 %v8527, %v8527
    %v8784 = vmul.f32 %v8528, %v8528
    %v8785 = vmul.f32 %v8529, %v8529
    %v8786 = vmul.f32 %v8530, %v8530
    %v8787 = vmul.f32 %v8531, %v8531
    %v8788 = vmul.f32 %v8532, %v8532
    %v8789 = vmul.f32 %v8533, %v8533
    %v8790 = vmul.f32 %v8534, %v8534
    %v8791 = vmul.f32 %v8535, %v8535
    %v8792 = vmul.f32 %v8536, %v8536
    %v8793 = vmul.f32 %v8537, %v8537
    %v8794 = vmul.f32 %v8538, %v8538
    %v8795 = vmul.f32 %v8539, %v8539
    %v8796 = vmul.f32 %v8540, %v8540
    %v8797 = vmul.f32 %v8541, %v8541
    %v8798 = vmul.f32 %v8542, %v8542
    %v8799 = vmul.f32 %v8543, %v8543
    %v8800 = vmul.f32 %v8544, %v8544
    %v8801 = vmul.f32 %v8545, %v8545
    %v8802 = vmul.f32 %v8546, %v8546
    %v8803 = vmul.f32 %v8547, %v8547
    %v8804 = vmul.f32 %v8548, %v8548
    %v8805 = vmul.f32 %v8549, %v8549
    %v8806 = vmul.f32 %v8550, %v8550
    %v8807 = vmul.f32 %v8551, %v8551
    %v8808 = vmul.f32 %v8552, %v8552
    %v8809 = vmul.f32 %v8553, %v8553
    %v8810 = vmul.f32 %v8554, %v8554
    %v8811 = vmul.f32 %v8555, %v8555
    %v8812 = vmul.f32 %v8556, %v8556
    %v8813 = vmul.f32 %v8557, %v8557
    %v8814 = vmul.f32 %v8558, %v8558
    %v8815 = vmul.f32 %v8559, %v8559
    %v8816 = vmul.f32 %v8560, %v8560
    %v8817 = vmul.f32 %v8561, %v8561
    %v8818 = vmul.f32 %v8562, %v8562
    %v8819 = vmul.f32 %v8563, %v8563
    %v8820 = vmul.f32 %v8564, %v8564
    %v8821 = vmul.f32 %v8565, %v8565
    %v8822 = vmul.f32 %v8566, %v8566
    %v8823 = vmul.f32 %v8567, %v8567
    %v8824 = vmul.f32 %v8568, %v8568
    %v8825 = vmul.f32 %v8569, %v8569
    %v8826 = vmul.f32 %v8570, %v8570
    %v8827 = vmul.f32 %v8571, %v8571
    %v8828 = vmul.f32 %v8572, %v8572
    %v8829 = vmul.f32 %v8573, %v8573
    %v8830 = vmul.f32 %v8574, %v8574
    %v8831 = vmul.f32 %v8575, %v8575
    %v8832 = vmul.f32 %v8576, %v8576
    %v8833 = vmul.f32 %v8577, %v8577
    %v8834 = vmul.f32 %v8578, %v8578
    %v8835 = vmul.f32 %v8579, %v8579
    %v8836 = vmul.f32 %v8580, %v8580
    %v8837 = vmul.f32 %v8581, %v8581
    %v8838 = vsel %vm7300, %v8582, 0.0
    %8839 = vadd.xlane.f32.xlu0 %v8838
    %v8840 = vpop.xlane.xlu0 %8839
    %v8841 = vsel %vm7300, %v8583, 0.0
    %8842 = vadd.xlane.f32.xlu0 %v8841
    %v8843 = vpop.xlane.xlu0 %8842
    %v8844 = vsel %vm7300, %v8584, 0.0
    %8845 = vadd.xlane.f32.xlu0 %v8844
    %v8846 = vpop.xlane.xlu0 %8845
    %v8847 = vsel %vm7300, %v8585, 0.0
    %8848 = vadd.xlane.f32.xlu0 %v8847
    %v8849 = vpop.xlane.xlu0 %8848
    %v8850 = vsel %vm7300, %v8586, 0.0
    %8851 = vadd.xlane.f32.xlu0 %v8850
    %v8852 = vpop.xlane.xlu0 %8851
    %v8853 = vsel %vm7300, %v8587, 0.0
    %8854 = vadd.xlane.f32.xlu0 %v8853
    %v8855 = vpop.xlane.xlu0 %8854
    %v8856 = vsel %vm7300, %v8588, 0.0
    %8857 = vadd.xlane.f32.xlu0 %v8856
    %v8858 = vpop.xlane.xlu0 %8857
    %v8859 = vsel %vm7300, %v8589, 0.0
    %8860 = vadd.xlane.f32.xlu0 %v8859
    %v8861 = vpop.xlane.xlu0 %8860
    %v8862 = vsel %vm7300, %v8590, 0.0
    %8863 = vadd.xlane.f32.xlu0 %v8862
    %v8864 = vpop.xlane.xlu0 %8863
    %v8865 = vsel %vm7300, %v8591, 0.0
    %8866 = vadd.xlane.f32.xlu0 %v8865
    %v8867 = vpop.xlane.xlu0 %8866
    %v8868 = vsel %vm7300, %v8592, 0.0
    %8869 = vadd.xlane.f32.xlu0 %v8868
    %v8870 = vpop.xlane.xlu0 %8869
    %v8871 = vsel %vm7300, %v8593, 0.0
    %8872 = vadd.xlane.f32.xlu0 %v8871
    %v8873 = vpop.xlane.xlu0 %8872
    %v8874 = vsel %vm7300, %v8594, 0.0
    %8875 = vadd.xlane.f32.xlu0 %v8874
    %v8876 = vpop.xlane.xlu0 %8875
    %v8877 = vsel %vm7300, %v8595, 0.0
    %8878 = vadd.xlane.f32.xlu0 %v8877
    %v8879 = vpop.xlane.xlu0 %8878
    %v8880 = vsel %vm7300, %v8596, 0.0
    %8881 = vadd.xlane.f32.xlu0 %v8880
    %v8882 = vpop.xlane.xlu0 %8881
    %v8883 = vsel %vm7300, %v8597, 0.0
    %8884 = vadd.xlane.f32.xlu0 %v8883
    %v8885 = vpop.xlane.xlu0 %8884
    %v8886 = vsel %vm7300, %v8598, 0.0
    %8887 = vadd.xlane.f32.xlu0 %v8886
    %v8888 = vpop.xlane.xlu0 %8887
    %v8889 = vsel %vm7300, %v8599, 0.0
    %8890 = vadd.xlane.f32.xlu0 %v8889
    %v8891 = vpop.xlane.xlu0 %8890
    %v8892 = vsel %vm7300, %v8600, 0.0
    %8893 = vadd.xlane.f32.xlu0 %v8892
    %v8894 = vpop.xlane.xlu0 %8893
    %v8895 = vsel %vm7300, %v8601, 0.0
    %8896 = vadd.xlane.f32.xlu0 %v8895
    %v8897 = vpop.xlane.xlu0 %8896
    %v8898 = vsel %vm7300, %v8602, 0.0
    %8899 = vadd.xlane.f32.xlu0 %v8898
    %v8900 = vpop.xlane.xlu0 %8899
    %v8901 = vsel %vm7300, %v8603, 0.0
    %8902 = vadd.xlane.f32.xlu0 %v8901
    %v8903 = vpop.xlane.xlu0 %8902
    %v8904 = vsel %vm7300, %v8604, 0.0
    %8905 = vadd.xlane.f32.xlu0 %v8904
    %v8906 = vpop.xlane.xlu0 %8905
    %v8907 = vsel %vm7300, %v8605, 0.0
    %8908 = vadd.xlane.f32.xlu0 %v8907
    %v8909 = vpop.xlane.xlu0 %8908
    %v8910 = vsel %vm7300, %v8606, 0.0
    %8911 = vadd.xlane.f32.xlu0 %v8910
    %v8912 = vpop.xlane.xlu0 %8911
    %v8913 = vsel %vm7300, %v8607, 0.0
    %8914 = vadd.xlane.f32.xlu0 %v8913
    %v8915 = vpop.xlane.xlu0 %8914
    %v8916 = vsel %vm7300, %v8608, 0.0
    %8917 = vadd.xlane.f32.xlu0 %v8916
    %v8918 = vpop.xlane.xlu0 %8917
    %v8919 = vsel %vm7300, %v8609, 0.0
    %8920 = vadd.xlane.f32.xlu0 %v8919
    %v8921 = vpop.xlane.xlu0 %8920
    %v8922 = vsel %vm7300, %v8610, 0.0
    %8923 = vadd.xlane.f32.xlu0 %v8922
    %v8924 = vpop.xlane.xlu0 %8923
    %v8925 = vsel %vm7300, %v8611, 0.0
    %8926 = vadd.xlane.f32.xlu0 %v8925
    %v8927 = vpop.xlane.xlu0 %8926
    %v8928 = vsel %vm7300, %v8612, 0.0
    %8929 = vadd.xlane.f32.xlu0 %v8928
    %v8930 = vpop.xlane.xlu0 %8929
    %v8931 = vsel %vm7300, %v8613, 0.0
    %8932 = vadd.xlane.f32.xlu0 %v8931
    %v8933 = vpop.xlane.xlu0 %8932
    %v8934 = vsel %vm7300, %v8614, 0.0
    %8935 = vadd.xlane.f32.xlu0 %v8934
    %v8936 = vpop.xlane.xlu0 %8935
    %v8937 = vsel %vm7300, %v8615, 0.0
    %8938 = vadd.xlane.f32.xlu0 %v8937
    %v8939 = vpop.xlane.xlu0 %8938
    %v8940 = vsel %vm7300, %v8616, 0.0
    %8941 = vadd.xlane.f32.xlu0 %v8940
    %v8942 = vpop.xlane.xlu0 %8941
    %v8943 = vsel %vm7300, %v8617, 0.0
    %8944 = vadd.xlane.f32.xlu0 %v8943
    %v8945 = vpop.xlane.xlu0 %8944
    %v8946 = vsel %vm7300, %v8618, 0.0
    %8947 = vadd.xlane.f32.xlu0 %v8946
    %v8948 = vpop.xlane.xlu0 %8947
    %v8949 = vsel %vm7300, %v8619, 0.0
    %8950 = vadd.xlane.f32.xlu0 %v8949
    %v8951 = vpop.xlane.xlu0 %8950
    %v8952 = vsel %vm7300, %v8620, 0.0
    %8953 = vadd.xlane.f32.xlu0 %v8952
    %v8954 = vpop.xlane.xlu0 %8953
    %v8955 = vsel %vm7300, %v8621, 0.0
    %8956 = vadd.xlane.f32.xlu0 %v8955
    %v8957 = vpop.xlane.xlu0 %8956
    %v8958 = vsel %vm7300, %v8622, 0.0
    %8959 = vadd.xlane.f32.xlu0 %v8958
    %v8960 = vpop.xlane.xlu0 %8959
    %v8961 = vsel %vm7300, %v8623, 0.0
    %8962 = vadd.xlane.f32.xlu0 %v8961
    %v8963 = vpop.xlane.xlu0 %8962
    %v8964 = vsel %vm7300, %v8624, 0.0
    %8965 = vadd.xlane.f32.xlu0 %v8964
    %v8966 = vpop.xlane.xlu0 %8965
    %v8967 = vsel %vm7300, %v8625, 0.0
    %8968 = vadd.xlane.f32.xlu0 %v8967
    %v8969 = vpop.xlane.xlu0 %8968
    %v8970 = vsel %vm7300, %v8626, 0.0
    %8971 = vadd.xlane.f32.xlu0 %v8970
    %v8972 = vpop.xlane.xlu0 %8971
    %v8973 = vsel %vm7300, %v8627, 0.0
    %8974 = vadd.xlane.f32.xlu0 %v8973
    %v8975 = vpop.xlane.xlu0 %8974
    %v8976 = vsel %vm7300, %v8628, 0.0
    %8977 = vadd.xlane.f32.xlu0 %v8976
    %v8978 = vpop.xlane.xlu0 %8977
    %v8979 = vsel %vm7300, %v8629, 0.0
    %8980 = vadd.xlane.f32.xlu0 %v8979
    %v8981 = vpop.xlane.xlu0 %8980
    %v8982 = vsel %vm7300, %v8630, 0.0
    %8983 = vadd.xlane.f32.xlu0 %v8982
    %v8984 = vpop.xlane.xlu0 %8983
    %v8985 = vsel %vm7300, %v8631, 0.0
    %8986 = vadd.xlane.f32.xlu0 %v8985
    %v8987 = vpop.xlane.xlu0 %8986
    %v8988 = vsel %vm7300, %v8632, 0.0
    %8989 = vadd.xlane.f32.xlu0 %v8988
    %v8990 = vpop.xlane.xlu0 %8989
    %v8991 = vsel %vm7300, %v8633, 0.0
    %8992 = vadd.xlane.f32.xlu0 %v8991
    %v8993 = vpop.xlane.xlu0 %8992
    %v8994 = vsel %vm7300, %v8634, 0.0
    %8995 = vadd.xlane.f32.xlu0 %v8994
    %v8996 = vpop.xlane.xlu0 %8995
    %v8997 = vsel %vm7300, %v8635, 0.0
    %8998 = vadd.xlane.f32.xlu0 %v8997
    %v8999 = vpop.xlane.xlu0 %8998
    %v9000 = vsel %vm7300, %v8636, 0.0
    %9001 = vadd.xlane.f32.xlu0 %v9000
    %v9002 = vpop.xlane.xlu0 %9001
    %v9003 = vsel %vm7300, %v8637, 0.0
    %9004 = vadd.xlane.f32.xlu0 %v9003
    %v9005 = vpop.xlane.xlu0 %9004
    %v9006 = vsel %vm7300, %v8638, 0.0
    %9007 = vadd.xlane.f32.xlu0 %v9006
    %v9008 = vpop.xlane.xlu0 %9007
    %v9009 = vsel %vm7300, %v8639, 0.0
    %9010 = vadd.xlane.f32.xlu0 %v9009
    %v9011 = vpop.xlane.xlu0 %9010
    %v9012 = vsel %vm7300, %v8640, 0.0
    %9013 = vadd.xlane.f32.xlu0 %v9012
    %v9014 = vpop.xlane.xlu0 %9013
    %v9015 = vsel %vm7300, %v8641, 0.0
    %9016 = vadd.xlane.f32.xlu0 %v9015
    %v9017 = vpop.xlane.xlu0 %9016
    %v9018 = vsel %vm7300, %v8642, 0.0
    %9019 = vadd.xlane.f32.xlu0 %v9018
    %v9020 = vpop.xlane.xlu0 %9019
    %v9021 = vsel %vm7300, %v8643, 0.0
    %9022 = vadd.xlane.f32.xlu0 %v9021
    %v9023 = vpop.xlane.xlu0 %9022
    %v9024 = vsel %vm7300, %v8644, 0.0
    %9025 = vadd.xlane.f32.xlu0 %v9024
    %v9026 = vpop.xlane.xlu0 %9025
    %v9027 = vsel %vm7300, %v8645, 0.0
    %9028 = vadd.xlane.f32.xlu0 %v9027
    %v9029 = vpop.xlane.xlu0 %9028
    %v9030 = vsel %vm7300, %v8646, 0.0
    %9031 = vadd.xlane.f32.xlu0 %v9030
    %v9032 = vpop.xlane.xlu0 %9031
    %v9033 = vsel %vm7300, %v8647, 0.0
    %9034 = vadd.xlane.f32.xlu0 %v9033
    %v9035 = vpop.xlane.xlu0 %9034
    %v9036 = vsel %vm7300, %v8648, 0.0
    %9037 = vadd.xlane.f32.xlu0 %v9036
    %v9038 = vpop.xlane.xlu0 %9037
    %v9039 = vsel %vm7300, %v8649, 0.0
    %9040 = vadd.xlane.f32.xlu0 %v9039
    %v9041 = vpop.xlane.xlu0 %9040
    %v9042 = vsel %vm7300, %v8650, 0.0
    %9043 = vadd.xlane.f32.xlu0 %v9042
    %v9044 = vpop.xlane.xlu0 %9043
    %v9045 = vsel %vm7300, %v8651, 0.0
    %9046 = vadd.xlane.f32.xlu0 %v9045
    %v9047 = vpop.xlane.xlu0 %9046
    %v9048 = vsel %vm7300, %v8652, 0.0
    %9049 = vadd.xlane.f32.xlu0 %v9048
    %v9050 = vpop.xlane.xlu0 %9049
    %v9051 = vsel %vm7300, %v8653, 0.0
    %9052 = vadd.xlane.f32.xlu0 %v9051
    %v9053 = vpop.xlane.xlu0 %9052
    %v9054 = vsel %vm7300, %v8654, 0.0
    %9055 = vadd.xlane.f32.xlu0 %v9054
    %v9056 = vpop.xlane.xlu0 %9055
    %v9057 = vsel %vm7300, %v8655, 0.0
    %9058 = vadd.xlane.f32.xlu0 %v9057
    %v9059 = vpop.xlane.xlu0 %9058
    %v9060 = vsel %vm7300, %v8656, 0.0
    %9061 = vadd.xlane.f32.xlu0 %v9060
    %v9062 = vpop.xlane.xlu0 %9061
    %v9063 = vsel %vm7300, %v8657, 0.0
    %9064 = vadd.xlane.f32.xlu0 %v9063
    %v9065 = vpop.xlane.xlu0 %9064
    %v9066 = vsel %vm7300, %v8658, 0.0
    %9067 = vadd.xlane.f32.xlu0 %v9066
    %v9068 = vpop.xlane.xlu0 %9067
    %v9069 = vsel %vm7300, %v8659, 0.0
    %9070 = vadd.xlane.f32.xlu0 %v9069
    %v9071 = vpop.xlane.xlu0 %9070
    %v9072 = vsel %vm7300, %v8660, 0.0
    %9073 = vadd.xlane.f32.xlu0 %v9072
    %v9074 = vpop.xlane.xlu0 %9073
    %v9075 = vsel %vm7300, %v8661, 0.0
    %9076 = vadd.xlane.f32.xlu0 %v9075
    %v9077 = vpop.xlane.xlu0 %9076
    %v9078 = vsel %vm7300, %v8662, 0.0
    %9079 = vadd.xlane.f32.xlu0 %v9078
    %v9080 = vpop.xlane.xlu0 %9079
    %v9081 = vsel %vm7300, %v8663, 0.0
    %9082 = vadd.xlane.f32.xlu0 %v9081
    %v9083 = vpop.xlane.xlu0 %9082
    %v9084 = vsel %vm7300, %v8664, 0.0
    %9085 = vadd.xlane.f32.xlu0 %v9084
    %v9086 = vpop.xlane.xlu0 %9085
    %v9087 = vsel %vm7300, %v8665, 0.0
    %9088 = vadd.xlane.f32.xlu0 %v9087
    %v9089 = vpop.xlane.xlu0 %9088
    %v9090 = vsel %vm7300, %v8666, 0.0
    %9091 = vadd.xlane.f32.xlu0 %v9090
    %v9092 = vpop.xlane.xlu0 %9091
    %v9093 = vsel %vm7300, %v8667, 0.0
    %9094 = vadd.xlane.f32.xlu0 %v9093
    %v9095 = vpop.xlane.xlu0 %9094
    %v9096 = vsel %vm7300, %v8668, 0.0
    %9097 = vadd.xlane.f32.xlu0 %v9096
    %v9098 = vpop.xlane.xlu0 %9097
    %v9099 = vsel %vm7300, %v8669, 0.0
    %9100 = vadd.xlane.f32.xlu0 %v9099
    %v9101 = vpop.xlane.xlu0 %9100
    %v9102 = vsel %vm7300, %v8670, 0.0
    %9103 = vadd.xlane.f32.xlu0 %v9102
    %v9104 = vpop.xlane.xlu0 %9103
    %v9105 = vsel %vm7300, %v8671, 0.0
    %9106 = vadd.xlane.f32.xlu0 %v9105
    %v9107 = vpop.xlane.xlu0 %9106
    %v9108 = vsel %vm7300, %v8672, 0.0
    %9109 = vadd.xlane.f32.xlu0 %v9108
    %v9110 = vpop.xlane.xlu0 %9109
    %v9111 = vsel %vm7300, %v8673, 0.0
    %9112 = vadd.xlane.f32.xlu0 %v9111
    %v9113 = vpop.xlane.xlu0 %9112
    %v9114 = vsel %vm7300, %v8674, 0.0
    %9115 = vadd.xlane.f32.xlu0 %v9114
    %v9116 = vpop.xlane.xlu0 %9115
    %v9117 = vsel %vm7300, %v8675, 0.0
    %9118 = vadd.xlane.f32.xlu0 %v9117
    %v9119 = vpop.xlane.xlu0 %9118
    %v9120 = vsel %vm7300, %v8676, 0.0
    %9121 = vadd.xlane.f32.xlu0 %v9120
    %v9122 = vpop.xlane.xlu0 %9121
    %v9123 = vsel %vm7300, %v8677, 0.0
    %9124 = vadd.xlane.f32.xlu0 %v9123
    %v9125 = vpop.xlane.xlu0 %9124
    %v9126 = vsel %vm7300, %v8678, 0.0
    %9127 = vadd.xlane.f32.xlu0 %v9126
    %v9128 = vpop.xlane.xlu0 %9127
    %v9129 = vsel %vm7300, %v8679, 0.0
    %9130 = vadd.xlane.f32.xlu0 %v9129
    %v9131 = vpop.xlane.xlu0 %9130
    %v9132 = vsel %vm7300, %v8680, 0.0
    %9133 = vadd.xlane.f32.xlu0 %v9132
    %v9134 = vpop.xlane.xlu0 %9133
    %v9135 = vsel %vm7300, %v8681, 0.0
    %9136 = vadd.xlane.f32.xlu0 %v9135
    %v9137 = vpop.xlane.xlu0 %9136
    %v9138 = vsel %vm7300, %v8682, 0.0
    %9139 = vadd.xlane.f32.xlu0 %v9138
    %v9140 = vpop.xlane.xlu0 %9139
    %v9141 = vsel %vm7300, %v8683, 0.0
    %9142 = vadd.xlane.f32.xlu0 %v9141
    %v9143 = vpop.xlane.xlu0 %9142
    %v9144 = vsel %vm7300, %v8684, 0.0
    %9145 = vadd.xlane.f32.xlu0 %v9144
    %v9146 = vpop.xlane.xlu0 %9145
    %v9147 = vsel %vm7300, %v8685, 0.0
    %9148 = vadd.xlane.f32.xlu0 %v9147
    %v9149 = vpop.xlane.xlu0 %9148
    %v9150 = vsel %vm7300, %v8686, 0.0
    %9151 = vadd.xlane.f32.xlu0 %v9150
    %v9152 = vpop.xlane.xlu0 %9151
    %v9153 = vsel %vm7300, %v8687, 0.0
    %9154 = vadd.xlane.f32.xlu0 %v9153
    %v9155 = vpop.xlane.xlu0 %9154
    %v9156 = vsel %vm7300, %v8688, 0.0
    %9157 = vadd.xlane.f32.xlu0 %v9156
    %v9158 = vpop.xlane.xlu0 %9157
    %v9159 = vsel %vm7300, %v8689, 0.0
    %9160 = vadd.xlane.f32.xlu0 %v9159
    %v9161 = vpop.xlane.xlu0 %9160
    %v9162 = vsel %vm7300, %v8690, 0.0
    %9163 = vadd.xlane.f32.xlu0 %v9162
    %v9164 = vpop.xlane.xlu0 %9163
    %v9165 = vsel %vm7300, %v8691, 0.0
    %9166 = vadd.xlane.f32.xlu0 %v9165
    %v9167 = vpop.xlane.xlu0 %9166
    %v9168 = vsel %vm7300, %v8692, 0.0
    %9169 = vadd.xlane.f32.xlu0 %v9168
    %v9170 = vpop.xlane.xlu0 %9169
    %v9171 = vsel %vm7300, %v8693, 0.0
    %9172 = vadd.xlane.f32.xlu0 %v9171
    %v9173 = vpop.xlane.xlu0 %9172
    %v9174 = vsel %vm7300, %v8694, 0.0
    %9175 = vadd.xlane.f32.xlu0 %v9174
    %v9176 = vpop.xlane.xlu0 %9175
    %v9177 = vsel %vm7300, %v8695, 0.0
    %9178 = vadd.xlane.f32.xlu0 %v9177
    %v9179 = vpop.xlane.xlu0 %9178
    %v9180 = vsel %vm7300, %v8696, 0.0
    %9181 = vadd.xlane.f32.xlu0 %v9180
    %v9182 = vpop.xlane.xlu0 %9181
    %v9183 = vsel %vm7300, %v8697, 0.0
    %9184 = vadd.xlane.f32.xlu0 %v9183
    %v9185 = vpop.xlane.xlu0 %9184
    %v9186 = vsel %vm7300, %v8698, 0.0
    %9187 = vadd.xlane.f32.xlu0 %v9186
    %v9188 = vpop.xlane.xlu0 %9187
    %v9189 = vsel %vm7300, %v8699, 0.0
    %9190 = vadd.xlane.f32.xlu0 %v9189
    %v9191 = vpop.xlane.xlu0 %9190
    %v9192 = vsel %vm7300, %v8700, 0.0
    %9193 = vadd.xlane.f32.xlu0 %v9192
    %v9194 = vpop.xlane.xlu0 %9193
    %v9195 = vsel %vm7300, %v8701, 0.0
    %9196 = vadd.xlane.f32.xlu0 %v9195
    %v9197 = vpop.xlane.xlu0 %9196
    %v9198 = vsel %vm7300, %v8702, 0.0
    %9199 = vadd.xlane.f32.xlu0 %v9198
    %v9200 = vpop.xlane.xlu0 %9199
    %v9201 = vsel %vm7300, %v8703, 0.0
    %9202 = vadd.xlane.f32.xlu0 %v9201
    %v9203 = vpop.xlane.xlu0 %9202
    %v9204 = vsel %vm7300, %v8704, 0.0
    %9205 = vadd.xlane.f32.xlu0 %v9204
    %v9206 = vpop.xlane.xlu0 %9205
    %v9207 = vsel %vm7300, %v8705, 0.0
    %9208 = vadd.xlane.f32.xlu0 %v9207
    %v9209 = vpop.xlane.xlu0 %9208
    %v9210 = vsel %vm7300, %v8706, 0.0
    %9211 = vadd.xlane.f32.xlu0 %v9210
    %v9212 = vpop.xlane.xlu0 %9211
    %v9213 = vsel %vm7300, %v8707, 0.0
    %9214 = vadd.xlane.f32.xlu0 %v9213
    %v9215 = vpop.xlane.xlu0 %9214
    %v9216 = vsel %vm7300, %v8708, 0.0
    %9217 = vadd.xlane.f32.xlu0 %v9216
    %v9218 = vpop.xlane.xlu0 %9217
    %v9219 = vsel %vm7300, %v8709, 0.0
    %9220 = vadd.xlane.f32.xlu0 %v9219
    %v9221 = vpop.xlane.xlu0 %9220
    %v9222 = vsel %vm7300, %v8710, 0.0
    %9223 = vadd.xlane.f32.xlu0 %v9222
    %v9224 = vpop.xlane.xlu0 %9223
    %v9225 = vsel %vm7300, %v8711, 0.0
    %9226 = vadd.xlane.f32.xlu0 %v9225
    %v9227 = vpop.xlane.xlu0 %9226
    %v9228 = vsel %vm7300, %v8712, 0.0
    %9229 = vadd.xlane.f32.xlu0 %v9228
    %v9230 = vpop.xlane.xlu0 %9229
    %v9231 = vsel %vm7300, %v8713, 0.0
    %9232 = vadd.xlane.f32.xlu0 %v9231
    %v9233 = vpop.xlane.xlu0 %9232
    %v9234 = vsel %vm7300, %v8714, 0.0
    %9235 = vadd.xlane.f32.xlu0 %v9234
    %v9236 = vpop.xlane.xlu0 %9235
    %v9237 = vsel %vm7300, %v8715, 0.0
    %9238 = vadd.xlane.f32.xlu0 %v9237
    %v9239 = vpop.xlane.xlu0 %9238
    %v9240 = vsel %vm7300, %v8716, 0.0
    %9241 = vadd.xlane.f32.xlu0 %v9240
    %v9242 = vpop.xlane.xlu0 %9241
    %v9243 = vsel %vm7300, %v8717, 0.0
    %9244 = vadd.xlane.f32.xlu0 %v9243
    %v9245 = vpop.xlane.xlu0 %9244
    %v9246 = vsel %vm7300, %v8718, 0.0
    %9247 = vadd.xlane.f32.xlu0 %v9246
    %v9248 = vpop.xlane.xlu0 %9247
    %v9249 = vsel %vm7300, %v8719, 0.0
    %9250 = vadd.xlane.f32.xlu0 %v9249
    %v9251 = vpop.xlane.xlu0 %9250
    %v9252 = vsel %vm7300, %v8720, 0.0
    %9253 = vadd.xlane.f32.xlu0 %v9252
    %v9254 = vpop.xlane.xlu0 %9253
    %v9255 = vsel %vm7300, %v8721, 0.0
    %9256 = vadd.xlane.f32.xlu0 %v9255
    %v9257 = vpop.xlane.xlu0 %9256
    %v9258 = vsel %vm7300, %v8722, 0.0
    %9259 = vadd.xlane.f32.xlu0 %v9258
    %v9260 = vpop.xlane.xlu0 %9259
    %v9261 = vsel %vm7300, %v8723, 0.0
    %9262 = vadd.xlane.f32.xlu0 %v9261
    %v9263 = vpop.xlane.xlu0 %9262
    %v9264 = vsel %vm7300, %v8724, 0.0
    %9265 = vadd.xlane.f32.xlu0 %v9264
    %v9266 = vpop.xlane.xlu0 %9265
    %v9267 = vsel %vm7300, %v8725, 0.0
    %9268 = vadd.xlane.f32.xlu0 %v9267
    %v9269 = vpop.xlane.xlu0 %9268
    %v9270 = vsel %vm7300, %v8726, 0.0
    %9271 = vadd.xlane.f32.xlu0 %v9270
    %v9272 = vpop.xlane.xlu0 %9271
    %v9273 = vsel %vm7300, %v8727, 0.0
    %9274 = vadd.xlane.f32.xlu0 %v9273
    %v9275 = vpop.xlane.xlu0 %9274
    %v9276 = vsel %vm7300, %v8728, 0.0
    %9277 = vadd.xlane.f32.xlu0 %v9276
    %v9278 = vpop.xlane.xlu0 %9277
    %v9279 = vsel %vm7300, %v8729, 0.0
    %9280 = vadd.xlane.f32.xlu0 %v9279
    %v9281 = vpop.xlane.xlu0 %9280
    %v9282 = vsel %vm7300, %v8730, 0.0
    %9283 = vadd.xlane.f32.xlu0 %v9282
    %v9284 = vpop.xlane.xlu0 %9283
    %v9285 = vsel %vm7300, %v8731, 0.0
    %9286 = vadd.xlane.f32.xlu0 %v9285
    %v9287 = vpop.xlane.xlu0 %9286
    %v9288 = vsel %vm7300, %v8732, 0.0
    %9289 = vadd.xlane.f32.xlu0 %v9288
    %v9290 = vpop.xlane.xlu0 %9289
    %v9291 = vsel %vm7300, %v8733, 0.0
    %9292 = vadd.xlane.f32.xlu0 %v9291
    %v9293 = vpop.xlane.xlu0 %9292
    %v9294 = vsel %vm7300, %v8734, 0.0
    %9295 = vadd.xlane.f32.xlu0 %v9294
    %v9296 = vpop.xlane.xlu0 %9295
    %v9297 = vsel %vm7300, %v8735, 0.0
    %9298 = vadd.xlane.f32.xlu0 %v9297
    %v9299 = vpop.xlane.xlu0 %9298
    %v9300 = vsel %vm7300, %v8736, 0.0
    %9301 = vadd.xlane.f32.xlu0 %v9300
    %v9302 = vpop.xlane.xlu0 %9301
    %v9303 = vsel %vm7300, %v8737, 0.0
    %9304 = vadd.xlane.f32.xlu0 %v9303
    %v9305 = vpop.xlane.xlu0 %9304
    %v9306 = vsel %vm7300, %v8738, 0.0
    %9307 = vadd.xlane.f32.xlu0 %v9306
    %v9308 = vpop.xlane.xlu0 %9307
    %v9309 = vsel %vm7300, %v8739, 0.0
    %9310 = vadd.xlane.f32.xlu0 %v9309
    %v9311 = vpop.xlane.xlu0 %9310
    %v9312 = vsel %vm7300, %v8740, 0.0
    %9313 = vadd.xlane.f32.xlu0 %v9312
    %v9314 = vpop.xlane.xlu0 %9313
    %v9315 = vsel %vm7300, %v8741, 0.0
    %9316 = vadd.xlane.f32.xlu0 %v9315
    %v9317 = vpop.xlane.xlu0 %9316
    %v9318 = vsel %vm7300, %v8742, 0.0
    %9319 = vadd.xlane.f32.xlu0 %v9318
    %v9320 = vpop.xlane.xlu0 %9319
    %v9321 = vsel %vm7300, %v8743, 0.0
    %9322 = vadd.xlane.f32.xlu0 %v9321
    %v9323 = vpop.xlane.xlu0 %9322
    %v9324 = vsel %vm7300, %v8744, 0.0
    %9325 = vadd.xlane.f32.xlu0 %v9324
    %v9326 = vpop.xlane.xlu0 %9325
    %v9327 = vsel %vm7300, %v8745, 0.0
    %9328 = vadd.xlane.f32.xlu0 %v9327
    %v9329 = vpop.xlane.xlu0 %9328
    %v9330 = vsel %vm7300, %v8746, 0.0
    %9331 = vadd.xlane.f32.xlu0 %v9330
    %v9332 = vpop.xlane.xlu0 %9331
    %v9333 = vsel %vm7300, %v8747, 0.0
    %9334 = vadd.xlane.f32.xlu0 %v9333
    %v9335 = vpop.xlane.xlu0 %9334
    %v9336 = vsel %vm7300, %v8748, 0.0
    %9337 = vadd.xlane.f32.xlu0 %v9336
    %v9338 = vpop.xlane.xlu0 %9337
    %v9339 = vsel %vm7300, %v8749, 0.0
    %9340 = vadd.xlane.f32.xlu0 %v9339
    %v9341 = vpop.xlane.xlu0 %9340
    %v9342 = vsel %vm7300, %v8750, 0.0
    %9343 = vadd.xlane.f32.xlu0 %v9342
    %v9344 = vpop.xlane.xlu0 %9343
    %v9345 = vsel %vm7300, %v8751, 0.0
    %9346 = vadd.xlane.f32.xlu0 %v9345
    %v9347 = vpop.xlane.xlu0 %9346
    %v9348 = vsel %vm7300, %v8752, 0.0
    %9349 = vadd.xlane.f32.xlu0 %v9348
    %v9350 = vpop.xlane.xlu0 %9349
    %v9351 = vsel %vm7300, %v8753, 0.0
    %9352 = vadd.xlane.f32.xlu0 %v9351
    %v9353 = vpop.xlane.xlu0 %9352
    %v9354 = vsel %vm7300, %v8754, 0.0
    %9355 = vadd.xlane.f32.xlu0 %v9354
    %v9356 = vpop.xlane.xlu0 %9355
    %v9357 = vsel %vm7300, %v8755, 0.0
    %9358 = vadd.xlane.f32.xlu0 %v9357
    %v9359 = vpop.xlane.xlu0 %9358
    %v9360 = vsel %vm7300, %v8756, 0.0
    %9361 = vadd.xlane.f32.xlu0 %v9360
    %v9362 = vpop.xlane.xlu0 %9361
    %v9363 = vsel %vm7300, %v8757, 0.0
    %9364 = vadd.xlane.f32.xlu0 %v9363
    %v9365 = vpop.xlane.xlu0 %9364
    %v9366 = vsel %vm7300, %v8758, 0.0
    %9367 = vadd.xlane.f32.xlu0 %v9366
    %v9368 = vpop.xlane.xlu0 %9367
    %v9369 = vsel %vm7300, %v8759, 0.0
    %9370 = vadd.xlane.f32.xlu0 %v9369
    %v9371 = vpop.xlane.xlu0 %9370
    %v9372 = vsel %vm7300, %v8760, 0.0
    %9373 = vadd.xlane.f32.xlu0 %v9372
    %v9374 = vpop.xlane.xlu0 %9373
    %v9375 = vsel %vm7300, %v8761, 0.0
    %9376 = vadd.xlane.f32.xlu0 %v9375
    %v9377 = vpop.xlane.xlu0 %9376
    %v9378 = vsel %vm7300, %v8762, 0.0
    %9379 = vadd.xlane.f32.xlu0 %v9378
    %v9380 = vpop.xlane.xlu0 %9379
    %v9381 = vsel %vm7300, %v8763, 0.0
    %9382 = vadd.xlane.f32.xlu0 %v9381
    %v9383 = vpop.xlane.xlu0 %9382
    %v9384 = vsel %vm7300, %v8764, 0.0
    %9385 = vadd.xlane.f32.xlu0 %v9384
    %v9386 = vpop.xlane.xlu0 %9385
    %v9387 = vsel %vm7300, %v8765, 0.0
    %9388 = vadd.xlane.f32.xlu0 %v9387
    %v9389 = vpop.xlane.xlu0 %9388
    %v9390 = vsel %vm7300, %v8766, 0.0
    %9391 = vadd.xlane.f32.xlu0 %v9390
    %v9392 = vpop.xlane.xlu0 %9391
    %v9393 = vsel %vm7300, %v8767, 0.0
    %9394 = vadd.xlane.f32.xlu0 %v9393
    %v9395 = vpop.xlane.xlu0 %9394
    %v9396 = vsel %vm7300, %v8768, 0.0
    %9397 = vadd.xlane.f32.xlu0 %v9396
    %v9398 = vpop.xlane.xlu0 %9397
    %v9399 = vsel %vm7300, %v8769, 0.0
    %9400 = vadd.xlane.f32.xlu0 %v9399
    %v9401 = vpop.xlane.xlu0 %9400
    %v9402 = vsel %vm7300, %v8770, 0.0
    %9403 = vadd.xlane.f32.xlu0 %v9402
    %v9404 = vpop.xlane.xlu0 %9403
    %v9405 = vsel %vm7300, %v8771, 0.0
    %9406 = vadd.xlane.f32.xlu0 %v9405
    %v9407 = vpop.xlane.xlu0 %9406
    %v9408 = vsel %vm7300, %v8772, 0.0
    %9409 = vadd.xlane.f32.xlu0 %v9408
    %v9410 = vpop.xlane.xlu0 %9409
    %v9411 = vsel %vm7300, %v8773, 0.0
    %9412 = vadd.xlane.f32.xlu0 %v9411
    %v9413 = vpop.xlane.xlu0 %9412
    %v9414 = vsel %vm7300, %v8774, 0.0
    %9415 = vadd.xlane.f32.xlu0 %v9414
    %v9416 = vpop.xlane.xlu0 %9415
    %v9417 = vsel %vm7300, %v8775, 0.0
    %9418 = vadd.xlane.f32.xlu0 %v9417
    %v9419 = vpop.xlane.xlu0 %9418
    %v9420 = vsel %vm7300, %v8776, 0.0
    %9421 = vadd.xlane.f32.xlu0 %v9420
    %v9422 = vpop.xlane.xlu0 %9421
    %v9423 = vsel %vm7300, %v8777, 0.0
    %9424 = vadd.xlane.f32.xlu0 %v9423
    %v9425 = vpop.xlane.xlu0 %9424
    %v9426 = vsel %vm7300, %v8778, 0.0
    %9427 = vadd.xlane.f32.xlu0 %v9426
    %v9428 = vpop.xlane.xlu0 %9427
    %v9429 = vsel %vm7300, %v8779, 0.0
    %9430 = vadd.xlane.f32.xlu0 %v9429
    %v9431 = vpop.xlane.xlu0 %9430
    %v9432 = vsel %vm7300, %v8780, 0.0
    %9433 = vadd.xlane.f32.xlu0 %v9432
    %v9434 = vpop.xlane.xlu0 %9433
    %v9435 = vsel %vm7300, %v8781, 0.0
    %9436 = vadd.xlane.f32.xlu0 %v9435
    %v9437 = vpop.xlane.xlu0 %9436
    %v9438 = vsel %vm7300, %v8782, 0.0
    %9439 = vadd.xlane.f32.xlu0 %v9438
    %v9440 = vpop.xlane.xlu0 %9439
    %v9441 = vsel %vm7300, %v8783, 0.0
    %9442 = vadd.xlane.f32.xlu0 %v9441
    %v9443 = vpop.xlane.xlu0 %9442
    %v9444 = vsel %vm7300, %v8784, 0.0
    %9445 = vadd.xlane.f32.xlu0 %v9444
    %v9446 = vpop.xlane.xlu0 %9445
    %v9447 = vsel %vm7300, %v8785, 0.0
    %9448 = vadd.xlane.f32.xlu0 %v9447
    %v9449 = vpop.xlane.xlu0 %9448
    %v9450 = vsel %vm7300, %v8786, 0.0
    %9451 = vadd.xlane.f32.xlu0 %v9450
    %v9452 = vpop.xlane.xlu0 %9451
    %v9453 = vsel %vm7300, %v8787, 0.0
    %9454 = vadd.xlane.f32.xlu0 %v9453
    %v9455 = vpop.xlane.xlu0 %9454
    %v9456 = vsel %vm7300, %v8788, 0.0
    %9457 = vadd.xlane.f32.xlu0 %v9456
    %v9458 = vpop.xlane.xlu0 %9457
    %v9459 = vsel %vm7300, %v8789, 0.0
    %9460 = vadd.xlane.f32.xlu0 %v9459
    %v9461 = vpop.xlane.xlu0 %9460
    %v9462 = vsel %vm7300, %v8790, 0.0
    %9463 = vadd.xlane.f32.xlu0 %v9462
    %v9464 = vpop.xlane.xlu0 %9463
    %v9465 = vsel %vm7300, %v8791, 0.0
    %9466 = vadd.xlane.f32.xlu0 %v9465
    %v9467 = vpop.xlane.xlu0 %9466
    %v9468 = vsel %vm7300, %v8792, 0.0
    %9469 = vadd.xlane.f32.xlu0 %v9468
    %v9470 = vpop.xlane.xlu0 %9469
    %v9471 = vsel %vm7300, %v8793, 0.0
    %9472 = vadd.xlane.f32.xlu0 %v9471
    %v9473 = vpop.xlane.xlu0 %9472
    %v9474 = vsel %vm7300, %v8794, 0.0
    %9475 = vadd.xlane.f32.xlu0 %v9474
    %v9476 = vpop.xlane.xlu0 %9475
    %v9477 = vsel %vm7300, %v8795, 0.0
    %9478 = vadd.xlane.f32.xlu0 %v9477
    %v9479 = vpop.xlane.xlu0 %9478
    %v9480 = vsel %vm7300, %v8796, 0.0
    %9481 = vadd.xlane.f32.xlu0 %v9480
    %v9482 = vpop.xlane.xlu0 %9481
    %v9483 = vsel %vm7300, %v8797, 0.0
    %9484 = vadd.xlane.f32.xlu0 %v9483
    %v9485 = vpop.xlane.xlu0 %9484
    %v9486 = vsel %vm7300, %v8798, 0.0
    %9487 = vadd.xlane.f32.xlu0 %v9486
    %v9488 = vpop.xlane.xlu0 %9487
    %v9489 = vsel %vm7300, %v8799, 0.0
    %9490 = vadd.xlane.f32.xlu0 %v9489
    %v9491 = vpop.xlane.xlu0 %9490
    %v9492 = vsel %vm7300, %v8800, 0.0
    %9493 = vadd.xlane.f32.xlu0 %v9492
    %v9494 = vpop.xlane.xlu0 %9493
    %v9495 = vsel %vm7300, %v8801, 0.0
    %9496 = vadd.xlane.f32.xlu0 %v9495
    %v9497 = vpop.xlane.xlu0 %9496
    %v9498 = vsel %vm7300, %v8802, 0.0
    %9499 = vadd.xlane.f32.xlu0 %v9498
    %v9500 = vpop.xlane.xlu0 %9499
    %v9501 = vsel %vm7300, %v8803, 0.0
    %9502 = vadd.xlane.f32.xlu0 %v9501
    %v9503 = vpop.xlane.xlu0 %9502
    %v9504 = vsel %vm7300, %v8804, 0.0
    %9505 = vadd.xlane.f32.xlu0 %v9504
    %v9506 = vpop.xlane.xlu0 %9505
    %v9507 = vsel %vm7300, %v8805, 0.0
    %9508 = vadd.xlane.f32.xlu0 %v9507
    %v9509 = vpop.xlane.xlu0 %9508
    %v9510 = vsel %vm7300, %v8806, 0.0
    %9511 = vadd.xlane.f32.xlu0 %v9510
    %v9512 = vpop.xlane.xlu0 %9511
    %v9513 = vsel %vm7300, %v8807, 0.0
    %9514 = vadd.xlane.f32.xlu0 %v9513
    %v9515 = vpop.xlane.xlu0 %9514
    %v9516 = vsel %vm7300, %v8808, 0.0
    %9517 = vadd.xlane.f32.xlu0 %v9516
    %v9518 = vpop.xlane.xlu0 %9517
    %v9519 = vsel %vm7300, %v8809, 0.0
    %9520 = vadd.xlane.f32.xlu0 %v9519
    %v9521 = vpop.xlane.xlu0 %9520
    %v9522 = vsel %vm7300, %v8810, 0.0
    %9523 = vadd.xlane.f32.xlu0 %v9522
    %v9524 = vpop.xlane.xlu0 %9523
    %v9525 = vsel %vm7300, %v8811, 0.0
    %9526 = vadd.xlane.f32.xlu0 %v9525
    %v9527 = vpop.xlane.xlu0 %9526
    %v9528 = vsel %vm7300, %v8812, 0.0
    %9529 = vadd.xlane.f32.xlu0 %v9528
    %v9530 = vpop.xlane.xlu0 %9529
    %v9531 = vsel %vm7300, %v8813, 0.0
    %9532 = vadd.xlane.f32.xlu0 %v9531
    %v9533 = vpop.xlane.xlu0 %9532
    %v9534 = vsel %vm7300, %v8814, 0.0
    %9535 = vadd.xlane.f32.xlu0 %v9534
    %v9536 = vpop.xlane.xlu0 %9535
    %v9537 = vsel %vm7300, %v8815, 0.0
    %9538 = vadd.xlane.f32.xlu0 %v9537
    %v9539 = vpop.xlane.xlu0 %9538
    %v9540 = vsel %vm7300, %v8816, 0.0
    %9541 = vadd.xlane.f32.xlu0 %v9540
    %v9542 = vpop.xlane.xlu0 %9541
    %v9543 = vsel %vm7300, %v8817, 0.0
    %9544 = vadd.xlane.f32.xlu0 %v9543
    %v9545 = vpop.xlane.xlu0 %9544
    %v9546 = vsel %vm7300, %v8818, 0.0
    %9547 = vadd.xlane.f32.xlu0 %v9546
    %v9548 = vpop.xlane.xlu0 %9547
    %v9549 = vsel %vm7300, %v8819, 0.0
    %9550 = vadd.xlane.f32.xlu0 %v9549
    %v9551 = vpop.xlane.xlu0 %9550
    %v9552 = vsel %vm7300, %v8820, 0.0
    %9553 = vadd.xlane.f32.xlu0 %v9552
    %v9554 = vpop.xlane.xlu0 %9553
    %v9555 = vsel %vm7300, %v8821, 0.0
    %9556 = vadd.xlane.f32.xlu0 %v9555
    %v9557 = vpop.xlane.xlu0 %9556
    %v9558 = vsel %vm7300, %v8822, 0.0
    %9559 = vadd.xlane.f32.xlu0 %v9558
    %v9560 = vpop.xlane.xlu0 %9559
    %v9561 = vsel %vm7300, %v8823, 0.0
    %9562 = vadd.xlane.f32.xlu0 %v9561
    %v9563 = vpop.xlane.xlu0 %9562
    %v9564 = vsel %vm7300, %v8824, 0.0
    %9565 = vadd.xlane.f32.xlu0 %v9564
    %v9566 = vpop.xlane.xlu0 %9565
    %v9567 = vsel %vm7300, %v8825, 0.0
    %9568 = vadd.xlane.f32.xlu0 %v9567
    %v9569 = vpop.xlane.xlu0 %9568
    %v9570 = vsel %vm7300, %v8826, 0.0
    %9571 = vadd.xlane.f32.xlu0 %v9570
    %v9572 = vpop.xlane.xlu0 %9571
    %v9573 = vsel %vm7300, %v8827, 0.0
    %9574 = vadd.xlane.f32.xlu0 %v9573
    %v9575 = vpop.xlane.xlu0 %9574
    %v9576 = vsel %vm7300, %v8828, 0.0
    %9577 = vadd.xlane.f32.xlu0 %v9576
    %v9578 = vpop.xlane.xlu0 %9577
    %v9579 = vsel %vm7300, %v8829, 0.0
    %9580 = vadd.xlane.f32.xlu0 %v9579
    %v9581 = vpop.xlane.xlu0 %9580
    %v9582 = vsel %vm7300, %v8830, 0.0
    %9583 = vadd.xlane.f32.xlu0 %v9582
    %v9584 = vpop.xlane.xlu0 %9583
    %v9585 = vsel %vm7300, %v8831, 0.0
    %9586 = vadd.xlane.f32.xlu0 %v9585
    %v9587 = vpop.xlane.xlu0 %9586
    %v9588 = vsel %vm7300, %v8832, 0.0
    %9589 = vadd.xlane.f32.xlu0 %v9588
    %v9590 = vpop.xlane.xlu0 %9589
    %v9591 = vsel %vm7300, %v8833, 0.0
    %9592 = vadd.xlane.f32.xlu0 %v9591
    %v9593 = vpop.xlane.xlu0 %9592
    %v9594 = vsel %vm7300, %v8834, 0.0
    %9595 = vadd.xlane.f32.xlu0 %v9594
    %v9596 = vpop.xlane.xlu0 %9595
    %v9597 = vsel %vm7300, %v8835, 0.0
    %9598 = vadd.xlane.f32.xlu0 %v9597
    %v9599 = vpop.xlane.xlu0 %9598
    %v9600 = vsel %vm7300, %v8836, 0.0
    %9601 = vadd.xlane.f32.xlu0 %v9600
    %v9602 = vpop.xlane.xlu0 %9601
    %v9603 = vsel %vm7300, %v8837, 0.0
    %9604 = vadd.xlane.f32.xlu0 %v9603
    %v9605 = vpop.xlane.xlu0 %9604
    %v9606 = vmul.f32 %v8840, %v8069
    %v9607 = vmul.f32 %v8843, %v8069
    %v9608 = vmul.f32 %v8846, %v8069
    %v9609 = vmul.f32 %v8849, %v8069
    %v9610 = vmul.f32 %v8852, %v8069
    %v9611 = vmul.f32 %v8855, %v8069
    %v9612 = vmul.f32 %v8858, %v8069
    %v9613 = vmul.f32 %v8861, %v8069
    %v9614 = vmul.f32 %v8864, %v8069
    %v9615 = vmul.f32 %v8867, %v8069
    %v9616 = vmul.f32 %v8870, %v8069
    %v9617 = vmul.f32 %v8873, %v8069
    %v9618 = vmul.f32 %v8876, %v8069
    %v9619 = vmul.f32 %v8879, %v8069
    %v9620 = vmul.f32 %v8882, %v8069
    %v9621 = vmul.f32 %v8885, %v8069
    %v9622 = vmul.f32 %v8888, %v8069
    %v9623 = vmul.f32 %v8891, %v8069
    %v9624 = vmul.f32 %v8894, %v8069
    %v9625 = vmul.f32 %v8897, %v8069
    %v9626 = vmul.f32 %v8900, %v8069
    %v9627 = vmul.f32 %v8903, %v8069
    %v9628 = vmul.f32 %v8906, %v8069
    %v9629 = vmul.f32 %v8909, %v8069
    %v9630 = vmul.f32 %v8912, %v8069
    %v9631 = vmul.f32 %v8915, %v8069
    %v9632 = vmul.f32 %v8918, %v8069
    %v9633 = vmul.f32 %v8921, %v8069
    %v9634 = vmul.f32 %v8924, %v8069
    %v9635 = vmul.f32 %v8927, %v8069
    %v9636 = vmul.f32 %v8930, %v8069
    %v9637 = vmul.f32 %v8933, %v8069
    %v9638 = vmul.f32 %v8936, %v8069
    %v9639 = vmul.f32 %v8939, %v8069
    %v9640 = vmul.f32 %v8942, %v8069
    %v9641 = vmul.f32 %v8945, %v8069
    %v9642 = vmul.f32 %v8948, %v8069
    %v9643 = vmul.f32 %v8951, %v8069
    %v9644 = vmul.f32 %v8954, %v8069
    %v9645 = vmul.f32 %v8957, %v8069
    %v9646 = vmul.f32 %v8960, %v8069
    %v9647 = vmul.f32 %v8963, %v8069
    %v9648 = vmul.f32 %v8966, %v8069
    %v9649 = vmul.f32 %v8969, %v8069
    %v9650 = vmul.f32 %v8972, %v8069
    %v9651 = vmul.f32 %v8975, %v8069
    %v9652 = vmul.f32 %v8978, %v8069
    %v9653 = vmul.f32 %v8981, %v8069
    %v9654 = vmul.f32 %v8984, %v8069
    %v9655 = vmul.f32 %v8987, %v8069
    %v9656 = vmul.f32 %v8990, %v8069
    %v9657 = vmul.f32 %v8993, %v8069
    %v9658 = vmul.f32 %v8996, %v8069
    %v9659 = vmul.f32 %v8999, %v8069
    %v9660 = vmul.f32 %v9002, %v8069
    %v9661 = vmul.f32 %v9005, %v8069
    %v9662 = vmul.f32 %v9008, %v8069
    %v9663 = vmul.f32 %v9011, %v8069
    %v9664 = vmul.f32 %v9014, %v8069
    %v9665 = vmul.f32 %v9017, %v8069
    %v9666 = vmul.f32 %v9020, %v8069
    %v9667 = vmul.f32 %v9023, %v8069
    %v9668 = vmul.f32 %v9026, %v8069
    %v9669 = vmul.f32 %v9029, %v8069
    %v9670 = vmul.f32 %v9032, %v8069
    %v9671 = vmul.f32 %v9035, %v8069
    %v9672 = vmul.f32 %v9038, %v8069
    %v9673 = vmul.f32 %v9041, %v8069
    %v9674 = vmul.f32 %v9044, %v8069
    %v9675 = vmul.f32 %v9047, %v8069
    %v9676 = vmul.f32 %v9050, %v8069
    %v9677 = vmul.f32 %v9053, %v8069
    %v9678 = vmul.f32 %v9056, %v8069
    %v9679 = vmul.f32 %v9059, %v8069
    %v9680 = vmul.f32 %v9062, %v8069
    %v9681 = vmul.f32 %v9065, %v8069
    %v9682 = vmul.f32 %v9068, %v8069
    %v9683 = vmul.f32 %v9071, %v8069
    %v9684 = vmul.f32 %v9074, %v8069
    %v9685 = vmul.f32 %v9077, %v8069
    %v9686 = vmul.f32 %v9080, %v8069
    %v9687 = vmul.f32 %v9083, %v8069
    %v9688 = vmul.f32 %v9086, %v8069
    %v9689 = vmul.f32 %v9089, %v8069
    %v9690 = vmul.f32 %v9092, %v8069
    %v9691 = vmul.f32 %v9095, %v8069
    %v9692 = vmul.f32 %v9098, %v8069
    %v9693 = vmul.f32 %v9101, %v8069
    %v9694 = vmul.f32 %v9104, %v8069
    %v9695 = vmul.f32 %v9107, %v8069
    %v9696 = vmul.f32 %v9110, %v8069
    %v9697 = vmul.f32 %v9113, %v8069
    %v9698 = vmul.f32 %v9116, %v8069
    %v9699 = vmul.f32 %v9119, %v8069
    %v9700 = vmul.f32 %v9122, %v8069
    %v9701 = vmul.f32 %v9125, %v8069
    %v9702 = vmul.f32 %v9128, %v8069
    %v9703 = vmul.f32 %v9131, %v8069
    %v9704 = vmul.f32 %v9134, %v8069
    %v9705 = vmul.f32 %v9137, %v8069
    %v9706 = vmul.f32 %v9140, %v8069
    %v9707 = vmul.f32 %v9143, %v8069
    %v9708 = vmul.f32 %v9146, %v8069
    %v9709 = vmul.f32 %v9149, %v8069
    %v9710 = vmul.f32 %v9152, %v8069
    %v9711 = vmul.f32 %v9155, %v8069
    %v9712 = vmul.f32 %v9158, %v8069
    %v9713 = vmul.f32 %v9161, %v8069
    %v9714 = vmul.f32 %v9164, %v8069
    %v9715 = vmul.f32 %v9167, %v8069
    %v9716 = vmul.f32 %v9170, %v8069
    %v9717 = vmul.f32 %v9173, %v8069
    %v9718 = vmul.f32 %v9176, %v8069
    %v9719 = vmul.f32 %v9179, %v8069
    %v9720 = vmul.f32 %v9182, %v8069
    %v9721 = vmul.f32 %v9185, %v8069
    %v9722 = vmul.f32 %v9188, %v8069
    %v9723 = vmul.f32 %v9191, %v8069
    %v9724 = vmul.f32 %v9194, %v8069
    %v9725 = vmul.f32 %v9197, %v8069
    %v9726 = vmul.f32 %v9200, %v8069
    %v9727 = vmul.f32 %v9203, %v8069
    %v9728 = vmul.f32 %v9206, %v8069
    %v9729 = vmul.f32 %v9209, %v8069
    %v9730 = vmul.f32 %v9212, %v8069
    %v9731 = vmul.f32 %v9215, %v8069
    %v9732 = vmul.f32 %v9218, %v8069
    %v9733 = vmul.f32 %v9221, %v8069
    %v9734 = vmul.f32 %v9224, %v8069
    %v9735 = vmul.f32 %v9227, %v8069
    %v9736 = vmul.f32 %v9230, %v8069
    %v9737 = vmul.f32 %v9233, %v8069
    %v9738 = vmul.f32 %v9236, %v8069
    %v9739 = vmul.f32 %v9239, %v8069
    %v9740 = vmul.f32 %v9242, %v8069
    %v9741 = vmul.f32 %v9245, %v8069
    %v9742 = vmul.f32 %v9248, %v8069
    %v9743 = vmul.f32 %v9251, %v8069
    %v9744 = vmul.f32 %v9254, %v8069
    %v9745 = vmul.f32 %v9257, %v8069
    %v9746 = vmul.f32 %v9260, %v8069
    %v9747 = vmul.f32 %v9263, %v8069
    %v9748 = vmul.f32 %v9266, %v8069
    %v9749 = vmul.f32 %v9269, %v8069
    %v9750 = vmul.f32 %v9272, %v8069
    %v9751 = vmul.f32 %v9275, %v8069
    %v9752 = vmul.f32 %v9278, %v8069
    %v9753 = vmul.f32 %v9281, %v8069
    %v9754 = vmul.f32 %v9284, %v8069
    %v9755 = vmul.f32 %v9287, %v8069
    %v9756 = vmul.f32 %v9290, %v8069
    %v9757 = vmul.f32 %v9293, %v8069
    %v9758 = vmul.f32 %v9296, %v8069
    %v9759 = vmul.f32 %v9299, %v8069
    %v9760 = vmul.f32 %v9302, %v8069
    %v9761 = vmul.f32 %v9305, %v8069
    %v9762 = vmul.f32 %v9308, %v8069
    %v9763 = vmul.f32 %v9311, %v8069
    %v9764 = vmul.f32 %v9314, %v8069
    %v9765 = vmul.f32 %v9317, %v8069
    %v9766 = vmul.f32 %v9320, %v8069
    %v9767 = vmul.f32 %v9323, %v8069
    %v9768 = vmul.f32 %v9326, %v8069
    %v9769 = vmul.f32 %v9329, %v8069
    %v9770 = vmul.f32 %v9332, %v8069
    %v9771 = vmul.f32 %v9335, %v8069
    %v9772 = vmul.f32 %v9338, %v8069
    %v9773 = vmul.f32 %v9341, %v8069
    %v9774 = vmul.f32 %v9344, %v8069
    %v9775 = vmul.f32 %v9347, %v8069
    %v9776 = vmul.f32 %v9350, %v8069
    %v9777 = vmul.f32 %v9353, %v8069
    %v9778 = vmul.f32 %v9356, %v8069
    %v9779 = vmul.f32 %v9359, %v8069
    %v9780 = vmul.f32 %v9362, %v8069
    %v9781 = vmul.f32 %v9365, %v8069
    %v9782 = vmul.f32 %v9368, %v8069
    %v9783 = vmul.f32 %v9371, %v8069
    %v9784 = vmul.f32 %v9374, %v8069
    %v9785 = vmul.f32 %v9377, %v8069
    %v9786 = vmul.f32 %v9380, %v8069
    %v9787 = vmul.f32 %v9383, %v8069
    %v9788 = vmul.f32 %v9386, %v8069
    %v9789 = vmul.f32 %v9389, %v8069
    %v9790 = vmul.f32 %v9392, %v8069
    %v9791 = vmul.f32 %v9395, %v8069
    %v9792 = vmul.f32 %v9398, %v8069
    %v9793 = vmul.f32 %v9401, %v8069
    %v9794 = vmul.f32 %v9404, %v8069
    %v9795 = vmul.f32 %v9407, %v8069
    %v9796 = vmul.f32 %v9410, %v8069
    %v9797 = vmul.f32 %v9413, %v8069
    %v9798 = vmul.f32 %v9416, %v8069
    %v9799 = vmul.f32 %v9419, %v8069
    %v9800 = vmul.f32 %v9422, %v8069
    %v9801 = vmul.f32 %v9425, %v8069
    %v9802 = vmul.f32 %v9428, %v8069
    %v9803 = vmul.f32 %v9431, %v8069
    %v9804 = vmul.f32 %v9434, %v8069
    %v9805 = vmul.f32 %v9437, %v8069
    %v9806 = vmul.f32 %v9440, %v8069
    %v9807 = vmul.f32 %v9443, %v8069
    %v9808 = vmul.f32 %v9446, %v8069
    %v9809 = vmul.f32 %v9449, %v8069
    %v9810 = vmul.f32 %v9452, %v8069
    %v9811 = vmul.f32 %v9455, %v8069
    %v9812 = vmul.f32 %v9458, %v8069
    %v9813 = vmul.f32 %v9461, %v8069
    %v9814 = vmul.f32 %v9464, %v8069
    %v9815 = vmul.f32 %v9467, %v8069
    %v9816 = vmul.f32 %v9470, %v8069
    %v9817 = vmul.f32 %v9473, %v8069
    %v9818 = vmul.f32 %v9476, %v8069
    %v9819 = vmul.f32 %v9479, %v8069
    %v9820 = vmul.f32 %v9482, %v8069
    %v9821 = vmul.f32 %v9485, %v8069
    %v9822 = vmul.f32 %v9488, %v8069
    %v9823 = vmul.f32 %v9491, %v8069
    %v9824 = vmul.f32 %v9494, %v8069
    %v9825 = vmul.f32 %v9497, %v8069
    %v9826 = vmul.f32 %v9500, %v8069
    %v9827 = vmul.f32 %v9503, %v8069
    %v9828 = vmul.f32 %v9506, %v8069
    %v9829 = vmul.f32 %v9509, %v8069
    %v9830 = vmul.f32 %v9512, %v8069
    %v9831 = vmul.f32 %v9515, %v8069
    %v9832 = vmul.f32 %v9518, %v8069
    %v9833 = vmul.f32 %v9521, %v8069
    %v9834 = vmul.f32 %v9524, %v8069
    %v9835 = vmul.f32 %v9527, %v8069
    %v9836 = vmul.f32 %v9530, %v8069
    %v9837 = vmul.f32 %v9533, %v8069
    %v9838 = vmul.f32 %v9536, %v8069
    %v9839 = vmul.f32 %v9539, %v8069
    %v9840 = vmul.f32 %v9542, %v8069
    %v9841 = vmul.f32 %v9545, %v8069
    %v9842 = vmul.f32 %v9548, %v8069
    %v9843 = vmul.f32 %v9551, %v8069
    %v9844 = vmul.f32 %v9554, %v8069
    %v9845 = vmul.f32 %v9557, %v8069
    %v9846 = vmul.f32 %v9560, %v8069
    %v9847 = vmul.f32 %v9563, %v8069
    %v9848 = vmul.f32 %v9566, %v8069
    %v9849 = vmul.f32 %v9569, %v8069
    %v9850 = vmul.f32 %v9572, %v8069
    %v9851 = vmul.f32 %v9575, %v8069
    %v9852 = vmul.f32 %v9578, %v8069
    %v9853 = vmul.f32 %v9581, %v8069
    %v9854 = vmul.f32 %v9584, %v8069
    %v9855 = vmul.f32 %v9587, %v8069
    %v9856 = vmul.f32 %v9590, %v8069
    %v9857 = vmul.f32 %v9593, %v8069
    %v9858 = vmul.f32 %v9596, %v8069
    %v9859 = vmul.f32 %v9599, %v8069
    %v9860 = vmul.f32 %v9602, %v8069
    %v9861 = vmul.f32 %v9605, %v8069
    %v9862 = vadd.f32 %v9606, 1e-05
    %v9863 = vadd.f32 %v9607, 1e-05
    %v9864 = vadd.f32 %v9608, 1e-05
    %v9865 = vadd.f32 %v9609, 1e-05
    %v9866 = vadd.f32 %v9610, 1e-05
    %v9867 = vadd.f32 %v9611, 1e-05
    %v9868 = vadd.f32 %v9612, 1e-05
    %v9869 = vadd.f32 %v9613, 1e-05
    %v9870 = vadd.f32 %v9614, 1e-05
    %v9871 = vadd.f32 %v9615, 1e-05
    %v9872 = vadd.f32 %v9616, 1e-05
    %v9873 = vadd.f32 %v9617, 1e-05
    %v9874 = vadd.f32 %v9618, 1e-05
    %v9875 = vadd.f32 %v9619, 1e-05
    %v9876 = vadd.f32 %v9620, 1e-05
    %v9877 = vadd.f32 %v9621, 1e-05
    %v9878 = vadd.f32 %v9622, 1e-05
    %v9879 = vadd.f32 %v9623, 1e-05
    %v9880 = vadd.f32 %v9624, 1e-05
    %v9881 = vadd.f32 %v9625, 1e-05
    %v9882 = vadd.f32 %v9626, 1e-05
    %v9883 = vadd.f32 %v9627, 1e-05
    %v9884 = vadd.f32 %v9628, 1e-05
    %v9885 = vadd.f32 %v9629, 1e-05
    %v9886 = vadd.f32 %v9630, 1e-05
    %v9887 = vadd.f32 %v9631, 1e-05
    %v9888 = vadd.f32 %v9632, 1e-05
    %v9889 = vadd.f32 %v9633, 1e-05
    %v9890 = vadd.f32 %v9634, 1e-05
    %v9891 = vadd.f32 %v9635, 1e-05
    %v9892 = vadd.f32 %v9636, 1e-05
    %v9893 = vadd.f32 %v9637, 1e-05
    %v9894 = vadd.f32 %v9638, 1e-05
    %v9895 = vadd.f32 %v9639, 1e-05
    %v9896 = vadd.f32 %v9640, 1e-05
    %v9897 = vadd.f32 %v9641, 1e-05
    %v9898 = vadd.f32 %v9642, 1e-05
    %v9899 = vadd.f32 %v9643, 1e-05
    %v9900 = vadd.f32 %v9644, 1e-05
    %v9901 = vadd.f32 %v9645, 1e-05
    %v9902 = vadd.f32 %v9646, 1e-05
    %v9903 = vadd.f32 %v9647, 1e-05
    %v9904 = vadd.f32 %v9648, 1e-05
    %v9905 = vadd.f32 %v9649, 1e-05
    %v9906 = vadd.f32 %v9650, 1e-05
    %v9907 = vadd.f32 %v9651, 1e-05
    %v9908 = vadd.f32 %v9652, 1e-05
    %v9909 = vadd.f32 %v9653, 1e-05
    %v9910 = vadd.f32 %v9654, 1e-05
    %v9911 = vadd.f32 %v9655, 1e-05
    %v9912 = vadd.f32 %v9656, 1e-05
    %v9913 = vadd.f32 %v9657, 1e-05
    %v9914 = vadd.f32 %v9658, 1e-05
    %v9915 = vadd.f32 %v9659, 1e-05
    %v9916 = vadd.f32 %v9660, 1e-05
    %v9917 = vadd.f32 %v9661, 1e-05
    %v9918 = vadd.f32 %v9662, 1e-05
    %v9919 = vadd.f32 %v9663, 1e-05
    %v9920 = vadd.f32 %v9664, 1e-05
    %v9921 = vadd.f32 %v9665, 1e-05
    %v9922 = vadd.f32 %v9666, 1e-05
    %v9923 = vadd.f32 %v9667, 1e-05
    %v9924 = vadd.f32 %v9668, 1e-05
    %v9925 = vadd.f32 %v9669, 1e-05
    %v9926 = vadd.f32 %v9670, 1e-05
    %v9927 = vadd.f32 %v9671, 1e-05
    %v9928 = vadd.f32 %v9672, 1e-05
    %v9929 = vadd.f32 %v9673, 1e-05
    %v9930 = vadd.f32 %v9674, 1e-05
    %v9931 = vadd.f32 %v9675, 1e-05
    %v9932 = vadd.f32 %v9676, 1e-05
    %v9933 = vadd.f32 %v9677, 1e-05
    %v9934 = vadd.f32 %v9678, 1e-05
    %v9935 = vadd.f32 %v9679, 1e-05
    %v9936 = vadd.f32 %v9680, 1e-05
    %v9937 = vadd.f32 %v9681, 1e-05
    %v9938 = vadd.f32 %v9682, 1e-05
    %v9939 = vadd.f32 %v9683, 1e-05
    %v9940 = vadd.f32 %v9684, 1e-05
    %v9941 = vadd.f32 %v9685, 1e-05
    %v9942 = vadd.f32 %v9686, 1e-05
    %v9943 = vadd.f32 %v9687, 1e-05
    %v9944 = vadd.f32 %v9688, 1e-05
    %v9945 = vadd.f32 %v9689, 1e-05
    %v9946 = vadd.f32 %v9690, 1e-05
    %v9947 = vadd.f32 %v9691, 1e-05
    %v9948 = vadd.f32 %v9692, 1e-05
    %v9949 = vadd.f32 %v9693, 1e-05
    %v9950 = vadd.f32 %v9694, 1e-05
    %v9951 = vadd.f32 %v9695, 1e-05
    %v9952 = vadd.f32 %v9696, 1e-05
    %v9953 = vadd.f32 %v9697, 1e-05
    %v9954 = vadd.f32 %v9698, 1e-05
    %v9955 = vadd.f32 %v9699, 1e-05
    %v9956 = vadd.f32 %v9700, 1e-05
    %v9957 = vadd.f32 %v9701, 1e-05
    %v9958 = vadd.f32 %v9702, 1e-05
    %v9959 = vadd.f32 %v9703, 1e-05
    %v9960 = vadd.f32 %v9704, 1e-05
    %v9961 = vadd.f32 %v9705, 1e-05
    %v9962 = vadd.f32 %v9706, 1e-05
    %v9963 = vadd.f32 %v9707, 1e-05
    %v9964 = vadd.f32 %v9708, 1e-05
    %v9965 = vadd.f32 %v9709, 1e-05
    %v9966 = vadd.f32 %v9710, 1e-05
    %v9967 = vadd.f32 %v9711, 1e-05
    %v9968 = vadd.f32 %v9712, 1e-05
    %v9969 = vadd.f32 %v9713, 1e-05
    %v9970 = vadd.f32 %v9714, 1e-05
    %v9971 = vadd.f32 %v9715, 1e-05
    %v9972 = vadd.f32 %v9716, 1e-05
    %v9973 = vadd.f32 %v9717, 1e-05
    %v9974 = vadd.f32 %v9718, 1e-05
    %v9975 = vadd.f32 %v9719, 1e-05
    %v9976 = vadd.f32 %v9720, 1e-05
    %v9977 = vadd.f32 %v9721, 1e-05
    %v9978 = vadd.f32 %v9722, 1e-05
    %v9979 = vadd.f32 %v9723, 1e-05
    %v9980 = vadd.f32 %v9724, 1e-05
    %v9981 = vadd.f32 %v9725, 1e-05
    %v9982 = vadd.f32 %v9726, 1e-05
    %v9983 = vadd.f32 %v9727, 1e-05
    %v9984 = vadd.f32 %v9728, 1e-05
    %v9985 = vadd.f32 %v9729, 1e-05
    %v9986 = vadd.f32 %v9730, 1e-05
    %v9987 = vadd.f32 %v9731, 1e-05
    %v9988 = vadd.f32 %v9732, 1e-05
    %v9989 = vadd.f32 %v9733, 1e-05
    %v9990 = vadd.f32 %v9734, 1e-05
    %v9991 = vadd.f32 %v9735, 1e-05
    %v9992 = vadd.f32 %v9736, 1e-05
    %v9993 = vadd.f32 %v9737, 1e-05
    %v9994 = vadd.f32 %v9738, 1e-05
    %v9995 = vadd.f32 %v9739, 1e-05
    %v9996 = vadd.f32 %v9740, 1e-05
    %v9997 = vadd.f32 %v9741, 1e-05
    %v9998 = vadd.f32 %v9742, 1e-05
    %v9999 = vadd.f32 %v9743, 1e-05
    %v10000 = vadd.f32 %v9744, 1e-05
    %v10001 = vadd.f32 %v9745, 1e-05
    %v10002 = vadd.f32 %v9746, 1e-05
    %v10003 = vadd.f32 %v9747, 1e-05
    %v10004 = vadd.f32 %v9748, 1e-05
    %v10005 = vadd.f32 %v9749, 1e-05
    %v10006 = vadd.f32 %v9750, 1e-05
    %v10007 = vadd.f32 %v9751, 1e-05
    %v10008 = vadd.f32 %v9752, 1e-05
    %v10009 = vadd.f32 %v9753, 1e-05
    %v10010 = vadd.f32 %v9754, 1e-05
    %v10011 = vadd.f32 %v9755, 1e-05
    %v10012 = vadd.f32 %v9756, 1e-05
    %v10013 = vadd.f32 %v9757, 1e-05
    %v10014 = vadd.f32 %v9758, 1e-05
    %v10015 = vadd.f32 %v9759, 1e-05
    %v10016 = vadd.f32 %v9760, 1e-05
    %v10017 = vadd.f32 %v9761, 1e-05
    %v10018 = vadd.f32 %v9762, 1e-05
    %v10019 = vadd.f32 %v9763, 1e-05
    %v10020 = vadd.f32 %v9764, 1e-05
    %v10021 = vadd.f32 %v9765, 1e-05
    %v10022 = vadd.f32 %v9766, 1e-05
    %v10023 = vadd.f32 %v9767, 1e-05
    %v10024 = vadd.f32 %v9768, 1e-05
    %v10025 = vadd.f32 %v9769, 1e-05
    %v10026 = vadd.f32 %v9770, 1e-05
    %v10027 = vadd.f32 %v9771, 1e-05
    %v10028 = vadd.f32 %v9772, 1e-05
    %v10029 = vadd.f32 %v9773, 1e-05
    %v10030 = vadd.f32 %v9774, 1e-05
    %v10031 = vadd.f32 %v9775, 1e-05
    %v10032 = vadd.f32 %v9776, 1e-05
    %v10033 = vadd.f32 %v9777, 1e-05
    %v10034 = vadd.f32 %v9778, 1e-05
    %v10035 = vadd.f32 %v9779, 1e-05
    %v10036 = vadd.f32 %v9780, 1e-05
    %v10037 = vadd.f32 %v9781, 1e-05
    %v10038 = vadd.f32 %v9782, 1e-05
    %v10039 = vadd.f32 %v9783, 1e-05
    %v10040 = vadd.f32 %v9784, 1e-05
    %v10041 = vadd.f32 %v9785, 1e-05
    %v10042 = vadd.f32 %v9786, 1e-05
    %v10043 = vadd.f32 %v9787, 1e-05
    %v10044 = vadd.f32 %v9788, 1e-05
    %v10045 = vadd.f32 %v9789, 1e-05
    %v10046 = vadd.f32 %v9790, 1e-05
    %v10047 = vadd.f32 %v9791, 1e-05
    %v10048 = vadd.f32 %v9792, 1e-05
    %v10049 = vadd.f32 %v9793, 1e-05
    %v10050 = vadd.f32 %v9794, 1e-05
    %v10051 = vadd.f32 %v9795, 1e-05
    %v10052 = vadd.f32 %v9796, 1e-05
    %v10053 = vadd.f32 %v9797, 1e-05
    %v10054 = vadd.f32 %v9798, 1e-05
    %v10055 = vadd.f32 %v9799, 1e-05
    %v10056 = vadd.f32 %v9800, 1e-05
    %v10057 = vadd.f32 %v9801, 1e-05
    %v10058 = vadd.f32 %v9802, 1e-05
    %v10059 = vadd.f32 %v9803, 1e-05
    %v10060 = vadd.f32 %v9804, 1e-05
    %v10061 = vadd.f32 %v9805, 1e-05
    %v10062 = vadd.f32 %v9806, 1e-05
    %v10063 = vadd.f32 %v9807, 1e-05
    %v10064 = vadd.f32 %v9808, 1e-05
    %v10065 = vadd.f32 %v9809, 1e-05
    %v10066 = vadd.f32 %v9810, 1e-05
    %v10067 = vadd.f32 %v9811, 1e-05
    %v10068 = vadd.f32 %v9812, 1e-05
    %v10069 = vadd.f32 %v9813, 1e-05
    %v10070 = vadd.f32 %v9814, 1e-05
    %v10071 = vadd.f32 %v9815, 1e-05
    %v10072 = vadd.f32 %v9816, 1e-05
    %v10073 = vadd.f32 %v9817, 1e-05
    %v10074 = vadd.f32 %v9818, 1e-05
    %v10075 = vadd.f32 %v9819, 1e-05
    %v10076 = vadd.f32 %v9820, 1e-05
    %v10077 = vadd.f32 %v9821, 1e-05
    %v10078 = vadd.f32 %v9822, 1e-05
    %v10079 = vadd.f32 %v9823, 1e-05
    %v10080 = vadd.f32 %v9824, 1e-05
    %v10081 = vadd.f32 %v9825, 1e-05
    %v10082 = vadd.f32 %v9826, 1e-05
    %v10083 = vadd.f32 %v9827, 1e-05
    %v10084 = vadd.f32 %v9828, 1e-05
    %v10085 = vadd.f32 %v9829, 1e-05
    %v10086 = vadd.f32 %v9830, 1e-05
    %v10087 = vadd.f32 %v9831, 1e-05
    %v10088 = vadd.f32 %v9832, 1e-05
    %v10089 = vadd.f32 %v9833, 1e-05
    %v10090 = vadd.f32 %v9834, 1e-05
    %v10091 = vadd.f32 %v9835, 1e-05
    %v10092 = vadd.f32 %v9836, 1e-05
    %v10093 = vadd.f32 %v9837, 1e-05
    %v10094 = vadd.f32 %v9838, 1e-05
    %v10095 = vadd.f32 %v9839, 1e-05
    %v10096 = vadd.f32 %v9840, 1e-05
    %v10097 = vadd.f32 %v9841, 1e-05
    %v10098 = vadd.f32 %v9842, 1e-05
    %v10099 = vadd.f32 %v9843, 1e-05
    %v10100 = vadd.f32 %v9844, 1e-05
    %v10101 = vadd.f32 %v9845, 1e-05
    %v10102 = vadd.f32 %v9846, 1e-05
    %v10103 = vadd.f32 %v9847, 1e-05
    %v10104 = vadd.f32 %v9848, 1e-05
    %v10105 = vadd.f32 %v9849, 1e-05
    %v10106 = vadd.f32 %v9850, 1e-05
    %v10107 = vadd.f32 %v9851, 1e-05
    %v10108 = vadd.f32 %v9852, 1e-05
    %v10109 = vadd.f32 %v9853, 1e-05
    %v10110 = vadd.f32 %v9854, 1e-05
    %v10111 = vadd.f32 %v9855, 1e-05
    %v10112 = vadd.f32 %v9856, 1e-05
    %v10113 = vadd.f32 %v9857, 1e-05
    %v10114 = vadd.f32 %v9858, 1e-05
    %v10115 = vadd.f32 %v9859, 1e-05
    %v10116 = vadd.f32 %v9860, 1e-05
    %v10117 = vadd.f32 %v9861, 1e-05
    %v10118 = vrsqrt.pop %v9862
    %v10119 = vrsqrt.pop %v9863
    %v10120 = vrsqrt.pop %v9864
    %v10121 = vrsqrt.pop %v9865
    %v10122 = vrsqrt.pop %v9866
    %v10123 = vrsqrt.pop %v9867
    %v10124 = vrsqrt.pop %v9868
    %v10125 = vrsqrt.pop %v9869
    %v10126 = vrsqrt.pop %v9870
    %v10127 = vrsqrt.pop %v9871
    %v10128 = vrsqrt.pop %v9872
    %v10129 = vrsqrt.pop %v9873
    %v10130 = vrsqrt.pop %v9874
    %v10131 = vrsqrt.pop %v9875
    %v10132 = vrsqrt.pop %v9876
    %v10133 = vrsqrt.pop %v9877
    %v10134 = vrsqrt.pop %v9878
    %v10135 = vrsqrt.pop %v9879
    %v10136 = vrsqrt.pop %v9880
    %v10137 = vrsqrt.pop %v9881
    %v10138 = vrsqrt.pop %v9882
    %v10139 = vrsqrt.pop %v9883
    %v10140 = vrsqrt.pop %v9884
    %v10141 = vrsqrt.pop %v9885
    %v10142 = vrsqrt.pop %v9886
    %v10143 = vrsqrt.pop %v9887
    %v10144 = vrsqrt.pop %v9888
    %v10145 = vrsqrt.pop %v9889
    %v10146 = vrsqrt.pop %v9890
    %v10147 = vrsqrt.pop %v9891
    %v10148 = vrsqrt.pop %v9892
    %v10149 = vrsqrt.pop %v9893
    %v10150 = vrsqrt.pop %v9894
    %v10151 = vrsqrt.pop %v9895
    %v10152 = vrsqrt.pop %v9896
    %v10153 = vrsqrt.pop %v9897
    %v10154 = vrsqrt.pop %v9898
    %v10155 = vrsqrt.pop %v9899
    %v10156 = vrsqrt.pop %v9900
    %v10157 = vrsqrt.pop %v9901
    %v10158 = vrsqrt.pop %v9902
    %v10159 = vrsqrt.pop %v9903
    %v10160 = vrsqrt.pop %v9904
    %v10161 = vrsqrt.pop %v9905
    %v10162 = vrsqrt.pop %v9906
    %v10163 = vrsqrt.pop %v9907
    %v10164 = vrsqrt.pop %v9908
    %v10165 = vrsqrt.pop %v9909
    %v10166 = vrsqrt.pop %v9910
    %v10167 = vrsqrt.pop %v9911
    %v10168 = vrsqrt.pop %v9912
    %v10169 = vrsqrt.pop %v9913
    %v10170 = vrsqrt.pop %v9914
    %v10171 = vrsqrt.pop %v9915
    %v10172 = vrsqrt.pop %v9916
    %v10173 = vrsqrt.pop %v9917
    %v10174 = vrsqrt.pop %v9918
    %v10175 = vrsqrt.pop %v9919
    %v10176 = vrsqrt.pop %v9920
    %v10177 = vrsqrt.pop %v9921
    %v10178 = vrsqrt.pop %v9922
    %v10179 = vrsqrt.pop %v9923
    %v10180 = vrsqrt.pop %v9924
    %v10181 = vrsqrt.pop %v9925
    %v10182 = vrsqrt.pop %v9926
    %v10183 = vrsqrt.pop %v9927
    %v10184 = vrsqrt.pop %v9928
    %v10185 = vrsqrt.pop %v9929
    %v10186 = vrsqrt.pop %v9930
    %v10187 = vrsqrt.pop %v9931
    %v10188 = vrsqrt.pop %v9932
    %v10189 = vrsqrt.pop %v9933
    %v10190 = vrsqrt.pop %v9934
    %v10191 = vrsqrt.pop %v9935
    %v10192 = vrsqrt.pop %v9936
    %v10193 = vrsqrt.pop %v9937
    %v10194 = vrsqrt.pop %v9938
    %v10195 = vrsqrt.pop %v9939
    %v10196 = vrsqrt.pop %v9940
    %v10197 = vrsqrt.pop %v9941
    %v10198 = vrsqrt.pop %v9942
    %v10199 = vrsqrt.pop %v9943
    %v10200 = vrsqrt.pop %v9944
    %v10201 = vrsqrt.pop %v9945
    %v10202 = vrsqrt.pop %v9946
    %v10203 = vrsqrt.pop %v9947
    %v10204 = vrsqrt.pop %v9948
    %v10205 = vrsqrt.pop %v9949
    %v10206 = vrsqrt.pop %v9950
    %v10207 = vrsqrt.pop %v9951
    %v10208 = vrsqrt.pop %v9952
    %v10209 = vrsqrt.pop %v9953
    %v10210 = vrsqrt.pop %v9954
    %v10211 = vrsqrt.pop %v9955
    %v10212 = vrsqrt.pop %v9956
    %v10213 = vrsqrt.pop %v9957
    %v10214 = vrsqrt.pop %v9958
    %v10215 = vrsqrt.pop %v9959
    %v10216 = vrsqrt.pop %v9960
    %v10217 = vrsqrt.pop %v9961
    %v10218 = vrsqrt.pop %v9962
    %v10219 = vrsqrt.pop %v9963
    %v10220 = vrsqrt.pop %v9964
    %v10221 = vrsqrt.pop %v9965
    %v10222 = vrsqrt.pop %v9966
    %v10223 = vrsqrt.pop %v9967
    %v10224 = vrsqrt.pop %v9968
    %v10225 = vrsqrt.pop %v9969
    %v10226 = vrsqrt.pop %v9970
    %v10227 = vrsqrt.pop %v9971
    %v10228 = vrsqrt.pop %v9972
    %v10229 = vrsqrt.pop %v9973
    %v10230 = vrsqrt.pop %v9974
    %v10231 = vrsqrt.pop %v9975
    %v10232 = vrsqrt.pop %v9976
    %v10233 = vrsqrt.pop %v9977
    %v10234 = vrsqrt.pop %v9978
    %v10235 = vrsqrt.pop %v9979
    %v10236 = vrsqrt.pop %v9980
    %v10237 = vrsqrt.pop %v9981
    %v10238 = vrsqrt.pop %v9982
    %v10239 = vrsqrt.pop %v9983
    %v10240 = vrsqrt.pop %v9984
    %v10241 = vrsqrt.pop %v9985
    %v10242 = vrsqrt.pop %v9986
    %v10243 = vrsqrt.pop %v9987
    %v10244 = vrsqrt.pop %v9988
    %v10245 = vrsqrt.pop %v9989
    %v10246 = vrsqrt.pop %v9990
    %v10247 = vrsqrt.pop %v9991
    %v10248 = vrsqrt.pop %v9992
    %v10249 = vrsqrt.pop %v9993
    %v10250 = vrsqrt.pop %v9994
    %v10251 = vrsqrt.pop %v9995
    %v10252 = vrsqrt.pop %v9996
    %v10253 = vrsqrt.pop %v9997
    %v10254 = vrsqrt.pop %v9998
    %v10255 = vrsqrt.pop %v9999
    %v10256 = vrsqrt.pop %v10000
    %v10257 = vrsqrt.pop %v10001
    %v10258 = vrsqrt.pop %v10002
    %v10259 = vrsqrt.pop %v10003
    %v10260 = vrsqrt.pop %v10004
    %v10261 = vrsqrt.pop %v10005
    %v10262 = vrsqrt.pop %v10006
    %v10263 = vrsqrt.pop %v10007
    %v10264 = vrsqrt.pop %v10008
    %v10265 = vrsqrt.pop %v10009
    %v10266 = vrsqrt.pop %v10010
    %v10267 = vrsqrt.pop %v10011
    %v10268 = vrsqrt.pop %v10012
    %v10269 = vrsqrt.pop %v10013
    %v10270 = vrsqrt.pop %v10014
    %v10271 = vrsqrt.pop %v10015
    %v10272 = vrsqrt.pop %v10016
    %v10273 = vrsqrt.pop %v10017
    %v10274 = vrsqrt.pop %v10018
    %v10275 = vrsqrt.pop %v10019
    %v10276 = vrsqrt.pop %v10020
    %v10277 = vrsqrt.pop %v10021
    %v10278 = vrsqrt.pop %v10022
    %v10279 = vrsqrt.pop %v10023
    %v10280 = vrsqrt.pop %v10024
    %v10281 = vrsqrt.pop %v10025
    %v10282 = vrsqrt.pop %v10026
    %v10283 = vrsqrt.pop %v10027
    %v10284 = vrsqrt.pop %v10028
    %v10285 = vrsqrt.pop %v10029
    %v10286 = vrsqrt.pop %v10030
    %v10287 = vrsqrt.pop %v10031
    %v10288 = vrsqrt.pop %v10032
    %v10289 = vrsqrt.pop %v10033
    %v10290 = vrsqrt.pop %v10034
    %v10291 = vrsqrt.pop %v10035
    %v10292 = vrsqrt.pop %v10036
    %v10293 = vrsqrt.pop %v10037
    %v10294 = vrsqrt.pop %v10038
    %v10295 = vrsqrt.pop %v10039
    %v10296 = vrsqrt.pop %v10040
    %v10297 = vrsqrt.pop %v10041
    %v10298 = vrsqrt.pop %v10042
    %v10299 = vrsqrt.pop %v10043
    %v10300 = vrsqrt.pop %v10044
    %v10301 = vrsqrt.pop %v10045
    %v10302 = vrsqrt.pop %v10046
    %v10303 = vrsqrt.pop %v10047
    %v10304 = vrsqrt.pop %v10048
    %v10305 = vrsqrt.pop %v10049
    %v10306 = vrsqrt.pop %v10050
    %v10307 = vrsqrt.pop %v10051
    %v10308 = vrsqrt.pop %v10052
    %v10309 = vrsqrt.pop %v10053
    %v10310 = vrsqrt.pop %v10054
    %v10311 = vrsqrt.pop %v10055
    %v10312 = vrsqrt.pop %v10056
    %v10313 = vrsqrt.pop %v10057
    %v10314 = vrsqrt.pop %v10058
    %v10315 = vrsqrt.pop %v10059
    %v10316 = vrsqrt.pop %v10060
    %v10317 = vrsqrt.pop %v10061
    %v10318 = vrsqrt.pop %v10062
    %v10319 = vrsqrt.pop %v10063
    %v10320 = vrsqrt.pop %v10064
    %v10321 = vrsqrt.pop %v10065
    %v10322 = vrsqrt.pop %v10066
    %v10323 = vrsqrt.pop %v10067
    %v10324 = vrsqrt.pop %v10068
    %v10325 = vrsqrt.pop %v10069
    %v10326 = vrsqrt.pop %v10070
    %v10327 = vrsqrt.pop %v10071
    %v10328 = vrsqrt.pop %v10072
    %v10329 = vrsqrt.pop %v10073
    %v10330 = vrsqrt.pop %v10074
    %v10331 = vrsqrt.pop %v10075
    %v10332 = vrsqrt.pop %v10076
    %v10333 = vrsqrt.pop %v10077
    %v10334 = vrsqrt.pop %v10078
    %v10335 = vrsqrt.pop %v10079
    %v10336 = vrsqrt.pop %v10080
    %v10337 = vrsqrt.pop %v10081
    %v10338 = vrsqrt.pop %v10082
    %v10339 = vrsqrt.pop %v10083
    %v10340 = vrsqrt.pop %v10084
    %v10341 = vrsqrt.pop %v10085
    %v10342 = vrsqrt.pop %v10086
    %v10343 = vrsqrt.pop %v10087
    %v10344 = vrsqrt.pop %v10088
    %v10345 = vrsqrt.pop %v10089
    %v10346 = vrsqrt.pop %v10090
    %v10347 = vrsqrt.pop %v10091
    %v10348 = vrsqrt.pop %v10092
    %v10349 = vrsqrt.pop %v10093
    %v10350 = vrsqrt.pop %v10094
    %v10351 = vrsqrt.pop %v10095
    %v10352 = vrsqrt.pop %v10096
    %v10353 = vrsqrt.pop %v10097
    %v10354 = vrsqrt.pop %v10098
    %v10355 = vrsqrt.pop %v10099
    %v10356 = vrsqrt.pop %v10100
    %v10357 = vrsqrt.pop %v10101
    %v10358 = vrsqrt.pop %v10102
    %v10359 = vrsqrt.pop %v10103
    %v10360 = vrsqrt.pop %v10104
    %v10361 = vrsqrt.pop %v10105
    %v10362 = vrsqrt.pop %v10106
    %v10363 = vrsqrt.pop %v10107
    %v10364 = vrsqrt.pop %v10108
    %v10365 = vrsqrt.pop %v10109
    %v10366 = vrsqrt.pop %v10110
    %v10367 = vrsqrt.pop %v10111
    %v10368 = vrsqrt.pop %v10112
    %v10369 = vrsqrt.pop %v10113
    %v10370 = vrsqrt.pop %v10114
    %v10371 = vrsqrt.pop %v10115
    %v10372 = vrsqrt.pop %v10116
    %v10373 = vrsqrt.pop %v10117
    %v10374 = vmul.f32 %v8326, %v10118
    %v10375 = vmul.f32 %v8327, %v10119
    %v10376 = vmul.f32 %v8328, %v10120
    %v10377 = vmul.f32 %v8329, %v10121
    %v10378 = vmul.f32 %v8330, %v10122
    %v10379 = vmul.f32 %v8331, %v10123
    %v10380 = vmul.f32 %v8332, %v10124
    %v10381 = vmul.f32 %v8333, %v10125
    %v10382 = vmul.f32 %v8334, %v10126
    %v10383 = vmul.f32 %v8335, %v10127
    %v10384 = vmul.f32 %v8336, %v10128
    %v10385 = vmul.f32 %v8337, %v10129
    %v10386 = vmul.f32 %v8338, %v10130
    %v10387 = vmul.f32 %v8339, %v10131
    %v10388 = vmul.f32 %v8340, %v10132
    %v10389 = vmul.f32 %v8341, %v10133
    %v10390 = vmul.f32 %v8342, %v10134
    %v10391 = vmul.f32 %v8343, %v10135
    %v10392 = vmul.f32 %v8344, %v10136
    %v10393 = vmul.f32 %v8345, %v10137
    %v10394 = vmul.f32 %v8346, %v10138
    %v10395 = vmul.f32 %v8347, %v10139
    %v10396 = vmul.f32 %v8348, %v10140
    %v10397 = vmul.f32 %v8349, %v10141
    %v10398 = vmul.f32 %v8350, %v10142
    %v10399 = vmul.f32 %v8351, %v10143
    %v10400 = vmul.f32 %v8352, %v10144
    %v10401 = vmul.f32 %v8353, %v10145
    %v10402 = vmul.f32 %v8354, %v10146
    %v10403 = vmul.f32 %v8355, %v10147
    %v10404 = vmul.f32 %v8356, %v10148
    %v10405 = vmul.f32 %v8357, %v10149
    %v10406 = vmul.f32 %v8358, %v10150
    %v10407 = vmul.f32 %v8359, %v10151
    %v10408 = vmul.f32 %v8360, %v10152
    %v10409 = vmul.f32 %v8361, %v10153
    %v10410 = vmul.f32 %v8362, %v10154
    %v10411 = vmul.f32 %v8363, %v10155
    %v10412 = vmul.f32 %v8364, %v10156
    %v10413 = vmul.f32 %v8365, %v10157
    %v10414 = vmul.f32 %v8366, %v10158
    %v10415 = vmul.f32 %v8367, %v10159
    %v10416 = vmul.f32 %v8368, %v10160
    %v10417 = vmul.f32 %v8369, %v10161
    %v10418 = vmul.f32 %v8370, %v10162
    %v10419 = vmul.f32 %v8371, %v10163
    %v10420 = vmul.f32 %v8372, %v10164
    %v10421 = vmul.f32 %v8373, %v10165
    %v10422 = vmul.f32 %v8374, %v10166
    %v10423 = vmul.f32 %v8375, %v10167
    %v10424 = vmul.f32 %v8376, %v10168
    %v10425 = vmul.f32 %v8377, %v10169
    %v10426 = vmul.f32 %v8378, %v10170
    %v10427 = vmul.f32 %v8379, %v10171
    %v10428 = vmul.f32 %v8380, %v10172
    %v10429 = vmul.f32 %v8381, %v10173
    %v10430 = vmul.f32 %v8382, %v10174
    %v10431 = vmul.f32 %v8383, %v10175
    %v10432 = vmul.f32 %v8384, %v10176
    %v10433 = vmul.f32 %v8385, %v10177
    %v10434 = vmul.f32 %v8386, %v10178
    %v10435 = vmul.f32 %v8387, %v10179
    %v10436 = vmul.f32 %v8388, %v10180
    %v10437 = vmul.f32 %v8389, %v10181
    %v10438 = vmul.f32 %v8390, %v10182
    %v10439 = vmul.f32 %v8391, %v10183
    %v10440 = vmul.f32 %v8392, %v10184
    %v10441 = vmul.f32 %v8393, %v10185
    %v10442 = vmul.f32 %v8394, %v10186
    %v10443 = vmul.f32 %v8395, %v10187
    %v10444 = vmul.f32 %v8396, %v10188
    %v10445 = vmul.f32 %v8397, %v10189
    %v10446 = vmul.f32 %v8398, %v10190
    %v10447 = vmul.f32 %v8399, %v10191
    %v10448 = vmul.f32 %v8400, %v10192
    %v10449 = vmul.f32 %v8401, %v10193
    %v10450 = vmul.f32 %v8402, %v10194
    %v10451 = vmul.f32 %v8403, %v10195
    %v10452 = vmul.f32 %v8404, %v10196
    %v10453 = vmul.f32 %v8405, %v10197
    %v10454 = vmul.f32 %v8406, %v10198
    %v10455 = vmul.f32 %v8407, %v10199
    %v10456 = vmul.f32 %v8408, %v10200
    %v10457 = vmul.f32 %v8409, %v10201
    %v10458 = vmul.f32 %v8410, %v10202
    %v10459 = vmul.f32 %v8411, %v10203
    %v10460 = vmul.f32 %v8412, %v10204
    %v10461 = vmul.f32 %v8413, %v10205
    %v10462 = vmul.f32 %v8414, %v10206
    %v10463 = vmul.f32 %v8415, %v10207
    %v10464 = vmul.f32 %v8416, %v10208
    %v10465 = vmul.f32 %v8417, %v10209
    %v10466 = vmul.f32 %v8418, %v10210
    %v10467 = vmul.f32 %v8419, %v10211
    %v10468 = vmul.f32 %v8420, %v10212
    %v10469 = vmul.f32 %v8421, %v10213
    %v10470 = vmul.f32 %v8422, %v10214
    %v10471 = vmul.f32 %v8423, %v10215
    %v10472 = vmul.f32 %v8424, %v10216
    %v10473 = vmul.f32 %v8425, %v10217
    %v10474 = vmul.f32 %v8426, %v10218
    %v10475 = vmul.f32 %v8427, %v10219
    %v10476 = vmul.f32 %v8428, %v10220
    %v10477 = vmul.f32 %v8429, %v10221
    %v10478 = vmul.f32 %v8430, %v10222
    %v10479 = vmul.f32 %v8431, %v10223
    %v10480 = vmul.f32 %v8432, %v10224
    %v10481 = vmul.f32 %v8433, %v10225
    %v10482 = vmul.f32 %v8434, %v10226
    %v10483 = vmul.f32 %v8435, %v10227
    %v10484 = vmul.f32 %v8436, %v10228
    %v10485 = vmul.f32 %v8437, %v10229
    %v10486 = vmul.f32 %v8438, %v10230
    %v10487 = vmul.f32 %v8439, %v10231
    %v10488 = vmul.f32 %v8440, %v10232
    %v10489 = vmul.f32 %v8441, %v10233
    %v10490 = vmul.f32 %v8442, %v10234
    %v10491 = vmul.f32 %v8443, %v10235
    %v10492 = vmul.f32 %v8444, %v10236
    %v10493 = vmul.f32 %v8445, %v10237
    %v10494 = vmul.f32 %v8446, %v10238
    %v10495 = vmul.f32 %v8447, %v10239
    %v10496 = vmul.f32 %v8448, %v10240
    %v10497 = vmul.f32 %v8449, %v10241
    %v10498 = vmul.f32 %v8450, %v10242
    %v10499 = vmul.f32 %v8451, %v10243
    %v10500 = vmul.f32 %v8452, %v10244
    %v10501 = vmul.f32 %v8453, %v10245
    %v10502 = vmul.f32 %v8454, %v10246
    %v10503 = vmul.f32 %v8455, %v10247
    %v10504 = vmul.f32 %v8456, %v10248
    %v10505 = vmul.f32 %v8457, %v10249
    %v10506 = vmul.f32 %v8458, %v10250
    %v10507 = vmul.f32 %v8459, %v10251
    %v10508 = vmul.f32 %v8460, %v10252
    %v10509 = vmul.f32 %v8461, %v10253
    %v10510 = vmul.f32 %v8462, %v10254
    %v10511 = vmul.f32 %v8463, %v10255
    %v10512 = vmul.f32 %v8464, %v10256
    %v10513 = vmul.f32 %v8465, %v10257
    %v10514 = vmul.f32 %v8466, %v10258
    %v10515 = vmul.f32 %v8467, %v10259
    %v10516 = vmul.f32 %v8468, %v10260
    %v10517 = vmul.f32 %v8469, %v10261
    %v10518 = vmul.f32 %v8470, %v10262
    %v10519 = vmul.f32 %v8471, %v10263
    %v10520 = vmul.f32 %v8472, %v10264
    %v10521 = vmul.f32 %v8473, %v10265
    %v10522 = vmul.f32 %v8474, %v10266
    %v10523 = vmul.f32 %v8475, %v10267
    %v10524 = vmul.f32 %v8476, %v10268
    %v10525 = vmul.f32 %v8477, %v10269
    %v10526 = vmul.f32 %v8478, %v10270
    %v10527 = vmul.f32 %v8479, %v10271
    %v10528 = vmul.f32 %v8480, %v10272
    %v10529 = vmul.f32 %v8481, %v10273
    %v10530 = vmul.f32 %v8482, %v10274
    %v10531 = vmul.f32 %v8483, %v10275
    %v10532 = vmul.f32 %v8484, %v10276
    %v10533 = vmul.f32 %v8485, %v10277
    %v10534 = vmul.f32 %v8486, %v10278
    %v10535 = vmul.f32 %v8487, %v10279
    %v10536 = vmul.f32 %v8488, %v10280
    %v10537 = vmul.f32 %v8489, %v10281
    %v10538 = vmul.f32 %v8490, %v10282
    %v10539 = vmul.f32 %v8491, %v10283
    %v10540 = vmul.f32 %v8492, %v10284
    %v10541 = vmul.f32 %v8493, %v10285
    %v10542 = vmul.f32 %v8494, %v10286
    %v10543 = vmul.f32 %v8495, %v10287
    %v10544 = vmul.f32 %v8496, %v10288
    %v10545 = vmul.f32 %v8497, %v10289
    %v10546 = vmul.f32 %v8498, %v10290
    %v10547 = vmul.f32 %v8499, %v10291
    %v10548 = vmul.f32 %v8500, %v10292
    %v10549 = vmul.f32 %v8501, %v10293
    %v10550 = vmul.f32 %v8502, %v10294
    %v10551 = vmul.f32 %v8503, %v10295
    %v10552 = vmul.f32 %v8504, %v10296
    %v10553 = vmul.f32 %v8505, %v10297
    %v10554 = vmul.f32 %v8506, %v10298
    %v10555 = vmul.f32 %v8507, %v10299
    %v10556 = vmul.f32 %v8508, %v10300
    %v10557 = vmul.f32 %v8509, %v10301
    %v10558 = vmul.f32 %v8510, %v10302
    %v10559 = vmul.f32 %v8511, %v10303
    %v10560 = vmul.f32 %v8512, %v10304
    %v10561 = vmul.f32 %v8513, %v10305
    %v10562 = vmul.f32 %v8514, %v10306
    %v10563 = vmul.f32 %v8515, %v10307
    %v10564 = vmul.f32 %v8516, %v10308
    %v10565 = vmul.f32 %v8517, %v10309
    %v10566 = vmul.f32 %v8518, %v10310
    %v10567 = vmul.f32 %v8519, %v10311
    %v10568 = vmul.f32 %v8520, %v10312
    %v10569 = vmul.f32 %v8521, %v10313
    %v10570 = vmul.f32 %v8522, %v10314
    %v10571 = vmul.f32 %v8523, %v10315
    %v10572 = vmul.f32 %v8524, %v10316
    %v10573 = vmul.f32 %v8525, %v10317
    %v10574 = vmul.f32 %v8526, %v10318
    %v10575 = vmul.f32 %v8527, %v10319
    %v10576 = vmul.f32 %v8528, %v10320
    %v10577 = vmul.f32 %v8529, %v10321
    %v10578 = vmul.f32 %v8530, %v10322
    %v10579 = vmul.f32 %v8531, %v10323
    %v10580 = vmul.f32 %v8532, %v10324
    %v10581 = vmul.f32 %v8533, %v10325
    %v10582 = vmul.f32 %v8534, %v10326
    %v10583 = vmul.f32 %v8535, %v10327
    %v10584 = vmul.f32 %v8536, %v10328
    %v10585 = vmul.f32 %v8537, %v10329
    %v10586 = vmul.f32 %v8538, %v10330
    %v10587 = vmul.f32 %v8539, %v10331
    %v10588 = vmul.f32 %v8540, %v10332
    %v10589 = vmul.f32 %v8541, %v10333
    %v10590 = vmul.f32 %v8542, %v10334
    %v10591 = vmul.f32 %v8543, %v10335
    %v10592 = vmul.f32 %v8544, %v10336
    %v10593 = vmul.f32 %v8545, %v10337
    %v10594 = vmul.f32 %v8546, %v10338
    %v10595 = vmul.f32 %v8547, %v10339
    %v10596 = vmul.f32 %v8548, %v10340
    %v10597 = vmul.f32 %v8549, %v10341
    %v10598 = vmul.f32 %v8550, %v10342
    %v10599 = vmul.f32 %v8551, %v10343
    %v10600 = vmul.f32 %v8552, %v10344
    %v10601 = vmul.f32 %v8553, %v10345
    %v10602 = vmul.f32 %v8554, %v10346
    %v10603 = vmul.f32 %v8555, %v10347
    %v10604 = vmul.f32 %v8556, %v10348
    %v10605 = vmul.f32 %v8557, %v10349
    %v10606 = vmul.f32 %v8558, %v10350
    %v10607 = vmul.f32 %v8559, %v10351
    %v10608 = vmul.f32 %v8560, %v10352
    %v10609 = vmul.f32 %v8561, %v10353
    %v10610 = vmul.f32 %v8562, %v10354
    %v10611 = vmul.f32 %v8563, %v10355
    %v10612 = vmul.f32 %v8564, %v10356
    %v10613 = vmul.f32 %v8565, %v10357
    %v10614 = vmul.f32 %v8566, %v10358
    %v10615 = vmul.f32 %v8567, %v10359
    %v10616 = vmul.f32 %v8568, %v10360
    %v10617 = vmul.f32 %v8569, %v10361
    %v10618 = vmul.f32 %v8570, %v10362
    %v10619 = vmul.f32 %v8571, %v10363
    %v10620 = vmul.f32 %v8572, %v10364
    %v10621 = vmul.f32 %v8573, %v10365
    %v10622 = vmul.f32 %v8574, %v10366
    %v10623 = vmul.f32 %v8575, %v10367
    %v10624 = vmul.f32 %v8576, %v10368
    %v10625 = vmul.f32 %v8577, %v10369
    %v10626 = vmul.f32 %v8578, %v10370
    %v10627 = vmul.f32 %v8579, %v10371
    %v10628 = vmul.f32 %v8580, %v10372
    %v10629 = vmul.f32 %v8581, %v10373
    %v10630 = vlaneseq
    %v10631 = vshrl.u32 %v10630, 7
    %v10632 = vsub.s32 0, %v10631
    %v10633 = vrot.slane %v5172, %v10632
    %v10634 = vmul.f32 %v10374, %v10633
    %v10635 = vmul.f32 %v10375, %v10633
    %v10636 = vmul.f32 %v10376, %v10633
    %v10637 = vmul.f32 %v10377, %v10633
    %v10638 = vmul.f32 %v10378, %v10633
    %v10639 = vmul.f32 %v10379, %v10633
    %v10640 = vmul.f32 %v10380, %v10633
    %v10641 = vmul.f32 %v10381, %v10633
    %v10642 = vmul.f32 %v10382, %v10633
    %v10643 = vmul.f32 %v10383, %v10633
    %v10644 = vmul.f32 %v10384, %v10633
    %v10645 = vmul.f32 %v10385, %v10633
    %v10646 = vmul.f32 %v10386, %v10633
    %v10647 = vmul.f32 %v10387, %v10633
    %v10648 = vmul.f32 %v10388, %v10633
    %v10649 = vmul.f32 %v10389, %v10633
    %v10650 = vmul.f32 %v10390, %v10633
    %v10651 = vmul.f32 %v10391, %v10633
    %v10652 = vmul.f32 %v10392, %v10633
    %v10653 = vmul.f32 %v10393, %v10633
    %v10654 = vmul.f32 %v10394, %v10633
    %v10655 = vmul.f32 %v10395, %v10633
    %v10656 = vmul.f32 %v10396, %v10633
    %v10657 = vmul.f32 %v10397, %v10633
    %v10658 = vmul.f32 %v10398, %v10633
    %v10659 = vmul.f32 %v10399, %v10633
    %v10660 = vmul.f32 %v10400, %v10633
    %v10661 = vmul.f32 %v10401, %v10633
    %v10662 = vmul.f32 %v10402, %v10633
    %v10663 = vmul.f32 %v10403, %v10633
    %v10664 = vmul.f32 %v10404, %v10633
    %v10665 = vmul.f32 %v10405, %v10633
    %v10666 = vmul.f32 %v10406, %v10633
    %v10667 = vmul.f32 %v10407, %v10633
    %v10668 = vmul.f32 %v10408, %v10633
    %v10669 = vmul.f32 %v10409, %v10633
    %v10670 = vmul.f32 %v10410, %v10633
    %v10671 = vmul.f32 %v10411, %v10633
    %v10672 = vmul.f32 %v10412, %v10633
    %v10673 = vmul.f32 %v10413, %v10633
    %v10674 = vmul.f32 %v10414, %v10633
    %v10675 = vmul.f32 %v10415, %v10633
    %v10676 = vmul.f32 %v10416, %v10633
    %v10677 = vmul.f32 %v10417, %v10633
    %v10678 = vmul.f32 %v10418, %v10633
    %v10679 = vmul.f32 %v10419, %v10633
    %v10680 = vmul.f32 %v10420, %v10633
    %v10681 = vmul.f32 %v10421, %v10633
    %v10682 = vmul.f32 %v10422, %v10633
    %v10683 = vmul.f32 %v10423, %v10633
    %v10684 = vmul.f32 %v10424, %v10633
    %v10685 = vmul.f32 %v10425, %v10633
    %v10686 = vmul.f32 %v10426, %v10633
    %v10687 = vmul.f32 %v10427, %v10633
    %v10688 = vmul.f32 %v10428, %v10633
    %v10689 = vmul.f32 %v10429, %v10633
    %v10690 = vmul.f32 %v10430, %v10633
    %v10691 = vmul.f32 %v10431, %v10633
    %v10692 = vmul.f32 %v10432, %v10633
    %v10693 = vmul.f32 %v10433, %v10633
    %v10694 = vmul.f32 %v10434, %v10633
    %v10695 = vmul.f32 %v10435, %v10633
    %v10696 = vmul.f32 %v10436, %v10633
    %v10697 = vmul.f32 %v10437, %v10633
    %v10698 = vmul.f32 %v10438, %v10633
    %v10699 = vmul.f32 %v10439, %v10633
    %v10700 = vmul.f32 %v10440, %v10633
    %v10701 = vmul.f32 %v10441, %v10633
    %v10702 = vmul.f32 %v10442, %v10633
    %v10703 = vmul.f32 %v10443, %v10633
    %v10704 = vmul.f32 %v10444, %v10633
    %v10705 = vmul.f32 %v10445, %v10633
    %v10706 = vmul.f32 %v10446, %v10633
    %v10707 = vmul.f32 %v10447, %v10633
    %v10708 = vmul.f32 %v10448, %v10633
    %v10709 = vmul.f32 %v10449, %v10633
    %v10710 = vmul.f32 %v10450, %v10633
    %v10711 = vmul.f32 %v10451, %v10633
    %v10712 = vmul.f32 %v10452, %v10633
    %v10713 = vmul.f32 %v10453, %v10633
    %v10714 = vmul.f32 %v10454, %v10633
    %v10715 = vmul.f32 %v10455, %v10633
    %v10716 = vmul.f32 %v10456, %v10633
    %v10717 = vmul.f32 %v10457, %v10633
    %v10718 = vmul.f32 %v10458, %v10633
    %v10719 = vmul.f32 %v10459, %v10633
    %v10720 = vmul.f32 %v10460, %v10633
    %v10721 = vmul.f32 %v10461, %v10633
    %v10722 = vmul.f32 %v10462, %v10633
    %v10723 = vmul.f32 %v10463, %v10633
    %v10724 = vmul.f32 %v10464, %v10633
    %v10725 = vmul.f32 %v10465, %v10633
    %v10726 = vmul.f32 %v10466, %v10633
    %v10727 = vmul.f32 %v10467, %v10633
    %v10728 = vmul.f32 %v10468, %v10633
    %v10729 = vmul.f32 %v10469, %v10633
    %v10730 = vmul.f32 %v10470, %v10633
    %v10731 = vmul.f32 %v10471, %v10633
    %v10732 = vmul.f32 %v10472, %v10633
    %v10733 = vmul.f32 %v10473, %v10633
    %v10734 = vmul.f32 %v10474, %v10633
    %v10735 = vmul.f32 %v10475, %v10633
    %v10736 = vmul.f32 %v10476, %v10633
    %v10737 = vmul.f32 %v10477, %v10633
    %v10738 = vmul.f32 %v10478, %v10633
    %v10739 = vmul.f32 %v10479, %v10633
    %v10740 = vmul.f32 %v10480, %v10633
    %v10741 = vmul.f32 %v10481, %v10633
    %v10742 = vmul.f32 %v10482, %v10633
    %v10743 = vmul.f32 %v10483, %v10633
    %v10744 = vmul.f32 %v10484, %v10633
    %v10745 = vmul.f32 %v10485, %v10633
    %v10746 = vmul.f32 %v10486, %v10633
    %v10747 = vmul.f32 %v10487, %v10633
    %v10748 = vmul.f32 %v10488, %v10633
    %v10749 = vmul.f32 %v10489, %v10633
    %v10750 = vmul.f32 %v10490, %v10633
    %v10751 = vmul.f32 %v10491, %v10633
    %v10752 = vmul.f32 %v10492, %v10633
    %v10753 = vmul.f32 %v10493, %v10633
    %v10754 = vmul.f32 %v10494, %v10633
    %v10755 = vmul.f32 %v10495, %v10633
    %v10756 = vmul.f32 %v10496, %v10633
    %v10757 = vmul.f32 %v10497, %v10633
    %v10758 = vmul.f32 %v10498, %v10633
    %v10759 = vmul.f32 %v10499, %v10633
    %v10760 = vmul.f32 %v10500, %v10633
    %v10761 = vmul.f32 %v10501, %v10633
    %v10762 = vmul.f32 %v10502, %v10633
    %v10763 = vmul.f32 %v10503, %v10633
    %v10764 = vmul.f32 %v10504, %v10633
    %v10765 = vmul.f32 %v10505, %v10633
    %v10766 = vmul.f32 %v10506, %v10633
    %v10767 = vmul.f32 %v10507, %v10633
    %v10768 = vmul.f32 %v10508, %v10633
    %v10769 = vmul.f32 %v10509, %v10633
    %v10770 = vmul.f32 %v10510, %v10633
    %v10771 = vmul.f32 %v10511, %v10633
    %v10772 = vmul.f32 %v10512, %v10633
    %v10773 = vmul.f32 %v10513, %v10633
    %v10774 = vmul.f32 %v10514, %v10633
    %v10775 = vmul.f32 %v10515, %v10633
    %v10776 = vmul.f32 %v10516, %v10633
    %v10777 = vmul.f32 %v10517, %v10633
    %v10778 = vmul.f32 %v10518, %v10633
    %v10779 = vmul.f32 %v10519, %v10633
    %v10780 = vmul.f32 %v10520, %v10633
    %v10781 = vmul.f32 %v10521, %v10633
    %v10782 = vmul.f32 %v10522, %v10633
    %v10783 = vmul.f32 %v10523, %v10633
    %v10784 = vmul.f32 %v10524, %v10633
    %v10785 = vmul.f32 %v10525, %v10633
    %v10786 = vmul.f32 %v10526, %v10633
    %v10787 = vmul.f32 %v10527, %v10633
    %v10788 = vmul.f32 %v10528, %v10633
    %v10789 = vmul.f32 %v10529, %v10633
    %v10790 = vmul.f32 %v10530, %v10633
    %v10791 = vmul.f32 %v10531, %v10633
    %v10792 = vmul.f32 %v10532, %v10633
    %v10793 = vmul.f32 %v10533, %v10633
    %v10794 = vmul.f32 %v10534, %v10633
    %v10795 = vmul.f32 %v10535, %v10633
    %v10796 = vmul.f32 %v10536, %v10633
    %v10797 = vmul.f32 %v10537, %v10633
    %v10798 = vmul.f32 %v10538, %v10633
    %v10799 = vmul.f32 %v10539, %v10633
    %v10800 = vmul.f32 %v10540, %v10633
    %v10801 = vmul.f32 %v10541, %v10633
    %v10802 = vmul.f32 %v10542, %v10633
    %v10803 = vmul.f32 %v10543, %v10633
    %v10804 = vmul.f32 %v10544, %v10633
    %v10805 = vmul.f32 %v10545, %v10633
    %v10806 = vmul.f32 %v10546, %v10633
    %v10807 = vmul.f32 %v10547, %v10633
    %v10808 = vmul.f32 %v10548, %v10633
    %v10809 = vmul.f32 %v10549, %v10633
    %v10810 = vmul.f32 %v10550, %v10633
    %v10811 = vmul.f32 %v10551, %v10633
    %v10812 = vmul.f32 %v10552, %v10633
    %v10813 = vmul.f32 %v10553, %v10633
    %v10814 = vmul.f32 %v10554, %v10633
    %v10815 = vmul.f32 %v10555, %v10633
    %v10816 = vmul.f32 %v10556, %v10633
    %v10817 = vmul.f32 %v10557, %v10633
    %v10818 = vmul.f32 %v10558, %v10633
    %v10819 = vmul.f32 %v10559, %v10633
    %v10820 = vmul.f32 %v10560, %v10633
    %v10821 = vmul.f32 %v10561, %v10633
    %v10822 = vmul.f32 %v10562, %v10633
    %v10823 = vmul.f32 %v10563, %v10633
    %v10824 = vmul.f32 %v10564, %v10633
    %v10825 = vmul.f32 %v10565, %v10633
    %v10826 = vmul.f32 %v10566, %v10633
    %v10827 = vmul.f32 %v10567, %v10633
    %v10828 = vmul.f32 %v10568, %v10633
    %v10829 = vmul.f32 %v10569, %v10633
    %v10830 = vmul.f32 %v10570, %v10633
    %v10831 = vmul.f32 %v10571, %v10633
    %v10832 = vmul.f32 %v10572, %v10633
    %v10833 = vmul.f32 %v10573, %v10633
    %v10834 = vmul.f32 %v10574, %v10633
    %v10835 = vmul.f32 %v10575, %v10633
    %v10836 = vmul.f32 %v10576, %v10633
    %v10837 = vmul.f32 %v10577, %v10633
    %v10838 = vmul.f32 %v10578, %v10633
    %v10839 = vmul.f32 %v10579, %v10633
    %v10840 = vmul.f32 %v10580, %v10633
    %v10841 = vmul.f32 %v10581, %v10633
    %v10842 = vmul.f32 %v10582, %v10633
    %v10843 = vmul.f32 %v10583, %v10633
    %v10844 = vmul.f32 %v10584, %v10633
    %v10845 = vmul.f32 %v10585, %v10633
    %v10846 = vmul.f32 %v10586, %v10633
    %v10847 = vmul.f32 %v10587, %v10633
    %v10848 = vmul.f32 %v10588, %v10633
    %v10849 = vmul.f32 %v10589, %v10633
    %v10850 = vmul.f32 %v10590, %v10633
    %v10851 = vmul.f32 %v10591, %v10633
    %v10852 = vmul.f32 %v10592, %v10633
    %v10853 = vmul.f32 %v10593, %v10633
    %v10854 = vmul.f32 %v10594, %v10633
    %v10855 = vmul.f32 %v10595, %v10633
    %v10856 = vmul.f32 %v10596, %v10633
    %v10857 = vmul.f32 %v10597, %v10633
    %v10858 = vmul.f32 %v10598, %v10633
    %v10859 = vmul.f32 %v10599, %v10633
    %v10860 = vmul.f32 %v10600, %v10633
    %v10861 = vmul.f32 %v10601, %v10633
    %v10862 = vmul.f32 %v10602, %v10633
    %v10863 = vmul.f32 %v10603, %v10633
    %v10864 = vmul.f32 %v10604, %v10633
    %v10865 = vmul.f32 %v10605, %v10633
    %v10866 = vmul.f32 %v10606, %v10633
    %v10867 = vmul.f32 %v10607, %v10633
    %v10868 = vmul.f32 %v10608, %v10633
    %v10869 = vmul.f32 %v10609, %v10633
    %v10870 = vmul.f32 %v10610, %v10633
    %v10871 = vmul.f32 %v10611, %v10633
    %v10872 = vmul.f32 %v10612, %v10633
    %v10873 = vmul.f32 %v10613, %v10633
    %v10874 = vmul.f32 %v10614, %v10633
    %v10875 = vmul.f32 %v10615, %v10633
    %v10876 = vmul.f32 %v10616, %v10633
    %v10877 = vmul.f32 %v10617, %v10633
    %v10878 = vmul.f32 %v10618, %v10633
    %v10879 = vmul.f32 %v10619, %v10633
    %v10880 = vmul.f32 %v10620, %v10633
    %v10881 = vmul.f32 %v10621, %v10633
    %v10882 = vmul.f32 %v10622, %v10633
    %v10883 = vmul.f32 %v10623, %v10633
    %v10884 = vmul.f32 %v10624, %v10633
    %v10885 = vmul.f32 %v10625, %v10633
    %v10886 = vmul.f32 %v10626, %v10633
    %v10887 = vmul.f32 %v10627, %v10633
    %v10888 = vmul.f32 %v10628, %v10633
    %v10889 = vmul.f32 %v10629, %v10633
    %v10890 = vlaneseq
    %v10891 = vshrl.u32 %v10890, 7
    %v10892 = vsub.s32 0, %v10891
    %v10893 = vrot.slane %v5173, %v10892
    %v10894 = vadd.f32 %v10634, %v10893
    %v10895 = vadd.f32 %v10635, %v10893
    %v10896 = vadd.f32 %v10636, %v10893
    %v10897 = vadd.f32 %v10637, %v10893
    %v10898 = vadd.f32 %v10638, %v10893
    %v10899 = vadd.f32 %v10639, %v10893
    %v10900 = vadd.f32 %v10640, %v10893
    %v10901 = vadd.f32 %v10641, %v10893
    %v10902 = vadd.f32 %v10642, %v10893
    %v10903 = vadd.f32 %v10643, %v10893
    %v10904 = vadd.f32 %v10644, %v10893
    %v10905 = vadd.f32 %v10645, %v10893
    %v10906 = vadd.f32 %v10646, %v10893
    %v10907 = vadd.f32 %v10647, %v10893
    %v10908 = vadd.f32 %v10648, %v10893
    %v10909 = vadd.f32 %v10649, %v10893
    %v10910 = vadd.f32 %v10650, %v10893
    %v10911 = vadd.f32 %v10651, %v10893
    %v10912 = vadd.f32 %v10652, %v10893
    %v10913 = vadd.f32 %v10653, %v10893
    %v10914 = vadd.f32 %v10654, %v10893
    %v10915 = vadd.f32 %v10655, %v10893
    %v10916 = vadd.f32 %v10656, %v10893
    %v10917 = vadd.f32 %v10657, %v10893
    %v10918 = vadd.f32 %v10658, %v10893
    %v10919 = vadd.f32 %v10659, %v10893
    %v10920 = vadd.f32 %v10660, %v10893
    %v10921 = vadd.f32 %v10661, %v10893
    %v10922 = vadd.f32 %v10662, %v10893
    %v10923 = vadd.f32 %v10663, %v10893
    %v10924 = vadd.f32 %v10664, %v10893
    %v10925 = vadd.f32 %v10665, %v10893
    %v10926 = vadd.f32 %v10666, %v10893
    %v10927 = vadd.f32 %v10667, %v10893
    %v10928 = vadd.f32 %v10668, %v10893
    %v10929 = vadd.f32 %v10669, %v10893
    %v10930 = vadd.f32 %v10670, %v10893
    %v10931 = vadd.f32 %v10671, %v10893
    %v10932 = vadd.f32 %v10672, %v10893
    %v10933 = vadd.f32 %v10673, %v10893
    %v10934 = vadd.f32 %v10674, %v10893
    %v10935 = vadd.f32 %v10675, %v10893
    %v10936 = vadd.f32 %v10676, %v10893
    %v10937 = vadd.f32 %v10677, %v10893
    %v10938 = vadd.f32 %v10678, %v10893
    %v10939 = vadd.f32 %v10679, %v10893
    %v10940 = vadd.f32 %v10680, %v10893
    %v10941 = vadd.f32 %v10681, %v10893
    %v10942 = vadd.f32 %v10682, %v10893
    %v10943 = vadd.f32 %v10683, %v10893
    %v10944 = vadd.f32 %v10684, %v10893
    %v10945 = vadd.f32 %v10685, %v10893
    %v10946 = vadd.f32 %v10686, %v10893
    %v10947 = vadd.f32 %v10687, %v10893
    %v10948 = vadd.f32 %v10688, %v10893
    %v10949 = vadd.f32 %v10689, %v10893
    %v10950 = vadd.f32 %v10690, %v10893
    %v10951 = vadd.f32 %v10691, %v10893
    %v10952 = vadd.f32 %v10692, %v10893
    %v10953 = vadd.f32 %v10693, %v10893
    %v10954 = vadd.f32 %v10694, %v10893
    %v10955 = vadd.f32 %v10695, %v10893
    %v10956 = vadd.f32 %v10696, %v10893
    %v10957 = vadd.f32 %v10697, %v10893
    %v10958 = vadd.f32 %v10698, %v10893
    %v10959 = vadd.f32 %v10699, %v10893
    %v10960 = vadd.f32 %v10700, %v10893
    %v10961 = vadd.f32 %v10701, %v10893
    %v10962 = vadd.f32 %v10702, %v10893
    %v10963 = vadd.f32 %v10703, %v10893
    %v10964 = vadd.f32 %v10704, %v10893
    %v10965 = vadd.f32 %v10705, %v10893
    %v10966 = vadd.f32 %v10706, %v10893
    %v10967 = vadd.f32 %v10707, %v10893
    %v10968 = vadd.f32 %v10708, %v10893
    %v10969 = vadd.f32 %v10709, %v10893
    %v10970 = vadd.f32 %v10710, %v10893
    %v10971 = vadd.f32 %v10711, %v10893
    %v10972 = vadd.f32 %v10712, %v10893
    %v10973 = vadd.f32 %v10713, %v10893
    %v10974 = vadd.f32 %v10714, %v10893
    %v10975 = vadd.f32 %v10715, %v10893
    %v10976 = vadd.f32 %v10716, %v10893
    %v10977 = vadd.f32 %v10717, %v10893
    %v10978 = vadd.f32 %v10718, %v10893
    %v10979 = vadd.f32 %v10719, %v10893
    %v10980 = vadd.f32 %v10720, %v10893
    %v10981 = vadd.f32 %v10721, %v10893
    %v10982 = vadd.f32 %v10722, %v10893
    %v10983 = vadd.f32 %v10723, %v10893
    %v10984 = vadd.f32 %v10724, %v10893
    %v10985 = vadd.f32 %v10725, %v10893
    %v10986 = vadd.f32 %v10726, %v10893
    %v10987 = vadd.f32 %v10727, %v10893
    %v10988 = vadd.f32 %v10728, %v10893
    %v10989 = vadd.f32 %v10729, %v10893
    %v10990 = vadd.f32 %v10730, %v10893
    %v10991 = vadd.f32 %v10731, %v10893
    %v10992 = vadd.f32 %v10732, %v10893
    %v10993 = vadd.f32 %v10733, %v10893
    %v10994 = vadd.f32 %v10734, %v10893
    %v10995 = vadd.f32 %v10735, %v10893
    %v10996 = vadd.f32 %v10736, %v10893
    %v10997 = vadd.f32 %v10737, %v10893
    %v10998 = vadd.f32 %v10738, %v10893
    %v10999 = vadd.f32 %v10739, %v10893
    %v11000 = vadd.f32 %v10740, %v10893
    %v11001 = vadd.f32 %v10741, %v10893
    %v11002 = vadd.f32 %v10742, %v10893
    %v11003 = vadd.f32 %v10743, %v10893
    %v11004 = vadd.f32 %v10744, %v10893
    %v11005 = vadd.f32 %v10745, %v10893
    %v11006 = vadd.f32 %v10746, %v10893
    %v11007 = vadd.f32 %v10747, %v10893
    %v11008 = vadd.f32 %v10748, %v10893
    %v11009 = vadd.f32 %v10749, %v10893
    %v11010 = vadd.f32 %v10750, %v10893
    %v11011 = vadd.f32 %v10751, %v10893
    %v11012 = vadd.f32 %v10752, %v10893
    %v11013 = vadd.f32 %v10753, %v10893
    %v11014 = vadd.f32 %v10754, %v10893
    %v11015 = vadd.f32 %v10755, %v10893
    %v11016 = vadd.f32 %v10756, %v10893
    %v11017 = vadd.f32 %v10757, %v10893
    %v11018 = vadd.f32 %v10758, %v10893
    %v11019 = vadd.f32 %v10759, %v10893
    %v11020 = vadd.f32 %v10760, %v10893
    %v11021 = vadd.f32 %v10761, %v10893
    %v11022 = vadd.f32 %v10762, %v10893
    %v11023 = vadd.f32 %v10763, %v10893
    %v11024 = vadd.f32 %v10764, %v10893
    %v11025 = vadd.f32 %v10765, %v10893
    %v11026 = vadd.f32 %v10766, %v10893
    %v11027 = vadd.f32 %v10767, %v10893
    %v11028 = vadd.f32 %v10768, %v10893
    %v11029 = vadd.f32 %v10769, %v10893
    %v11030 = vadd.f32 %v10770, %v10893
    %v11031 = vadd.f32 %v10771, %v10893
    %v11032 = vadd.f32 %v10772, %v10893
    %v11033 = vadd.f32 %v10773, %v10893
    %v11034 = vadd.f32 %v10774, %v10893
    %v11035 = vadd.f32 %v10775, %v10893
    %v11036 = vadd.f32 %v10776, %v10893
    %v11037 = vadd.f32 %v10777, %v10893
    %v11038 = vadd.f32 %v10778, %v10893
    %v11039 = vadd.f32 %v10779, %v10893
    %v11040 = vadd.f32 %v10780, %v10893
    %v11041 = vadd.f32 %v10781, %v10893
    %v11042 = vadd.f32 %v10782, %v10893
    %v11043 = vadd.f32 %v10783, %v10893
    %v11044 = vadd.f32 %v10784, %v10893
    %v11045 = vadd.f32 %v10785, %v10893
    %v11046 = vadd.f32 %v10786, %v10893
    %v11047 = vadd.f32 %v10787, %v10893
    %v11048 = vadd.f32 %v10788, %v10893
    %v11049 = vadd.f32 %v10789, %v10893
    %v11050 = vadd.f32 %v10790, %v10893
    %v11051 = vadd.f32 %v10791, %v10893
    %v11052 = vadd.f32 %v10792, %v10893
    %v11053 = vadd.f32 %v10793, %v10893
    %v11054 = vadd.f32 %v10794, %v10893
    %v11055 = vadd.f32 %v10795, %v10893
    %v11056 = vadd.f32 %v10796, %v10893
    %v11057 = vadd.f32 %v10797, %v10893
    %v11058 = vadd.f32 %v10798, %v10893
    %v11059 = vadd.f32 %v10799, %v10893
    %v11060 = vadd.f32 %v10800, %v10893
    %v11061 = vadd.f32 %v10801, %v10893
    %v11062 = vadd.f32 %v10802, %v10893
    %v11063 = vadd.f32 %v10803, %v10893
    %v11064 = vadd.f32 %v10804, %v10893
    %v11065 = vadd.f32 %v10805, %v10893
    %v11066 = vadd.f32 %v10806, %v10893
    %v11067 = vadd.f32 %v10807, %v10893
    %v11068 = vadd.f32 %v10808, %v10893
    %v11069 = vadd.f32 %v10809, %v10893
    %v11070 = vadd.f32 %v10810, %v10893
    %v11071 = vadd.f32 %v10811, %v10893
    %v11072 = vadd.f32 %v10812, %v10893
    %v11073 = vadd.f32 %v10813, %v10893
    %v11074 = vadd.f32 %v10814, %v10893
    %v11075 = vadd.f32 %v10815, %v10893
    %v11076 = vadd.f32 %v10816, %v10893
    %v11077 = vadd.f32 %v10817, %v10893
    %v11078 = vadd.f32 %v10818, %v10893
    %v11079 = vadd.f32 %v10819, %v10893
    %v11080 = vadd.f32 %v10820, %v10893
    %v11081 = vadd.f32 %v10821, %v10893
    %v11082 = vadd.f32 %v10822, %v10893
    %v11083 = vadd.f32 %v10823, %v10893
    %v11084 = vadd.f32 %v10824, %v10893
    %v11085 = vadd.f32 %v10825, %v10893
    %v11086 = vadd.f32 %v10826, %v10893
    %v11087 = vadd.f32 %v10827, %v10893
    %v11088 = vadd.f32 %v10828, %v10893
    %v11089 = vadd.f32 %v10829, %v10893
    %v11090 = vadd.f32 %v10830, %v10893
    %v11091 = vadd.f32 %v10831, %v10893
    %v11092 = vadd.f32 %v10832, %v10893
    %v11093 = vadd.f32 %v10833, %v10893
    %v11094 = vadd.f32 %v10834, %v10893
    %v11095 = vadd.f32 %v10835, %v10893
    %v11096 = vadd.f32 %v10836, %v10893
    %v11097 = vadd.f32 %v10837, %v10893
    %v11098 = vadd.f32 %v10838, %v10893
    %v11099 = vadd.f32 %v10839, %v10893
    %v11100 = vadd.f32 %v10840, %v10893
    %v11101 = vadd.f32 %v10841, %v10893
    %v11102 = vadd.f32 %v10842, %v10893
    %v11103 = vadd.f32 %v10843, %v10893
    %v11104 = vadd.f32 %v10844, %v10893
    %v11105 = vadd.f32 %v10845, %v10893
    %v11106 = vadd.f32 %v10846, %v10893
    %v11107 = vadd.f32 %v10847, %v10893
    %v11108 = vadd.f32 %v10848, %v10893
    %v11109 = vadd.f32 %v10849, %v10893
    %v11110 = vadd.f32 %v10850, %v10893
    %v11111 = vadd.f32 %v10851, %v10893
    %v11112 = vadd.f32 %v10852, %v10893
    %v11113 = vadd.f32 %v10853, %v10893
    %v11114 = vadd.f32 %v10854, %v10893
    %v11115 = vadd.f32 %v10855, %v10893
    %v11116 = vadd.f32 %v10856, %v10893
    %v11117 = vadd.f32 %v10857, %v10893
    %v11118 = vadd.f32 %v10858, %v10893
    %v11119 = vadd.f32 %v10859, %v10893
    %v11120 = vadd.f32 %v10860, %v10893
    %v11121 = vadd.f32 %v10861, %v10893
    %v11122 = vadd.f32 %v10862, %v10893
    %v11123 = vadd.f32 %v10863, %v10893
    %v11124 = vadd.f32 %v10864, %v10893
    %v11125 = vadd.f32 %v10865, %v10893
    %v11126 = vadd.f32 %v10866, %v10893
    %v11127 = vadd.f32 %v10867, %v10893
    %v11128 = vadd.f32 %v10868, %v10893
    %v11129 = vadd.f32 %v10869, %v10893
    %v11130 = vadd.f32 %v10870, %v10893
    %v11131 = vadd.f32 %v10871, %v10893
    %v11132 = vadd.f32 %v10872, %v10893
    %v11133 = vadd.f32 %v10873, %v10893
    %v11134 = vadd.f32 %v10874, %v10893
    %v11135 = vadd.f32 %v10875, %v10893
    %v11136 = vadd.f32 %v10876, %v10893
    %v11137 = vadd.f32 %v10877, %v10893
    %v11138 = vadd.f32 %v10878, %v10893
    %v11139 = vadd.f32 %v10879, %v10893
    %v11140 = vadd.f32 %v10880, %v10893
    %v11141 = vadd.f32 %v10881, %v10893
    %v11142 = vadd.f32 %v10882, %v10893
    %v11143 = vadd.f32 %v10883, %v10893
    %v11144 = vadd.f32 %v10884, %v10893
    %v11145 = vadd.f32 %v10885, %v10893
    %v11146 = vadd.f32 %v10886, %v10893
    %v11147 = vadd.f32 %v10887, %v10893
    %v11148 = vadd.f32 %v10888, %v10893
    %v11149 = vadd.f32 %v10889, %v10893
    %v11150 = vmax.f32 %v10894, 0.0
    %v11151 = vmax.f32 %v10895, 0.0
    %v11152 = vmax.f32 %v10896, 0.0
    %v11153 = vmax.f32 %v10897, 0.0
    %v11154 = vmax.f32 %v10898, 0.0
    %v11155 = vmax.f32 %v10899, 0.0
    %v11156 = vmax.f32 %v10900, 0.0
    %v11157 = vmax.f32 %v10901, 0.0
    %v11158 = vmax.f32 %v10902, 0.0
    %v11159 = vmax.f32 %v10903, 0.0
    %v11160 = vmax.f32 %v10904, 0.0
    %v11161 = vmax.f32 %v10905, 0.0
    %v11162 = vmax.f32 %v10906, 0.0
    %v11163 = vmax.f32 %v10907, 0.0
    %v11164 = vmax.f32 %v10908, 0.0
    %v11165 = vmax.f32 %v10909, 0.0
    %v11166 = vmax.f32 %v10910, 0.0
    %v11167 = vmax.f32 %v10911, 0.0
    %v11168 = vmax.f32 %v10912, 0.0
    %v11169 = vmax.f32 %v10913, 0.0
    %v11170 = vmax.f32 %v10914, 0.0
    %v11171 = vmax.f32 %v10915, 0.0
    %v11172 = vmax.f32 %v10916, 0.0
    %v11173 = vmax.f32 %v10917, 0.0
    %v11174 = vmax.f32 %v10918, 0.0
    %v11175 = vmax.f32 %v10919, 0.0
    %v11176 = vmax.f32 %v10920, 0.0
    %v11177 = vmax.f32 %v10921, 0.0
    %v11178 = vmax.f32 %v10922, 0.0
    %v11179 = vmax.f32 %v10923, 0.0
    %v11180 = vmax.f32 %v10924, 0.0
    %v11181 = vmax.f32 %v10925, 0.0
    %v11182 = vmax.f32 %v10926, 0.0
    %v11183 = vmax.f32 %v10927, 0.0
    %v11184 = vmax.f32 %v10928, 0.0
    %v11185 = vmax.f32 %v10929, 0.0
    %v11186 = vmax.f32 %v10930, 0.0
    %v11187 = vmax.f32 %v10931, 0.0
    %v11188 = vmax.f32 %v10932, 0.0
    %v11189 = vmax.f32 %v10933, 0.0
    %v11190 = vmax.f32 %v10934, 0.0
    %v11191 = vmax.f32 %v10935, 0.0
    %v11192 = vmax.f32 %v10936, 0.0
    %v11193 = vmax.f32 %v10937, 0.0
    %v11194 = vmax.f32 %v10938, 0.0
    %v11195 = vmax.f32 %v10939, 0.0
    %v11196 = vmax.f32 %v10940, 0.0
    %v11197 = vmax.f32 %v10941, 0.0
    %v11198 = vmax.f32 %v10942, 0.0
    %v11199 = vmax.f32 %v10943, 0.0
    %v11200 = vmax.f32 %v10944, 0.0
    %v11201 = vmax.f32 %v10945, 0.0
    %v11202 = vmax.f32 %v10946, 0.0
    %v11203 = vmax.f32 %v10947, 0.0
    %v11204 = vmax.f32 %v10948, 0.0
    %v11205 = vmax.f32 %v10949, 0.0
    %v11206 = vmax.f32 %v10950, 0.0
    %v11207 = vmax.f32 %v10951, 0.0
    %v11208 = vmax.f32 %v10952, 0.0
    %v11209 = vmax.f32 %v10953, 0.0
    %v11210 = vmax.f32 %v10954, 0.0
    %v11211 = vmax.f32 %v10955, 0.0
    %v11212 = vmax.f32 %v10956, 0.0
    %v11213 = vmax.f32 %v10957, 0.0
    %v11214 = vmax.f32 %v10958, 0.0
    %v11215 = vmax.f32 %v10959, 0.0
    %v11216 = vmax.f32 %v10960, 0.0
    %v11217 = vmax.f32 %v10961, 0.0
    %v11218 = vmax.f32 %v10962, 0.0
    %v11219 = vmax.f32 %v10963, 0.0
    %v11220 = vmax.f32 %v10964, 0.0
    %v11221 = vmax.f32 %v10965, 0.0
    %v11222 = vmax.f32 %v10966, 0.0
    %v11223 = vmax.f32 %v10967, 0.0
    %v11224 = vmax.f32 %v10968, 0.0
    %v11225 = vmax.f32 %v10969, 0.0
    %v11226 = vmax.f32 %v10970, 0.0
    %v11227 = vmax.f32 %v10971, 0.0
    %v11228 = vmax.f32 %v10972, 0.0
    %v11229 = vmax.f32 %v10973, 0.0
    %v11230 = vmax.f32 %v10974, 0.0
    %v11231 = vmax.f32 %v10975, 0.0
    %v11232 = vmax.f32 %v10976, 0.0
    %v11233 = vmax.f32 %v10977, 0.0
    %v11234 = vmax.f32 %v10978, 0.0
    %v11235 = vmax.f32 %v10979, 0.0
    %v11236 = vmax.f32 %v10980, 0.0
    %v11237 = vmax.f32 %v10981, 0.0
    %v11238 = vmax.f32 %v10982, 0.0
    %v11239 = vmax.f32 %v10983, 0.0
    %v11240 = vmax.f32 %v10984, 0.0
    %v11241 = vmax.f32 %v10985, 0.0
    %v11242 = vmax.f32 %v10986, 0.0
    %v11243 = vmax.f32 %v10987, 0.0
    %v11244 = vmax.f32 %v10988, 0.0
    %v11245 = vmax.f32 %v10989, 0.0
    %v11246 = vmax.f32 %v10990, 0.0
    %v11247 = vmax.f32 %v10991, 0.0
    %v11248 = vmax.f32 %v10992, 0.0
    %v11249 = vmax.f32 %v10993, 0.0
    %v11250 = vmax.f32 %v10994, 0.0
    %v11251 = vmax.f32 %v10995, 0.0
    %v11252 = vmax.f32 %v10996, 0.0
    %v11253 = vmax.f32 %v10997, 0.0
    %v11254 = vmax.f32 %v10998, 0.0
    %v11255 = vmax.f32 %v10999, 0.0
    %v11256 = vmax.f32 %v11000, 0.0
    %v11257 = vmax.f32 %v11001, 0.0
    %v11258 = vmax.f32 %v11002, 0.0
    %v11259 = vmax.f32 %v11003, 0.0
    %v11260 = vmax.f32 %v11004, 0.0
    %v11261 = vmax.f32 %v11005, 0.0
    %v11262 = vmax.f32 %v11006, 0.0
    %v11263 = vmax.f32 %v11007, 0.0
    %v11264 = vmax.f32 %v11008, 0.0
    %v11265 = vmax.f32 %v11009, 0.0
    %v11266 = vmax.f32 %v11010, 0.0
    %v11267 = vmax.f32 %v11011, 0.0
    %v11268 = vmax.f32 %v11012, 0.0
    %v11269 = vmax.f32 %v11013, 0.0
    %v11270 = vmax.f32 %v11014, 0.0
    %v11271 = vmax.f32 %v11015, 0.0
    %v11272 = vmax.f32 %v11016, 0.0
    %v11273 = vmax.f32 %v11017, 0.0
    %v11274 = vmax.f32 %v11018, 0.0
    %v11275 = vmax.f32 %v11019, 0.0
    %v11276 = vmax.f32 %v11020, 0.0
    %v11277 = vmax.f32 %v11021, 0.0
    %v11278 = vmax.f32 %v11022, 0.0
    %v11279 = vmax.f32 %v11023, 0.0
    %v11280 = vmax.f32 %v11024, 0.0
    %v11281 = vmax.f32 %v11025, 0.0
    %v11282 = vmax.f32 %v11026, 0.0
    %v11283 = vmax.f32 %v11027, 0.0
    %v11284 = vmax.f32 %v11028, 0.0
    %v11285 = vmax.f32 %v11029, 0.0
    %v11286 = vmax.f32 %v11030, 0.0
    %v11287 = vmax.f32 %v11031, 0.0
    %v11288 = vmax.f32 %v11032, 0.0
    %v11289 = vmax.f32 %v11033, 0.0
    %v11290 = vmax.f32 %v11034, 0.0
    %v11291 = vmax.f32 %v11035, 0.0
    %v11292 = vmax.f32 %v11036, 0.0
    %v11293 = vmax.f32 %v11037, 0.0
    %v11294 = vmax.f32 %v11038, 0.0
    %v11295 = vmax.f32 %v11039, 0.0
    %v11296 = vmax.f32 %v11040, 0.0
    %v11297 = vmax.f32 %v11041, 0.0
    %v11298 = vmax.f32 %v11042, 0.0
    %v11299 = vmax.f32 %v11043, 0.0
    %v11300 = vmax.f32 %v11044, 0.0
    %v11301 = vmax.f32 %v11045, 0.0
    %v11302 = vmax.f32 %v11046, 0.0
    %v11303 = vmax.f32 %v11047, 0.0
    %v11304 = vmax.f32 %v11048, 0.0
    %v11305 = vmax.f32 %v11049, 0.0
    %v11306 = vmax.f32 %v11050, 0.0
    %v11307 = vmax.f32 %v11051, 0.0
    %v11308 = vmax.f32 %v11052, 0.0
    %v11309 = vmax.f32 %v11053, 0.0
    %v11310 = vmax.f32 %v11054, 0.0
    %v11311 = vmax.f32 %v11055, 0.0
    %v11312 = vmax.f32 %v11056, 0.0
    %v11313 = vmax.f32 %v11057, 0.0
    %v11314 = vmax.f32 %v11058, 0.0
    %v11315 = vmax.f32 %v11059, 0.0
    %v11316 = vmax.f32 %v11060, 0.0
    %v11317 = vmax.f32 %v11061, 0.0
    %v11318 = vmax.f32 %v11062, 0.0
    %v11319 = vmax.f32 %v11063, 0.0
    %v11320 = vmax.f32 %v11064, 0.0
    %v11321 = vmax.f32 %v11065, 0.0
    %v11322 = vmax.f32 %v11066, 0.0
    %v11323 = vmax.f32 %v11067, 0.0
    %v11324 = vmax.f32 %v11068, 0.0
    %v11325 = vmax.f32 %v11069, 0.0
    %v11326 = vmax.f32 %v11070, 0.0
    %v11327 = vmax.f32 %v11071, 0.0
    %v11328 = vmax.f32 %v11072, 0.0
    %v11329 = vmax.f32 %v11073, 0.0
    %v11330 = vmax.f32 %v11074, 0.0
    %v11331 = vmax.f32 %v11075, 0.0
    %v11332 = vmax.f32 %v11076, 0.0
    %v11333 = vmax.f32 %v11077, 0.0
    %v11334 = vmax.f32 %v11078, 0.0
    %v11335 = vmax.f32 %v11079, 0.0
    %v11336 = vmax.f32 %v11080, 0.0
    %v11337 = vmax.f32 %v11081, 0.0
    %v11338 = vmax.f32 %v11082, 0.0
    %v11339 = vmax.f32 %v11083, 0.0
    %v11340 = vmax.f32 %v11084, 0.0
    %v11341 = vmax.f32 %v11085, 0.0
    %v11342 = vmax.f32 %v11086, 0.0
    %v11343 = vmax.f32 %v11087, 0.0
    %v11344 = vmax.f32 %v11088, 0.0
    %v11345 = vmax.f32 %v11089, 0.0
    %v11346 = vmax.f32 %v11090, 0.0
    %v11347 = vmax.f32 %v11091, 0.0
    %v11348 = vmax.f32 %v11092, 0.0
    %v11349 = vmax.f32 %v11093, 0.0
    %v11350 = vmax.f32 %v11094, 0.0
    %v11351 = vmax.f32 %v11095, 0.0
    %v11352 = vmax.f32 %v11096, 0.0
    %v11353 = vmax.f32 %v11097, 0.0
    %v11354 = vmax.f32 %v11098, 0.0
    %v11355 = vmax.f32 %v11099, 0.0
    %v11356 = vmax.f32 %v11100, 0.0
    %v11357 = vmax.f32 %v11101, 0.0
    %v11358 = vmax.f32 %v11102, 0.0
    %v11359 = vmax.f32 %v11103, 0.0
    %v11360 = vmax.f32 %v11104, 0.0
    %v11361 = vmax.f32 %v11105, 0.0
    %v11362 = vmax.f32 %v11106, 0.0
    %v11363 = vmax.f32 %v11107, 0.0
    %v11364 = vmax.f32 %v11108, 0.0
    %v11365 = vmax.f32 %v11109, 0.0
    %v11366 = vmax.f32 %v11110, 0.0
    %v11367 = vmax.f32 %v11111, 0.0
    %v11368 = vmax.f32 %v11112, 0.0
    %v11369 = vmax.f32 %v11113, 0.0
    %v11370 = vmax.f32 %v11114, 0.0
    %v11371 = vmax.f32 %v11115, 0.0
    %v11372 = vmax.f32 %v11116, 0.0
    %v11373 = vmax.f32 %v11117, 0.0
    %v11374 = vmax.f32 %v11118, 0.0
    %v11375 = vmax.f32 %v11119, 0.0
    %v11376 = vmax.f32 %v11120, 0.0
    %v11377 = vmax.f32 %v11121, 0.0
    %v11378 = vmax.f32 %v11122, 0.0
    %v11379 = vmax.f32 %v11123, 0.0
    %v11380 = vmax.f32 %v11124, 0.0
    %v11381 = vmax.f32 %v11125, 0.0
    %v11382 = vmax.f32 %v11126, 0.0
    %v11383 = vmax.f32 %v11127, 0.0
    %v11384 = vmax.f32 %v11128, 0.0
    %v11385 = vmax.f32 %v11129, 0.0
    %v11386 = vmax.f32 %v11130, 0.0
    %v11387 = vmax.f32 %v11131, 0.0
    %v11388 = vmax.f32 %v11132, 0.0
    %v11389 = vmax.f32 %v11133, 0.0
    %v11390 = vmax.f32 %v11134, 0.0
    %v11391 = vmax.f32 %v11135, 0.0
    %v11392 = vmax.f32 %v11136, 0.0
    %v11393 = vmax.f32 %v11137, 0.0
    %v11394 = vmax.f32 %v11138, 0.0
    %v11395 = vmax.f32 %v11139, 0.0
    %v11396 = vmax.f32 %v11140, 0.0
    %v11397 = vmax.f32 %v11141, 0.0
    %v11398 = vmax.f32 %v11142, 0.0
    %v11399 = vmax.f32 %v11143, 0.0
    %v11400 = vmax.f32 %v11144, 0.0
    %v11401 = vmax.f32 %v11145, 0.0
    %v11402 = vmax.f32 %v11146, 0.0
    %v11403 = vmax.f32 %v11147, 0.0
    %v11404 = vmax.f32 %v11148, 0.0
    %v11405 = vmax.f32 %v11149, 0.0
    %v11406 = vld [vmem:[#allocation2] sm:$0xff]
    %v11407 = vlaneseq
    %v11408 = vshrl.u32 %v11407, 7
    %v11409 = vsub.s32 0, %v11408
    %v11410 = vrot.slane %v50, %v11409
    %11412 = vbcast.lane.b32.xlu0 %v11410, 256
    %v11413 = vpop.permute.xlu0 %11412
    %s11415 = sor.u32 256, 8
    %11416 = vbcast.lane.b32.xlu0 %v11410, %s11415
    %v11417 = vpop.permute.xlu0 %11416
    %s11419 = sor.u32 256, 16
    %11420 = vbcast.lane.b32.xlu0 %v11410, %s11419
    %v11421 = vpop.permute.xlu0 %11420
    %s11423 = sor.u32 256, 24
    %11424 = vbcast.lane.b32.xlu0 %v11410, %s11423
    %v11425 = vpop.permute.xlu0 %11424
    %s11427 = sor.u32 256, 32
    %11428 = vbcast.lane.b32.xlu0 %v11410, %s11427
    %v11429 = vpop.permute.xlu0 %11428
    %s11431 = sor.u32 256, 40
    %11432 = vbcast.lane.b32.xlu0 %v11410, %s11431
    %v11433 = vpop.permute.xlu0 %11432
    %s11435 = sor.u32 256, 48
    %11436 = vbcast.lane.b32.xlu0 %v11410, %s11435
    %v11437 = vpop.permute.xlu0 %11436
    %s11439 = sor.u32 256, 56
    %11440 = vbcast.lane.b32.xlu0 %v11410, %s11439
    %v11441 = vpop.permute.xlu0 %11440
    %s11443 = sor.u32 256, 64
    %11444 = vbcast.lane.b32.xlu0 %v11410, %s11443
    %v11445 = vpop.permute.xlu0 %11444
    %s11447 = sor.u32 256, 72
    %11448 = vbcast.lane.b32.xlu0 %v11410, %s11447
    %v11449 = vpop.permute.xlu0 %11448
    %s11451 = sor.u32 256, 80
    %11452 = vbcast.lane.b32.xlu0 %v11410, %s11451
    %v11453 = vpop.permute.xlu0 %11452
    %s11455 = sor.u32 256, 88
    %11456 = vbcast.lane.b32.xlu0 %v11410, %s11455
    %v11457 = vpop.permute.xlu0 %11456
    %s11459 = sor.u32 256, 96
    %11460 = vbcast.lane.b32.xlu0 %v11410, %s11459
    %v11461 = vpop.permute.xlu0 %11460
    %s11463 = sor.u32 256, 104
    %11464 = vbcast.lane.b32.xlu0 %v11410, %s11463
    %v11465 = vpop.permute.xlu0 %11464
    %s11467 = sor.u32 256, 112
    %11468 = vbcast.lane.b32.xlu0 %v11410, %s11467
    %v11469 = vpop.permute.xlu0 %11468
    %s11471 = sor.u32 256, 120
    %11472 = vbcast.lane.b32.xlu0 %v11410, %s11471
    %v11473 = vpop.permute.xlu0 %11472
    %v11474 = vlaneseq
    %v11475 = vshrl.u32 %v11474, 7
    %v11476 = vsub.s32 0, %v11475
    %v11477 = vrot.slane %v51, %v11476
    %11479 = vbcast.lane.b32.xlu0 %v11477, 256
    %v11480 = vpop.permute.xlu0 %11479
    %s11482 = sor.u32 256, 8
    %11483 = vbcast.lane.b32.xlu0 %v11477, %s11482
    %v11484 = vpop.permute.xlu0 %11483
    %s11486 = sor.u32 256, 16
    %11487 = vbcast.lane.b32.xlu0 %v11477, %s11486
    %v11488 = vpop.permute.xlu0 %11487
    %s11490 = sor.u32 256, 24
    %11491 = vbcast.lane.b32.xlu0 %v11477, %s11490
    %v11492 = vpop.permute.xlu0 %11491
    %s11494 = sor.u32 256, 32
    %11495 = vbcast.lane.b32.xlu0 %v11477, %s11494
    %v11496 = vpop.permute.xlu0 %11495
    %s11498 = sor.u32 256, 40
    %11499 = vbcast.lane.b32.xlu0 %v11477, %s11498
    %v11500 = vpop.permute.xlu0 %11499
    %s11502 = sor.u32 256, 48
    %11503 = vbcast.lane.b32.xlu0 %v11477, %s11502
    %v11504 = vpop.permute.xlu0 %11503
    %s11506 = sor.u32 256, 56
    %11507 = vbcast.lane.b32.xlu0 %v11477, %s11506
    %v11508 = vpop.permute.xlu0 %11507
    %s11510 = sor.u32 256, 64
    %11511 = vbcast.lane.b32.xlu0 %v11477, %s11510
    %v11512 = vpop.permute.xlu0 %11511
    %s11514 = sor.u32 256, 72
    %11515 = vbcast.lane.b32.xlu0 %v11477, %s11514
    %v11516 = vpop.permute.xlu0 %11515
    %s11518 = sor.u32 256, 80
    %11519 = vbcast.lane.b32.xlu0 %v11477, %s11518
    %v11520 = vpop.permute.xlu0 %11519
    %s11522 = sor.u32 256, 88
    %11523 = vbcast.lane.b32.xlu0 %v11477, %s11522
    %v11524 = vpop.permute.xlu0 %11523
    %s11526 = sor.u32 256, 96
    %11527 = vbcast.lane.b32.xlu0 %v11477, %s11526
    %v11528 = vpop.permute.xlu0 %11527
    %s11530 = sor.u32 256, 104
    %11531 = vbcast.lane.b32.xlu0 %v11477, %s11530
    %v11532 = vpop.permute.xlu0 %11531
    %s11534 = sor.u32 256, 112
    %11535 = vbcast.lane.b32.xlu0 %v11477, %s11534
    %v11536 = vpop.permute.xlu0 %11535
    %s11538 = sor.u32 256, 120
    %11539 = vbcast.lane.b32.xlu0 %v11477, %s11538
    %v11540 = vpop.permute.xlu0 %11539
    %v11541 = vlaneseq
    %v11542 = vshrl.u32 %v11541, 7
    %v11543 = vsub.s32 1, %v11542
    %v11544 = vrot.slane %v50, %v11543
    %11546 = vbcast.lane.b32.xlu0 %v11544, 256
    %v11547 = vpop.permute.xlu0 %11546
    %s11549 = sor.u32 256, 8
    %11550 = vbcast.lane.b32.xlu0 %v11544, %s11549
    %v11551 = vpop.permute.xlu0 %11550
    %s11553 = sor.u32 256, 16
    %11554 = vbcast.lane.b32.xlu0 %v11544, %s11553
    %v11555 = vpop.permute.xlu0 %11554
    %s11557 = sor.u32 256, 24
    %11558 = vbcast.lane.b32.xlu0 %v11544, %s11557
    %v11559 = vpop.permute.xlu0 %11558
    %s11561 = sor.u32 256, 32
    %11562 = vbcast.lane.b32.xlu0 %v11544, %s11561
    %v11563 = vpop.permute.xlu0 %11562
    %s11565 = sor.u32 256, 40
    %11566 = vbcast.lane.b32.xlu0 %v11544, %s11565
    %v11567 = vpop.permute.xlu0 %11566
    %s11569 = sor.u32 256, 48
    %11570 = vbcast.lane.b32.xlu0 %v11544, %s11569
    %v11571 = vpop.permute.xlu0 %11570
    %s11573 = sor.u32 256, 56
    %11574 = vbcast.lane.b32.xlu0 %v11544, %s11573
    %v11575 = vpop.permute.xlu0 %11574
    %s11577 = sor.u32 256, 64
    %11578 = vbcast.lane.b32.xlu0 %v11544, %s11577
    %v11579 = vpop.permute.xlu0 %11578
    %s11581 = sor.u32 256, 72
    %11582 = vbcast.lane.b32.xlu0 %v11544, %s11581
    %v11583 = vpop.permute.xlu0 %11582
    %s11585 = sor.u32 256, 80
    %11586 = vbcast.lane.b32.xlu0 %v11544, %s11585
    %v11587 = vpop.permute.xlu0 %11586
    %s11589 = sor.u32 256, 88
    %11590 = vbcast.lane.b32.xlu0 %v11544, %s11589
    %v11591 = vpop.permute.xlu0 %11590
    %s11593 = sor.u32 256, 96
    %11594 = vbcast.lane.b32.xlu0 %v11544, %s11593
    %v11595 = vpop.permute.xlu0 %11594
    %s11597 = sor.u32 256, 104
    %11598 = vbcast.lane.b32.xlu0 %v11544, %s11597
    %v11599 = vpop.permute.xlu0 %11598
    %s11601 = sor.u32 256, 112
    %11602 = vbcast.lane.b32.xlu0 %v11544, %s11601
    %v11603 = vpop.permute.xlu0 %11602
    %s11605 = sor.u32 256, 120
    %11606 = vbcast.lane.b32.xlu0 %v11544, %s11605
    %v11607 = vpop.permute.xlu0 %11606
    %v11608 = vlaneseq
    %v11609 = vshrl.u32 %v11608, 7
    %v11610 = vsub.s32 1, %v11609
    %v11611 = vrot.slane %v51, %v11610
    %11613 = vbcast.lane.b32.xlu0 %v11611, 256
    %v11614 = vpop.permute.xlu0 %11613
    %s11616 = sor.u32 256, 8
    %11617 = vbcast.lane.b32.xlu0 %v11611, %s11616
    %v11618 = vpop.permute.xlu0 %11617
    %s11620 = sor.u32 256, 16
    %11621 = vbcast.lane.b32.xlu0 %v11611, %s11620
    %v11622 = vpop.permute.xlu0 %11621
    %s11624 = sor.u32 256, 24
    %11625 = vbcast.lane.b32.xlu0 %v11611, %s11624
    %v11626 = vpop.permute.xlu0 %11625
    %s11628 = sor.u32 256, 32
    %11629 = vbcast.lane.b32.xlu0 %v11611, %s11628
    %v11630 = vpop.permute.xlu0 %11629
    %s11632 = sor.u32 256, 40
    %11633 = vbcast.lane.b32.xlu0 %v11611, %s11632
    %v11634 = vpop.permute.xlu0 %11633
    %s11636 = sor.u32 256, 48
    %11637 = vbcast.lane.b32.xlu0 %v11611, %s11636
    %v11638 = vpop.permute.xlu0 %11637
    %s11640 = sor.u32 256, 56
    %11641 = vbcast.lane.b32.xlu0 %v11611, %s11640
    %v11642 = vpop.permute.xlu0 %11641
    %s11644 = sor.u32 256, 64
    %11645 = vbcast.lane.b32.xlu0 %v11611, %s11644
    %v11646 = vpop.permute.xlu0 %11645
    %s11648 = sor.u32 256, 72
    %11649 = vbcast.lane.b32.xlu0 %v11611, %s11648
    %v11650 = vpop.permute.xlu0 %11649
    %s11652 = sor.u32 256, 80
    %11653 = vbcast.lane.b32.xlu0 %v11611, %s11652
    %v11654 = vpop.permute.xlu0 %11653
    %s11656 = sor.u32 256, 88
    %11657 = vbcast.lane.b32.xlu0 %v11611, %s11656
    %v11658 = vpop.permute.xlu0 %11657
    %s11660 = sor.u32 256, 96
    %11661 = vbcast.lane.b32.xlu0 %v11611, %s11660
    %v11662 = vpop.permute.xlu0 %11661
    %s11664 = sor.u32 256, 104
    %11665 = vbcast.lane.b32.xlu0 %v11611, %s11664
    %v11666 = vpop.permute.xlu0 %11665
    %s11668 = sor.u32 256, 112
    %11669 = vbcast.lane.b32.xlu0 %v11611, %s11668
    %v11670 = vpop.permute.xlu0 %11669
    %s11672 = sor.u32 256, 120
    %11673 = vbcast.lane.b32.xlu0 %v11611, %s11672
    %v11674 = vpop.permute.xlu0 %11673
    %v11675 = vlaneseq
    %v11676 = vshrl.u32 %v11675, 7
    %v11677 = vsub.s32 2, %v11676
    %v11678 = vrot.slane %v50, %v11677
    %11680 = vbcast.lane.b32.xlu0 %v11678, 256
    %v11681 = vpop.permute.xlu0 %11680
    %s11683 = sor.u32 256, 8
    %11684 = vbcast.lane.b32.xlu0 %v11678, %s11683
    %v11685 = vpop.permute.xlu0 %11684
    %s11687 = sor.u32 256, 16
    %11688 = vbcast.lane.b32.xlu0 %v11678, %s11687
    %v11689 = vpop.permute.xlu0 %11688
    %s11691 = sor.u32 256, 24
    %11692 = vbcast.lane.b32.xlu0 %v11678, %s11691
    %v11693 = vpop.permute.xlu0 %11692
    %s11695 = sor.u32 256, 32
    %11696 = vbcast.lane.b32.xlu0 %v11678, %s11695
    %v11697 = vpop.permute.xlu0 %11696
    %s11699 = sor.u32 256, 40
    %11700 = vbcast.lane.b32.xlu0 %v11678, %s11699
    %v11701 = vpop.permute.xlu0 %11700
    %s11703 = sor.u32 256, 48
    %11704 = vbcast.lane.b32.xlu0 %v11678, %s11703
    %v11705 = vpop.permute.xlu0 %11704
    %s11707 = sor.u32 256, 56
    %11708 = vbcast.lane.b32.xlu0 %v11678, %s11707
    %v11709 = vpop.permute.xlu0 %11708
    %s11711 = sor.u32 256, 64
    %11712 = vbcast.lane.b32.xlu0 %v11678, %s11711
    %v11713 = vpop.permute.xlu0 %11712
    %s11715 = sor.u32 256, 72
    %11716 = vbcast.lane.b32.xlu0 %v11678, %s11715
    %v11717 = vpop.permute.xlu0 %11716
    %s11719 = sor.u32 256, 80
    %11720 = vbcast.lane.b32.xlu0 %v11678, %s11719
    %v11721 = vpop.permute.xlu0 %11720
    %s11723 = sor.u32 256, 88
    %11724 = vbcast.lane.b32.xlu0 %v11678, %s11723
    %v11725 = vpop.permute.xlu0 %11724
    %s11727 = sor.u32 256, 96
    %11728 = vbcast.lane.b32.xlu0 %v11678, %s11727
    %v11729 = vpop.permute.xlu0 %11728
    %s11731 = sor.u32 256, 104
    %11732 = vbcast.lane.b32.xlu0 %v11678, %s11731
    %v11733 = vpop.permute.xlu0 %11732
    %s11735 = sor.u32 256, 112
    %11736 = vbcast.lane.b32.xlu0 %v11678, %s11735
    %v11737 = vpop.permute.xlu0 %11736
    %s11739 = sor.u32 256, 120
    %11740 = vbcast.lane.b32.xlu0 %v11678, %s11739
    %v11741 = vpop.permute.xlu0 %11740
    %v11742 = vlaneseq
    %v11743 = vshrl.u32 %v11742, 7
    %v11744 = vsub.s32 2, %v11743
    %v11745 = vrot.slane %v51, %v11744
    %11747 = vbcast.lane.b32.xlu0 %v11745, 256
    %v11748 = vpop.permute.xlu0 %11747
    %s11750 = sor.u32 256, 8
    %11751 = vbcast.lane.b32.xlu0 %v11745, %s11750
    %v11752 = vpop.permute.xlu0 %11751
    %s11754 = sor.u32 256, 16
    %11755 = vbcast.lane.b32.xlu0 %v11745, %s11754
    %v11756 = vpop.permute.xlu0 %11755
    %s11758 = sor.u32 256, 24
    %11759 = vbcast.lane.b32.xlu0 %v11745, %s11758
    %v11760 = vpop.permute.xlu0 %11759
    %s11762 = sor.u32 256, 32
    %11763 = vbcast.lane.b32.xlu0 %v11745, %s11762
    %v11764 = vpop.permute.xlu0 %11763
    %s11766 = sor.u32 256, 40
    %11767 = vbcast.lane.b32.xlu0 %v11745, %s11766
    %v11768 = vpop.permute.xlu0 %11767
    %s11770 = sor.u32 256, 48
    %11771 = vbcast.lane.b32.xlu0 %v11745, %s11770
    %v11772 = vpop.permute.xlu0 %11771
    %s11774 = sor.u32 256, 56
    %11775 = vbcast.lane.b32.xlu0 %v11745, %s11774
    %v11776 = vpop.permute.xlu0 %11775
    %s11778 = sor.u32 256, 64
    %11779 = vbcast.lane.b32.xlu0 %v11745, %s11778
    %v11780 = vpop.permute.xlu0 %11779
    %s11782 = sor.u32 256, 72
    %11783 = vbcast.lane.b32.xlu0 %v11745, %s11782
    %v11784 = vpop.permute.xlu0 %11783
    %s11786 = sor.u32 256, 80
    %11787 = vbcast.lane.b32.xlu0 %v11745, %s11786
    %v11788 = vpop.permute.xlu0 %11787
    %s11790 = sor.u32 256, 88
    %11791 = vbcast.lane.b32.xlu0 %v11745, %s11790
    %v11792 = vpop.permute.xlu0 %11791
    %s11794 = sor.u32 256, 96
    %11795 = vbcast.lane.b32.xlu0 %v11745, %s11794
    %v11796 = vpop.permute.xlu0 %11795
    %s11798 = sor.u32 256, 104
    %11799 = vbcast.lane.b32.xlu0 %v11745, %s11798
    %v11800 = vpop.permute.xlu0 %11799
    %s11802 = sor.u32 256, 112
    %11803 = vbcast.lane.b32.xlu0 %v11745, %s11802
    %v11804 = vpop.permute.xlu0 %11803
    %s11806 = sor.u32 256, 120
    %11807 = vbcast.lane.b32.xlu0 %v11745, %s11806
    %v11808 = vpop.permute.xlu0 %11807
    %v11809 = vlaneseq
    %v11810 = vshrl.u32 %v11809, 7
    %v11811 = vsub.s32 3, %v11810
    %v11812 = vrot.slane %v50, %v11811
    %11814 = vbcast.lane.b32.xlu0 %v11812, 256
    %v11815 = vpop.permute.xlu0 %11814
    %s11817 = sor.u32 256, 8
    %11818 = vbcast.lane.b32.xlu0 %v11812, %s11817
    %v11819 = vpop.permute.xlu0 %11818
    %s11821 = sor.u32 256, 16
    %11822 = vbcast.lane.b32.xlu0 %v11812, %s11821
    %v11823 = vpop.permute.xlu0 %11822
    %s11825 = sor.u32 256, 24
    %11826 = vbcast.lane.b32.xlu0 %v11812, %s11825
    %v11827 = vpop.permute.xlu0 %11826
    %s11829 = sor.u32 256, 32
    %11830 = vbcast.lane.b32.xlu0 %v11812, %s11829
    %v11831 = vpop.permute.xlu0 %11830
    %s11833 = sor.u32 256, 40
    %11834 = vbcast.lane.b32.xlu0 %v11812, %s11833
    %v11835 = vpop.permute.xlu0 %11834
    %s11837 = sor.u32 256, 48
    %11838 = vbcast.lane.b32.xlu0 %v11812, %s11837
    %v11839 = vpop.permute.xlu0 %11838
    %s11841 = sor.u32 256, 56
    %11842 = vbcast.lane.b32.xlu0 %v11812, %s11841
    %v11843 = vpop.permute.xlu0 %11842
    %s11845 = sor.u32 256, 64
    %11846 = vbcast.lane.b32.xlu0 %v11812, %s11845
    %v11847 = vpop.permute.xlu0 %11846
    %s11849 = sor.u32 256, 72
    %11850 = vbcast.lane.b32.xlu0 %v11812, %s11849
    %v11851 = vpop.permute.xlu0 %11850
    %s11853 = sor.u32 256, 80
    %11854 = vbcast.lane.b32.xlu0 %v11812, %s11853
    %v11855 = vpop.permute.xlu0 %11854
    %s11857 = sor.u32 256, 88
    %11858 = vbcast.lane.b32.xlu0 %v11812, %s11857
    %v11859 = vpop.permute.xlu0 %11858
    %s11861 = sor.u32 256, 96
    %11862 = vbcast.lane.b32.xlu0 %v11812, %s11861
    %v11863 = vpop.permute.xlu0 %11862
    %s11865 = sor.u32 256, 104
    %11866 = vbcast.lane.b32.xlu0 %v11812, %s11865
    %v11867 = vpop.permute.xlu0 %11866
    %s11869 = sor.u32 256, 112
    %11870 = vbcast.lane.b32.xlu0 %v11812, %s11869
    %v11871 = vpop.permute.xlu0 %11870
    %s11873 = sor.u32 256, 120
    %11874 = vbcast.lane.b32.xlu0 %v11812, %s11873
    %v11875 = vpop.permute.xlu0 %11874
    %v11876 = vlaneseq
    %v11877 = vshrl.u32 %v11876, 7
    %v11878 = vsub.s32 3, %v11877
    %v11879 = vrot.slane %v51, %v11878
    %11881 = vbcast.lane.b32.xlu0 %v11879, 256
    %v11882 = vpop.permute.xlu0 %11881
    %s11884 = sor.u32 256, 8
    %11885 = vbcast.lane.b32.xlu0 %v11879, %s11884
    %v11886 = vpop.permute.xlu0 %11885
    %s11888 = sor.u32 256, 16
    %11889 = vbcast.lane.b32.xlu0 %v11879, %s11888
    %v11890 = vpop.permute.xlu0 %11889
    %s11892 = sor.u32 256, 24
    %11893 = vbcast.lane.b32.xlu0 %v11879, %s11892
    %v11894 = vpop.permute.xlu0 %11893
    %s11896 = sor.u32 256, 32
    %11897 = vbcast.lane.b32.xlu0 %v11879, %s11896
    %v11898 = vpop.permute.xlu0 %11897
    %s11900 = sor.u32 256, 40
    %11901 = vbcast.lane.b32.xlu0 %v11879, %s11900
    %v11902 = vpop.permute.xlu0 %11901
    %s11904 = sor.u32 256, 48
    %11905 = vbcast.lane.b32.xlu0 %v11879, %s11904
    %v11906 = vpop.permute.xlu0 %11905
    %s11908 = sor.u32 256, 56
    %11909 = vbcast.lane.b32.xlu0 %v11879, %s11908
    %v11910 = vpop.permute.xlu0 %11909
    %s11912 = sor.u32 256, 64
    %11913 = vbcast.lane.b32.xlu0 %v11879, %s11912
    %v11914 = vpop.permute.xlu0 %11913
    %s11916 = sor.u32 256, 72
    %11917 = vbcast.lane.b32.xlu0 %v11879, %s11916
    %v11918 = vpop.permute.xlu0 %11917
    %s11920 = sor.u32 256, 80
    %11921 = vbcast.lane.b32.xlu0 %v11879, %s11920
    %v11922 = vpop.permute.xlu0 %11921
    %s11924 = sor.u32 256, 88
    %11925 = vbcast.lane.b32.xlu0 %v11879, %s11924
    %v11926 = vpop.permute.xlu0 %11925
    %s11928 = sor.u32 256, 96
    %11929 = vbcast.lane.b32.xlu0 %v11879, %s11928
    %v11930 = vpop.permute.xlu0 %11929
    %s11932 = sor.u32 256, 104
    %11933 = vbcast.lane.b32.xlu0 %v11879, %s11932
    %v11934 = vpop.permute.xlu0 %11933
    %s11936 = sor.u32 256, 112
    %11937 = vbcast.lane.b32.xlu0 %v11879, %s11936
    %v11938 = vpop.permute.xlu0 %11937
    %s11940 = sor.u32 256, 120
    %11941 = vbcast.lane.b32.xlu0 %v11879, %s11940
    %v11942 = vpop.permute.xlu0 %11941
    %v11943 = vlaneseq
    %v11944 = vshrl.u32 %v11943, 7
    %v11945 = vsub.s32 4, %v11944
    %v11946 = vrot.slane %v50, %v11945
    %11948 = vbcast.lane.b32.xlu0 %v11946, 256
    %v11949 = vpop.permute.xlu0 %11948
    %s11951 = sor.u32 256, 8
    %11952 = vbcast.lane.b32.xlu0 %v11946, %s11951
    %v11953 = vpop.permute.xlu0 %11952
    %s11955 = sor.u32 256, 16
    %11956 = vbcast.lane.b32.xlu0 %v11946, %s11955
    %v11957 = vpop.permute.xlu0 %11956
    %s11959 = sor.u32 256, 24
    %11960 = vbcast.lane.b32.xlu0 %v11946, %s11959
    %v11961 = vpop.permute.xlu0 %11960
    %s11963 = sor.u32 256, 32
    %11964 = vbcast.lane.b32.xlu0 %v11946, %s11963
    %v11965 = vpop.permute.xlu0 %11964
    %s11967 = sor.u32 256, 40
    %11968 = vbcast.lane.b32.xlu0 %v11946, %s11967
    %v11969 = vpop.permute.xlu0 %11968
    %s11971 = sor.u32 256, 48
    %11972 = vbcast.lane.b32.xlu0 %v11946, %s11971
    %v11973 = vpop.permute.xlu0 %11972
    %s11975 = sor.u32 256, 56
    %11976 = vbcast.lane.b32.xlu0 %v11946, %s11975
    %v11977 = vpop.permute.xlu0 %11976
    %s11979 = sor.u32 256, 64
    %11980 = vbcast.lane.b32.xlu0 %v11946, %s11979
    %v11981 = vpop.permute.xlu0 %11980
    %s11983 = sor.u32 256, 72
    %11984 = vbcast.lane.b32.xlu0 %v11946, %s11983
    %v11985 = vpop.permute.xlu0 %11984
    %s11987 = sor.u32 256, 80
    %11988 = vbcast.lane.b32.xlu0 %v11946, %s11987
    %v11989 = vpop.permute.xlu0 %11988
    %s11991 = sor.u32 256, 88
    %11992 = vbcast.lane.b32.xlu0 %v11946, %s11991
    %v11993 = vpop.permute.xlu0 %11992
    %s11995 = sor.u32 256, 96
    %11996 = vbcast.lane.b32.xlu0 %v11946, %s11995
    %v11997 = vpop.permute.xlu0 %11996
    %s11999 = sor.u32 256, 104
    %12000 = vbcast.lane.b32.xlu0 %v11946, %s11999
    %v12001 = vpop.permute.xlu0 %12000
    %s12003 = sor.u32 256, 112
    %12004 = vbcast.lane.b32.xlu0 %v11946, %s12003
    %v12005 = vpop.permute.xlu0 %12004
    %s12007 = sor.u32 256, 120
    %12008 = vbcast.lane.b32.xlu0 %v11946, %s12007
    %v12009 = vpop.permute.xlu0 %12008
    %v12010 = vlaneseq
    %v12011 = vshrl.u32 %v12010, 7
    %v12012 = vsub.s32 4, %v12011
    %v12013 = vrot.slane %v51, %v12012
    %12015 = vbcast.lane.b32.xlu0 %v12013, 256
    %v12016 = vpop.permute.xlu0 %12015
    %s12018 = sor.u32 256, 8
    %12019 = vbcast.lane.b32.xlu0 %v12013, %s12018
    %v12020 = vpop.permute.xlu0 %12019
    %s12022 = sor.u32 256, 16
    %12023 = vbcast.lane.b32.xlu0 %v12013, %s12022
    %v12024 = vpop.permute.xlu0 %12023
    %s12026 = sor.u32 256, 24
    %12027 = vbcast.lane.b32.xlu0 %v12013, %s12026
    %v12028 = vpop.permute.xlu0 %12027
    %s12030 = sor.u32 256, 32
    %12031 = vbcast.lane.b32.xlu0 %v12013, %s12030
    %v12032 = vpop.permute.xlu0 %12031
    %s12034 = sor.u32 256, 40
    %12035 = vbcast.lane.b32.xlu0 %v12013, %s12034
    %v12036 = vpop.permute.xlu0 %12035
    %s12038 = sor.u32 256, 48
    %12039 = vbcast.lane.b32.xlu0 %v12013, %s12038
    %v12040 = vpop.permute.xlu0 %12039
    %s12042 = sor.u32 256, 56
    %12043 = vbcast.lane.b32.xlu0 %v12013, %s12042
    %v12044 = vpop.permute.xlu0 %12043
    %s12046 = sor.u32 256, 64
    %12047 = vbcast.lane.b32.xlu0 %v12013, %s12046
    %v12048 = vpop.permute.xlu0 %12047
    %s12050 = sor.u32 256, 72
    %12051 = vbcast.lane.b32.xlu0 %v12013, %s12050
    %v12052 = vpop.permute.xlu0 %12051
    %s12054 = sor.u32 256, 80
    %12055 = vbcast.lane.b32.xlu0 %v12013, %s12054
    %v12056 = vpop.permute.xlu0 %12055
    %s12058 = sor.u32 256, 88
    %12059 = vbcast.lane.b32.xlu0 %v12013, %s12058
    %v12060 = vpop.permute.xlu0 %12059
    %s12062 = sor.u32 256, 96
    %12063 = vbcast.lane.b32.xlu0 %v12013, %s12062
    %v12064 = vpop.permute.xlu0 %12063
    %s12066 = sor.u32 256, 104
    %12067 = vbcast.lane.b32.xlu0 %v12013, %s12066
    %v12068 = vpop.permute.xlu0 %12067
    %s12070 = sor.u32 256, 112
    %12071 = vbcast.lane.b32.xlu0 %v12013, %s12070
    %v12072 = vpop.permute.xlu0 %12071
    %s12074 = sor.u32 256, 120
    %12075 = vbcast.lane.b32.xlu0 %v12013, %s12074
    %v12076 = vpop.permute.xlu0 %12075
    %v12077 = vlaneseq
    %v12078 = vshrl.u32 %v12077, 7
    %v12079 = vsub.s32 5, %v12078
    %v12080 = vrot.slane %v50, %v12079
    %12082 = vbcast.lane.b32.xlu0 %v12080, 256
    %v12083 = vpop.permute.xlu0 %12082
    %s12085 = sor.u32 256, 8
    %12086 = vbcast.lane.b32.xlu0 %v12080, %s12085
    %v12087 = vpop.permute.xlu0 %12086
    %s12089 = sor.u32 256, 16
    %12090 = vbcast.lane.b32.xlu0 %v12080, %s12089
    %v12091 = vpop.permute.xlu0 %12090
    %s12093 = sor.u32 256, 24
    %12094 = vbcast.lane.b32.xlu0 %v12080, %s12093
    %v12095 = vpop.permute.xlu0 %12094
    %s12097 = sor.u32 256, 32
    %12098 = vbcast.lane.b32.xlu0 %v12080, %s12097
    %v12099 = vpop.permute.xlu0 %12098
    %s12101 = sor.u32 256, 40
    %12102 = vbcast.lane.b32.xlu0 %v12080, %s12101
    %v12103 = vpop.permute.xlu0 %12102
    %s12105 = sor.u32 256, 48
    %12106 = vbcast.lane.b32.xlu0 %v12080, %s12105
    %v12107 = vpop.permute.xlu0 %12106
    %s12109 = sor.u32 256, 56
    %12110 = vbcast.lane.b32.xlu0 %v12080, %s12109
    %v12111 = vpop.permute.xlu0 %12110
    %s12113 = sor.u32 256, 64
    %12114 = vbcast.lane.b32.xlu0 %v12080, %s12113
    %v12115 = vpop.permute.xlu0 %12114
    %s12117 = sor.u32 256, 72
    %12118 = vbcast.lane.b32.xlu0 %v12080, %s12117
    %v12119 = vpop.permute.xlu0 %12118
    %s12121 = sor.u32 256, 80
    %12122 = vbcast.lane.b32.xlu0 %v12080, %s12121
    %v12123 = vpop.permute.xlu0 %12122
    %s12125 = sor.u32 256, 88
    %12126 = vbcast.lane.b32.xlu0 %v12080, %s12125
    %v12127 = vpop.permute.xlu0 %12126
    %s12129 = sor.u32 256, 96
    %12130 = vbcast.lane.b32.xlu0 %v12080, %s12129
    %v12131 = vpop.permute.xlu0 %12130
    %s12133 = sor.u32 256, 104
    %12134 = vbcast.lane.b32.xlu0 %v12080, %s12133
    %v12135 = vpop.permute.xlu0 %12134
    %s12137 = sor.u32 256, 112
    %12138 = vbcast.lane.b32.xlu0 %v12080, %s12137
    %v12139 = vpop.permute.xlu0 %12138
    %s12141 = sor.u32 256, 120
    %12142 = vbcast.lane.b32.xlu0 %v12080, %s12141
    %v12143 = vpop.permute.xlu0 %12142
    %v12144 = vlaneseq
    %v12145 = vshrl.u32 %v12144, 7
    %v12146 = vsub.s32 5, %v12145
    %v12147 = vrot.slane %v51, %v12146
    %12149 = vbcast.lane.b32.xlu0 %v12147, 256
    %v12150 = vpop.permute.xlu0 %12149
    %s12152 = sor.u32 256, 8
    %12153 = vbcast.lane.b32.xlu0 %v12147, %s12152
    %v12154 = vpop.permute.xlu0 %12153
    %s12156 = sor.u32 256, 16
    %12157 = vbcast.lane.b32.xlu0 %v12147, %s12156
    %v12158 = vpop.permute.xlu0 %12157
    %s12160 = sor.u32 256, 24
    %12161 = vbcast.lane.b32.xlu0 %v12147, %s12160
    %v12162 = vpop.permute.xlu0 %12161
    %s12164 = sor.u32 256, 32
    %12165 = vbcast.lane.b32.xlu0 %v12147, %s12164
    %v12166 = vpop.permute.xlu0 %12165
    %s12168 = sor.u32 256, 40
    %12169 = vbcast.lane.b32.xlu0 %v12147, %s12168
    %v12170 = vpop.permute.xlu0 %12169
    %s12172 = sor.u32 256, 48
    %12173 = vbcast.lane.b32.xlu0 %v12147, %s12172
    %v12174 = vpop.permute.xlu0 %12173
    %s12176 = sor.u32 256, 56
    %12177 = vbcast.lane.b32.xlu0 %v12147, %s12176
    %v12178 = vpop.permute.xlu0 %12177
    %s12180 = sor.u32 256, 64
    %12181 = vbcast.lane.b32.xlu0 %v12147, %s12180
    %v12182 = vpop.permute.xlu0 %12181
    %s12184 = sor.u32 256, 72
    %12185 = vbcast.lane.b32.xlu0 %v12147, %s12184
    %v12186 = vpop.permute.xlu0 %12185
    %s12188 = sor.u32 256, 80
    %12189 = vbcast.lane.b32.xlu0 %v12147, %s12188
    %v12190 = vpop.permute.xlu0 %12189
    %s12192 = sor.u32 256, 88
    %12193 = vbcast.lane.b32.xlu0 %v12147, %s12192
    %v12194 = vpop.permute.xlu0 %12193
    %s12196 = sor.u32 256, 96
    %12197 = vbcast.lane.b32.xlu0 %v12147, %s12196
    %v12198 = vpop.permute.xlu0 %12197
    %s12200 = sor.u32 256, 104
    %12201 = vbcast.lane.b32.xlu0 %v12147, %s12200
    %v12202 = vpop.permute.xlu0 %12201
    %s12204 = sor.u32 256, 112
    %12205 = vbcast.lane.b32.xlu0 %v12147, %s12204
    %v12206 = vpop.permute.xlu0 %12205
    %s12208 = sor.u32 256, 120
    %12209 = vbcast.lane.b32.xlu0 %v12147, %s12208
    %v12210 = vpop.permute.xlu0 %12209
    %v12211 = vlaneseq
    %v12212 = vshrl.u32 %v12211, 7
    %v12213 = vsub.s32 6, %v12212
    %v12214 = vrot.slane %v50, %v12213
    %12216 = vbcast.lane.b32.xlu0 %v12214, 256
    %v12217 = vpop.permute.xlu0 %12216
    %s12219 = sor.u32 256, 8
    %12220 = vbcast.lane.b32.xlu0 %v12214, %s12219
    %v12221 = vpop.permute.xlu0 %12220
    %s12223 = sor.u32 256, 16
    %12224 = vbcast.lane.b32.xlu0 %v12214, %s12223
    %v12225 = vpop.permute.xlu0 %12224
    %s12227 = sor.u32 256, 24
    %12228 = vbcast.lane.b32.xlu0 %v12214, %s12227
    %v12229 = vpop.permute.xlu0 %12228
    %s12231 = sor.u32 256, 32
    %12232 = vbcast.lane.b32.xlu0 %v12214, %s12231
    %v12233 = vpop.permute.xlu0 %12232
    %s12235 = sor.u32 256, 40
    %12236 = vbcast.lane.b32.xlu0 %v12214, %s12235
    %v12237 = vpop.permute.xlu0 %12236
    %s12239 = sor.u32 256, 48
    %12240 = vbcast.lane.b32.xlu0 %v12214, %s12239
    %v12241 = vpop.permute.xlu0 %12240
    %s12243 = sor.u32 256, 56
    %12244 = vbcast.lane.b32.xlu0 %v12214, %s12243
    %v12245 = vpop.permute.xlu0 %12244
    %s12247 = sor.u32 256, 64
    %12248 = vbcast.lane.b32.xlu0 %v12214, %s12247
    %v12249 = vpop.permute.xlu0 %12248
    %s12251 = sor.u32 256, 72
    %12252 = vbcast.lane.b32.xlu0 %v12214, %s12251
    %v12253 = vpop.permute.xlu0 %12252
    %s12255 = sor.u32 256, 80
    %12256 = vbcast.lane.b32.xlu0 %v12214, %s12255
    %v12257 = vpop.permute.xlu0 %12256
    %s12259 = sor.u32 256, 88
    %12260 = vbcast.lane.b32.xlu0 %v12214, %s12259
    %v12261 = vpop.permute.xlu0 %12260
    %s12263 = sor.u32 256, 96
    %12264 = vbcast.lane.b32.xlu0 %v12214, %s12263
    %v12265 = vpop.permute.xlu0 %12264
    %s12267 = sor.u32 256, 104
    %12268 = vbcast.lane.b32.xlu0 %v12214, %s12267
    %v12269 = vpop.permute.xlu0 %12268
    %s12271 = sor.u32 256, 112
    %12272 = vbcast.lane.b32.xlu0 %v12214, %s12271
    %v12273 = vpop.permute.xlu0 %12272
    %s12275 = sor.u32 256, 120
    %12276 = vbcast.lane.b32.xlu0 %v12214, %s12275
    %v12277 = vpop.permute.xlu0 %12276
    %v12278 = vlaneseq
    %v12279 = vshrl.u32 %v12278, 7
    %v12280 = vsub.s32 6, %v12279
    %v12281 = vrot.slane %v51, %v12280
    %12283 = vbcast.lane.b32.xlu0 %v12281, 256
    %v12284 = vpop.permute.xlu0 %12283
    %s12286 = sor.u32 256, 8
    %12287 = vbcast.lane.b32.xlu0 %v12281, %s12286
    %v12288 = vpop.permute.xlu0 %12287
    %s12290 = sor.u32 256, 16
    %12291 = vbcast.lane.b32.xlu0 %v12281, %s12290
    %v12292 = vpop.permute.xlu0 %12291
    %s12294 = sor.u32 256, 24
    %12295 = vbcast.lane.b32.xlu0 %v12281, %s12294
    %v12296 = vpop.permute.xlu0 %12295
    %s12298 = sor.u32 256, 32
    %12299 = vbcast.lane.b32.xlu0 %v12281, %s12298
    %v12300 = vpop.permute.xlu0 %12299
    %s12302 = sor.u32 256, 40
    %12303 = vbcast.lane.b32.xlu0 %v12281, %s12302
    %v12304 = vpop.permute.xlu0 %12303
    %s12306 = sor.u32 256, 48
    %12307 = vbcast.lane.b32.xlu0 %v12281, %s12306
    %v12308 = vpop.permute.xlu0 %12307
    %s12310 = sor.u32 256, 56
    %12311 = vbcast.lane.b32.xlu0 %v12281, %s12310
    %v12312 = vpop.permute.xlu0 %12311
    %s12314 = sor.u32 256, 64
    %12315 = vbcast.lane.b32.xlu0 %v12281, %s12314
    %v12316 = vpop.permute.xlu0 %12315
    %s12318 = sor.u32 256, 72
    %12319 = vbcast.lane.b32.xlu0 %v12281, %s12318
    %v12320 = vpop.permute.xlu0 %12319
    %s12322 = sor.u32 256, 80
    %12323 = vbcast.lane.b32.xlu0 %v12281, %s12322
    %v12324 = vpop.permute.xlu0 %12323
    %s12326 = sor.u32 256, 88
    %12327 = vbcast.lane.b32.xlu0 %v12281, %s12326
    %v12328 = vpop.permute.xlu0 %12327
    %s12330 = sor.u32 256, 96
    %12331 = vbcast.lane.b32.xlu0 %v12281, %s12330
    %v12332 = vpop.permute.xlu0 %12331
    %s12334 = sor.u32 256, 104
    %12335 = vbcast.lane.b32.xlu0 %v12281, %s12334
    %v12336 = vpop.permute.xlu0 %12335
    %s12338 = sor.u32 256, 112
    %12339 = vbcast.lane.b32.xlu0 %v12281, %s12338
    %v12340 = vpop.permute.xlu0 %12339
    %s12342 = sor.u32 256, 120
    %12343 = vbcast.lane.b32.xlu0 %v12281, %s12342
    %v12344 = vpop.permute.xlu0 %12343
    %v12345 = vlaneseq
    %v12346 = vshrl.u32 %v12345, 7
    %v12347 = vsub.s32 7, %v12346
    %v12348 = vrot.slane %v50, %v12347
    %12350 = vbcast.lane.b32.xlu0 %v12348, 256
    %v12351 = vpop.permute.xlu0 %12350
    %s12353 = sor.u32 256, 8
    %12354 = vbcast.lane.b32.xlu0 %v12348, %s12353
    %v12355 = vpop.permute.xlu0 %12354
    %s12357 = sor.u32 256, 16
    %12358 = vbcast.lane.b32.xlu0 %v12348, %s12357
    %v12359 = vpop.permute.xlu0 %12358
    %s12361 = sor.u32 256, 24
    %12362 = vbcast.lane.b32.xlu0 %v12348, %s12361
    %v12363 = vpop.permute.xlu0 %12362
    %s12365 = sor.u32 256, 32
    %12366 = vbcast.lane.b32.xlu0 %v12348, %s12365
    %v12367 = vpop.permute.xlu0 %12366
    %s12369 = sor.u32 256, 40
    %12370 = vbcast.lane.b32.xlu0 %v12348, %s12369
    %v12371 = vpop.permute.xlu0 %12370
    %s12373 = sor.u32 256, 48
    %12374 = vbcast.lane.b32.xlu0 %v12348, %s12373
    %v12375 = vpop.permute.xlu0 %12374
    %s12377 = sor.u32 256, 56
    %12378 = vbcast.lane.b32.xlu0 %v12348, %s12377
    %v12379 = vpop.permute.xlu0 %12378
    %s12381 = sor.u32 256, 64
    %12382 = vbcast.lane.b32.xlu0 %v12348, %s12381
    %v12383 = vpop.permute.xlu0 %12382
    %s12385 = sor.u32 256, 72
    %12386 = vbcast.lane.b32.xlu0 %v12348, %s12385
    %v12387 = vpop.permute.xlu0 %12386
    %s12389 = sor.u32 256, 80
    %12390 = vbcast.lane.b32.xlu0 %v12348, %s12389
    %v12391 = vpop.permute.xlu0 %12390
    %s12393 = sor.u32 256, 88
    %12394 = vbcast.lane.b32.xlu0 %v12348, %s12393
    %v12395 = vpop.permute.xlu0 %12394
    %s12397 = sor.u32 256, 96
    %12398 = vbcast.lane.b32.xlu0 %v12348, %s12397
    %v12399 = vpop.permute.xlu0 %12398
    %s12401 = sor.u32 256, 104
    %12402 = vbcast.lane.b32.xlu0 %v12348, %s12401
    %v12403 = vpop.permute.xlu0 %12402
    %s12405 = sor.u32 256, 112
    %12406 = vbcast.lane.b32.xlu0 %v12348, %s12405
    %v12407 = vpop.permute.xlu0 %12406
    %s12409 = sor.u32 256, 120
    %12410 = vbcast.lane.b32.xlu0 %v12348, %s12409
    %v12411 = vpop.permute.xlu0 %12410
    %v12412 = vlaneseq
    %v12413 = vshrl.u32 %v12412, 7
    %v12414 = vsub.s32 7, %v12413
    %v12415 = vrot.slane %v51, %v12414
    %12417 = vbcast.lane.b32.xlu0 %v12415, 256
    %v12418 = vpop.permute.xlu0 %12417
    %s12420 = sor.u32 256, 8
    %12421 = vbcast.lane.b32.xlu0 %v12415, %s12420
    %v12422 = vpop.permute.xlu0 %12421
    %s12424 = sor.u32 256, 16
    %12425 = vbcast.lane.b32.xlu0 %v12415, %s12424
    %v12426 = vpop.permute.xlu0 %12425
    %s12428 = sor.u32 256, 24
    %12429 = vbcast.lane.b32.xlu0 %v12415, %s12428
    %v12430 = vpop.permute.xlu0 %12429
    %s12432 = sor.u32 256, 32
    %12433 = vbcast.lane.b32.xlu0 %v12415, %s12432
    %v12434 = vpop.permute.xlu0 %12433
    %s12436 = sor.u32 256, 40
    %12437 = vbcast.lane.b32.xlu0 %v12415, %s12436
    %v12438 = vpop.permute.xlu0 %12437
    %s12440 = sor.u32 256, 48
    %12441 = vbcast.lane.b32.xlu0 %v12415, %s12440
    %v12442 = vpop.permute.xlu0 %12441
    %s12444 = sor.u32 256, 56
    %12445 = vbcast.lane.b32.xlu0 %v12415, %s12444
    %v12446 = vpop.permute.xlu0 %12445
    %s12448 = sor.u32 256, 64
    %12449 = vbcast.lane.b32.xlu0 %v12415, %s12448
    %v12450 = vpop.permute.xlu0 %12449
    %s12452 = sor.u32 256, 72
    %12453 = vbcast.lane.b32.xlu0 %v12415, %s12452
    %v12454 = vpop.permute.xlu0 %12453
    %s12456 = sor.u32 256, 80
    %12457 = vbcast.lane.b32.xlu0 %v12415, %s12456
    %v12458 = vpop.permute.xlu0 %12457
    %s12460 = sor.u32 256, 88
    %12461 = vbcast.lane.b32.xlu0 %v12415, %s12460
    %v12462 = vpop.permute.xlu0 %12461
    %s12464 = sor.u32 256, 96
    %12465 = vbcast.lane.b32.xlu0 %v12415, %s12464
    %v12466 = vpop.permute.xlu0 %12465
    %s12468 = sor.u32 256, 104
    %12469 = vbcast.lane.b32.xlu0 %v12415, %s12468
    %v12470 = vpop.permute.xlu0 %12469
    %s12472 = sor.u32 256, 112
    %12473 = vbcast.lane.b32.xlu0 %v12415, %s12472
    %v12474 = vpop.permute.xlu0 %12473
    %s12476 = sor.u32 256, 120
    %12477 = vbcast.lane.b32.xlu0 %v12415, %s12476
    %v12478 = vpop.permute.xlu0 %12477
    %v12479 = vmul.f32 %v11413, %v11150
    %v12480 = vmul.f32 %v11417, %v11151
    %v12481 = vmul.f32 %v11421, %v11152
    %v12482 = vmul.f32 %v11425, %v11153
    %v12483 = vmul.f32 %v11429, %v11154
    %v12484 = vmul.f32 %v11433, %v11155
    %v12485 = vmul.f32 %v11437, %v11156
    %v12486 = vmul.f32 %v11441, %v11157
    %v12487 = vmul.f32 %v11445, %v11158
    %v12488 = vmul.f32 %v11449, %v11159
    %v12489 = vmul.f32 %v11453, %v11160
    %v12490 = vmul.f32 %v11457, %v11161
    %v12491 = vmul.f32 %v11461, %v11162
    %v12492 = vmul.f32 %v11465, %v11163
    %v12493 = vmul.f32 %v11469, %v11164
    %v12494 = vmul.f32 %v11473, %v11165
    %v12495 = vmul.f32 %v11480, %v11166
    %v12496 = vmul.f32 %v11484, %v11167
    %v12497 = vmul.f32 %v11488, %v11168
    %v12498 = vmul.f32 %v11492, %v11169
    %v12499 = vmul.f32 %v11496, %v11170
    %v12500 = vmul.f32 %v11500, %v11171
    %v12501 = vmul.f32 %v11504, %v11172
    %v12502 = vmul.f32 %v11508, %v11173
    %v12503 = vmul.f32 %v11512, %v11174
    %v12504 = vmul.f32 %v11516, %v11175
    %v12505 = vmul.f32 %v11520, %v11176
    %v12506 = vmul.f32 %v11524, %v11177
    %v12507 = vmul.f32 %v11528, %v11178
    %v12508 = vmul.f32 %v11532, %v11179
    %v12509 = vmul.f32 %v11536, %v11180
    %v12510 = vmul.f32 %v11540, %v11181
    %v12511 = vmul.f32 %v11547, %v11182
    %v12512 = vmul.f32 %v11551, %v11183
    %v12513 = vmul.f32 %v11555, %v11184
    %v12514 = vmul.f32 %v11559, %v11185
    %v12515 = vmul.f32 %v11563, %v11186
    %v12516 = vmul.f32 %v11567, %v11187
    %v12517 = vmul.f32 %v11571, %v11188
    %v12518 = vmul.f32 %v11575, %v11189
    %v12519 = vmul.f32 %v11579, %v11190
    %v12520 = vmul.f32 %v11583, %v11191
    %v12521 = vmul.f32 %v11587, %v11192
    %v12522 = vmul.f32 %v11591, %v11193
    %v12523 = vmul.f32 %v11595, %v11194
    %v12524 = vmul.f32 %v11599, %v11195
    %v12525 = vmul.f32 %v11603, %v11196
    %v12526 = vmul.f32 %v11607, %v11197
    %v12527 = vmul.f32 %v11614, %v11198
    %v12528 = vmul.f32 %v11618, %v11199
    %v12529 = vmul.f32 %v11622, %v11200
    %v12530 = vmul.f32 %v11626, %v11201
    %v12531 = vmul.f32 %v11630, %v11202
    %v12532 = vmul.f32 %v11634, %v11203
    %v12533 = vmul.f32 %v11638, %v11204
    %v12534 = vmul.f32 %v11642, %v11205
    %v12535 = vmul.f32 %v11646, %v11206
    %v12536 = vmul.f32 %v11650, %v11207
    %v12537 = vmul.f32 %v11654, %v11208
    %v12538 = vmul.f32 %v11658, %v11209
    %v12539 = vmul.f32 %v11662, %v11210
    %v12540 = vmul.f32 %v11666, %v11211
    %v12541 = vmul.f32 %v11670, %v11212
    %v12542 = vmul.f32 %v11674, %v11213
    %v12543 = vmul.f32 %v11681, %v11214
    %v12544 = vmul.f32 %v11685, %v11215
    %v12545 = vmul.f32 %v11689, %v11216
    %v12546 = vmul.f32 %v11693, %v11217
    %v12547 = vmul.f32 %v11697, %v11218
    %v12548 = vmul.f32 %v11701, %v11219
    %v12549 = vmul.f32 %v11705, %v11220
    %v12550 = vmul.f32 %v11709, %v11221
    %v12551 = vmul.f32 %v11713, %v11222
    %v12552 = vmul.f32 %v11717, %v11223
    %v12553 = vmul.f32 %v11721, %v11224
    %v12554 = vmul.f32 %v11725, %v11225
    %v12555 = vmul.f32 %v11729, %v11226
    %v12556 = vmul.f32 %v11733, %v11227
    %v12557 = vmul.f32 %v11737, %v11228
    %v12558 = vmul.f32 %v11741, %v11229
    %v12559 = vmul.f32 %v11748, %v11230
    %v12560 = vmul.f32 %v11752, %v11231
    %v12561 = vmul.f32 %v11756, %v11232
    %v12562 = vmul.f32 %v11760, %v11233
    %v12563 = vmul.f32 %v11764, %v11234
    %v12564 = vmul.f32 %v11768, %v11235
    %v12565 = vmul.f32 %v11772, %v11236
    %v12566 = vmul.f32 %v11776, %v11237
    %v12567 = vmul.f32 %v11780, %v11238
    %v12568 = vmul.f32 %v11784, %v11239
    %v12569 = vmul.f32 %v11788, %v11240
    %v12570 = vmul.f32 %v11792, %v11241
    %v12571 = vmul.f32 %v11796, %v11242
    %v12572 = vmul.f32 %v11800, %v11243
    %v12573 = vmul.f32 %v11804, %v11244
    %v12574 = vmul.f32 %v11808, %v11245
    %v12575 = vmul.f32 %v11815, %v11246
    %v12576 = vmul.f32 %v11819, %v11247
    %v12577 = vmul.f32 %v11823, %v11248
    %v12578 = vmul.f32 %v11827, %v11249
    %v12579 = vmul.f32 %v11831, %v11250
    %v12580 = vmul.f32 %v11835, %v11251
    %v12581 = vmul.f32 %v11839, %v11252
    %v12582 = vmul.f32 %v11843, %v11253
    %v12583 = vmul.f32 %v11847, %v11254
    %v12584 = vmul.f32 %v11851, %v11255
    %v12585 = vmul.f32 %v11855, %v11256
    %v12586 = vmul.f32 %v11859, %v11257
    %v12587 = vmul.f32 %v11863, %v11258
    %v12588 = vmul.f32 %v11867, %v11259
    %v12589 = vmul.f32 %v11871, %v11260
    %v12590 = vmul.f32 %v11875, %v11261
    %v12591 = vmul.f32 %v11882, %v11262
    %v12592 = vmul.f32 %v11886, %v11263
    %v12593 = vmul.f32 %v11890, %v11264
    %v12594 = vmul.f32 %v11894, %v11265
    %v12595 = vmul.f32 %v11898, %v11266
    %v12596 = vmul.f32 %v11902, %v11267
    %v12597 = vmul.f32 %v11906, %v11268
    %v12598 = vmul.f32 %v11910, %v11269
    %v12599 = vmul.f32 %v11914, %v11270
    %v12600 = vmul.f32 %v11918, %v11271
    %v12601 = vmul.f32 %v11922, %v11272
    %v12602 = vmul.f32 %v11926, %v11273
    %v12603 = vmul.f32 %v11930, %v11274
    %v12604 = vmul.f32 %v11934, %v11275
    %v12605 = vmul.f32 %v11938, %v11276
    %v12606 = vmul.f32 %v11942, %v11277
    %v12607 = vmul.f32 %v11949, %v11278
    %v12608 = vmul.f32 %v11953, %v11279
    %v12609 = vmul.f32 %v11957, %v11280
    %v12610 = vmul.f32 %v11961, %v11281
    %v12611 = vmul.f32 %v11965, %v11282
    %v12612 = vmul.f32 %v11969, %v11283
    %v12613 = vmul.f32 %v11973, %v11284
    %v12614 = vmul.f32 %v11977, %v11285
    %v12615 = vmul.f32 %v11981, %v11286
    %v12616 = vmul.f32 %v11985, %v11287
    %v12617 = vmul.f32 %v11989, %v11288
    %v12618 = vmul.f32 %v11993, %v11289
    %v12619 = vmul.f32 %v11997, %v11290
    %v12620 = vmul.f32 %v12001, %v11291
    %v12621 = vmul.f32 %v12005, %v11292
    %v12622 = vmul.f32 %v12009, %v11293
    %v12623 = vmul.f32 %v12016, %v11294
    %v12624 = vmul.f32 %v12020, %v11295
    %v12625 = vmul.f32 %v12024, %v11296
    %v12626 = vmul.f32 %v12028, %v11297
    %v12627 = vmul.f32 %v12032, %v11298
    %v12628 = vmul.f32 %v12036, %v11299
    %v12629 = vmul.f32 %v12040, %v11300
    %v12630 = vmul.f32 %v12044, %v11301
    %v12631 = vmul.f32 %v12048, %v11302
    %v12632 = vmul.f32 %v12052, %v11303
    %v12633 = vmul.f32 %v12056, %v11304
    %v12634 = vmul.f32 %v12060, %v11305
    %v12635 = vmul.f32 %v12064, %v11306
    %v12636 = vmul.f32 %v12068, %v11307
    %v12637 = vmul.f32 %v12072, %v11308
    %v12638 = vmul.f32 %v12076, %v11309
    %v12639 = vmul.f32 %v12083, %v11310
    %v12640 = vmul.f32 %v12087, %v11311
    %v12641 = vmul.f32 %v12091, %v11312
    %v12642 = vmul.f32 %v12095, %v11313
    %v12643 = vmul.f32 %v12099, %v11314
    %v12644 = vmul.f32 %v12103, %v11315
    %v12645 = vmul.f32 %v12107, %v11316
    %v12646 = vmul.f32 %v12111, %v11317
    %v12647 = vmul.f32 %v12115, %v11318
    %v12648 = vmul.f32 %v12119, %v11319
    %v12649 = vmul.f32 %v12123, %v11320
    %v12650 = vmul.f32 %v12127, %v11321
    %v12651 = vmul.f32 %v12131, %v11322
    %v12652 = vmul.f32 %v12135, %v11323
    %v12653 = vmul.f32 %v12139, %v11324
    %v12654 = vmul.f32 %v12143, %v11325
    %v12655 = vmul.f32 %v12150, %v11326
    %v12656 = vmul.f32 %v12154, %v11327
    %v12657 = vmul.f32 %v12158, %v11328
    %v12658 = vmul.f32 %v12162, %v11329
    %v12659 = vmul.f32 %v12166, %v11330
    %v12660 = vmul.f32 %v12170, %v11331
    %v12661 = vmul.f32 %v12174, %v11332
    %v12662 = vmul.f32 %v12178, %v11333
    %v12663 = vmul.f32 %v12182, %v11334
    %v12664 = vmul.f32 %v12186, %v11335
    %v12665 = vmul.f32 %v12190, %v11336
    %v12666 = vmul.f32 %v12194, %v11337
    %v12667 = vmul.f32 %v12198, %v11338
    %v12668 = vmul.f32 %v12202, %v11339
    %v12669 = vmul.f32 %v12206, %v11340
    %v12670 = vmul.f32 %v12210, %v11341
    %v12671 = vmul.f32 %v12217, %v11342
    %v12672 = vmul.f32 %v12221, %v11343
    %v12673 = vmul.f32 %v12225, %v11344
    %v12674 = vmul.f32 %v12229, %v11345
    %v12675 = vmul.f32 %v12233, %v11346
    %v12676 = vmul.f32 %v12237, %v11347
    %v12677 = vmul.f32 %v12241, %v11348
    %v12678 = vmul.f32 %v12245, %v11349
    %v12679 = vmul.f32 %v12249, %v11350
    %v12680 = vmul.f32 %v12253, %v11351
    %v12681 = vmul.f32 %v12257, %v11352
    %v12682 = vmul.f32 %v12261, %v11353
    %v12683 = vmul.f32 %v12265, %v11354
    %v12684 = vmul.f32 %v12269, %v11355
    %v12685 = vmul.f32 %v12273, %v11356
    %v12686 = vmul.f32 %v12277, %v11357
    %v12687 = vmul.f32 %v12284, %v11358
    %v12688 = vmul.f32 %v12288, %v11359
    %v12689 = vmul.f32 %v12292, %v11360
    %v12690 = vmul.f32 %v12296, %v11361
    %v12691 = vmul.f32 %v12300, %v11362
    %v12692 = vmul.f32 %v12304, %v11363
    %v12693 = vmul.f32 %v12308, %v11364
    %v12694 = vmul.f32 %v12312, %v11365
    %v12695 = vmul.f32 %v12316, %v11366
    %v12696 = vmul.f32 %v12320, %v11367
    %v12697 = vmul.f32 %v12324, %v11368
    %v12698 = vmul.f32 %v12328, %v11369
    %v12699 = vmul.f32 %v12332, %v11370
    %v12700 = vmul.f32 %v12336, %v11371
    %v12701 = vmul.f32 %v12340, %v11372
    %v12702 = vmul.f32 %v12344, %v11373
    %v12703 = vmul.f32 %v12351, %v11374
    %v12704 = vmul.f32 %v12355, %v11375
    %v12705 = vmul.f32 %v12359, %v11376
    %v12706 = vmul.f32 %v12363, %v11377
    %v12707 = vmul.f32 %v12367, %v11378
    %v12708 = vmul.f32 %v12371, %v11379
    %v12709 = vmul.f32 %v12375, %v11380
    %v12710 = vmul.f32 %v12379, %v11381
    %v12711 = vmul.f32 %v12383, %v11382
    %v12712 = vmul.f32 %v12387, %v11383
    %v12713 = vmul.f32 %v12391, %v11384
    %v12714 = vmul.f32 %v12395, %v11385
    %v12715 = vmul.f32 %v12399, %v11386
    %v12716 = vmul.f32 %v12403, %v11387
    %v12717 = vmul.f32 %v12407, %v11388
    %v12718 = vmul.f32 %v12411, %v11389
    %v12719 = vmul.f32 %v12418, %v11390
    %v12720 = vmul.f32 %v12422, %v11391
    %v12721 = vmul.f32 %v12426, %v11392
    %v12722 = vmul.f32 %v12430, %v11393
    %v12723 = vmul.f32 %v12434, %v11394
    %v12724 = vmul.f32 %v12438, %v11395
    %v12725 = vmul.f32 %v12442, %v11396
    %v12726 = vmul.f32 %v12446, %v11397
    %v12727 = vmul.f32 %v12450, %v11398
    %v12728 = vmul.f32 %v12454, %v11399
    %v12729 = vmul.f32 %v12458, %v11400
    %v12730 = vmul.f32 %v12462, %v11401
    %v12731 = vmul.f32 %v12466, %v11402
    %v12732 = vmul.f32 %v12470, %v11403
    %v12733 = vmul.f32 %v12474, %v11404
    %v12734 = vmul.f32 %v12478, %v11405
    %v12735 = vsel %vm7300, %v12479, 0.0
    %v12736 = vsel %vm7300, %v12480, 0.0
    %v12737 = vadd.f32 %v12735, %v12736
    %v12738 = vsel %vm7300, %v12481, 0.0
    %v12739 = vadd.f32 %v12737, %v12738
    %v12740 = vsel %vm7300, %v12482, 0.0
    %v12741 = vadd.f32 %v12739, %v12740
    %v12742 = vsel %vm7300, %v12483, 0.0
    %v12743 = vadd.f32 %v12741, %v12742
    %v12744 = vsel %vm7300, %v12484, 0.0
    %v12745 = vadd.f32 %v12743, %v12744
    %v12746 = vsel %vm7300, %v12485, 0.0
    %v12747 = vadd.f32 %v12745, %v12746
    %v12748 = vsel %vm7300, %v12486, 0.0
    %v12749 = vadd.f32 %v12747, %v12748
    %v12750 = vsel %vm7300, %v12487, 0.0
    %v12751 = vadd.f32 %v12749, %v12750
    %v12752 = vsel %vm7300, %v12488, 0.0
    %v12753 = vadd.f32 %v12751, %v12752
    %v12754 = vsel %vm7300, %v12489, 0.0
    %v12755 = vadd.f32 %v12753, %v12754
    %v12756 = vsel %vm7300, %v12490, 0.0
    %v12757 = vadd.f32 %v12755, %v12756
    %v12758 = vsel %vm7300, %v12491, 0.0
    %v12759 = vadd.f32 %v12757, %v12758
    %v12760 = vsel %vm7300, %v12492, 0.0
    %v12761 = vadd.f32 %v12759, %v12760
    %v12762 = vsel %vm7300, %v12493, 0.0
    %v12763 = vadd.f32 %v12761, %v12762
    %v12764 = vsel %vm7300, %v12494, 0.0
    %v12765 = vadd.f32 %v12763, %v12764
    %v12766 = vsel %vm7300, %v12495, 0.0
    %v12767 = vadd.f32 %v12765, %v12766
    %v12768 = vsel %vm7300, %v12496, 0.0
    %v12769 = vadd.f32 %v12767, %v12768
    %v12770 = vsel %vm7300, %v12497, 0.0
    %v12771 = vadd.f32 %v12769, %v12770
    %v12772 = vsel %vm7300, %v12498, 0.0
    %v12773 = vadd.f32 %v12771, %v12772
    %v12774 = vsel %vm7300, %v12499, 0.0
    %v12775 = vadd.f32 %v12773, %v12774
    %v12776 = vsel %vm7300, %v12500, 0.0
    %v12777 = vadd.f32 %v12775, %v12776
    %v12778 = vsel %vm7300, %v12501, 0.0
    %v12779 = vadd.f32 %v12777, %v12778
    %v12780 = vsel %vm7300, %v12502, 0.0
    %v12781 = vadd.f32 %v12779, %v12780
    %v12782 = vsel %vm7300, %v12503, 0.0
    %v12783 = vadd.f32 %v12781, %v12782
    %v12784 = vsel %vm7300, %v12504, 0.0
    %v12785 = vadd.f32 %v12783, %v12784
    %v12786 = vsel %vm7300, %v12505, 0.0
    %v12787 = vadd.f32 %v12785, %v12786
    %v12788 = vsel %vm7300, %v12506, 0.0
    %v12789 = vadd.f32 %v12787, %v12788
    %v12790 = vsel %vm7300, %v12507, 0.0
    %v12791 = vadd.f32 %v12789, %v12790
    %v12792 = vsel %vm7300, %v12508, 0.0
    %v12793 = vadd.f32 %v12791, %v12792
    %v12794 = vsel %vm7300, %v12509, 0.0
    %v12795 = vadd.f32 %v12793, %v12794
    %v12796 = vsel %vm7300, %v12510, 0.0
    %v12797 = vadd.f32 %v12795, %v12796
    %v12798 = vrot.slane %v12797, 4
    %v12799 = vadd.f32 %v12797, %v12798
    %v12800 = vrot.slane %v12799, 2
    %v12801 = vadd.f32 %v12799, %v12800
    %v12802 = vrot.slane %v12801, 1
    %v12803 = vadd.f32 %v12801, %v12802
    %v12804 = vsel %vm7300, %v12511, 0.0
    %v12805 = vsel %vm7300, %v12512, 0.0
    %v12806 = vadd.f32 %v12804, %v12805
    %v12807 = vsel %vm7300, %v12513, 0.0
    %v12808 = vadd.f32 %v12806, %v12807
    %v12809 = vsel %vm7300, %v12514, 0.0
    %v12810 = vadd.f32 %v12808, %v12809
    %v12811 = vsel %vm7300, %v12515, 0.0
    %v12812 = vadd.f32 %v12810, %v12811
    %v12813 = vsel %vm7300, %v12516, 0.0
    %v12814 = vadd.f32 %v12812, %v12813
    %v12815 = vsel %vm7300, %v12517, 0.0
    %v12816 = vadd.f32 %v12814, %v12815
    %v12817 = vsel %vm7300, %v12518, 0.0
    %v12818 = vadd.f32 %v12816, %v12817
    %v12819 = vsel %vm7300, %v12519, 0.0
    %v12820 = vadd.f32 %v12818, %v12819
    %v12821 = vsel %vm7300, %v12520, 0.0
    %v12822 = vadd.f32 %v12820, %v12821
    %v12823 = vsel %vm7300, %v12521, 0.0
    %v12824 = vadd.f32 %v12822, %v12823
    %v12825 = vsel %vm7300, %v12522, 0.0
    %v12826 = vadd.f32 %v12824, %v12825
    %v12827 = vsel %vm7300, %v12523, 0.0
    %v12828 = vadd.f32 %v12826, %v12827
    %v12829 = vsel %vm7300, %v12524, 0.0
    %v12830 = vadd.f32 %v12828, %v12829
    %v12831 = vsel %vm7300, %v12525, 0.0
    %v12832 = vadd.f32 %v12830, %v12831
    %v12833 = vsel %vm7300, %v12526, 0.0
    %v12834 = vadd.f32 %v12832, %v12833
    %v12835 = vsel %vm7300, %v12527, 0.0
    %v12836 = vadd.f32 %v12834, %v12835
    %v12837 = vsel %vm7300, %v12528, 0.0
    %v12838 = vadd.f32 %v12836, %v12837
    %v12839 = vsel %vm7300, %v12529, 0.0
    %v12840 = vadd.f32 %v12838, %v12839
    %v12841 = vsel %vm7300, %v12530, 0.0
    %v12842 = vadd.f32 %v12840, %v12841
    %v12843 = vsel %vm7300, %v12531, 0.0
    %v12844 = vadd.f32 %v12842, %v12843
    %v12845 = vsel %vm7300, %v12532, 0.0
    %v12846 = vadd.f32 %v12844, %v12845
    %v12847 = vsel %vm7300, %v12533, 0.0
    %v12848 = vadd.f32 %v12846, %v12847
    %v12849 = vsel %vm7300, %v12534, 0.0
    %v12850 = vadd.f32 %v12848, %v12849
    %v12851 = vsel %vm7300, %v12535, 0.0
    %v12852 = vadd.f32 %v12850, %v12851
    %v12853 = vsel %vm7300, %v12536, 0.0
    %v12854 = vadd.f32 %v12852, %v12853
    %v12855 = vsel %vm7300, %v12537, 0.0
    %v12856 = vadd.f32 %v12854, %v12855
    %v12857 = vsel %vm7300, %v12538, 0.0
    %v12858 = vadd.f32 %v12856, %v12857
    %v12859 = vsel %vm7300, %v12539, 0.0
    %v12860 = vadd.f32 %v12858, %v12859
    %v12861 = vsel %vm7300, %v12540, 0.0
    %v12862 = vadd.f32 %v12860, %v12861
    %v12863 = vsel %vm7300, %v12541, 0.0
    %v12864 = vadd.f32 %v12862, %v12863
    %v12865 = vsel %vm7300, %v12542, 0.0
    %v12866 = vadd.f32 %v12864, %v12865
    %v12867 = vrot.slane %v12866, 4
    %v12868 = vadd.f32 %v12866, %v12867
    %v12869 = vrot.slane %v12868, 2
    %v12870 = vadd.f32 %v12868, %v12869
    %v12871 = vrot.slane %v12870, 1
    %v12872 = vadd.f32 %v12870, %v12871
    %v12873 = vsel %vm7300, %v12543, 0.0
    %v12874 = vsel %vm7300, %v12544, 0.0
    %v12875 = vadd.f32 %v12873, %v12874
    %v12876 = vsel %vm7300, %v12545, 0.0
    %v12877 = vadd.f32 %v12875, %v12876
    %v12878 = vsel %vm7300, %v12546, 0.0
    %v12879 = vadd.f32 %v12877, %v12878
    %v12880 = vsel %vm7300, %v12547, 0.0
    %v12881 = vadd.f32 %v12879, %v12880
    %v12882 = vsel %vm7300, %v12548, 0.0
    %v12883 = vadd.f32 %v12881, %v12882
    %v12884 = vsel %vm7300, %v12549, 0.0
    %v12885 = vadd.f32 %v12883, %v12884
    %v12886 = vsel %vm7300, %v12550, 0.0
    %v12887 = vadd.f32 %v12885, %v12886
    %v12888 = vsel %vm7300, %v12551, 0.0
    %v12889 = vadd.f32 %v12887, %v12888
    %v12890 = vsel %vm7300, %v12552, 0.0
    %v12891 = vadd.f32 %v12889, %v12890
    %v12892 = vsel %vm7300, %v12553, 0.0
    %v12893 = vadd.f32 %v12891, %v12892
    %v12894 = vsel %vm7300, %v12554, 0.0
    %v12895 = vadd.f32 %v12893, %v12894
    %v12896 = vsel %vm7300, %v12555, 0.0
    %v12897 = vadd.f32 %v12895, %v12896
    %v12898 = vsel %vm7300, %v12556, 0.0
    %v12899 = vadd.f32 %v12897, %v12898
    %v12900 = vsel %vm7300, %v12557, 0.0
    %v12901 = vadd.f32 %v12899, %v12900
    %v12902 = vsel %vm7300, %v12558, 0.0
    %v12903 = vadd.f32 %v12901, %v12902
    %v12904 = vsel %vm7300, %v12559, 0.0
    %v12905 = vadd.f32 %v12903, %v12904
    %v12906 = vsel %vm7300, %v12560, 0.0
    %v12907 = vadd.f32 %v12905, %v12906
    %v12908 = vsel %vm7300, %v12561, 0.0
    %v12909 = vadd.f32 %v12907, %v12908
    %v12910 = vsel %vm7300, %v12562, 0.0
    %v12911 = vadd.f32 %v12909, %v12910
    %v12912 = vsel %vm7300, %v12563, 0.0
    %v12913 = vadd.f32 %v12911, %v12912
    %v12914 = vsel %vm7300, %v12564, 0.0
    %v12915 = vadd.f32 %v12913, %v12914
    %v12916 = vsel %vm7300, %v12565, 0.0
    %v12917 = vadd.f32 %v12915, %v12916
    %v12918 = vsel %vm7300, %v12566, 0.0
    %v12919 = vadd.f32 %v12917, %v12918
    %v12920 = vsel %vm7300, %v12567, 0.0
    %v12921 = vadd.f32 %v12919, %v12920
    %v12922 = vsel %vm7300, %v12568, 0.0
    %v12923 = vadd.f32 %v12921, %v12922
    %v12924 = vsel %vm7300, %v12569, 0.0
    %v12925 = vadd.f32 %v12923, %v12924
    %v12926 = vsel %vm7300, %v12570, 0.0
    %v12927 = vadd.f32 %v12925, %v12926
    %v12928 = vsel %vm7300, %v12571, 0.0
    %v12929 = vadd.f32 %v12927, %v12928
    %v12930 = vsel %vm7300, %v12572, 0.0
    %v12931 = vadd.f32 %v12929, %v12930
    %v12932 = vsel %vm7300, %v12573, 0.0
    %v12933 = vadd.f32 %v12931, %v12932
    %v12934 = vsel %vm7300, %v12574, 0.0
    %v12935 = vadd.f32 %v12933, %v12934
    %v12936 = vrot.slane %v12935, 4
    %v12937 = vadd.f32 %v12935, %v12936
    %v12938 = vrot.slane %v12937, 2
    %v12939 = vadd.f32 %v12937, %v12938
    %v12940 = vrot.slane %v12939, 1
    %v12941 = vadd.f32 %v12939, %v12940
    %v12942 = vsel %vm7300, %v12575, 0.0
    %v12943 = vsel %vm7300, %v12576, 0.0
    %v12944 = vadd.f32 %v12942, %v12943
    %v12945 = vsel %vm7300, %v12577, 0.0
    %v12946 = vadd.f32 %v12944, %v12945
    %v12947 = vsel %vm7300, %v12578, 0.0
    %v12948 = vadd.f32 %v12946, %v12947
    %v12949 = vsel %vm7300, %v12579, 0.0
    %v12950 = vadd.f32 %v12948, %v12949
    %v12951 = vsel %vm7300, %v12580, 0.0
    %v12952 = vadd.f32 %v12950, %v12951
    %v12953 = vsel %vm7300, %v12581, 0.0
    %v12954 = vadd.f32 %v12952, %v12953
    %v12955 = vsel %vm7300, %v12582, 0.0
    %v12956 = vadd.f32 %v12954, %v12955
    %v12957 = vsel %vm7300, %v12583, 0.0
    %v12958 = vadd.f32 %v12956, %v12957
    %v12959 = vsel %vm7300, %v12584, 0.0
    %v12960 = vadd.f32 %v12958, %v12959
    %v12961 = vsel %vm7300, %v12585, 0.0
    %v12962 = vadd.f32 %v12960, %v12961
    %v12963 = vsel %vm7300, %v12586, 0.0
    %v12964 = vadd.f32 %v12962, %v12963
    %v12965 = vsel %vm7300, %v12587, 0.0
    %v12966 = vadd.f32 %v12964, %v12965
    %v12967 = vsel %vm7300, %v12588, 0.0
    %v12968 = vadd.f32 %v12966, %v12967
    %v12969 = vsel %vm7300, %v12589, 0.0
    %v12970 = vadd.f32 %v12968, %v12969
    %v12971 = vsel %vm7300, %v12590, 0.0
    %v12972 = vadd.f32 %v12970, %v12971
    %v12973 = vsel %vm7300, %v12591, 0.0
    %v12974 = vadd.f32 %v12972, %v12973
    %v12975 = vsel %vm7300, %v12592, 0.0
    %v12976 = vadd.f32 %v12974, %v12975
    %v12977 = vsel %vm7300, %v12593, 0.0
    %v12978 = vadd.f32 %v12976, %v12977
    %v12979 = vsel %vm7300, %v12594, 0.0
    %v12980 = vadd.f32 %v12978, %v12979
    %v12981 = vsel %vm7300, %v12595, 0.0
    %v12982 = vadd.f32 %v12980, %v12981
    %v12983 = vsel %vm7300, %v12596, 0.0
    %v12984 = vadd.f32 %v12982, %v12983
    %v12985 = vsel %vm7300, %v12597, 0.0
    %v12986 = vadd.f32 %v12984, %v12985
    %v12987 = vsel %vm7300, %v12598, 0.0
    %v12988 = vadd.f32 %v12986, %v12987
    %v12989 = vsel %vm7300, %v12599, 0.0
    %v12990 = vadd.f32 %v12988, %v12989
    %v12991 = vsel %vm7300, %v12600, 0.0
    %v12992 = vadd.f32 %v12990, %v12991
    %v12993 = vsel %vm7300, %v12601, 0.0
    %v12994 = vadd.f32 %v12992, %v12993
    %v12995 = vsel %vm7300, %v12602, 0.0
    %v12996 = vadd.f32 %v12994, %v12995
    %v12997 = vsel %vm7300, %v12603, 0.0
    %v12998 = vadd.f32 %v12996, %v12997
    %v12999 = vsel %vm7300, %v12604, 0.0
    %v13000 = vadd.f32 %v12998, %v12999
    %v13001 = vsel %vm7300, %v12605, 0.0
    %v13002 = vadd.f32 %v13000, %v13001
    %v13003 = vsel %vm7300, %v12606, 0.0
    %v13004 = vadd.f32 %v13002, %v13003
    %v13005 = vrot.slane %v13004, 4
    %v13006 = vadd.f32 %v13004, %v13005
    %v13007 = vrot.slane %v13006, 2
    %v13008 = vadd.f32 %v13006, %v13007
    %v13009 = vrot.slane %v13008, 1
    %v13010 = vadd.f32 %v13008, %v13009
    %v13011 = vsel %vm7300, %v12607, 0.0
    %v13012 = vsel %vm7300, %v12608, 0.0
    %v13013 = vadd.f32 %v13011, %v13012
    %v13014 = vsel %vm7300, %v12609, 0.0
    %v13015 = vadd.f32 %v13013, %v13014
    %v13016 = vsel %vm7300, %v12610, 0.0
    %v13017 = vadd.f32 %v13015, %v13016
    %v13018 = vsel %vm7300, %v12611, 0.0
    %v13019 = vadd.f32 %v13017, %v13018
    %v13020 = vsel %vm7300, %v12612, 0.0
    %v13021 = vadd.f32 %v13019, %v13020
    %v13022 = vsel %vm7300, %v12613, 0.0
    %v13023 = vadd.f32 %v13021, %v13022
    %v13024 = vsel %vm7300, %v12614, 0.0
    %v13025 = vadd.f32 %v13023, %v13024
    %v13026 = vsel %vm7300, %v12615, 0.0
    %v13027 = vadd.f32 %v13025, %v13026
    %v13028 = vsel %vm7300, %v12616, 0.0
    %v13029 = vadd.f32 %v13027, %v13028
    %v13030 = vsel %vm7300, %v12617, 0.0
    %v13031 = vadd.f32 %v13029, %v13030
    %v13032 = vsel %vm7300, %v12618, 0.0
    %v13033 = vadd.f32 %v13031, %v13032
    %v13034 = vsel %vm7300, %v12619, 0.0
    %v13035 = vadd.f32 %v13033, %v13034
    %v13036 = vsel %vm7300, %v12620, 0.0
    %v13037 = vadd.f32 %v13035, %v13036
    %v13038 = vsel %vm7300, %v12621, 0.0
    %v13039 = vadd.f32 %v13037, %v13038
    %v13040 = vsel %vm7300, %v12622, 0.0
    %v13041 = vadd.f32 %v13039, %v13040
    %v13042 = vsel %vm7300, %v12623, 0.0
    %v13043 = vadd.f32 %v13041, %v13042
    %v13044 = vsel %vm7300, %v12624, 0.0
    %v13045 = vadd.f32 %v13043, %v13044
    %v13046 = vsel %vm7300, %v12625, 0.0
    %v13047 = vadd.f32 %v13045, %v13046
    %v13048 = vsel %vm7300, %v12626, 0.0
    %v13049 = vadd.f32 %v13047, %v13048
    %v13050 = vsel %vm7300, %v12627, 0.0
    %v13051 = vadd.f32 %v13049, %v13050
    %v13052 = vsel %vm7300, %v12628, 0.0
    %v13053 = vadd.f32 %v13051, %v13052
    %v13054 = vsel %vm7300, %v12629, 0.0
    %v13055 = vadd.f32 %v13053, %v13054
    %v13056 = vsel %vm7300, %v12630, 0.0
    %v13057 = vadd.f32 %v13055, %v13056
    %v13058 = vsel %vm7300, %v12631, 0.0
    %v13059 = vadd.f32 %v13057, %v13058
    %v13060 = vsel %vm7300, %v12632, 0.0
    %v13061 = vadd.f32 %v13059, %v13060
    %v13062 = vsel %vm7300, %v12633, 0.0
    %v13063 = vadd.f32 %v13061, %v13062
    %v13064 = vsel %vm7300, %v12634, 0.0
    %v13065 = vadd.f32 %v13063, %v13064
    %v13066 = vsel %vm7300, %v12635, 0.0
    %v13067 = vadd.f32 %v13065, %v13066
    %v13068 = vsel %vm7300, %v12636, 0.0
    %v13069 = vadd.f32 %v13067, %v13068
    %v13070 = vsel %vm7300, %v12637, 0.0
    %v13071 = vadd.f32 %v13069, %v13070
    %v13072 = vsel %vm7300, %v12638, 0.0
    %v13073 = vadd.f32 %v13071, %v13072
    %v13074 = vrot.slane %v13073, 4
    %v13075 = vadd.f32 %v13073, %v13074
    %v13076 = vrot.slane %v13075, 2
    %v13077 = vadd.f32 %v13075, %v13076
    %v13078 = vrot.slane %v13077, 1
    %v13079 = vadd.f32 %v13077, %v13078
    %v13080 = vsel %vm7300, %v12639, 0.0
    %v13081 = vsel %vm7300, %v12640, 0.0
    %v13082 = vadd.f32 %v13080, %v13081
    %v13083 = vsel %vm7300, %v12641, 0.0
    %v13084 = vadd.f32 %v13082, %v13083
    %v13085 = vsel %vm7300, %v12642, 0.0
    %v13086 = vadd.f32 %v13084, %v13085
    %v13087 = vsel %vm7300, %v12643, 0.0
    %v13088 = vadd.f32 %v13086, %v13087
    %v13089 = vsel %vm7300, %v12644, 0.0
    %v13090 = vadd.f32 %v13088, %v13089
    %v13091 = vsel %vm7300, %v12645, 0.0
    %v13092 = vadd.f32 %v13090, %v13091
    %v13093 = vsel %vm7300, %v12646, 0.0
    %v13094 = vadd.f32 %v13092, %v13093
    %v13095 = vsel %vm7300, %v12647, 0.0
    %v13096 = vadd.f32 %v13094, %v13095
    %v13097 = vsel %vm7300, %v12648, 0.0
    %v13098 = vadd.f32 %v13096, %v13097
    %v13099 = vsel %vm7300, %v12649, 0.0
    %v13100 = vadd.f32 %v13098, %v13099
    %v13101 = vsel %vm7300, %v12650, 0.0
    %v13102 = vadd.f32 %v13100, %v13101
    %v13103 = vsel %vm7300, %v12651, 0.0
    %v13104 = vadd.f32 %v13102, %v13103
    %v13105 = vsel %vm7300, %v12652, 0.0
    %v13106 = vadd.f32 %v13104, %v13105
    %v13107 = vsel %vm7300, %v12653, 0.0
    %v13108 = vadd.f32 %v13106, %v13107
    %v13109 = vsel %vm7300, %v12654, 0.0
    %v13110 = vadd.f32 %v13108, %v13109
    %v13111 = vsel %vm7300, %v12655, 0.0
    %v13112 = vadd.f32 %v13110, %v13111
    %v13113 = vsel %vm7300, %v12656, 0.0
    %v13114 = vadd.f32 %v13112, %v13113
    %v13115 = vsel %vm7300, %v12657, 0.0
    %v13116 = vadd.f32 %v13114, %v13115
    %v13117 = vsel %vm7300, %v12658, 0.0
    %v13118 = vadd.f32 %v13116, %v13117
    %v13119 = vsel %vm7300, %v12659, 0.0
    %v13120 = vadd.f32 %v13118, %v13119
    %v13121 = vsel %vm7300, %v12660, 0.0
    %v13122 = vadd.f32 %v13120, %v13121
    %v13123 = vsel %vm7300, %v12661, 0.0
    %v13124 = vadd.f32 %v13122, %v13123
    %v13125 = vsel %vm7300, %v12662, 0.0
    %v13126 = vadd.f32 %v13124, %v13125
    %v13127 = vsel %vm7300, %v12663, 0.0
    %v13128 = vadd.f32 %v13126, %v13127
    %v13129 = vsel %vm7300, %v12664, 0.0
    %v13130 = vadd.f32 %v13128, %v13129
    %v13131 = vsel %vm7300, %v12665, 0.0
    %v13132 = vadd.f32 %v13130, %v13131
    %v13133 = vsel %vm7300, %v12666, 0.0
    %v13134 = vadd.f32 %v13132, %v13133
    %v13135 = vsel %vm7300, %v12667, 0.0
    %v13136 = vadd.f32 %v13134, %v13135
    %v13137 = vsel %vm7300, %v12668, 0.0
    %v13138 = vadd.f32 %v13136, %v13137
    %v13139 = vsel %vm7300, %v12669, 0.0
    %v13140 = vadd.f32 %v13138, %v13139
    %v13141 = vsel %vm7300, %v12670, 0.0
    %v13142 = vadd.f32 %v13140, %v13141
    %v13143 = vrot.slane %v13142, 4
    %v13144 = vadd.f32 %v13142, %v13143
    %v13145 = vrot.slane %v13144, 2
    %v13146 = vadd.f32 %v13144, %v13145
    %v13147 = vrot.slane %v13146, 1
    %v13148 = vadd.f32 %v13146, %v13147
    %v13149 = vsel %vm7300, %v12671, 0.0
    %v13150 = vsel %vm7300, %v12672, 0.0
    %v13151 = vadd.f32 %v13149, %v13150
    %v13152 = vsel %vm7300, %v12673, 0.0
    %v13153 = vadd.f32 %v13151, %v13152
    %v13154 = vsel %vm7300, %v12674, 0.0
    %v13155 = vadd.f32 %v13153, %v13154
    %v13156 = vsel %vm7300, %v12675, 0.0
    %v13157 = vadd.f32 %v13155, %v13156
    %v13158 = vsel %vm7300, %v12676, 0.0
    %v13159 = vadd.f32 %v13157, %v13158
    %v13160 = vsel %vm7300, %v12677, 0.0
    %v13161 = vadd.f32 %v13159, %v13160
    %v13162 = vsel %vm7300, %v12678, 0.0
    %v13163 = vadd.f32 %v13161, %v13162
    %v13164 = vsel %vm7300, %v12679, 0.0
    %v13165 = vadd.f32 %v13163, %v13164
    %v13166 = vsel %vm7300, %v12680, 0.0
    %v13167 = vadd.f32 %v13165, %v13166
    %v13168 = vsel %vm7300, %v12681, 0.0
    %v13169 = vadd.f32 %v13167, %v13168
    %v13170 = vsel %vm7300, %v12682, 0.0
    %v13171 = vadd.f32 %v13169, %v13170
    %v13172 = vsel %vm7300, %v12683, 0.0
    %v13173 = vadd.f32 %v13171, %v13172
    %v13174 = vsel %vm7300, %v12684, 0.0
    %v13175 = vadd.f32 %v13173, %v13174
    %v13176 = vsel %vm7300, %v12685, 0.0
    %v13177 = vadd.f32 %v13175, %v13176
    %v13178 = vsel %vm7300, %v12686, 0.0
    %v13179 = vadd.f32 %v13177, %v13178
    %v13180 = vsel %vm7300, %v12687, 0.0
    %v13181 = vadd.f32 %v13179, %v13180
    %v13182 = vsel %vm7300, %v12688, 0.0
    %v13183 = vadd.f32 %v13181, %v13182
    %v13184 = vsel %vm7300, %v12689, 0.0
    %v13185 = vadd.f32 %v13183, %v13184
    %v13186 = vsel %vm7300, %v12690, 0.0
    %v13187 = vadd.f32 %v13185, %v13186
    %v13188 = vsel %vm7300, %v12691, 0.0
    %v13189 = vadd.f32 %v13187, %v13188
    %v13190 = vsel %vm7300, %v12692, 0.0
    %v13191 = vadd.f32 %v13189, %v13190
    %v13192 = vsel %vm7300, %v12693, 0.0
    %v13193 = vadd.f32 %v13191, %v13192
    %v13194 = vsel %vm7300, %v12694, 0.0
    %v13195 = vadd.f32 %v13193, %v13194
    %v13196 = vsel %vm7300, %v12695, 0.0
    %v13197 = vadd.f32 %v13195, %v13196
    %v13198 = vsel %vm7300, %v12696, 0.0
    %v13199 = vadd.f32 %v13197, %v13198
    %v13200 = vsel %vm7300, %v12697, 0.0
    %v13201 = vadd.f32 %v13199, %v13200
    %v13202 = vsel %vm7300, %v12698, 0.0
    %v13203 = vadd.f32 %v13201, %v13202
    %v13204 = vsel %vm7300, %v12699, 0.0
    %v13205 = vadd.f32 %v13203, %v13204
    %v13206 = vsel %vm7300, %v12700, 0.0
    %v13207 = vadd.f32 %v13205, %v13206
    %v13208 = vsel %vm7300, %v12701, 0.0
    %v13209 = vadd.f32 %v13207, %v13208
    %v13210 = vsel %vm7300, %v12702, 0.0
    %v13211 = vadd.f32 %v13209, %v13210
    %v13212 = vrot.slane %v13211, 4
    %v13213 = vadd.f32 %v13211, %v13212
    %v13214 = vrot.slane %v13213, 2
    %v13215 = vadd.f32 %v13213, %v13214
    %v13216 = vrot.slane %v13215, 1
    %v13217 = vadd.f32 %v13215, %v13216
    %v13218 = vsel %vm7300, %v12703, 0.0
    %v13219 = vsel %vm7300, %v12704, 0.0
    %v13220 = vadd.f32 %v13218, %v13219
    %v13221 = vsel %vm7300, %v12705, 0.0
    %v13222 = vadd.f32 %v13220, %v13221
    %v13223 = vsel %vm7300, %v12706, 0.0
    %v13224 = vadd.f32 %v13222, %v13223
    %v13225 = vsel %vm7300, %v12707, 0.0
    %v13226 = vadd.f32 %v13224, %v13225
    %v13227 = vsel %vm7300, %v12708, 0.0
    %v13228 = vadd.f32 %v13226, %v13227
    %v13229 = vsel %vm7300, %v12709, 0.0
    %v13230 = vadd.f32 %v13228, %v13229
    %v13231 = vsel %vm7300, %v12710, 0.0
    %v13232 = vadd.f32 %v13230, %v13231
    %v13233 = vsel %vm7300, %v12711, 0.0
    %v13234 = vadd.f32 %v13232, %v13233
    %v13235 = vsel %vm7300, %v12712, 0.0
    %v13236 = vadd.f32 %v13234, %v13235
    %v13237 = vsel %vm7300, %v12713, 0.0
    %v13238 = vadd.f32 %v13236, %v13237
    %v13239 = vsel %vm7300, %v12714, 0.0
    %v13240 = vadd.f32 %v13238, %v13239
    %v13241 = vsel %vm7300, %v12715, 0.0
    %v13242 = vadd.f32 %v13240, %v13241
    %v13243 = vsel %vm7300, %v12716, 0.0
    %v13244 = vadd.f32 %v13242, %v13243
    %v13245 = vsel %vm7300, %v12717, 0.0
    %v13246 = vadd.f32 %v13244, %v13245
    %v13247 = vsel %vm7300, %v12718, 0.0
    %v13248 = vadd.f32 %v13246, %v13247
    %v13249 = vsel %vm7300, %v12719, 0.0
    %v13250 = vadd.f32 %v13248, %v13249
    %v13251 = vsel %vm7300, %v12720, 0.0
    %v13252 = vadd.f32 %v13250, %v13251
    %v13253 = vsel %vm7300, %v12721, 0.0
    %v13254 = vadd.f32 %v13252, %v13253
    %v13255 = vsel %vm7300, %v12722, 0.0
    %v13256 = vadd.f32 %v13254, %v13255
    %v13257 = vsel %vm7300, %v12723, 0.0
    %v13258 = vadd.f32 %v13256, %v13257
    %v13259 = vsel %vm7300, %v12724, 0.0
    %v13260 = vadd.f32 %v13258, %v13259
    %v13261 = vsel %vm7300, %v12725, 0.0
    %v13262 = vadd.f32 %v13260, %v13261
    %v13263 = vsel %vm7300, %v12726, 0.0
    %v13264 = vadd.f32 %v13262, %v13263
    %v13265 = vsel %vm7300, %v12727, 0.0
    %v13266 = vadd.f32 %v13264, %v13265
    %v13267 = vsel %vm7300, %v12728, 0.0
    %v13268 = vadd.f32 %v13266, %v13267
    %v13269 = vsel %vm7300, %v12729, 0.0
    %v13270 = vadd.f32 %v13268, %v13269
    %v13271 = vsel %vm7300, %v12730, 0.0
    %v13272 = vadd.f32 %v13270, %v13271
    %v13273 = vsel %vm7300, %v12731, 0.0
    %v13274 = vadd.f32 %v13272, %v13273
    %v13275 = vsel %vm7300, %v12732, 0.0
    %v13276 = vadd.f32 %v13274, %v13275
    %v13277 = vsel %vm7300, %v12733, 0.0
    %v13278 = vadd.f32 %v13276, %v13277
    %v13279 = vsel %vm7300, %v12734, 0.0
    %v13280 = vadd.f32 %v13278, %v13279
    %v13281 = vrot.slane %v13280, 4
    %v13282 = vadd.f32 %v13280, %v13281
    %v13283 = vrot.slane %v13282, 2
    %v13284 = vadd.f32 %v13282, %v13283
    %v13285 = vrot.slane %v13284, 1
    %v13286 = vadd.f32 %v13284, %v13285
    %vm13295 = vcmask 1041409
    %v13296 = vsel %vm13295, %v12872, %v12803
    %vm13297 = vcmask 1042434
    %v13298 = vsel %vm13297, %v12941, %v13296
    %vm13299 = vcmask 1043459
    %v13300 = vsel %vm13299, %v13010, %v13298
    %vm13301 = vcmask 1044484
    %v13302 = vsel %vm13301, %v13079, %v13300
    %vm13303 = vcmask 1045509
    %v13304 = vsel %vm13303, %v13148, %v13302
    %vm13305 = vcmask 1046534
    %v13306 = vsel %vm13305, %v13217, %v13304
    %vm13307 = vcmask 1047559
    %v13308 = vsel %vm13307, %v13286, %v13306
    %v13310 = vadd.f32 %v11406, %v13308
    %13311 = vst.msk [vmem:[#allocation2] sm:$0xff] %vm7300, %v13310
    // Predicated region
    $region54: #{tpu_custom_call.1} parent=1 // pred_check
      %p13312 = pneg %p42
    $region55: #{tpu_custom_call.1} parent=1 // pred_check_branch
      %13314 = sbr.rel (%p13312) target = $region57
    $region56: #{tpu_custom_call.1} parent=1 // pred_region
      %v13315 = vld [vmem:[#allocation2] sm:$0xff]
      %v13316 = vld [vmem:[%s9] sm:$0x1]
      %v13317 = vld [vmem:[%s9 + $0x1] sm:$0x1]
      %v13318 = vld [vmem:[%s9 + $0x2] sm:$0x1]
      %v13319 = vld [vmem:[%s8] sm:$0xff]
      %v13320 = vld [vmem:[%s8 + $0x8] sm:$0xff]
      %v13321 = vld [vmem:[%s8 + $0x10] sm:$0xff]
      %v13322 = vld [vmem:[%s8 + $0x18] sm:$0xff]
      %v13323 = vlaneseq
      %v13324 = vshrl.u32 %v13323, 7
      %v13325 = vsub.s32 0, %v13324
      %v13326 = vrot.slane %v13316, %v13325
      %v13328 = vsel %vm7300, %v13315, 0
      %13330 = vmatprep.subr.mxu0 0.0
      %13331 = vmatpush1.msra.mxu0 %v13319
      %13332 = vmatprep.subr.mxu0 0.0
      %13333 = vmatpush1.msra.mxu0 %v13320
      %13334 = vmatprep.subr.mxu0 0.0
      %13335 = vmatpush1.msra.mxu0 %v13321
      %13336 = vmatprep.subr.mxu0 0.0
      %13337 = vmatpush1.msra.mxu0 %v13322
      %13338 = vmatprep.subr.mxu0 0.0
      %13339 = vmatpush1.msra.mxu0 0.0
      %13340 = vmatprep.subr.mxu0 0.0
      %13341 = vmatpush1.msra.mxu0 0.0
      %13342 = vmatprep.subr.mxu0 0.0
      %13343 = vmatpush1.msra.mxu0 0.0
      %13344 = vmatprep.subr.mxu0 0.0
      %13345 = vmatpush1.msra.mxu0 0.0
      %13346 = vmatprep.subr.mxu0 0.0
      %13347 = vmatpush1.msra.mxu0 0.0
      %13348 = vmatprep.subr.mxu0 0.0
      %13349 = vmatpush1.msra.mxu0 0.0
      %13350 = vmatprep.subr.mxu0 0.0
      %13351 = vmatpush1.msra.mxu0 0.0
      %13352 = vmatprep.subr.mxu0 0.0
      %13353 = vmatpush1.msra.mxu0 0.0
      %13354 = vmatprep.subr.mxu0 0.0
      %13355 = vmatpush1.msra.mxu0 0.0
      %13356 = vmatprep.subr.mxu0 0.0
      %13357 = vmatpush1.msra.mxu0 0.0
      %13358 = vmatprep.subr.mxu0 0.0
      %13359 = vmatpush1.msra.mxu0 0.0
      %13360 = vmatprep.subr.mxu0 0.0
      %13361 = vmatpush1.msra.mxu0 0.0
      %13362 = vmatprep.subr.mxu0 0.0
      %13363 = vmatpush1.msra.mxu0 0.0
      %13364 = vmatprep.subr.mxu0 0.0
      %13365 = vmatpush1.msra.mxu0 0.0
      %13366 = vmatprep.subr.mxu0 0.0
      %13367 = vmatpush1.msra.mxu0 0.0
      %13368 = vmatprep.subr.mxu0 0.0
      %13369 = vmatpush1.msra.mxu0 0.0
      %13370 = vmatprep.subr.mxu0 0.0
      %13371 = vmatpush1.msra.mxu0 0.0
      %13372 = vmatprep.subr.mxu0 0.0
      %13373 = vmatpush1.msra.mxu0 0.0
      %13374 = vmatprep.subr.mxu0 0.0
      %13375 = vmatpush1.msra.mxu0 0.0
      %13376 = vmatprep.subr.mxu0 0.0
      %13377 = vmatpush1.msra.mxu0 0.0
      %13378 = vmatprep.subr.mxu0 0.0
      %13379 = vmatpush1.msra.mxu0 0.0
      %13380 = vmatprep.subr.mxu0 0.0
      %13381 = vmatpush1.msra.mxu0 0.0
      %13382 = vmatprep.subr.mxu0 0.0
      %13383 = vmatpush1.msra.mxu0 0.0
      %13384 = vmatprep.subr.mxu0 0.0
      %13385 = vmatpush1.msra.mxu0 0.0
      %13386 = vmatprep.subr.mxu0 0.0
      %13387 = vmatpush1.msra.mxu0 0.0
      %13388 = vmatprep.subr.mxu0 0.0
      %13389 = vmatpush1.msra.mxu0 0.0
      %13390 = vmatprep.subr.mxu0 0.0
      %13391 = vmatpush1.msra.mxu0 0.0
      %13392 = vmatprep.subr.mxu0 0.0
      %13393 = vmatpush1.msra.mxu0 0.0
      %13394 = vmatprep.mubr.f32.mxu0 0.0
      %13395 = vmatmul.mubr.f32.gmra.mrb[0].mxu0 %v13328
      %v13396 = vpop.f32.mrb[0].mxu0
      %v13397 = vadd.f32 %v13326, %v13396
      %v13398 = vpop.f32.mrb[0].mxu0
      %13399 = vdwg.mxu0
      %v13400 = vsel %vm5186, %v13397, 0.0
      %13401 = vadd.xlane.f32.xlu0 %v13400
      %v13402 = vpop.xlane.xlu0 %13401
      %v13403 = vrcp.pop 64.0
      %v13404 = vmul.f32 %v13402, %v13403
      %v13405 = vsub.f32 %v13397, %v13404
      %v13406 = vmul.f32 %v13405, %v13405
      %v13407 = vsel %vm5186, %v13406, 0.0
      %13408 = vadd.xlane.f32.xlu0 %v13407
      %v13409 = vpop.xlane.xlu0 %13408
      %v13410 = vmul.f32 %v13409, %v13403
      %v13411 = vadd.f32 %v13410, 1e-05
      %v13412 = vrsqrt.pop %v13411
      %v13413 = vmul.f32 %v13405, %v13412
      %v13414 = vlaneseq
      %v13415 = vshrl.u32 %v13414, 7
      %v13416 = vsub.s32 0, %v13415
      %v13417 = vrot.slane %v13317, %v13416
      %v13418 = vmul.f32 %v13413, %v13417
      %v13419 = vlaneseq
      %v13420 = vshrl.u32 %v13419, 7
      %v13421 = vsub.s32 0, %v13420
      %v13422 = vrot.slane %v13318, %v13421
      %v13423 = vadd.f32 %v13418, %v13422
      %v13424 = vmax.f32 %v13423, 0.0
      %v13425 = vld [vmem:[%s10] sm:$0xff]
      %v13426 = vld [vmem:[%s10 + $0x8] sm:$0xff]
      %v13427 = vld [vmem:[%s10 + $0x10] sm:$0xff]
      %v13428 = vld [vmem:[%s10 + $0x18] sm:$0xff]
      %v13429 = vld [vmem:[%s10 + $0x20] sm:$0xff]
      %v13430 = vld [vmem:[%s10 + $0x28] sm:$0xff]
      %v13431 = vld [vmem:[%s10 + $0x30] sm:$0xff]
      %v13432 = vld [vmem:[%s10 + $0x38] sm:$0xff]
      %v13433 = vld [vmem:[%s11] sm:$0x1]
      %v13435 = vlaneseq
      %v13436 = vshrl.u32 %v13435, 7
      %v13437 = vsub.s32 0, %v13436
      %v13438 = vrot.slane %v13433, %v13437
      %v13441 = vsel %vm5186, %v13424, 0
      %13443 = vmatprep.subr.mxu0 0.0
      %13444 = vmatpush1.msra.mxu0 %v13425
      %13445 = vmatprep.subr.mxu0 0.0
      %13446 = vmatpush1.msra.mxu0 %v13426
      %13447 = vmatprep.subr.mxu0 0.0
      %13448 = vmatpush1.msra.mxu0 %v13427
      %13449 = vmatprep.subr.mxu0 0.0
      %13450 = vmatpush1.msra.mxu0 %v13428
      %13451 = vmatprep.subr.mxu0 0.0
      %13452 = vmatpush1.msra.mxu0 %v13429
      %13453 = vmatprep.subr.mxu0 0.0
      %13454 = vmatpush1.msra.mxu0 %v13430
      %13455 = vmatprep.subr.mxu0 0.0
      %13456 = vmatpush1.msra.mxu0 %v13431
      %13457 = vmatprep.subr.mxu0 0.0
      %13458 = vmatpush1.msra.mxu0 %v13432
      %13459 = vmatprep.subr.mxu0 0.0
      %13460 = vmatpush1.msra.mxu0 0.0
      %13461 = vmatprep.subr.mxu0 0.0
      %13462 = vmatpush1.msra.mxu0 0.0
      %13463 = vmatprep.subr.mxu0 0.0
      %13464 = vmatpush1.msra.mxu0 0.0
      %13465 = vmatprep.subr.mxu0 0.0
      %13466 = vmatpush1.msra.mxu0 0.0
      %13467 = vmatprep.subr.mxu0 0.0
      %13468 = vmatpush1.msra.mxu0 0.0
      %13469 = vmatprep.subr.mxu0 0.0
      %13470 = vmatpush1.msra.mxu0 0.0
      %13471 = vmatprep.subr.mxu0 0.0
      %13472 = vmatpush1.msra.mxu0 0.0
      %13473 = vmatprep.subr.mxu0 0.0
      %13474 = vmatpush1.msra.mxu0 0.0
      %13475 = vmatprep.subr.mxu0 0.0
      %13476 = vmatpush1.msra.mxu0 0.0
      %13477 = vmatprep.subr.mxu0 0.0
      %13478 = vmatpush1.msra.mxu0 0.0
      %13479 = vmatprep.subr.mxu0 0.0
      %13480 = vmatpush1.msra.mxu0 0.0
      %13481 = vmatprep.subr.mxu0 0.0
      %13482 = vmatpush1.msra.mxu0 0.0
      %13483 = vmatprep.subr.mxu0 0.0
      %13484 = vmatpush1.msra.mxu0 0.0
      %13485 = vmatprep.subr.mxu0 0.0
      %13486 = vmatpush1.msra.mxu0 0.0
      %13487 = vmatprep.subr.mxu0 0.0
      %13488 = vmatpush1.msra.mxu0 0.0
      %13489 = vmatprep.subr.mxu0 0.0
      %13490 = vmatpush1.msra.mxu0 0.0
      %13491 = vmatprep.subr.mxu0 0.0
      %13492 = vmatpush1.msra.mxu0 0.0
      %13493 = vmatprep.subr.mxu0 0.0
      %13494 = vmatpush1.msra.mxu0 0.0
      %13495 = vmatprep.subr.mxu0 0.0
      %13496 = vmatpush1.msra.mxu0 0.0
      %13497 = vmatprep.subr.mxu0 0.0
      %13498 = vmatpush1.msra.mxu0 0.0
      %13499 = vmatprep.subr.mxu0 0.0
      %13500 = vmatpush1.msra.mxu0 0.0
      %13501 = vmatprep.subr.mxu0 0.0
      %13502 = vmatpush1.msra.mxu0 0.0
      %13503 = vmatprep.subr.mxu0 0.0
      %13504 = vmatpush1.msra.mxu0 0.0
      %13505 = vmatprep.subr.mxu0 0.0
      %13506 = vmatpush1.msra.mxu0 0.0
      %13507 = vmatprep.mubr.f32.mxu0 0.0
      %13508 = vmatmul.mubr.f32.gmra.mrb[0].mxu0 %v13441
      %v13509 = vpop.f32.mrb[0].mxu0
      %v13510 = vadd.f32 %v13438, %v13509
      %v13511 = vpop.f32.mrb[0].mxu0
      %13512 = vdwg.mxu0
      %13513 = vst [vmem:[#allocation3] sm:$0xff] %v13510
    $region57: #{tpu_custom_call.1} parent=1 // pred_fallthru
      _
    // Predicated region
    $region58: #{tpu_custom_call.1} parent=1 // pred_check
      _
    $region59: #{tpu_custom_call.1} parent=1 // pred_check_branch
      %13515 = sbr.rel (0) target = $region61
    $region60: #{tpu_custom_call.1} parent=1 // pred_region
      %s13517 = ssub.s32 128, 128
      %13518 = vsyncadd [#allocation4], %s13517
      %s13520 = sshll.u32 [#allocation3], 4
      %s13521 = int_to_ptr.vmem [resolvable:$true] %s13520
      %13523 = dma.vmem_to_hbm [thread:$0]  %s13521, 128, %s12, [#allocation4]
    $region61: #{tpu_custom_call.1} parent=1 // pred_fallthru
      _
    // Predicated region
    $region62: #{tpu_custom_call.1} parent=1 // pred_check
      _
    $region63: #{tpu_custom_call.1} parent=1 // pred_check_branch
      %13525 = sbr.rel (0) target = $region65
    $region64: #{tpu_custom_call.1} parent=1 // pred_region
      %13526 = dma.done [#allocation4], 128
    $region65: #{tpu_custom_call.1} parent=1 // pred_fallthru
      _
    %13527 = vsyncpa [#allocation4], 1

</llo_original>
